<compile_context>
chip_gen: v5e
topology: v5e:2x2
jax: 0.10.0
libtpu: 0.0.40
codegen_flags: <defaults>
</compile_context>

<pallas_src>
import functools

import jax
import jax.numpy as jnp
from jax.experimental import pallas as pl
from jax.experimental.pallas import tpu as pltpu


# ---------------------------------------------------------------------------
# Pallas kernel: one grid step == one tile of Bt batch rows (Bt on the lane axis
# of the output).
#   h_ref    : (Bt, D)     relation-transformed head embeddings
#   tail_ref : (N, Bt, D)  gathered target embeddings (batch on sublanes)
#   bias_ref : (N, Bt)     bias_head[u][None, :] + bias_tail[v].T (folded, lane-dense)
#   out_ref  : (N, Bt)     margin - ||h - t|| + biases (batch on the lane axis)
# ---------------------------------------------------------------------------
def euclinet_dist_kernel(h_ref, tail_ref, bias_ref, out_ref, *, margin):
    h = h_ref[...]                                   # (Bt, D)
    t = tail_ref[...]                                # (N, Bt, D)

    # Direct squared-distance form (VPU mul/sub + XLU lane reduce); avoids the
    # M=1 MXU einsum and the ||t||^2 side stream of the previous version.
    diff = t - h[None, :, :]                         # (N, Bt, D)
    sq = jnp.sum(diff * diff, axis=-1)               # (N, Bt), always >= 0

    # Lane-dense epilogue: Bt (>=128) sits on the 128-lane axis -> unmasked vst.
    out_ref[...] = (margin - jnp.sqrt(sq)) + bias_ref[...]


def euclinet4kg_forward(drug_emb, target_emb, rel_transform, rel_bias,
                        bias_head, bias_tail, u_idx, r_idx, v_idx, margin,
                        *, block_b=256):
    """Plain-JAX glue (index padding, embedding gathers, the tiny per-row
    relation transform, bias folding) + a Pallas kernel for the hot path
    (Euclidean distance + margin + bias epilogue)."""
    B = u_idx.shape[0]
    N = v_idx.shape[1]
    D = drug_emb.shape[1]
    assert block_b % 128 == 0, "batch tile must be a multiple of 128 (lane axis)"

    # ---- pad the INDEX vectors (O(B)), not the gathered data (O(B*N*D)).
    # Pad index 0 is always valid, so every gather stays in-bounds; padded rows
    # produce finite garbage that is sliced off below.
    Bt = block_b
    Bp = -(-B // Bt) * Bt
    pad = Bp - B
    if pad:
        u_idx = jnp.pad(u_idx, (0, pad))
        r_idx = jnp.pad(r_idx, (0, pad))
        v_idx = jnp.pad(v_idx, ((0, pad), (0, 0)))

    # ---- glue: gathers + the tiny relation transform (2*D^2 FLOPs/row) stay in
    # XLA; this removes the dominant (B, D, D) HBM stream from the kernel.
    head = drug_emb[u_idx]                                             # (Bp, D)
    h_new = (jnp.einsum('bk,bjk->bj', head, rel_transform[r_idx],
                        preferred_element_type=jnp.float32)
             + rel_bias[r_idx])                                        # (Bp, D)

    # Transposed-index gathers -> batch-on-lane layout with zero extra copies.
    v_t = v_idx.T                                                      # (N, Bp)
    tail_t = target_emb[v_t]                                           # (N, Bp, D)
    bias_t = bias_head[u_idx][None, :] + bias_tail[v_t]                # (N, Bp)

    out_t = pl.pallas_call(
        functools.partial(euclinet_dist_kernel, margin=float(margin)),
        out_shape=jax.ShapeDtypeStruct((N, Bp), jnp.float32),
        grid=(Bp // Bt,),
        in_specs=[
            pl.BlockSpec((Bt, D), lambda i: (i, 0)),        # transformed heads
            pl.BlockSpec((N, Bt, D), lambda i: (0, i, 0)),  # gathered tails
            pl.BlockSpec((N, Bt), lambda i: (0, i)),        # folded biases
        ],
        out_specs=pl.BlockSpec((N, Bt), lambda i: (0, i)),  # (N, Bt) lane-dense
        compiler_params=pltpu.CompilerParams(
            dimension_semantics=("parallel",)),             # megacore on v7x
    )(h_new, tail_t, bias_t)

    # Tiny (N, B) -> (B, N) layout fixup on the result.
    return out_t[:, :B].T                                              # (B, N)


def reference_forward(drug_emb, target_emb, rel_transform, rel_bias,
                      bias_head, bias_tail, u_idx, r_idx, v_idx, margin):
    head = drug_emb[u_idx]                                   # (B, D)
    tail = target_emb[v_idx]                                 # (B, N, D)
    r_t = rel_transform[r_idx]                               # (B, D, D)
    r_b = rel_bias[r_idx]                                    # (B, D)
    h_new = jnp.einsum('bk,bjk->bj', head, r_t) + r_b        # (B, D)
    dist = jnp.sqrt(jnp.sum((h_new[:, None, :] - tail) ** 2, axis=-1))
    return margin - dist + bias_head[u_idx][:, None] + bias_tail[v_idx]


def _l2_normalize_rows(w):
    return w / jnp.sqrt(jnp.sum(jnp.square(w), axis=1, keepdims=True))


if __name__ == "__main__":
    # Small, deterministic problem sizes consistent with the module's __init__.
    NUM_DRUGS, NUM_DISEASES, NUM_TARGETS = 10, 5, 12
    DIM = 32        # embedding dim
    B = 12          # batch of (u, r) pairs (exercises index padding 12 -> 256)
    N_CAND = 8      # candidate tails per row
    MARGIN = 1.0

    key = jax.random.PRNGKey(0)
    k_drug, k_tgt, k_rel, k_rbias, k_bh, k_bt, k_u, k_r, k_v = jax.random.split(key, 9)

    # drug / target embeddings: xavier-uniform-like init, then L2 row-normalized
    # (matches normalization_ent_embedding).
    bnd_d = jnp.sqrt(6.0 / (NUM_DRUGS + DIM))
    drug_emb = _l2_normalize_rows(
        jax.random.uniform(k_drug, (NUM_DRUGS, DIM), jnp.float32, -bnd_d, bnd_d))
    bnd_t = jnp.sqrt(6.0 / (NUM_TARGETS + DIM))
    target_emb = _l2_normalize_rows(
        jax.random.uniform(k_tgt, (NUM_TARGETS, DIM), jnp.float32, -bnd_t, bnd_t))

    # relation_transform: (num_diseases, dim, dim), kaiming-uniform-like init.
    bnd_r = jnp.sqrt(6.0 / (DIM * DIM))
    rel_transform = jax.random.uniform(
        k_rel, (NUM_DISEASES, DIM, DIM), jnp.float32, -bnd_r, bnd_r)

    # relation_bias / bias_head / bias_tail are zeros in __init__; use small
    # deterministic nonzero values so the bias path is actually exercised.
    rel_bias = 0.01 * jax.random.normal(k_rbias, (NUM_DISEASES, DIM), jnp.float32)
    bias_head = 0.01 * jax.random.normal(k_bh, (NUM_DRUGS,), jnp.float32)
    bias_tail = 0.01 * jax.random.normal(k_bt, (NUM_TARGETS,), jnp.float32)

    u_idx = jax.random.randint(k_u, (B,), 0, NUM_DRUGS)
    r_idx = jax.random.randint(k_r, (B,), 0, NUM_DISEASES)
    v_idx = jax.random.randint(k_v, (B, N_CAND), 0, NUM_TARGETS)

    out = euclinet4kg_forward(drug_emb, target_emb, rel_transform, rel_bias,
                              bias_head, bias_tail, u_idx, r_idx, v_idx, MARGIN)
    out = jax.block_until_ready(out)

    ref = reference_forward(drug_emb, target_emb, rel_transform, rel_bias,
                            bias_head, bias_tail, u_idx, r_idx, v_idx, MARGIN)
    ref = jax.block_until_ready(ref)

    assert out.shape == (B, N_CAND), out.shape
    assert jnp.allclose(out, ref, atol=1e-5, rtol=1e-5), (out, ref)
    print("KERNEL_OK")
</pallas_src>

<mosaic_0001>
module attributes {stable_mosaic.version = 11 : i64} {
  func.func @euclinet_dist_kernel(%arg0: i32, %arg1: memref<256x32xf32, #tpu.memory_space<vmem>>, %arg2: memref<8x256x32xf32, #tpu.memory_space<vmem>>, %arg3: memref<8x256xf32, #tpu.memory_space<vmem>>, %arg4: memref<8x256xf32, #tpu.memory_space<vmem>>) attributes {dimension_semantics = [#tpu.dimension_semantics<parallel>], iteration_bounds = array<i64: 1>, scalar_prefetch = 0 : i64, scratch_operands = 0 : i64, tpu.core_type = #tpu.core_type<tc>, window_params = [{transform_indices = @transform_0, window_bounds = array<i64: 256, 32>}, {transform_indices = @transform_1, window_bounds = array<i64: 8, 256, 32>}, {transform_indices = @transform_2, window_bounds = array<i64: 8, 256>}, {transform_indices = @transform_3, window_bounds = array<i64: 8, 256>}]} {
    %c0 = arith.constant 0 : index
    %c0_0 = arith.constant 0 : index
    %0 = vector.load %arg1[%c0, %c0_0] : memref<256x32xf32, #tpu.memory_space<vmem>>, vector<256x32xf32>
    %c0_1 = arith.constant 0 : index
    %c0_2 = arith.constant 0 : index
    %c0_3 = arith.constant 0 : index
    %1 = vector.load %arg2[%c0_1, %c0_2, %c0_3] : memref<8x256x32xf32, #tpu.memory_space<vmem>>, vector<8x256x32xf32>
    %2 = vector.shape_cast %0 : vector<256x32xf32> to vector<1x256x32xf32>
    %3 = vector.broadcast %2 : vector<1x256x32xf32> to vector<8x256x32xf32>
    %4 = arith.subf %1, %3 : vector<8x256x32xf32>
    %5 = arith.mulf %4, %4 : vector<8x256x32xf32>
    %cst = arith.constant dense<0.000000e+00> : vector<8x256xf32>
    %6 = vector.multi_reduction <add>, %5, %cst [2] : vector<8x256x32xf32> to vector<8x256xf32>
    %7 = math.sqrt %6 : vector<8x256xf32>
    %cst_4 = arith.constant 1.000000e+00 : f32
    %8 = vector.broadcast %cst_4 : f32 to vector<8x256xf32>
    %9 = arith.subf %8, %7 : vector<8x256xf32>
    %c0_5 = arith.constant 0 : index
    %c0_6 = arith.constant 0 : index
    %10 = vector.load %arg3[%c0_5, %c0_6] : memref<8x256xf32, #tpu.memory_space<vmem>>, vector<8x256xf32>
    %11 = arith.addf %9, %10 : vector<8x256xf32>
    %c0_7 = arith.constant 0 : index
    %c0_8 = arith.constant 0 : index
    %12 = vector.load %arg4[%c0_7, %c0_8] : memref<8x256xf32, #tpu.memory_space<vmem>>, vector<8x256xf32>
    tpu.vector_store %arg4[%c0_7, %c0_8], %11 {strides = array<i32>} : memref<8x256xf32, #tpu.memory_space<vmem>>, vector<8x256xf32>,
    return
  }
  func.func @transform_0(%arg0: i32) -> (i32, i32) {
    %c0_i32 = arith.constant 0 : i32
    %c0_i32_0 = arith.constant 0 : i32
    return %arg0, %c0_i32 : i32, i32
  }
  func.func @transform_1(%arg0: i32) -> (i32, i32, i32) {
    %c0_i32 = arith.constant 0 : i32
    %c0_i32_0 = arith.constant 0 : i32
    %c0_i32_1 = arith.constant 0 : i32
    return %c0_i32, %arg0, %c0_i32_0 : i32, i32, i32
  }
  func.func @transform_2(%arg0: i32) -> (i32, i32) {
    %c0_i32 = arith.constant 0 : i32
    %c0_i32_0 = arith.constant 0 : i32
    return %c0_i32, %arg0 : i32, i32
  }
  func.func @transform_3(%arg0: i32) -> (i32, i32) {
    %c0_i32 = arith.constant 0 : i32
    %c0_i32_0 = arith.constant 0 : i32
    return %c0_i32, %arg0 : i32, i32
  }
}

</mosaic_0001>

<llo_original>
// kernel: tpu_custom_call.1
$region0: #{tpu_custom_call.1}
  #allocation0 [shape = 'u32[]', space=smem, size = 0x4, offset = 0x4, fixed_abs, tag = 'smem constant byte address 0x4 - core index']
  #allocation1 [shape = 'u32[72,128]{1,0:T(1,128)}', space=vmem, size = 0x9000, scoped, tag = 'internal scratch']
  %s0 = inlined_call_operand.vmem [shape: f32[256,32], index: 0, kind: input, shape index: {}]
  %s1 = inlined_call_operand.vmem [shape: f32[8,256,32], index: 1, kind: input, shape index: {}]
  %s2 = inlined_call_operand.vmem [shape: f32[8,256], index: 2, kind: input, shape index: {}]
  %s3 = inlined_call_operand.hbm [shape: f32[8,256], index: 3, kind: output, shape index: {}]
  %s4 = sld [smem:[#allocation0]]
  $region22: #{tpu_custom_call.1} parent=0
    _
  %s6 = ssub.s32 1, %s4
  %s7 = scalar_select 0, %s6, %s4
  $region1: #{tpu_custom_call.1} parent=0
    #allocation2 [shape = 'u8[8192]{0}', space=vmem, size = 0x2000, scoped, tag = 'output window, operand 0, single buffered']
    #allocation3 [shape = 's32[1]{0}', space=sflag, size = 0x4, scoped, tag = 'scoped memory for tpu_custom_call.1']
    %8 = vsyncpa [#allocation3], 0
    // Predicated region
    $region2: #{tpu_custom_call.1} parent=1 // pred_check
      _
    $region3: #{tpu_custom_call.1} parent=1 // pred_check_branch
      %10 = sbr.rel (0) target = $region5
    $region4: #{tpu_custom_call.1} parent=1 // pred_region
      _
    $region5: #{tpu_custom_call.1} parent=1 // pred_fallthru
      _
    // Predicated region
    $region6: #{tpu_custom_call.1} parent=1 // pred_check
      _
    $region7: #{tpu_custom_call.1} parent=1 // pred_check_branch
      %12 = sbr.rel (0) target = $region9
    $region8: #{tpu_custom_call.1} parent=1 // pred_region
      _
    $region9: #{tpu_custom_call.1} parent=1 // pred_fallthru
      _
    // Predicated region
    $region10: #{tpu_custom_call.1} parent=1 // pred_check
      _
    $region11: #{tpu_custom_call.1} parent=1 // pred_check_branch
      %14 = sbr.rel (0) target = $region13
    $region12: #{tpu_custom_call.1} parent=1 // pred_region
      _
    $region13: #{tpu_custom_call.1} parent=1 // pred_fallthru
      _
    %v15 = vld [vmem:[%s0] sm:$0xff]
    %v16 = vld [vmem:[%s0 + $0x8] sm:$0xff]
    %v17 = vld [vmem:[%s0 + $0x10] sm:$0xff]
    %v18 = vld [vmem:[%s0 + $0x18] sm:$0xff]
    %v19 = vld [vmem:[%s0 + $0x20] sm:$0xff]
    %v20 = vld [vmem:[%s0 + $0x28] sm:$0xff]
    %v21 = vld [vmem:[%s0 + $0x30] sm:$0xff]
    %v22 = vld [vmem:[%s0 + $0x38] sm:$0xff]
    %v23 = vld [vmem:[%s0 + $0x40] sm:$0xff]
    %v24 = vld [vmem:[%s0 + $0x48] sm:$0xff]
    %v25 = vld [vmem:[%s0 + $0x50] sm:$0xff]
    %v26 = vld [vmem:[%s0 + $0x58] sm:$0xff]
    %v27 = vld [vmem:[%s0 + $0x60] sm:$0xff]
    %v28 = vld [vmem:[%s0 + $0x68] sm:$0xff]
    %v29 = vld [vmem:[%s0 + $0x70] sm:$0xff]
    %v30 = vld [vmem:[%s0 + $0x78] sm:$0xff]
    %v31 = vld [vmem:[%s0 + $0x80] sm:$0xff]
    %v32 = vld [vmem:[%s0 + $0x88] sm:$0xff]
    %v33 = vld [vmem:[%s0 + $0x90] sm:$0xff]
    %v34 = vld [vmem:[%s0 + $0x98] sm:$0xff]
    %v35 = vld [vmem:[%s0 + $0xa0] sm:$0xff]
    %v36 = vld [vmem:[%s0 + $0xa8] sm:$0xff]
    %v37 = vld [vmem:[%s0 + $0xb0] sm:$0xff]
    %v38 = vld [vmem:[%s0 + $0xb8] sm:$0xff]
    %v39 = vld [vmem:[%s0 + $0xc0] sm:$0xff]
    %v40 = vld [vmem:[%s0 + $0xc8] sm:$0xff]
    %v41 = vld [vmem:[%s0 + $0xd0] sm:$0xff]
    %v42 = vld [vmem:[%s0 + $0xd8] sm:$0xff]
    %v43 = vld [vmem:[%s0 + $0xe0] sm:$0xff]
    %v44 = vld [vmem:[%s0 + $0xe8] sm:$0xff]
    %v45 = vld [vmem:[%s0 + $0xf0] sm:$0xff]
    %v46 = vld [vmem:[%s0 + $0xf8] sm:$0xff]
    %v47 = vld [vmem:[%s1] sm:$0xff]
    %v48 = vld [vmem:[%s1 + $0x8] sm:$0xff]
    %v49 = vld [vmem:[%s1 + $0x10] sm:$0xff]
    %v50 = vld [vmem:[%s1 + $0x18] sm:$0xff]
    %v51 = vld [vmem:[%s1 + $0x20] sm:$0xff]
    %v52 = vld [vmem:[%s1 + $0x28] sm:$0xff]
    %v53 = vld [vmem:[%s1 + $0x30] sm:$0xff]
    %v54 = vld [vmem:[%s1 + $0x38] sm:$0xff]
    %v55 = vld [vmem:[%s1 + $0x40] sm:$0xff]
    %v56 = vld [vmem:[%s1 + $0x48] sm:$0xff]
    %v57 = vld [vmem:[%s1 + $0x50] sm:$0xff]
    %v58 = vld [vmem:[%s1 + $0x58] sm:$0xff]
    %v59 = vld [vmem:[%s1 + $0x60] sm:$0xff]
    %v60 = vld [vmem:[%s1 + $0x68] sm:$0xff]
    %v61 = vld [vmem:[%s1 + $0x70] sm:$0xff]
    %v62 = vld [vmem:[%s1 + $0x78] sm:$0xff]
    %v63 = vld [vmem:[%s1 + $0x80] sm:$0xff]
    %v64 = vld [vmem:[%s1 + $0x88] sm:$0xff]
    %v65 = vld [vmem:[%s1 + $0x90] sm:$0xff]
    %v66 = vld [vmem:[%s1 + $0x98] sm:$0xff]
    %v67 = vld [vmem:[%s1 + $0xa0] sm:$0xff]
    %v68 = vld [vmem:[%s1 + $0xa8] sm:$0xff]
    %v69 = vld [vmem:[%s1 + $0xb0] sm:$0xff]
    %v70 = vld [vmem:[%s1 + $0xb8] sm:$0xff]
    %v71 = vld [vmem:[%s1 + $0xc0] sm:$0xff]
    %v72 = vld [vmem:[%s1 + $0xc8] sm:$0xff]
    %v73 = vld [vmem:[%s1 + $0xd0] sm:$0xff]
    %v74 = vld [vmem:[%s1 + $0xd8] sm:$0xff]
    %v75 = vld [vmem:[%s1 + $0xe0] sm:$0xff]
    %v76 = vld [vmem:[%s1 + $0xe8] sm:$0xff]
    %v77 = vld [vmem:[%s1 + $0xf0] sm:$0xff]
    %v78 = vld [vmem:[%s1 + $0xf8] sm:$0xff]
    %v79 = vld [vmem:[%s1 + $0x100] sm:$0xff]
    %v80 = vld [vmem:[%s1 + $0x108] sm:$0xff]
    %v81 = vld [vmem:[%s1 + $0x110] sm:$0xff]
    %v82 = vld [vmem:[%s1 + $0x118] sm:$0xff]
    %v83 = vld [vmem:[%s1 + $0x120] sm:$0xff]
    %v84 = vld [vmem:[%s1 + $0x128] sm:$0xff]
    %v85 = vld [vmem:[%s1 + $0x130] sm:$0xff]
    %v86 = vld [vmem:[%s1 + $0x138] sm:$0xff]
    %v87 = vld [vmem:[%s1 + $0x140] sm:$0xff]
    %v88 = vld [vmem:[%s1 + $0x148] sm:$0xff]
    %v89 = vld [vmem:[%s1 + $0x150] sm:$0xff]
    %v90 = vld [vmem:[%s1 + $0x158] sm:$0xff]
    %v91 = vld [vmem:[%s1 + $0x160] sm:$0xff]
    %v92 = vld [vmem:[%s1 + $0x168] sm:$0xff]
    %v93 = vld [vmem:[%s1 + $0x170] sm:$0xff]
    %v94 = vld [vmem:[%s1 + $0x178] sm:$0xff]
    %v95 = vld [vmem:[%s1 + $0x180] sm:$0xff]
    %v96 = vld [vmem:[%s1 + $0x188] sm:$0xff]
    %v97 = vld [vmem:[%s1 + $0x190] sm:$0xff]
    %v98 = vld [vmem:[%s1 + $0x198] sm:$0xff]
    %v99 = vld [vmem:[%s1 + $0x1a0] sm:$0xff]
    %v100 = vld [vmem:[%s1 + $0x1a8] sm:$0xff]
    %v101 = vld [vmem:[%s1 + $0x1b0] sm:$0xff]
    %v102 = vld [vmem:[%s1 + $0x1b8] sm:$0xff]
    %v103 = vld [vmem:[%s1 + $0x1c0] sm:$0xff]
    %v104 = vld [vmem:[%s1 + $0x1c8] sm:$0xff]
    %v105 = vld [vmem:[%s1 + $0x1d0] sm:$0xff]
    %v106 = vld [vmem:[%s1 + $0x1d8] sm:$0xff]
    %v107 = vld [vmem:[%s1 + $0x1e0] sm:$0xff]
    %v108 = vld [vmem:[%s1 + $0x1e8] sm:$0xff]
    %v109 = vld [vmem:[%s1 + $0x1f0] sm:$0xff]
    %v110 = vld [vmem:[%s1 + $0x1f8] sm:$0xff]
    %v111 = vld [vmem:[%s1 + $0x200] sm:$0xff]
    %v112 = vld [vmem:[%s1 + $0x208] sm:$0xff]
    %v113 = vld [vmem:[%s1 + $0x210] sm:$0xff]
    %v114 = vld [vmem:[%s1 + $0x218] sm:$0xff]
    %v115 = vld [vmem:[%s1 + $0x220] sm:$0xff]
    %v116 = vld [vmem:[%s1 + $0x228] sm:$0xff]
    %v117 = vld [vmem:[%s1 + $0x230] sm:$0xff]
    %v118 = vld [vmem:[%s1 + $0x238] sm:$0xff]
    %v119 = vld [vmem:[%s1 + $0x240] sm:$0xff]
    %v120 = vld [vmem:[%s1 + $0x248] sm:$0xff]
    %v121 = vld [vmem:[%s1 + $0x250] sm:$0xff]
    %v122 = vld [vmem:[%s1 + $0x258] sm:$0xff]
    %v123 = vld [vmem:[%s1 + $0x260] sm:$0xff]
    %v124 = vld [vmem:[%s1 + $0x268] sm:$0xff]
    %v125 = vld [vmem:[%s1 + $0x270] sm:$0xff]
    %v126 = vld [vmem:[%s1 + $0x278] sm:$0xff]
    %v127 = vld [vmem:[%s1 + $0x280] sm:$0xff]
    %v128 = vld [vmem:[%s1 + $0x288] sm:$0xff]
    %v129 = vld [vmem:[%s1 + $0x290] sm:$0xff]
    %v130 = vld [vmem:[%s1 + $0x298] sm:$0xff]
    %v131 = vld [vmem:[%s1 + $0x2a0] sm:$0xff]
    %v132 = vld [vmem:[%s1 + $0x2a8] sm:$0xff]
    %v133 = vld [vmem:[%s1 + $0x2b0] sm:$0xff]
    %v134 = vld [vmem:[%s1 + $0x2b8] sm:$0xff]
    %v135 = vld [vmem:[%s1 + $0x2c0] sm:$0xff]
    %v136 = vld [vmem:[%s1 + $0x2c8] sm:$0xff]
    %v137 = vld [vmem:[%s1 + $0x2d0] sm:$0xff]
    %v138 = vld [vmem:[%s1 + $0x2d8] sm:$0xff]
    %v139 = vld [vmem:[%s1 + $0x2e0] sm:$0xff]
    %v140 = vld [vmem:[%s1 + $0x2e8] sm:$0xff]
    %v141 = vld [vmem:[%s1 + $0x2f0] sm:$0xff]
    %v142 = vld [vmem:[%s1 + $0x2f8] sm:$0xff]
    %v143 = vld [vmem:[%s1 + $0x300] sm:$0xff]
    %v144 = vld [vmem:[%s1 + $0x308] sm:$0xff]
    %v145 = vld [vmem:[%s1 + $0x310] sm:$0xff]
    %v146 = vld [vmem:[%s1 + $0x318] sm:$0xff]
    %v147 = vld [vmem:[%s1 + $0x320] sm:$0xff]
    %v148 = vld [vmem:[%s1 + $0x328] sm:$0xff]
    %v149 = vld [vmem:[%s1 + $0x330] sm:$0xff]
    %v150 = vld [vmem:[%s1 + $0x338] sm:$0xff]
    %v151 = vld [vmem:[%s1 + $0x340] sm:$0xff]
    %v152 = vld [vmem:[%s1 + $0x348] sm:$0xff]
    %v153 = vld [vmem:[%s1 + $0x350] sm:$0xff]
    %v154 = vld [vmem:[%s1 + $0x358] sm:$0xff]
    %v155 = vld [vmem:[%s1 + $0x360] sm:$0xff]
    %v156 = vld [vmem:[%s1 + $0x368] sm:$0xff]
    %v157 = vld [vmem:[%s1 + $0x370] sm:$0xff]
    %v158 = vld [vmem:[%s1 + $0x378] sm:$0xff]
    %v159 = vld [vmem:[%s1 + $0x380] sm:$0xff]
    %v160 = vld [vmem:[%s1 + $0x388] sm:$0xff]
    %v161 = vld [vmem:[%s1 + $0x390] sm:$0xff]
    %v162 = vld [vmem:[%s1 + $0x398] sm:$0xff]
    %v163 = vld [vmem:[%s1 + $0x3a0] sm:$0xff]
    %v164 = vld [vmem:[%s1 + $0x3a8] sm:$0xff]
    %v165 = vld [vmem:[%s1 + $0x3b0] sm:$0xff]
    %v166 = vld [vmem:[%s1 + $0x3b8] sm:$0xff]
    %v167 = vld [vmem:[%s1 + $0x3c0] sm:$0xff]
    %v168 = vld [vmem:[%s1 + $0x3c8] sm:$0xff]
    %v169 = vld [vmem:[%s1 + $0x3d0] sm:$0xff]
    %v170 = vld [vmem:[%s1 + $0x3d8] sm:$0xff]
    %v171 = vld [vmem:[%s1 + $0x3e0] sm:$0xff]
    %v172 = vld [vmem:[%s1 + $0x3e8] sm:$0xff]
    %v173 = vld [vmem:[%s1 + $0x3f0] sm:$0xff]
    %v174 = vld [vmem:[%s1 + $0x3f8] sm:$0xff]
    %v175 = vld [vmem:[%s1 + $0x400] sm:$0xff]
    %v176 = vld [vmem:[%s1 + $0x408] sm:$0xff]
    %v177 = vld [vmem:[%s1 + $0x410] sm:$0xff]
    %v178 = vld [vmem:[%s1 + $0x418] sm:$0xff]
    %v179 = vld [vmem:[%s1 + $0x420] sm:$0xff]
    %v180 = vld [vmem:[%s1 + $0x428] sm:$0xff]
    %v181 = vld [vmem:[%s1 + $0x430] sm:$0xff]
    %v182 = vld [vmem:[%s1 + $0x438] sm:$0xff]
    %v183 = vld [vmem:[%s1 + $0x440] sm:$0xff]
    %v184 = vld [vmem:[%s1 + $0x448] sm:$0xff]
    %v185 = vld [vmem:[%s1 + $0x450] sm:$0xff]
    %v186 = vld [vmem:[%s1 + $0x458] sm:$0xff]
    %v187 = vld [vmem:[%s1 + $0x460] sm:$0xff]
    %v188 = vld [vmem:[%s1 + $0x468] sm:$0xff]
    %v189 = vld [vmem:[%s1 + $0x470] sm:$0xff]
    %v190 = vld [vmem:[%s1 + $0x478] sm:$0xff]
    %v191 = vld [vmem:[%s1 + $0x480] sm:$0xff]
    %v192 = vld [vmem:[%s1 + $0x488] sm:$0xff]
    %v193 = vld [vmem:[%s1 + $0x490] sm:$0xff]
    %v194 = vld [vmem:[%s1 + $0x498] sm:$0xff]
    %v195 = vld [vmem:[%s1 + $0x4a0] sm:$0xff]
    %v196 = vld [vmem:[%s1 + $0x4a8] sm:$0xff]
    %v197 = vld [vmem:[%s1 + $0x4b0] sm:$0xff]
    %v198 = vld [vmem:[%s1 + $0x4b8] sm:$0xff]
    %v199 = vld [vmem:[%s1 + $0x4c0] sm:$0xff]
    %v200 = vld [vmem:[%s1 + $0x4c8] sm:$0xff]
    %v201 = vld [vmem:[%s1 + $0x4d0] sm:$0xff]
    %v202 = vld [vmem:[%s1 + $0x4d8] sm:$0xff]
    %v203 = vld [vmem:[%s1 + $0x4e0] sm:$0xff]
    %v204 = vld [vmem:[%s1 + $0x4e8] sm:$0xff]
    %v205 = vld [vmem:[%s1 + $0x4f0] sm:$0xff]
    %v206 = vld [vmem:[%s1 + $0x4f8] sm:$0xff]
    %v207 = vld [vmem:[%s1 + $0x500] sm:$0xff]
    %v208 = vld [vmem:[%s1 + $0x508] sm:$0xff]
    %v209 = vld [vmem:[%s1 + $0x510] sm:$0xff]
    %v210 = vld [vmem:[%s1 + $0x518] sm:$0xff]
    %v211 = vld [vmem:[%s1 + $0x520] sm:$0xff]
    %v212 = vld [vmem:[%s1 + $0x528] sm:$0xff]
    %v213 = vld [vmem:[%s1 + $0x530] sm:$0xff]
    %v214 = vld [vmem:[%s1 + $0x538] sm:$0xff]
    %v215 = vld [vmem:[%s1 + $0x540] sm:$0xff]
    %v216 = vld [vmem:[%s1 + $0x548] sm:$0xff]
    %v217 = vld [vmem:[%s1 + $0x550] sm:$0xff]
    %v218 = vld [vmem:[%s1 + $0x558] sm:$0xff]
    %v219 = vld [vmem:[%s1 + $0x560] sm:$0xff]
    %v220 = vld [vmem:[%s1 + $0x568] sm:$0xff]
    %v221 = vld [vmem:[%s1 + $0x570] sm:$0xff]
    %v222 = vld [vmem:[%s1 + $0x578] sm:$0xff]
    %v223 = vld [vmem:[%s1 + $0x580] sm:$0xff]
    %v224 = vld [vmem:[%s1 + $0x588] sm:$0xff]
    %v225 = vld [vmem:[%s1 + $0x590] sm:$0xff]
    %v226 = vld [vmem:[%s1 + $0x598] sm:$0xff]
    %v227 = vld [vmem:[%s1 + $0x5a0] sm:$0xff]
    %v228 = vld [vmem:[%s1 + $0x5a8] sm:$0xff]
    %v229 = vld [vmem:[%s1 + $0x5b0] sm:$0xff]
    %v230 = vld [vmem:[%s1 + $0x5b8] sm:$0xff]
    %v231 = vld [vmem:[%s1 + $0x5c0] sm:$0xff]
    %v232 = vld [vmem:[%s1 + $0x5c8] sm:$0xff]
    %v233 = vld [vmem:[%s1 + $0x5d0] sm:$0xff]
    %v234 = vld [vmem:[%s1 + $0x5d8] sm:$0xff]
    %v235 = vld [vmem:[%s1 + $0x5e0] sm:$0xff]
    %v236 = vld [vmem:[%s1 + $0x5e8] sm:$0xff]
    %v237 = vld [vmem:[%s1 + $0x5f0] sm:$0xff]
    %v238 = vld [vmem:[%s1 + $0x5f8] sm:$0xff]
    %v239 = vld [vmem:[%s1 + $0x600] sm:$0xff]
    %v240 = vld [vmem:[%s1 + $0x608] sm:$0xff]
    %v241 = vld [vmem:[%s1 + $0x610] sm:$0xff]
    %v242 = vld [vmem:[%s1 + $0x618] sm:$0xff]
    %v243 = vld [vmem:[%s1 + $0x620] sm:$0xff]
    %v244 = vld [vmem:[%s1 + $0x628] sm:$0xff]
    %v245 = vld [vmem:[%s1 + $0x630] sm:$0xff]
    %v246 = vld [vmem:[%s1 + $0x638] sm:$0xff]
    %v247 = vld [vmem:[%s1 + $0x640] sm:$0xff]
    %v248 = vld [vmem:[%s1 + $0x648] sm:$0xff]
    %v249 = vld [vmem:[%s1 + $0x650] sm:$0xff]
    %v250 = vld [vmem:[%s1 + $0x658] sm:$0xff]
    %v251 = vld [vmem:[%s1 + $0x660] sm:$0xff]
    %v252 = vld [vmem:[%s1 + $0x668] sm:$0xff]
    %v253 = vld [vmem:[%s1 + $0x670] sm:$0xff]
    %v254 = vld [vmem:[%s1 + $0x678] sm:$0xff]
    %v255 = vld [vmem:[%s1 + $0x680] sm:$0xff]
    %v256 = vld [vmem:[%s1 + $0x688] sm:$0xff]
    %v257 = vld [vmem:[%s1 + $0x690] sm:$0xff]
    %v258 = vld [vmem:[%s1 + $0x698] sm:$0xff]
    %v259 = vld [vmem:[%s1 + $0x6a0] sm:$0xff]
    %v260 = vld [vmem:[%s1 + $0x6a8] sm:$0xff]
    %v261 = vld [vmem:[%s1 + $0x6b0] sm:$0xff]
    %v262 = vld [vmem:[%s1 + $0x6b8] sm:$0xff]
    %v263 = vld [vmem:[%s1 + $0x6c0] sm:$0xff]
    %v264 = vld [vmem:[%s1 + $0x6c8] sm:$0xff]
    %v265 = vld [vmem:[%s1 + $0x6d0] sm:$0xff]
    %v266 = vld [vmem:[%s1 + $0x6d8] sm:$0xff]
    %v267 = vld [vmem:[%s1 + $0x6e0] sm:$0xff]
    %v268 = vld [vmem:[%s1 + $0x6e8] sm:$0xff]
    %v269 = vld [vmem:[%s1 + $0x6f0] sm:$0xff]
    %v270 = vld [vmem:[%s1 + $0x6f8] sm:$0xff]
    %v271 = vld [vmem:[%s1 + $0x700] sm:$0xff]
    %v272 = vld [vmem:[%s1 + $0x708] sm:$0xff]
    %v273 = vld [vmem:[%s1 + $0x710] sm:$0xff]
    %v274 = vld [vmem:[%s1 + $0x718] sm:$0xff]
    %v275 = vld [vmem:[%s1 + $0x720] sm:$0xff]
    %v276 = vld [vmem:[%s1 + $0x728] sm:$0xff]
    %v277 = vld [vmem:[%s1 + $0x730] sm:$0xff]
    %v278 = vld [vmem:[%s1 + $0x738] sm:$0xff]
    %v279 = vld [vmem:[%s1 + $0x740] sm:$0xff]
    %v280 = vld [vmem:[%s1 + $0x748] sm:$0xff]
    %v281 = vld [vmem:[%s1 + $0x750] sm:$0xff]
    %v282 = vld [vmem:[%s1 + $0x758] sm:$0xff]
    %v283 = vld [vmem:[%s1 + $0x760] sm:$0xff]
    %v284 = vld [vmem:[%s1 + $0x768] sm:$0xff]
    %v285 = vld [vmem:[%s1 + $0x770] sm:$0xff]
    %v286 = vld [vmem:[%s1 + $0x778] sm:$0xff]
    %v287 = vld [vmem:[%s1 + $0x780] sm:$0xff]
    %v288 = vld [vmem:[%s1 + $0x788] sm:$0xff]
    %v289 = vld [vmem:[%s1 + $0x790] sm:$0xff]
    %v290 = vld [vmem:[%s1 + $0x798] sm:$0xff]
    %v291 = vld [vmem:[%s1 + $0x7a0] sm:$0xff]
    %v292 = vld [vmem:[%s1 + $0x7a8] sm:$0xff]
    %v293 = vld [vmem:[%s1 + $0x7b0] sm:$0xff]
    %v294 = vld [vmem:[%s1 + $0x7b8] sm:$0xff]
    %v295 = vld [vmem:[%s1 + $0x7c0] sm:$0xff]
    %v296 = vld [vmem:[%s1 + $0x7c8] sm:$0xff]
    %v297 = vld [vmem:[%s1 + $0x7d0] sm:$0xff]
    %v298 = vld [vmem:[%s1 + $0x7d8] sm:$0xff]
    %v299 = vld [vmem:[%s1 + $0x7e0] sm:$0xff]
    %v300 = vld [vmem:[%s1 + $0x7e8] sm:$0xff]
    %v301 = vld [vmem:[%s1 + $0x7f0] sm:$0xff]
    %v302 = vld [vmem:[%s1 + $0x7f8] sm:$0xff]
    %v303 = vsub.f32 %v47, %v15
    %v304 = vsub.f32 %v48, %v16
    %v305 = vsub.f32 %v49, %v17
    %v306 = vsub.f32 %v50, %v18
    %v307 = vsub.f32 %v51, %v19
    %v308 = vsub.f32 %v52, %v20
    %v309 = vsub.f32 %v53, %v21
    %v310 = vsub.f32 %v54, %v22
    %v311 = vsub.f32 %v55, %v23
    %v312 = vsub.f32 %v56, %v24
    %v313 = vsub.f32 %v57, %v25
    %v314 = vsub.f32 %v58, %v26
    %v315 = vsub.f32 %v59, %v27
    %v316 = vsub.f32 %v60, %v28
    %v317 = vsub.f32 %v61, %v29
    %v318 = vsub.f32 %v62, %v30
    %v319 = vsub.f32 %v63, %v31
    %v320 = vsub.f32 %v64, %v32
    %v321 = vsub.f32 %v65, %v33
    %v322 = vsub.f32 %v66, %v34
    %v323 = vsub.f32 %v67, %v35
    %v324 = vsub.f32 %v68, %v36
    %v325 = vsub.f32 %v69, %v37
    %v326 = vsub.f32 %v70, %v38
    %v327 = vsub.f32 %v71, %v39
    %v328 = vsub.f32 %v72, %v40
    %v329 = vsub.f32 %v73, %v41
    %v330 = vsub.f32 %v74, %v42
    %v331 = vsub.f32 %v75, %v43
    %v332 = vsub.f32 %v76, %v44
    %v333 = vsub.f32 %v77, %v45
    %v334 = vsub.f32 %v78, %v46
    %v335 = vsub.f32 %v79, %v15
    %v336 = vsub.f32 %v80, %v16
    %v337 = vsub.f32 %v81, %v17
    %v338 = vsub.f32 %v82, %v18
    %v339 = vsub.f32 %v83, %v19
    %v340 = vsub.f32 %v84, %v20
    %v341 = vsub.f32 %v85, %v21
    %v342 = vsub.f32 %v86, %v22
    %v343 = vsub.f32 %v87, %v23
    %v344 = vsub.f32 %v88, %v24
    %v345 = vsub.f32 %v89, %v25
    %v346 = vsub.f32 %v90, %v26
    %v347 = vsub.f32 %v91, %v27
    %v348 = vsub.f32 %v92, %v28
    %v349 = vsub.f32 %v93, %v29
    %v350 = vsub.f32 %v94, %v30
    %v351 = vsub.f32 %v95, %v31
    %v352 = vsub.f32 %v96, %v32
    %v353 = vsub.f32 %v97, %v33
    %v354 = vsub.f32 %v98, %v34
    %v355 = vsub.f32 %v99, %v35
    %v356 = vsub.f32 %v100, %v36
    %v357 = vsub.f32 %v101, %v37
    %v358 = vsub.f32 %v102, %v38
    %v359 = vsub.f32 %v103, %v39
    %v360 = vsub.f32 %v104, %v40
    %v361 = vsub.f32 %v105, %v41
    %v362 = vsub.f32 %v106, %v42
    %v363 = vsub.f32 %v107, %v43
    %v364 = vsub.f32 %v108, %v44
    %v365 = vsub.f32 %v109, %v45
    %v366 = vsub.f32 %v110, %v46
    %v367 = vsub.f32 %v111, %v15
    %v368 = vsub.f32 %v112, %v16
    %v369 = vsub.f32 %v113, %v17
    %v370 = vsub.f32 %v114, %v18
    %v371 = vsub.f32 %v115, %v19
    %v372 = vsub.f32 %v116, %v20
    %v373 = vsub.f32 %v117, %v21
    %v374 = vsub.f32 %v118, %v22
    %v375 = vsub.f32 %v119, %v23
    %v376 = vsub.f32 %v120, %v24
    %v377 = vsub.f32 %v121, %v25
    %v378 = vsub.f32 %v122, %v26
    %v379 = vsub.f32 %v123, %v27
    %v380 = vsub.f32 %v124, %v28
    %v381 = vsub.f32 %v125, %v29
    %v382 = vsub.f32 %v126, %v30
    %v383 = vsub.f32 %v127, %v31
    %v384 = vsub.f32 %v128, %v32
    %v385 = vsub.f32 %v129, %v33
    %v386 = vsub.f32 %v130, %v34
    %v387 = vsub.f32 %v131, %v35
    %v388 = vsub.f32 %v132, %v36
    %v389 = vsub.f32 %v133, %v37
    %v390 = vsub.f32 %v134, %v38
    %v391 = vsub.f32 %v135, %v39
    %v392 = vsub.f32 %v136, %v40
    %v393 = vsub.f32 %v137, %v41
    %v394 = vsub.f32 %v138, %v42
    %v395 = vsub.f32 %v139, %v43
    %v396 = vsub.f32 %v140, %v44
    %v397 = vsub.f32 %v141, %v45
    %v398 = vsub.f32 %v142, %v46
    %v399 = vsub.f32 %v143, %v15
    %v400 = vsub.f32 %v144, %v16
    %v401 = vsub.f32 %v145, %v17
    %v402 = vsub.f32 %v146, %v18
    %v403 = vsub.f32 %v147, %v19
    %v404 = vsub.f32 %v148, %v20
    %v405 = vsub.f32 %v149, %v21
    %v406 = vsub.f32 %v150, %v22
    %v407 = vsub.f32 %v151, %v23
    %v408 = vsub.f32 %v152, %v24
    %v409 = vsub.f32 %v153, %v25
    %v410 = vsub.f32 %v154, %v26
    %v411 = vsub.f32 %v155, %v27
    %v412 = vsub.f32 %v156, %v28
    %v413 = vsub.f32 %v157, %v29
    %v414 = vsub.f32 %v158, %v30
    %v415 = vsub.f32 %v159, %v31
    %v416 = vsub.f32 %v160, %v32
    %v417 = vsub.f32 %v161, %v33
    %v418 = vsub.f32 %v162, %v34
    %v419 = vsub.f32 %v163, %v35
    %v420 = vsub.f32 %v164, %v36
    %v421 = vsub.f32 %v165, %v37
    %v422 = vsub.f32 %v166, %v38
    %v423 = vsub.f32 %v167, %v39
    %v424 = vsub.f32 %v168, %v40
    %v425 = vsub.f32 %v169, %v41
    %v426 = vsub.f32 %v170, %v42
    %v427 = vsub.f32 %v171, %v43
    %v428 = vsub.f32 %v172, %v44
    %v429 = vsub.f32 %v173, %v45
    %v430 = vsub.f32 %v174, %v46
    %v431 = vsub.f32 %v175, %v15
    %v432 = vsub.f32 %v176, %v16
    %v433 = vsub.f32 %v177, %v17
    %v434 = vsub.f32 %v178, %v18
    %v435 = vsub.f32 %v179, %v19
    %v436 = vsub.f32 %v180, %v20
    %v437 = vsub.f32 %v181, %v21
    %v438 = vsub.f32 %v182, %v22
    %v439 = vsub.f32 %v183, %v23
    %v440 = vsub.f32 %v184, %v24
    %v441 = vsub.f32 %v185, %v25
    %v442 = vsub.f32 %v186, %v26
    %v443 = vsub.f32 %v187, %v27
    %v444 = vsub.f32 %v188, %v28
    %v445 = vsub.f32 %v189, %v29
    %v446 = vsub.f32 %v190, %v30
    %v447 = vsub.f32 %v191, %v31
    %v448 = vsub.f32 %v192, %v32
    %v449 = vsub.f32 %v193, %v33
    %v450 = vsub.f32 %v194, %v34
    %v451 = vsub.f32 %v195, %v35
    %v452 = vsub.f32 %v196, %v36
    %v453 = vsub.f32 %v197, %v37
    %v454 = vsub.f32 %v198, %v38
    %v455 = vsub.f32 %v199, %v39
    %v456 = vsub.f32 %v200, %v40
    %v457 = vsub.f32 %v201, %v41
    %v458 = vsub.f32 %v202, %v42
    %v459 = vsub.f32 %v203, %v43
    %v460 = vsub.f32 %v204, %v44
    %v461 = vsub.f32 %v205, %v45
    %v462 = vsub.f32 %v206, %v46
    %v463 = vsub.f32 %v207, %v15
    %v464 = vsub.f32 %v208, %v16
    %v465 = vsub.f32 %v209, %v17
    %v466 = vsub.f32 %v210, %v18
    %v467 = vsub.f32 %v211, %v19
    %v468 = vsub.f32 %v212, %v20
    %v469 = vsub.f32 %v213, %v21
    %v470 = vsub.f32 %v214, %v22
    %v471 = vsub.f32 %v215, %v23
    %v472 = vsub.f32 %v216, %v24
    %v473 = vsub.f32 %v217, %v25
    %v474 = vsub.f32 %v218, %v26
    %v475 = vsub.f32 %v219, %v27
    %v476 = vsub.f32 %v220, %v28
    %v477 = vsub.f32 %v221, %v29
    %v478 = vsub.f32 %v222, %v30
    %v479 = vsub.f32 %v223, %v31
    %v480 = vsub.f32 %v224, %v32
    %v481 = vsub.f32 %v225, %v33
    %v482 = vsub.f32 %v226, %v34
    %v483 = vsub.f32 %v227, %v35
    %v484 = vsub.f32 %v228, %v36
    %v485 = vsub.f32 %v229, %v37
    %v486 = vsub.f32 %v230, %v38
    %v487 = vsub.f32 %v231, %v39
    %v488 = vsub.f32 %v232, %v40
    %v489 = vsub.f32 %v233, %v41
    %v490 = vsub.f32 %v234, %v42
    %v491 = vsub.f32 %v235, %v43
    %v492 = vsub.f32 %v236, %v44
    %v493 = vsub.f32 %v237, %v45
    %v494 = vsub.f32 %v238, %v46
    %v495 = vsub.f32 %v239, %v15
    %v496 = vsub.f32 %v240, %v16
    %v497 = vsub.f32 %v241, %v17
    %v498 = vsub.f32 %v242, %v18
    %v499 = vsub.f32 %v243, %v19
    %v500 = vsub.f32 %v244, %v20
    %v501 = vsub.f32 %v245, %v21
    %v502 = vsub.f32 %v246, %v22
    %v503 = vsub.f32 %v247, %v23
    %v504 = vsub.f32 %v248, %v24
    %v505 = vsub.f32 %v249, %v25
    %v506 = vsub.f32 %v250, %v26
    %v507 = vsub.f32 %v251, %v27
    %v508 = vsub.f32 %v252, %v28
    %v509 = vsub.f32 %v253, %v29
    %v510 = vsub.f32 %v254, %v30
    %v511 = vsub.f32 %v255, %v31
    %v512 = vsub.f32 %v256, %v32
    %v513 = vsub.f32 %v257, %v33
    %v514 = vsub.f32 %v258, %v34
    %v515 = vsub.f32 %v259, %v35
    %v516 = vsub.f32 %v260, %v36
    %v517 = vsub.f32 %v261, %v37
    %v518 = vsub.f32 %v262, %v38
    %v519 = vsub.f32 %v263, %v39
    %v520 = vsub.f32 %v264, %v40
    %v521 = vsub.f32 %v265, %v41
    %v522 = vsub.f32 %v266, %v42
    %v523 = vsub.f32 %v267, %v43
    %v524 = vsub.f32 %v268, %v44
    %v525 = vsub.f32 %v269, %v45
    %v526 = vsub.f32 %v270, %v46
    %v527 = vsub.f32 %v271, %v15
    %v528 = vsub.f32 %v272, %v16
    %v529 = vsub.f32 %v273, %v17
    %v530 = vsub.f32 %v274, %v18
    %v531 = vsub.f32 %v275, %v19
    %v532 = vsub.f32 %v276, %v20
    %v533 = vsub.f32 %v277, %v21
    %v534 = vsub.f32 %v278, %v22
    %v535 = vsub.f32 %v279, %v23
    %v536 = vsub.f32 %v280, %v24
    %v537 = vsub.f32 %v281, %v25
    %v538 = vsub.f32 %v282, %v26
    %v539 = vsub.f32 %v283, %v27
    %v540 = vsub.f32 %v284, %v28
    %v541 = vsub.f32 %v285, %v29
    %v542 = vsub.f32 %v286, %v30
    %v543 = vsub.f32 %v287, %v31
    %v544 = vsub.f32 %v288, %v32
    %v545 = vsub.f32 %v289, %v33
    %v546 = vsub.f32 %v290, %v34
    %v547 = vsub.f32 %v291, %v35
    %v548 = vsub.f32 %v292, %v36
    %v549 = vsub.f32 %v293, %v37
    %v550 = vsub.f32 %v294, %v38
    %v551 = vsub.f32 %v295, %v39
    %v552 = vsub.f32 %v296, %v40
    %v553 = vsub.f32 %v297, %v41
    %v554 = vsub.f32 %v298, %v42
    %v555 = vsub.f32 %v299, %v43
    %v556 = vsub.f32 %v300, %v44
    %v557 = vsub.f32 %v301, %v45
    %v558 = vsub.f32 %v302, %v46
    %v559 = vmul.f32 %v303, %v303
    %v560 = vmul.f32 %v304, %v304
    %v561 = vmul.f32 %v305, %v305
    %v562 = vmul.f32 %v306, %v306
    %v563 = vmul.f32 %v307, %v307
    %v564 = vmul.f32 %v308, %v308
    %v565 = vmul.f32 %v309, %v309
    %v566 = vmul.f32 %v310, %v310
    %v567 = vmul.f32 %v311, %v311
    %v568 = vmul.f32 %v312, %v312
    %v569 = vmul.f32 %v313, %v313
    %v570 = vmul.f32 %v314, %v314
    %v571 = vmul.f32 %v315, %v315
    %v572 = vmul.f32 %v316, %v316
    %v573 = vmul.f32 %v317, %v317
    %v574 = vmul.f32 %v318, %v318
    %v575 = vmul.f32 %v319, %v319
    %v576 = vmul.f32 %v320, %v320
    %v577 = vmul.f32 %v321, %v321
    %v578 = vmul.f32 %v322, %v322
    %v579 = vmul.f32 %v323, %v323
    %v580 = vmul.f32 %v324, %v324
    %v581 = vmul.f32 %v325, %v325
    %v582 = vmul.f32 %v326, %v326
    %v583 = vmul.f32 %v327, %v327
    %v584 = vmul.f32 %v328, %v328
    %v585 = vmul.f32 %v329, %v329
    %v586 = vmul.f32 %v330, %v330
    %v587 = vmul.f32 %v331, %v331
    %v588 = vmul.f32 %v332, %v332
    %v589 = vmul.f32 %v333, %v333
    %v590 = vmul.f32 %v334, %v334
    %v591 = vmul.f32 %v335, %v335
    %v592 = vmul.f32 %v336, %v336
    %v593 = vmul.f32 %v337, %v337
    %v594 = vmul.f32 %v338, %v338
    %v595 = vmul.f32 %v339, %v339
    %v596 = vmul.f32 %v340, %v340
    %v597 = vmul.f32 %v341, %v341
    %v598 = vmul.f32 %v342, %v342
    %v599 = vmul.f32 %v343, %v343
    %v600 = vmul.f32 %v344, %v344
    %v601 = vmul.f32 %v345, %v345
    %v602 = vmul.f32 %v346, %v346
    %v603 = vmul.f32 %v347, %v347
    %v604 = vmul.f32 %v348, %v348
    %v605 = vmul.f32 %v349, %v349
    %v606 = vmul.f32 %v350, %v350
    %v607 = vmul.f32 %v351, %v351
    %v608 = vmul.f32 %v352, %v352
    %v609 = vmul.f32 %v353, %v353
    %v610 = vmul.f32 %v354, %v354
    %v611 = vmul.f32 %v355, %v355
    %v612 = vmul.f32 %v356, %v356
    %v613 = vmul.f32 %v357, %v357
    %v614 = vmul.f32 %v358, %v358
    %v615 = vmul.f32 %v359, %v359
    %v616 = vmul.f32 %v360, %v360
    %v617 = vmul.f32 %v361, %v361
    %v618 = vmul.f32 %v362, %v362
    %v619 = vmul.f32 %v363, %v363
    %v620 = vmul.f32 %v364, %v364
    %v621 = vmul.f32 %v365, %v365
    %v622 = vmul.f32 %v366, %v366
    %v623 = vmul.f32 %v367, %v367
    %v624 = vmul.f32 %v368, %v368
    %v625 = vmul.f32 %v369, %v369
    %v626 = vmul.f32 %v370, %v370
    %v627 = vmul.f32 %v371, %v371
    %v628 = vmul.f32 %v372, %v372
    %v629 = vmul.f32 %v373, %v373
    %v630 = vmul.f32 %v374, %v374
    %v631 = vmul.f32 %v375, %v375
    %v632 = vmul.f32 %v376, %v376
    %v633 = vmul.f32 %v377, %v377
    %v634 = vmul.f32 %v378, %v378
    %v635 = vmul.f32 %v379, %v379
    %v636 = vmul.f32 %v380, %v380
    %v637 = vmul.f32 %v381, %v381
    %v638 = vmul.f32 %v382, %v382
    %v639 = vmul.f32 %v383, %v383
    %v640 = vmul.f32 %v384, %v384
    %v641 = vmul.f32 %v385, %v385
    %v642 = vmul.f32 %v386, %v386
    %v643 = vmul.f32 %v387, %v387
    %v644 = vmul.f32 %v388, %v388
    %v645 = vmul.f32 %v389, %v389
    %v646 = vmul.f32 %v390, %v390
    %v647 = vmul.f32 %v391, %v391
    %v648 = vmul.f32 %v392, %v392
    %v649 = vmul.f32 %v393, %v393
    %v650 = vmul.f32 %v394, %v394
    %v651 = vmul.f32 %v395, %v395
    %v652 = vmul.f32 %v396, %v396
    %v653 = vmul.f32 %v397, %v397
    %v654 = vmul.f32 %v398, %v398
    %v655 = vmul.f32 %v399, %v399
    %v656 = vmul.f32 %v400, %v400
    %v657 = vmul.f32 %v401, %v401
    %v658 = vmul.f32 %v402, %v402
    %v659 = vmul.f32 %v403, %v403
    %v660 = vmul.f32 %v404, %v404
    %v661 = vmul.f32 %v405, %v405
    %v662 = vmul.f32 %v406, %v406
    %v663 = vmul.f32 %v407, %v407
    %v664 = vmul.f32 %v408, %v408
    %v665 = vmul.f32 %v409, %v409
    %v666 = vmul.f32 %v410, %v410
    %v667 = vmul.f32 %v411, %v411
    %v668 = vmul.f32 %v412, %v412
    %v669 = vmul.f32 %v413, %v413
    %v670 = vmul.f32 %v414, %v414
    %v671 = vmul.f32 %v415, %v415
    %v672 = vmul.f32 %v416, %v416
    %v673 = vmul.f32 %v417, %v417
    %v674 = vmul.f32 %v418, %v418
    %v675 = vmul.f32 %v419, %v419
    %v676 = vmul.f32 %v420, %v420
    %v677 = vmul.f32 %v421, %v421
    %v678 = vmul.f32 %v422, %v422
    %v679 = vmul.f32 %v423, %v423
    %v680 = vmul.f32 %v424, %v424
    %v681 = vmul.f32 %v425, %v425
    %v682 = vmul.f32 %v426, %v426
    %v683 = vmul.f32 %v427, %v427
    %v684 = vmul.f32 %v428, %v428
    %v685 = vmul.f32 %v429, %v429
    %v686 = vmul.f32 %v430, %v430
    %v687 = vmul.f32 %v431, %v431
    %v688 = vmul.f32 %v432, %v432
    %v689 = vmul.f32 %v433, %v433
    %v690 = vmul.f32 %v434, %v434
    %v691 = vmul.f32 %v435, %v435
    %v692 = vmul.f32 %v436, %v436
    %v693 = vmul.f32 %v437, %v437
    %v694 = vmul.f32 %v438, %v438
    %v695 = vmul.f32 %v439, %v439
    %v696 = vmul.f32 %v440, %v440
    %v697 = vmul.f32 %v441, %v441
    %v698 = vmul.f32 %v442, %v442
    %v699 = vmul.f32 %v443, %v443
    %v700 = vmul.f32 %v444, %v444
    %v701 = vmul.f32 %v445, %v445
    %v702 = vmul.f32 %v446, %v446
    %v703 = vmul.f32 %v447, %v447
    %v704 = vmul.f32 %v448, %v448
    %v705 = vmul.f32 %v449, %v449
    %v706 = vmul.f32 %v450, %v450
    %v707 = vmul.f32 %v451, %v451
    %v708 = vmul.f32 %v452, %v452
    %v709 = vmul.f32 %v453, %v453
    %v710 = vmul.f32 %v454, %v454
    %v711 = vmul.f32 %v455, %v455
    %v712 = vmul.f32 %v456, %v456
    %v713 = vmul.f32 %v457, %v457
    %v714 = vmul.f32 %v458, %v458
    %v715 = vmul.f32 %v459, %v459
    %v716 = vmul.f32 %v460, %v460
    %v717 = vmul.f32 %v461, %v461
    %v718 = vmul.f32 %v462, %v462
    %v719 = vmul.f32 %v463, %v463
    %v720 = vmul.f32 %v464, %v464
    %v721 = vmul.f32 %v465, %v465
    %v722 = vmul.f32 %v466, %v466
    %v723 = vmul.f32 %v467, %v467
    %v724 = vmul.f32 %v468, %v468
    %v725 = vmul.f32 %v469, %v469
    %v726 = vmul.f32 %v470, %v470
    %v727 = vmul.f32 %v471, %v471
    %v728 = vmul.f32 %v472, %v472
    %v729 = vmul.f32 %v473, %v473
    %v730 = vmul.f32 %v474, %v474
    %v731 = vmul.f32 %v475, %v475
    %v732 = vmul.f32 %v476, %v476
    %v733 = vmul.f32 %v477, %v477
    %v734 = vmul.f32 %v478, %v478
    %v735 = vmul.f32 %v479, %v479
    %v736 = vmul.f32 %v480, %v480
    %v737 = vmul.f32 %v481, %v481
    %v738 = vmul.f32 %v482, %v482
    %v739 = vmul.f32 %v483, %v483
    %v740 = vmul.f32 %v484, %v484
    %v741 = vmul.f32 %v485, %v485
    %v742 = vmul.f32 %v486, %v486
    %v743 = vmul.f32 %v487, %v487
    %v744 = vmul.f32 %v488, %v488
    %v745 = vmul.f32 %v489, %v489
    %v746 = vmul.f32 %v490, %v490
    %v747 = vmul.f32 %v491, %v491
    %v748 = vmul.f32 %v492, %v492
    %v749 = vmul.f32 %v493, %v493
    %v750 = vmul.f32 %v494, %v494
    %v751 = vmul.f32 %v495, %v495
    %v752 = vmul.f32 %v496, %v496
    %v753 = vmul.f32 %v497, %v497
    %v754 = vmul.f32 %v498, %v498
    %v755 = vmul.f32 %v499, %v499
    %v756 = vmul.f32 %v500, %v500
    %v757 = vmul.f32 %v501, %v501
    %v758 = vmul.f32 %v502, %v502
    %v759 = vmul.f32 %v503, %v503
    %v760 = vmul.f32 %v504, %v504
    %v761 = vmul.f32 %v505, %v505
    %v762 = vmul.f32 %v506, %v506
    %v763 = vmul.f32 %v507, %v507
    %v764 = vmul.f32 %v508, %v508
    %v765 = vmul.f32 %v509, %v509
    %v766 = vmul.f32 %v510, %v510
    %v767 = vmul.f32 %v511, %v511
    %v768 = vmul.f32 %v512, %v512
    %v769 = vmul.f32 %v513, %v513
    %v770 = vmul.f32 %v514, %v514
    %v771 = vmul.f32 %v515, %v515
    %v772 = vmul.f32 %v516, %v516
    %v773 = vmul.f32 %v517, %v517
    %v774 = vmul.f32 %v518, %v518
    %v775 = vmul.f32 %v519, %v519
    %v776 = vmul.f32 %v520, %v520
    %v777 = vmul.f32 %v521, %v521
    %v778 = vmul.f32 %v522, %v522
    %v779 = vmul.f32 %v523, %v523
    %v780 = vmul.f32 %v524, %v524
    %v781 = vmul.f32 %v525, %v525
    %v782 = vmul.f32 %v526, %v526
    %v783 = vmul.f32 %v527, %v527
    %v784 = vmul.f32 %v528, %v528
    %v785 = vmul.f32 %v529, %v529
    %v786 = vmul.f32 %v530, %v530
    %v787 = vmul.f32 %v531, %v531
    %v788 = vmul.f32 %v532, %v532
    %v789 = vmul.f32 %v533, %v533
    %v790 = vmul.f32 %v534, %v534
    %v791 = vmul.f32 %v535, %v535
    %v792 = vmul.f32 %v536, %v536
    %v793 = vmul.f32 %v537, %v537
    %v794 = vmul.f32 %v538, %v538
    %v795 = vmul.f32 %v539, %v539
    %v796 = vmul.f32 %v540, %v540
    %v797 = vmul.f32 %v541, %v541
    %v798 = vmul.f32 %v542, %v542
    %v799 = vmul.f32 %v543, %v543
    %v800 = vmul.f32 %v544, %v544
    %v801 = vmul.f32 %v545, %v545
    %v802 = vmul.f32 %v546, %v546
    %v803 = vmul.f32 %v547, %v547
    %v804 = vmul.f32 %v548, %v548
    %v805 = vmul.f32 %v549, %v549
    %v806 = vmul.f32 %v550, %v550
    %v807 = vmul.f32 %v551, %v551
    %v808 = vmul.f32 %v552, %v552
    %v809 = vmul.f32 %v553, %v553
    %v810 = vmul.f32 %v554, %v554
    %v811 = vmul.f32 %v555, %v555
    %v812 = vmul.f32 %v556, %v556
    %v813 = vmul.f32 %v557, %v557
    %v814 = vmul.f32 %v558, %v558
    %vm815 = vcmask 261120
    %v816 = vsel %vm815, %v559, 0.0
    %817 = vadd.xlane.f32.xlu0 %v816
    %v818 = vpop.xlane.xlu0 %817
    %v819 = vsel %vm815, %v560, 0.0
    %820 = vadd.xlane.f32.xlu0 %v819
    %v821 = vpop.xlane.xlu0 %820
    %v822 = vsel %vm815, %v561, 0.0
    %823 = vadd.xlane.f32.xlu0 %v822
    %v824 = vpop.xlane.xlu0 %823
    %v825 = vsel %vm815, %v562, 0.0
    %826 = vadd.xlane.f32.xlu0 %v825
    %v827 = vpop.xlane.xlu0 %826
    %v828 = vsel %vm815, %v563, 0.0
    %829 = vadd.xlane.f32.xlu0 %v828
    %v830 = vpop.xlane.xlu0 %829
    %v831 = vsel %vm815, %v564, 0.0
    %832 = vadd.xlane.f32.xlu0 %v831
    %v833 = vpop.xlane.xlu0 %832
    %v834 = vsel %vm815, %v565, 0.0
    %835 = vadd.xlane.f32.xlu0 %v834
    %v836 = vpop.xlane.xlu0 %835
    %v837 = vsel %vm815, %v566, 0.0
    %838 = vadd.xlane.f32.xlu0 %v837
    %v839 = vpop.xlane.xlu0 %838
    %v840 = vsel %vm815, %v567, 0.0
    %841 = vadd.xlane.f32.xlu0 %v840
    %v842 = vpop.xlane.xlu0 %841
    %v843 = vsel %vm815, %v568, 0.0
    %844 = vadd.xlane.f32.xlu0 %v843
    %v845 = vpop.xlane.xlu0 %844
    %v846 = vsel %vm815, %v569, 0.0
    %847 = vadd.xlane.f32.xlu0 %v846
    %v848 = vpop.xlane.xlu0 %847
    %v849 = vsel %vm815, %v570, 0.0
    %850 = vadd.xlane.f32.xlu0 %v849
    %v851 = vpop.xlane.xlu0 %850
    %v852 = vsel %vm815, %v571, 0.0
    %853 = vadd.xlane.f32.xlu0 %v852
    %v854 = vpop.xlane.xlu0 %853
    %v855 = vsel %vm815, %v572, 0.0
    %856 = vadd.xlane.f32.xlu0 %v855
    %v857 = vpop.xlane.xlu0 %856
    %v858 = vsel %vm815, %v573, 0.0
    %859 = vadd.xlane.f32.xlu0 %v858
    %v860 = vpop.xlane.xlu0 %859
    %v861 = vsel %vm815, %v574, 0.0
    %862 = vadd.xlane.f32.xlu0 %v861
    %v863 = vpop.xlane.xlu0 %862
    %v864 = vsel %vm815, %v575, 0.0
    %865 = vadd.xlane.f32.xlu0 %v864
    %v866 = vpop.xlane.xlu0 %865
    %v867 = vsel %vm815, %v576, 0.0
    %868 = vadd.xlane.f32.xlu0 %v867
    %v869 = vpop.xlane.xlu0 %868
    %v870 = vsel %vm815, %v577, 0.0
    %871 = vadd.xlane.f32.xlu0 %v870
    %v872 = vpop.xlane.xlu0 %871
    %v873 = vsel %vm815, %v578, 0.0
    %874 = vadd.xlane.f32.xlu0 %v873
    %v875 = vpop.xlane.xlu0 %874
    %v876 = vsel %vm815, %v579, 0.0
    %877 = vadd.xlane.f32.xlu0 %v876
    %v878 = vpop.xlane.xlu0 %877
    %v879 = vsel %vm815, %v580, 0.0
    %880 = vadd.xlane.f32.xlu0 %v879
    %v881 = vpop.xlane.xlu0 %880
    %v882 = vsel %vm815, %v581, 0.0
    %883 = vadd.xlane.f32.xlu0 %v882
    %v884 = vpop.xlane.xlu0 %883
    %v885 = vsel %vm815, %v582, 0.0
    %886 = vadd.xlane.f32.xlu0 %v885
    %v887 = vpop.xlane.xlu0 %886
    %v888 = vsel %vm815, %v583, 0.0
    %889 = vadd.xlane.f32.xlu0 %v888
    %v890 = vpop.xlane.xlu0 %889
    %v891 = vsel %vm815, %v584, 0.0
    %892 = vadd.xlane.f32.xlu0 %v891
    %v893 = vpop.xlane.xlu0 %892
    %v894 = vsel %vm815, %v585, 0.0
    %895 = vadd.xlane.f32.xlu0 %v894
    %v896 = vpop.xlane.xlu0 %895
    %v897 = vsel %vm815, %v586, 0.0
    %898 = vadd.xlane.f32.xlu0 %v897
    %v899 = vpop.xlane.xlu0 %898
    %v900 = vsel %vm815, %v587, 0.0
    %901 = vadd.xlane.f32.xlu0 %v900
    %v902 = vpop.xlane.xlu0 %901
    %v903 = vsel %vm815, %v588, 0.0
    %904 = vadd.xlane.f32.xlu0 %v903
    %v905 = vpop.xlane.xlu0 %904
    %v906 = vsel %vm815, %v589, 0.0
    %907 = vadd.xlane.f32.xlu0 %v906
    %v908 = vpop.xlane.xlu0 %907
    %v909 = vsel %vm815, %v590, 0.0
    %910 = vadd.xlane.f32.xlu0 %v909
    %v911 = vpop.xlane.xlu0 %910
    %v912 = vsel %vm815, %v591, 0.0
    %913 = vadd.xlane.f32.xlu0 %v912
    %v914 = vpop.xlane.xlu0 %913
    %v915 = vsel %vm815, %v592, 0.0
    %916 = vadd.xlane.f32.xlu0 %v915
    %v917 = vpop.xlane.xlu0 %916
    %v918 = vsel %vm815, %v593, 0.0
    %919 = vadd.xlane.f32.xlu0 %v918
    %v920 = vpop.xlane.xlu0 %919
    %v921 = vsel %vm815, %v594, 0.0
    %922 = vadd.xlane.f32.xlu0 %v921
    %v923 = vpop.xlane.xlu0 %922
    %v924 = vsel %vm815, %v595, 0.0
    %925 = vadd.xlane.f32.xlu0 %v924
    %v926 = vpop.xlane.xlu0 %925
    %v927 = vsel %vm815, %v596, 0.0
    %928 = vadd.xlane.f32.xlu0 %v927
    %v929 = vpop.xlane.xlu0 %928
    %v930 = vsel %vm815, %v597, 0.0
    %931 = vadd.xlane.f32.xlu0 %v930
    %v932 = vpop.xlane.xlu0 %931
    %v933 = vsel %vm815, %v598, 0.0
    %934 = vadd.xlane.f32.xlu0 %v933
    %v935 = vpop.xlane.xlu0 %934
    %v936 = vsel %vm815, %v599, 0.0
    %937 = vadd.xlane.f32.xlu0 %v936
    %v938 = vpop.xlane.xlu0 %937
    %v939 = vsel %vm815, %v600, 0.0
    %940 = vadd.xlane.f32.xlu0 %v939
    %v941 = vpop.xlane.xlu0 %940
    %v942 = vsel %vm815, %v601, 0.0
    %943 = vadd.xlane.f32.xlu0 %v942
    %v944 = vpop.xlane.xlu0 %943
    %v945 = vsel %vm815, %v602, 0.0
    %946 = vadd.xlane.f32.xlu0 %v945
    %v947 = vpop.xlane.xlu0 %946
    %v948 = vsel %vm815, %v603, 0.0
    %949 = vadd.xlane.f32.xlu0 %v948
    %v950 = vpop.xlane.xlu0 %949
    %v951 = vsel %vm815, %v604, 0.0
    %952 = vadd.xlane.f32.xlu0 %v951
    %v953 = vpop.xlane.xlu0 %952
    %v954 = vsel %vm815, %v605, 0.0
    %955 = vadd.xlane.f32.xlu0 %v954
    %v956 = vpop.xlane.xlu0 %955
    %v957 = vsel %vm815, %v606, 0.0
    %958 = vadd.xlane.f32.xlu0 %v957
    %v959 = vpop.xlane.xlu0 %958
    %v960 = vsel %vm815, %v607, 0.0
    %961 = vadd.xlane.f32.xlu0 %v960
    %v962 = vpop.xlane.xlu0 %961
    %v963 = vsel %vm815, %v608, 0.0
    %964 = vadd.xlane.f32.xlu0 %v963
    %v965 = vpop.xlane.xlu0 %964
    %v966 = vsel %vm815, %v609, 0.0
    %967 = vadd.xlane.f32.xlu0 %v966
    %v968 = vpop.xlane.xlu0 %967
    %v969 = vsel %vm815, %v610, 0.0
    %970 = vadd.xlane.f32.xlu0 %v969
    %v971 = vpop.xlane.xlu0 %970
    %v972 = vsel %vm815, %v611, 0.0
    %973 = vadd.xlane.f32.xlu0 %v972
    %v974 = vpop.xlane.xlu0 %973
    %v975 = vsel %vm815, %v612, 0.0
    %976 = vadd.xlane.f32.xlu0 %v975
    %v977 = vpop.xlane.xlu0 %976
    %v978 = vsel %vm815, %v613, 0.0
    %979 = vadd.xlane.f32.xlu0 %v978
    %v980 = vpop.xlane.xlu0 %979
    %v981 = vsel %vm815, %v614, 0.0
    %982 = vadd.xlane.f32.xlu0 %v981
    %v983 = vpop.xlane.xlu0 %982
    %v984 = vsel %vm815, %v615, 0.0
    %985 = vadd.xlane.f32.xlu0 %v984
    %v986 = vpop.xlane.xlu0 %985
    %v987 = vsel %vm815, %v616, 0.0
    %988 = vadd.xlane.f32.xlu0 %v987
    %v989 = vpop.xlane.xlu0 %988
    %v990 = vsel %vm815, %v617, 0.0
    %991 = vadd.xlane.f32.xlu0 %v990
    %v992 = vpop.xlane.xlu0 %991
    %v993 = vsel %vm815, %v618, 0.0
    %994 = vadd.xlane.f32.xlu0 %v993
    %v995 = vpop.xlane.xlu0 %994
    %v996 = vsel %vm815, %v619, 0.0
    %997 = vadd.xlane.f32.xlu0 %v996
    %v998 = vpop.xlane.xlu0 %997
    %v999 = vsel %vm815, %v620, 0.0
    %1000 = vadd.xlane.f32.xlu0 %v999
    %v1001 = vpop.xlane.xlu0 %1000
    %v1002 = vsel %vm815, %v621, 0.0
    %1003 = vadd.xlane.f32.xlu0 %v1002
    %v1004 = vpop.xlane.xlu0 %1003
    %v1005 = vsel %vm815, %v622, 0.0
    %1006 = vadd.xlane.f32.xlu0 %v1005
    %v1007 = vpop.xlane.xlu0 %1006
    %v1008 = vsel %vm815, %v623, 0.0
    %1009 = vadd.xlane.f32.xlu0 %v1008
    %v1010 = vpop.xlane.xlu0 %1009
    %v1011 = vsel %vm815, %v624, 0.0
    %1012 = vadd.xlane.f32.xlu0 %v1011
    %v1013 = vpop.xlane.xlu0 %1012
    %v1014 = vsel %vm815, %v625, 0.0
    %1015 = vadd.xlane.f32.xlu0 %v1014
    %v1016 = vpop.xlane.xlu0 %1015
    %v1017 = vsel %vm815, %v626, 0.0
    %1018 = vadd.xlane.f32.xlu0 %v1017
    %v1019 = vpop.xlane.xlu0 %1018
    %v1020 = vsel %vm815, %v627, 0.0
    %1021 = vadd.xlane.f32.xlu0 %v1020
    %v1022 = vpop.xlane.xlu0 %1021
    %v1023 = vsel %vm815, %v628, 0.0
    %1024 = vadd.xlane.f32.xlu0 %v1023
    %v1025 = vpop.xlane.xlu0 %1024
    %v1026 = vsel %vm815, %v629, 0.0
    %1027 = vadd.xlane.f32.xlu0 %v1026
    %v1028 = vpop.xlane.xlu0 %1027
    %v1029 = vsel %vm815, %v630, 0.0
    %1030 = vadd.xlane.f32.xlu0 %v1029
    %v1031 = vpop.xlane.xlu0 %1030
    %v1032 = vsel %vm815, %v631, 0.0
    %1033 = vadd.xlane.f32.xlu0 %v1032
    %v1034 = vpop.xlane.xlu0 %1033
    %v1035 = vsel %vm815, %v632, 0.0
    %1036 = vadd.xlane.f32.xlu0 %v1035
    %v1037 = vpop.xlane.xlu0 %1036
    %v1038 = vsel %vm815, %v633, 0.0
    %1039 = vadd.xlane.f32.xlu0 %v1038
    %v1040 = vpop.xlane.xlu0 %1039
    %v1041 = vsel %vm815, %v634, 0.0
    %1042 = vadd.xlane.f32.xlu0 %v1041
    %v1043 = vpop.xlane.xlu0 %1042
    %v1044 = vsel %vm815, %v635, 0.0
    %1045 = vadd.xlane.f32.xlu0 %v1044
    %v1046 = vpop.xlane.xlu0 %1045
    %v1047 = vsel %vm815, %v636, 0.0
    %1048 = vadd.xlane.f32.xlu0 %v1047
    %v1049 = vpop.xlane.xlu0 %1048
    %v1050 = vsel %vm815, %v637, 0.0
    %1051 = vadd.xlane.f32.xlu0 %v1050
    %v1052 = vpop.xlane.xlu0 %1051
    %v1053 = vsel %vm815, %v638, 0.0
    %1054 = vadd.xlane.f32.xlu0 %v1053
    %v1055 = vpop.xlane.xlu0 %1054
    %v1056 = vsel %vm815, %v639, 0.0
    %1057 = vadd.xlane.f32.xlu0 %v1056
    %v1058 = vpop.xlane.xlu0 %1057
    %v1059 = vsel %vm815, %v640, 0.0
    %1060 = vadd.xlane.f32.xlu0 %v1059
    %v1061 = vpop.xlane.xlu0 %1060
    %v1062 = vsel %vm815, %v641, 0.0
    %1063 = vadd.xlane.f32.xlu0 %v1062
    %v1064 = vpop.xlane.xlu0 %1063
    %v1065 = vsel %vm815, %v642, 0.0
    %1066 = vadd.xlane.f32.xlu0 %v1065
    %v1067 = vpop.xlane.xlu0 %1066
    %v1068 = vsel %vm815, %v643, 0.0
    %1069 = vadd.xlane.f32.xlu0 %v1068
    %v1070 = vpop.xlane.xlu0 %1069
    %v1071 = vsel %vm815, %v644, 0.0
    %1072 = vadd.xlane.f32.xlu0 %v1071
    %v1073 = vpop.xlane.xlu0 %1072
    %v1074 = vsel %vm815, %v645, 0.0
    %1075 = vadd.xlane.f32.xlu0 %v1074
    %v1076 = vpop.xlane.xlu0 %1075
    %v1077 = vsel %vm815, %v646, 0.0
    %1078 = vadd.xlane.f32.xlu0 %v1077
    %v1079 = vpop.xlane.xlu0 %1078
    %v1080 = vsel %vm815, %v647, 0.0
    %1081 = vadd.xlane.f32.xlu0 %v1080
    %v1082 = vpop.xlane.xlu0 %1081
    %v1083 = vsel %vm815, %v648, 0.0
    %1084 = vadd.xlane.f32.xlu0 %v1083
    %v1085 = vpop.xlane.xlu0 %1084
    %v1086 = vsel %vm815, %v649, 0.0
    %1087 = vadd.xlane.f32.xlu0 %v1086
    %v1088 = vpop.xlane.xlu0 %1087
    %v1089 = vsel %vm815, %v650, 0.0
    %1090 = vadd.xlane.f32.xlu0 %v1089
    %v1091 = vpop.xlane.xlu0 %1090
    %v1092 = vsel %vm815, %v651, 0.0
    %1093 = vadd.xlane.f32.xlu0 %v1092
    %v1094 = vpop.xlane.xlu0 %1093
    %v1095 = vsel %vm815, %v652, 0.0
    %1096 = vadd.xlane.f32.xlu0 %v1095
    %v1097 = vpop.xlane.xlu0 %1096
    %v1098 = vsel %vm815, %v653, 0.0
    %1099 = vadd.xlane.f32.xlu0 %v1098
    %v1100 = vpop.xlane.xlu0 %1099
    %v1101 = vsel %vm815, %v654, 0.0
    %1102 = vadd.xlane.f32.xlu0 %v1101
    %v1103 = vpop.xlane.xlu0 %1102
    %v1104 = vsel %vm815, %v655, 0.0
    %1105 = vadd.xlane.f32.xlu0 %v1104
    %v1106 = vpop.xlane.xlu0 %1105
    %v1107 = vsel %vm815, %v656, 0.0
    %1108 = vadd.xlane.f32.xlu0 %v1107
    %v1109 = vpop.xlane.xlu0 %1108
    %v1110 = vsel %vm815, %v657, 0.0
    %1111 = vadd.xlane.f32.xlu0 %v1110
    %v1112 = vpop.xlane.xlu0 %1111
    %v1113 = vsel %vm815, %v658, 0.0
    %1114 = vadd.xlane.f32.xlu0 %v1113
    %v1115 = vpop.xlane.xlu0 %1114
    %v1116 = vsel %vm815, %v659, 0.0
    %1117 = vadd.xlane.f32.xlu0 %v1116
    %v1118 = vpop.xlane.xlu0 %1117
    %v1119 = vsel %vm815, %v660, 0.0
    %1120 = vadd.xlane.f32.xlu0 %v1119
    %v1121 = vpop.xlane.xlu0 %1120
    %v1122 = vsel %vm815, %v661, 0.0
    %1123 = vadd.xlane.f32.xlu0 %v1122
    %v1124 = vpop.xlane.xlu0 %1123
    %v1125 = vsel %vm815, %v662, 0.0
    %1126 = vadd.xlane.f32.xlu0 %v1125
    %v1127 = vpop.xlane.xlu0 %1126
    %v1128 = vsel %vm815, %v663, 0.0
    %1129 = vadd.xlane.f32.xlu0 %v1128
    %v1130 = vpop.xlane.xlu0 %1129
    %v1131 = vsel %vm815, %v664, 0.0
    %1132 = vadd.xlane.f32.xlu0 %v1131
    %v1133 = vpop.xlane.xlu0 %1132
    %v1134 = vsel %vm815, %v665, 0.0
    %1135 = vadd.xlane.f32.xlu0 %v1134
    %v1136 = vpop.xlane.xlu0 %1135
    %v1137 = vsel %vm815, %v666, 0.0
    %1138 = vadd.xlane.f32.xlu0 %v1137
    %v1139 = vpop.xlane.xlu0 %1138
    %v1140 = vsel %vm815, %v667, 0.0
    %1141 = vadd.xlane.f32.xlu0 %v1140
    %v1142 = vpop.xlane.xlu0 %1141
    %v1143 = vsel %vm815, %v668, 0.0
    %1144 = vadd.xlane.f32.xlu0 %v1143
    %v1145 = vpop.xlane.xlu0 %1144
    %v1146 = vsel %vm815, %v669, 0.0
    %1147 = vadd.xlane.f32.xlu0 %v1146
    %v1148 = vpop.xlane.xlu0 %1147
    %v1149 = vsel %vm815, %v670, 0.0
    %1150 = vadd.xlane.f32.xlu0 %v1149
    %v1151 = vpop.xlane.xlu0 %1150
    %v1152 = vsel %vm815, %v671, 0.0
    %1153 = vadd.xlane.f32.xlu0 %v1152
    %v1154 = vpop.xlane.xlu0 %1153
    %v1155 = vsel %vm815, %v672, 0.0
    %1156 = vadd.xlane.f32.xlu0 %v1155
    %v1157 = vpop.xlane.xlu0 %1156
    %v1158 = vsel %vm815, %v673, 0.0
    %1159 = vadd.xlane.f32.xlu0 %v1158
    %v1160 = vpop.xlane.xlu0 %1159
    %v1161 = vsel %vm815, %v674, 0.0
    %1162 = vadd.xlane.f32.xlu0 %v1161
    %v1163 = vpop.xlane.xlu0 %1162
    %v1164 = vsel %vm815, %v675, 0.0
    %1165 = vadd.xlane.f32.xlu0 %v1164
    %v1166 = vpop.xlane.xlu0 %1165
    %v1167 = vsel %vm815, %v676, 0.0
    %1168 = vadd.xlane.f32.xlu0 %v1167
    %v1169 = vpop.xlane.xlu0 %1168
    %v1170 = vsel %vm815, %v677, 0.0
    %1171 = vadd.xlane.f32.xlu0 %v1170
    %v1172 = vpop.xlane.xlu0 %1171
    %v1173 = vsel %vm815, %v678, 0.0
    %1174 = vadd.xlane.f32.xlu0 %v1173
    %v1175 = vpop.xlane.xlu0 %1174
    %v1176 = vsel %vm815, %v679, 0.0
    %1177 = vadd.xlane.f32.xlu0 %v1176
    %v1178 = vpop.xlane.xlu0 %1177
    %v1179 = vsel %vm815, %v680, 0.0
    %1180 = vadd.xlane.f32.xlu0 %v1179
    %v1181 = vpop.xlane.xlu0 %1180
    %v1182 = vsel %vm815, %v681, 0.0
    %1183 = vadd.xlane.f32.xlu0 %v1182
    %v1184 = vpop.xlane.xlu0 %1183
    %v1185 = vsel %vm815, %v682, 0.0
    %1186 = vadd.xlane.f32.xlu0 %v1185
    %v1187 = vpop.xlane.xlu0 %1186
    %v1188 = vsel %vm815, %v683, 0.0
    %1189 = vadd.xlane.f32.xlu0 %v1188
    %v1190 = vpop.xlane.xlu0 %1189
    %v1191 = vsel %vm815, %v684, 0.0
    %1192 = vadd.xlane.f32.xlu0 %v1191
    %v1193 = vpop.xlane.xlu0 %1192
    %v1194 = vsel %vm815, %v685, 0.0
    %1195 = vadd.xlane.f32.xlu0 %v1194
    %v1196 = vpop.xlane.xlu0 %1195
    %v1197 = vsel %vm815, %v686, 0.0
    %1198 = vadd.xlane.f32.xlu0 %v1197
    %v1199 = vpop.xlane.xlu0 %1198
    %v1200 = vsel %vm815, %v687, 0.0
    %1201 = vadd.xlane.f32.xlu0 %v1200
    %v1202 = vpop.xlane.xlu0 %1201
    %v1203 = vsel %vm815, %v688, 0.0
    %1204 = vadd.xlane.f32.xlu0 %v1203
    %v1205 = vpop.xlane.xlu0 %1204
    %v1206 = vsel %vm815, %v689, 0.0
    %1207 = vadd.xlane.f32.xlu0 %v1206
    %v1208 = vpop.xlane.xlu0 %1207
    %v1209 = vsel %vm815, %v690, 0.0
    %1210 = vadd.xlane.f32.xlu0 %v1209
    %v1211 = vpop.xlane.xlu0 %1210
    %v1212 = vsel %vm815, %v691, 0.0
    %1213 = vadd.xlane.f32.xlu0 %v1212
    %v1214 = vpop.xlane.xlu0 %1213
    %v1215 = vsel %vm815, %v692, 0.0
    %1216 = vadd.xlane.f32.xlu0 %v1215
    %v1217 = vpop.xlane.xlu0 %1216
    %v1218 = vsel %vm815, %v693, 0.0
    %1219 = vadd.xlane.f32.xlu0 %v1218
    %v1220 = vpop.xlane.xlu0 %1219
    %v1221 = vsel %vm815, %v694, 0.0
    %1222 = vadd.xlane.f32.xlu0 %v1221
    %v1223 = vpop.xlane.xlu0 %1222
    %v1224 = vsel %vm815, %v695, 0.0
    %1225 = vadd.xlane.f32.xlu0 %v1224
    %v1226 = vpop.xlane.xlu0 %1225
    %v1227 = vsel %vm815, %v696, 0.0
    %1228 = vadd.xlane.f32.xlu0 %v1227
    %v1229 = vpop.xlane.xlu0 %1228
    %v1230 = vsel %vm815, %v697, 0.0
    %1231 = vadd.xlane.f32.xlu0 %v1230
    %v1232 = vpop.xlane.xlu0 %1231
    %v1233 = vsel %vm815, %v698, 0.0
    %1234 = vadd.xlane.f32.xlu0 %v1233
    %v1235 = vpop.xlane.xlu0 %1234
    %v1236 = vsel %vm815, %v699, 0.0
    %1237 = vadd.xlane.f32.xlu0 %v1236
    %v1238 = vpop.xlane.xlu0 %1237
    %v1239 = vsel %vm815, %v700, 0.0
    %1240 = vadd.xlane.f32.xlu0 %v1239
    %v1241 = vpop.xlane.xlu0 %1240
    %v1242 = vsel %vm815, %v701, 0.0
    %1243 = vadd.xlane.f32.xlu0 %v1242
    %v1244 = vpop.xlane.xlu0 %1243
    %v1245 = vsel %vm815, %v702, 0.0
    %1246 = vadd.xlane.f32.xlu0 %v1245
    %v1247 = vpop.xlane.xlu0 %1246
    %v1248 = vsel %vm815, %v703, 0.0
    %1249 = vadd.xlane.f32.xlu0 %v1248
    %v1250 = vpop.xlane.xlu0 %1249
    %v1251 = vsel %vm815, %v704, 0.0
    %1252 = vadd.xlane.f32.xlu0 %v1251
    %v1253 = vpop.xlane.xlu0 %1252
    %v1254 = vsel %vm815, %v705, 0.0
    %1255 = vadd.xlane.f32.xlu0 %v1254
    %v1256 = vpop.xlane.xlu0 %1255
    %v1257 = vsel %vm815, %v706, 0.0
    %1258 = vadd.xlane.f32.xlu0 %v1257
    %v1259 = vpop.xlane.xlu0 %1258
    %v1260 = vsel %vm815, %v707, 0.0
    %1261 = vadd.xlane.f32.xlu0 %v1260
    %v1262 = vpop.xlane.xlu0 %1261
    %v1263 = vsel %vm815, %v708, 0.0
    %1264 = vadd.xlane.f32.xlu0 %v1263
    %v1265 = vpop.xlane.xlu0 %1264
    %v1266 = vsel %vm815, %v709, 0.0
    %1267 = vadd.xlane.f32.xlu0 %v1266
    %v1268 = vpop.xlane.xlu0 %1267
    %v1269 = vsel %vm815, %v710, 0.0
    %1270 = vadd.xlane.f32.xlu0 %v1269
    %v1271 = vpop.xlane.xlu0 %1270
    %v1272 = vsel %vm815, %v711, 0.0
    %1273 = vadd.xlane.f32.xlu0 %v1272
    %v1274 = vpop.xlane.xlu0 %1273
    %v1275 = vsel %vm815, %v712, 0.0
    %1276 = vadd.xlane.f32.xlu0 %v1275
    %v1277 = vpop.xlane.xlu0 %1276
    %v1278 = vsel %vm815, %v713, 0.0
    %1279 = vadd.xlane.f32.xlu0 %v1278
    %v1280 = vpop.xlane.xlu0 %1279
    %v1281 = vsel %vm815, %v714, 0.0
    %1282 = vadd.xlane.f32.xlu0 %v1281
    %v1283 = vpop.xlane.xlu0 %1282
    %v1284 = vsel %vm815, %v715, 0.0
    %1285 = vadd.xlane.f32.xlu0 %v1284
    %v1286 = vpop.xlane.xlu0 %1285
    %v1287 = vsel %vm815, %v716, 0.0
    %1288 = vadd.xlane.f32.xlu0 %v1287
    %v1289 = vpop.xlane.xlu0 %1288
    %v1290 = vsel %vm815, %v717, 0.0
    %1291 = vadd.xlane.f32.xlu0 %v1290
    %v1292 = vpop.xlane.xlu0 %1291
    %v1293 = vsel %vm815, %v718, 0.0
    %1294 = vadd.xlane.f32.xlu0 %v1293
    %v1295 = vpop.xlane.xlu0 %1294
    %v1296 = vsel %vm815, %v719, 0.0
    %1297 = vadd.xlane.f32.xlu0 %v1296
    %v1298 = vpop.xlane.xlu0 %1297
    %v1299 = vsel %vm815, %v720, 0.0
    %1300 = vadd.xlane.f32.xlu0 %v1299
    %v1301 = vpop.xlane.xlu0 %1300
    %v1302 = vsel %vm815, %v721, 0.0
    %1303 = vadd.xlane.f32.xlu0 %v1302
    %v1304 = vpop.xlane.xlu0 %1303
    %v1305 = vsel %vm815, %v722, 0.0
    %1306 = vadd.xlane.f32.xlu0 %v1305
    %v1307 = vpop.xlane.xlu0 %1306
    %v1308 = vsel %vm815, %v723, 0.0
    %1309 = vadd.xlane.f32.xlu0 %v1308
    %v1310 = vpop.xlane.xlu0 %1309
    %v1311 = vsel %vm815, %v724, 0.0
    %1312 = vadd.xlane.f32.xlu0 %v1311
    %v1313 = vpop.xlane.xlu0 %1312
    %v1314 = vsel %vm815, %v725, 0.0
    %1315 = vadd.xlane.f32.xlu0 %v1314
    %v1316 = vpop.xlane.xlu0 %1315
    %v1317 = vsel %vm815, %v726, 0.0
    %1318 = vadd.xlane.f32.xlu0 %v1317
    %v1319 = vpop.xlane.xlu0 %1318
    %v1320 = vsel %vm815, %v727, 0.0
    %1321 = vadd.xlane.f32.xlu0 %v1320
    %v1322 = vpop.xlane.xlu0 %1321
    %v1323 = vsel %vm815, %v728, 0.0
    %1324 = vadd.xlane.f32.xlu0 %v1323
    %v1325 = vpop.xlane.xlu0 %1324
    %v1326 = vsel %vm815, %v729, 0.0
    %1327 = vadd.xlane.f32.xlu0 %v1326
    %v1328 = vpop.xlane.xlu0 %1327
    %v1329 = vsel %vm815, %v730, 0.0
    %1330 = vadd.xlane.f32.xlu0 %v1329
    %v1331 = vpop.xlane.xlu0 %1330
    %v1332 = vsel %vm815, %v731, 0.0
    %1333 = vadd.xlane.f32.xlu0 %v1332
    %v1334 = vpop.xlane.xlu0 %1333
    %v1335 = vsel %vm815, %v732, 0.0
    %1336 = vadd.xlane.f32.xlu0 %v1335
    %v1337 = vpop.xlane.xlu0 %1336
    %v1338 = vsel %vm815, %v733, 0.0
    %1339 = vadd.xlane.f32.xlu0 %v1338
    %v1340 = vpop.xlane.xlu0 %1339
    %v1341 = vsel %vm815, %v734, 0.0
    %1342 = vadd.xlane.f32.xlu0 %v1341
    %v1343 = vpop.xlane.xlu0 %1342
    %v1344 = vsel %vm815, %v735, 0.0
    %1345 = vadd.xlane.f32.xlu0 %v1344
    %v1346 = vpop.xlane.xlu0 %1345
    %v1347 = vsel %vm815, %v736, 0.0
    %1348 = vadd.xlane.f32.xlu0 %v1347
    %v1349 = vpop.xlane.xlu0 %1348
    %v1350 = vsel %vm815, %v737, 0.0
    %1351 = vadd.xlane.f32.xlu0 %v1350
    %v1352 = vpop.xlane.xlu0 %1351
    %v1353 = vsel %vm815, %v738, 0.0
    %1354 = vadd.xlane.f32.xlu0 %v1353
    %v1355 = vpop.xlane.xlu0 %1354
    %v1356 = vsel %vm815, %v739, 0.0
    %1357 = vadd.xlane.f32.xlu0 %v1356
    %v1358 = vpop.xlane.xlu0 %1357
    %v1359 = vsel %vm815, %v740, 0.0
    %1360 = vadd.xlane.f32.xlu0 %v1359
    %v1361 = vpop.xlane.xlu0 %1360
    %v1362 = vsel %vm815, %v741, 0.0
    %1363 = vadd.xlane.f32.xlu0 %v1362
    %v1364 = vpop.xlane.xlu0 %1363
    %v1365 = vsel %vm815, %v742, 0.0
    %1366 = vadd.xlane.f32.xlu0 %v1365
    %v1367 = vpop.xlane.xlu0 %1366
    %v1368 = vsel %vm815, %v743, 0.0
    %1369 = vadd.xlane.f32.xlu0 %v1368
    %v1370 = vpop.xlane.xlu0 %1369
    %v1371 = vsel %vm815, %v744, 0.0
    %1372 = vadd.xlane.f32.xlu0 %v1371
    %v1373 = vpop.xlane.xlu0 %1372
    %v1374 = vsel %vm815, %v745, 0.0
    %1375 = vadd.xlane.f32.xlu0 %v1374
    %v1376 = vpop.xlane.xlu0 %1375
    %v1377 = vsel %vm815, %v746, 0.0
    %1378 = vadd.xlane.f32.xlu0 %v1377
    %v1379 = vpop.xlane.xlu0 %1378
    %v1380 = vsel %vm815, %v747, 0.0
    %1381 = vadd.xlane.f32.xlu0 %v1380
    %v1382 = vpop.xlane.xlu0 %1381
    %v1383 = vsel %vm815, %v748, 0.0
    %1384 = vadd.xlane.f32.xlu0 %v1383
    %v1385 = vpop.xlane.xlu0 %1384
    %v1386 = vsel %vm815, %v749, 0.0
    %1387 = vadd.xlane.f32.xlu0 %v1386
    %v1388 = vpop.xlane.xlu0 %1387
    %v1389 = vsel %vm815, %v750, 0.0
    %1390 = vadd.xlane.f32.xlu0 %v1389
    %v1391 = vpop.xlane.xlu0 %1390
    %v1392 = vsel %vm815, %v751, 0.0
    %1393 = vadd.xlane.f32.xlu0 %v1392
    %v1394 = vpop.xlane.xlu0 %1393
    %v1395 = vsel %vm815, %v752, 0.0
    %1396 = vadd.xlane.f32.xlu0 %v1395
    %v1397 = vpop.xlane.xlu0 %1396
    %v1398 = vsel %vm815, %v753, 0.0
    %1399 = vadd.xlane.f32.xlu0 %v1398
    %v1400 = vpop.xlane.xlu0 %1399
    %v1401 = vsel %vm815, %v754, 0.0
    %1402 = vadd.xlane.f32.xlu0 %v1401
    %v1403 = vpop.xlane.xlu0 %1402
    %v1404 = vsel %vm815, %v755, 0.0
    %1405 = vadd.xlane.f32.xlu0 %v1404
    %v1406 = vpop.xlane.xlu0 %1405
    %v1407 = vsel %vm815, %v756, 0.0
    %1408 = vadd.xlane.f32.xlu0 %v1407
    %v1409 = vpop.xlane.xlu0 %1408
    %v1410 = vsel %vm815, %v757, 0.0
    %1411 = vadd.xlane.f32.xlu0 %v1410
    %v1412 = vpop.xlane.xlu0 %1411
    %v1413 = vsel %vm815, %v758, 0.0
    %1414 = vadd.xlane.f32.xlu0 %v1413
    %v1415 = vpop.xlane.xlu0 %1414
    %v1416 = vsel %vm815, %v759, 0.0
    %1417 = vadd.xlane.f32.xlu0 %v1416
    %v1418 = vpop.xlane.xlu0 %1417
    %v1419 = vsel %vm815, %v760, 0.0
    %1420 = vadd.xlane.f32.xlu0 %v1419
    %v1421 = vpop.xlane.xlu0 %1420
    %v1422 = vsel %vm815, %v761, 0.0
    %1423 = vadd.xlane.f32.xlu0 %v1422
    %v1424 = vpop.xlane.xlu0 %1423
    %v1425 = vsel %vm815, %v762, 0.0
    %1426 = vadd.xlane.f32.xlu0 %v1425
    %v1427 = vpop.xlane.xlu0 %1426
    %v1428 = vsel %vm815, %v763, 0.0
    %1429 = vadd.xlane.f32.xlu0 %v1428
    %v1430 = vpop.xlane.xlu0 %1429
    %v1431 = vsel %vm815, %v764, 0.0
    %1432 = vadd.xlane.f32.xlu0 %v1431
    %v1433 = vpop.xlane.xlu0 %1432
    %v1434 = vsel %vm815, %v765, 0.0
    %1435 = vadd.xlane.f32.xlu0 %v1434
    %v1436 = vpop.xlane.xlu0 %1435
    %v1437 = vsel %vm815, %v766, 0.0
    %1438 = vadd.xlane.f32.xlu0 %v1437
    %v1439 = vpop.xlane.xlu0 %1438
    %v1440 = vsel %vm815, %v767, 0.0
    %1441 = vadd.xlane.f32.xlu0 %v1440
    %v1442 = vpop.xlane.xlu0 %1441
    %v1443 = vsel %vm815, %v768, 0.0
    %1444 = vadd.xlane.f32.xlu0 %v1443
    %v1445 = vpop.xlane.xlu0 %1444
    %v1446 = vsel %vm815, %v769, 0.0
    %1447 = vadd.xlane.f32.xlu0 %v1446
    %v1448 = vpop.xlane.xlu0 %1447
    %v1449 = vsel %vm815, %v770, 0.0
    %1450 = vadd.xlane.f32.xlu0 %v1449
    %v1451 = vpop.xlane.xlu0 %1450
    %v1452 = vsel %vm815, %v771, 0.0
    %1453 = vadd.xlane.f32.xlu0 %v1452
    %v1454 = vpop.xlane.xlu0 %1453
    %v1455 = vsel %vm815, %v772, 0.0
    %1456 = vadd.xlane.f32.xlu0 %v1455
    %v1457 = vpop.xlane.xlu0 %1456
    %v1458 = vsel %vm815, %v773, 0.0
    %1459 = vadd.xlane.f32.xlu0 %v1458
    %v1460 = vpop.xlane.xlu0 %1459
    %v1461 = vsel %vm815, %v774, 0.0
    %1462 = vadd.xlane.f32.xlu0 %v1461
    %v1463 = vpop.xlane.xlu0 %1462
    %v1464 = vsel %vm815, %v775, 0.0
    %1465 = vadd.xlane.f32.xlu0 %v1464
    %v1466 = vpop.xlane.xlu0 %1465
    %v1467 = vsel %vm815, %v776, 0.0
    %1468 = vadd.xlane.f32.xlu0 %v1467
    %v1469 = vpop.xlane.xlu0 %1468
    %v1470 = vsel %vm815, %v777, 0.0
    %1471 = vadd.xlane.f32.xlu0 %v1470
    %v1472 = vpop.xlane.xlu0 %1471
    %v1473 = vsel %vm815, %v778, 0.0
    %1474 = vadd.xlane.f32.xlu0 %v1473
    %v1475 = vpop.xlane.xlu0 %1474
    %v1476 = vsel %vm815, %v779, 0.0
    %1477 = vadd.xlane.f32.xlu0 %v1476
    %v1478 = vpop.xlane.xlu0 %1477
    %v1479 = vsel %vm815, %v780, 0.0
    %1480 = vadd.xlane.f32.xlu0 %v1479
    %v1481 = vpop.xlane.xlu0 %1480
    %v1482 = vsel %vm815, %v781, 0.0
    %1483 = vadd.xlane.f32.xlu0 %v1482
    %v1484 = vpop.xlane.xlu0 %1483
    %v1485 = vsel %vm815, %v782, 0.0
    %1486 = vadd.xlane.f32.xlu0 %v1485
    %v1487 = vpop.xlane.xlu0 %1486
    %v1488 = vsel %vm815, %v783, 0.0
    %1489 = vadd.xlane.f32.xlu0 %v1488
    %v1490 = vpop.xlane.xlu0 %1489
    %v1491 = vsel %vm815, %v784, 0.0
    %1492 = vadd.xlane.f32.xlu0 %v1491
    %v1493 = vpop.xlane.xlu0 %1492
    %v1494 = vsel %vm815, %v785, 0.0
    %1495 = vadd.xlane.f32.xlu0 %v1494
    %v1496 = vpop.xlane.xlu0 %1495
    %v1497 = vsel %vm815, %v786, 0.0
    %1498 = vadd.xlane.f32.xlu0 %v1497
    %v1499 = vpop.xlane.xlu0 %1498
    %v1500 = vsel %vm815, %v787, 0.0
    %1501 = vadd.xlane.f32.xlu0 %v1500
    %v1502 = vpop.xlane.xlu0 %1501
    %v1503 = vsel %vm815, %v788, 0.0
    %1504 = vadd.xlane.f32.xlu0 %v1503
    %v1505 = vpop.xlane.xlu0 %1504
    %v1506 = vsel %vm815, %v789, 0.0
    %1507 = vadd.xlane.f32.xlu0 %v1506
    %v1508 = vpop.xlane.xlu0 %1507
    %v1509 = vsel %vm815, %v790, 0.0
    %1510 = vadd.xlane.f32.xlu0 %v1509
    %v1511 = vpop.xlane.xlu0 %1510
    %v1512 = vsel %vm815, %v791, 0.0
    %1513 = vadd.xlane.f32.xlu0 %v1512
    %v1514 = vpop.xlane.xlu0 %1513
    %v1515 = vsel %vm815, %v792, 0.0
    %1516 = vadd.xlane.f32.xlu0 %v1515
    %v1517 = vpop.xlane.xlu0 %1516
    %v1518 = vsel %vm815, %v793, 0.0
    %1519 = vadd.xlane.f32.xlu0 %v1518
    %v1520 = vpop.xlane.xlu0 %1519
    %v1521 = vsel %vm815, %v794, 0.0
    %1522 = vadd.xlane.f32.xlu0 %v1521
    %v1523 = vpop.xlane.xlu0 %1522
    %v1524 = vsel %vm815, %v795, 0.0
    %1525 = vadd.xlane.f32.xlu0 %v1524
    %v1526 = vpop.xlane.xlu0 %1525
    %v1527 = vsel %vm815, %v796, 0.0
    %1528 = vadd.xlane.f32.xlu0 %v1527
    %v1529 = vpop.xlane.xlu0 %1528
    %v1530 = vsel %vm815, %v797, 0.0
    %1531 = vadd.xlane.f32.xlu0 %v1530
    %v1532 = vpop.xlane.xlu0 %1531
    %v1533 = vsel %vm815, %v798, 0.0
    %1534 = vadd.xlane.f32.xlu0 %v1533
    %v1535 = vpop.xlane.xlu0 %1534
    %v1536 = vsel %vm815, %v799, 0.0
    %1537 = vadd.xlane.f32.xlu0 %v1536
    %v1538 = vpop.xlane.xlu0 %1537
    %v1539 = vsel %vm815, %v800, 0.0
    %1540 = vadd.xlane.f32.xlu0 %v1539
    %v1541 = vpop.xlane.xlu0 %1540
    %v1542 = vsel %vm815, %v801, 0.0
    %1543 = vadd.xlane.f32.xlu0 %v1542
    %v1544 = vpop.xlane.xlu0 %1543
    %v1545 = vsel %vm815, %v802, 0.0
    %1546 = vadd.xlane.f32.xlu0 %v1545
    %v1547 = vpop.xlane.xlu0 %1546
    %v1548 = vsel %vm815, %v803, 0.0
    %1549 = vadd.xlane.f32.xlu0 %v1548
    %v1550 = vpop.xlane.xlu0 %1549
    %v1551 = vsel %vm815, %v804, 0.0
    %1552 = vadd.xlane.f32.xlu0 %v1551
    %v1553 = vpop.xlane.xlu0 %1552
    %v1554 = vsel %vm815, %v805, 0.0
    %1555 = vadd.xlane.f32.xlu0 %v1554
    %v1556 = vpop.xlane.xlu0 %1555
    %v1557 = vsel %vm815, %v806, 0.0
    %1558 = vadd.xlane.f32.xlu0 %v1557
    %v1559 = vpop.xlane.xlu0 %1558
    %v1560 = vsel %vm815, %v807, 0.0
    %1561 = vadd.xlane.f32.xlu0 %v1560
    %v1562 = vpop.xlane.xlu0 %1561
    %v1563 = vsel %vm815, %v808, 0.0
    %1564 = vadd.xlane.f32.xlu0 %v1563
    %v1565 = vpop.xlane.xlu0 %1564
    %v1566 = vsel %vm815, %v809, 0.0
    %1567 = vadd.xlane.f32.xlu0 %v1566
    %v1568 = vpop.xlane.xlu0 %1567
    %v1569 = vsel %vm815, %v810, 0.0
    %1570 = vadd.xlane.f32.xlu0 %v1569
    %v1571 = vpop.xlane.xlu0 %1570
    %v1572 = vsel %vm815, %v811, 0.0
    %1573 = vadd.xlane.f32.xlu0 %v1572
    %v1574 = vpop.xlane.xlu0 %1573
    %v1575 = vsel %vm815, %v812, 0.0
    %1576 = vadd.xlane.f32.xlu0 %v1575
    %v1577 = vpop.xlane.xlu0 %1576
    %v1578 = vsel %vm815, %v813, 0.0
    %1579 = vadd.xlane.f32.xlu0 %v1578
    %v1580 = vpop.xlane.xlu0 %1579
    %v1581 = vsel %vm815, %v814, 0.0
    %1582 = vadd.xlane.f32.xlu0 %v1581
    %v1583 = vpop.xlane.xlu0 %1582
    %v1584 = vrsqrt.pop %v818
    %v1585 = vmul.f32 %v1584, %v818
    %v1586 = vmul.f32 %v1585, %v1584
    %v1587 = vmul.f32 0.5, %v1586
    %v1588 = vsub.f32 1.5, %v1587
    %v1589 = vmul.f32 %v1584, %v1588
    %v1590 = vmul.f32 %v818, %v1589
    %vm1591 = vcmp.eq.f32.partialorder %v818, inf
    %v1592 = vsel %vm1591, %v818, %v1590
    %vm1593 = vcmp.eq.f32.partialorder %v818, 0.0
    %v1594 = vand.u32 %v818, 2147483648
    %v1595 = vsel %vm1593, %v1594, %v1592
    %v1596 = vrsqrt.pop %v821
    %v1597 = vmul.f32 %v1596, %v821
    %v1598 = vmul.f32 %v1597, %v1596
    %v1599 = vmul.f32 0.5, %v1598
    %v1600 = vsub.f32 1.5, %v1599
    %v1601 = vmul.f32 %v1596, %v1600
    %v1602 = vmul.f32 %v821, %v1601
    %vm1603 = vcmp.eq.f32.partialorder %v821, inf
    %v1604 = vsel %vm1603, %v821, %v1602
    %vm1605 = vcmp.eq.f32.partialorder %v821, 0.0
    %v1606 = vand.u32 %v821, 2147483648
    %v1607 = vsel %vm1605, %v1606, %v1604
    %v1608 = vrsqrt.pop %v824
    %v1609 = vmul.f32 %v1608, %v824
    %v1610 = vmul.f32 %v1609, %v1608
    %v1611 = vmul.f32 0.5, %v1610
    %v1612 = vsub.f32 1.5, %v1611
    %v1613 = vmul.f32 %v1608, %v1612
    %v1614 = vmul.f32 %v824, %v1613
    %vm1615 = vcmp.eq.f32.partialorder %v824, inf
    %v1616 = vsel %vm1615, %v824, %v1614
    %vm1617 = vcmp.eq.f32.partialorder %v824, 0.0
    %v1618 = vand.u32 %v824, 2147483648
    %v1619 = vsel %vm1617, %v1618, %v1616
    %v1620 = vrsqrt.pop %v827
    %v1621 = vmul.f32 %v1620, %v827
    %v1622 = vmul.f32 %v1621, %v1620
    %v1623 = vmul.f32 0.5, %v1622
    %v1624 = vsub.f32 1.5, %v1623
    %v1625 = vmul.f32 %v1620, %v1624
    %v1626 = vmul.f32 %v827, %v1625
    %vm1627 = vcmp.eq.f32.partialorder %v827, inf
    %v1628 = vsel %vm1627, %v827, %v1626
    %vm1629 = vcmp.eq.f32.partialorder %v827, 0.0
    %v1630 = vand.u32 %v827, 2147483648
    %v1631 = vsel %vm1629, %v1630, %v1628
    %v1632 = vrsqrt.pop %v830
    %v1633 = vmul.f32 %v1632, %v830
    %v1634 = vmul.f32 %v1633, %v1632
    %v1635 = vmul.f32 0.5, %v1634
    %v1636 = vsub.f32 1.5, %v1635
    %v1637 = vmul.f32 %v1632, %v1636
    %v1638 = vmul.f32 %v830, %v1637
    %vm1639 = vcmp.eq.f32.partialorder %v830, inf
    %v1640 = vsel %vm1639, %v830, %v1638
    %vm1641 = vcmp.eq.f32.partialorder %v830, 0.0
    %v1642 = vand.u32 %v830, 2147483648
    %v1643 = vsel %vm1641, %v1642, %v1640
    %v1644 = vrsqrt.pop %v833
    %v1645 = vmul.f32 %v1644, %v833
    %v1646 = vmul.f32 %v1645, %v1644
    %v1647 = vmul.f32 0.5, %v1646
    %v1648 = vsub.f32 1.5, %v1647
    %v1649 = vmul.f32 %v1644, %v1648
    %v1650 = vmul.f32 %v833, %v1649
    %vm1651 = vcmp.eq.f32.partialorder %v833, inf
    %v1652 = vsel %vm1651, %v833, %v1650
    %vm1653 = vcmp.eq.f32.partialorder %v833, 0.0
    %v1654 = vand.u32 %v833, 2147483648
    %v1655 = vsel %vm1653, %v1654, %v1652
    %v1656 = vrsqrt.pop %v836
    %v1657 = vmul.f32 %v1656, %v836
    %v1658 = vmul.f32 %v1657, %v1656
    %v1659 = vmul.f32 0.5, %v1658
    %v1660 = vsub.f32 1.5, %v1659
    %v1661 = vmul.f32 %v1656, %v1660
    %v1662 = vmul.f32 %v836, %v1661
    %vm1663 = vcmp.eq.f32.partialorder %v836, inf
    %v1664 = vsel %vm1663, %v836, %v1662
    %vm1665 = vcmp.eq.f32.partialorder %v836, 0.0
    %v1666 = vand.u32 %v836, 2147483648
    %v1667 = vsel %vm1665, %v1666, %v1664
    %v1668 = vrsqrt.pop %v839
    %v1669 = vmul.f32 %v1668, %v839
    %v1670 = vmul.f32 %v1669, %v1668
    %v1671 = vmul.f32 0.5, %v1670
    %v1672 = vsub.f32 1.5, %v1671
    %v1673 = vmul.f32 %v1668, %v1672
    %v1674 = vmul.f32 %v839, %v1673
    %vm1675 = vcmp.eq.f32.partialorder %v839, inf
    %v1676 = vsel %vm1675, %v839, %v1674
    %vm1677 = vcmp.eq.f32.partialorder %v839, 0.0
    %v1678 = vand.u32 %v839, 2147483648
    %v1679 = vsel %vm1677, %v1678, %v1676
    %v1680 = vrsqrt.pop %v842
    %v1681 = vmul.f32 %v1680, %v842
    %v1682 = vmul.f32 %v1681, %v1680
    %v1683 = vmul.f32 0.5, %v1682
    %v1684 = vsub.f32 1.5, %v1683
    %v1685 = vmul.f32 %v1680, %v1684
    %v1686 = vmul.f32 %v842, %v1685
    %vm1687 = vcmp.eq.f32.partialorder %v842, inf
    %v1688 = vsel %vm1687, %v842, %v1686
    %vm1689 = vcmp.eq.f32.partialorder %v842, 0.0
    %v1690 = vand.u32 %v842, 2147483648
    %v1691 = vsel %vm1689, %v1690, %v1688
    %v1692 = vrsqrt.pop %v845
    %v1693 = vmul.f32 %v1692, %v845
    %v1694 = vmul.f32 %v1693, %v1692
    %v1695 = vmul.f32 0.5, %v1694
    %v1696 = vsub.f32 1.5, %v1695
    %v1697 = vmul.f32 %v1692, %v1696
    %v1698 = vmul.f32 %v845, %v1697
    %vm1699 = vcmp.eq.f32.partialorder %v845, inf
    %v1700 = vsel %vm1699, %v845, %v1698
    %vm1701 = vcmp.eq.f32.partialorder %v845, 0.0
    %v1702 = vand.u32 %v845, 2147483648
    %v1703 = vsel %vm1701, %v1702, %v1700
    %v1704 = vrsqrt.pop %v848
    %v1705 = vmul.f32 %v1704, %v848
    %v1706 = vmul.f32 %v1705, %v1704
    %v1707 = vmul.f32 0.5, %v1706
    %v1708 = vsub.f32 1.5, %v1707
    %v1709 = vmul.f32 %v1704, %v1708
    %v1710 = vmul.f32 %v848, %v1709
    %vm1711 = vcmp.eq.f32.partialorder %v848, inf
    %v1712 = vsel %vm1711, %v848, %v1710
    %vm1713 = vcmp.eq.f32.partialorder %v848, 0.0
    %v1714 = vand.u32 %v848, 2147483648
    %v1715 = vsel %vm1713, %v1714, %v1712
    %v1716 = vrsqrt.pop %v851
    %v1717 = vmul.f32 %v1716, %v851
    %v1718 = vmul.f32 %v1717, %v1716
    %v1719 = vmul.f32 0.5, %v1718
    %v1720 = vsub.f32 1.5, %v1719
    %v1721 = vmul.f32 %v1716, %v1720
    %v1722 = vmul.f32 %v851, %v1721
    %vm1723 = vcmp.eq.f32.partialorder %v851, inf
    %v1724 = vsel %vm1723, %v851, %v1722
    %vm1725 = vcmp.eq.f32.partialorder %v851, 0.0
    %v1726 = vand.u32 %v851, 2147483648
    %v1727 = vsel %vm1725, %v1726, %v1724
    %v1728 = vrsqrt.pop %v854
    %v1729 = vmul.f32 %v1728, %v854
    %v1730 = vmul.f32 %v1729, %v1728
    %v1731 = vmul.f32 0.5, %v1730
    %v1732 = vsub.f32 1.5, %v1731
    %v1733 = vmul.f32 %v1728, %v1732
    %v1734 = vmul.f32 %v854, %v1733
    %vm1735 = vcmp.eq.f32.partialorder %v854, inf
    %v1736 = vsel %vm1735, %v854, %v1734
    %vm1737 = vcmp.eq.f32.partialorder %v854, 0.0
    %v1738 = vand.u32 %v854, 2147483648
    %v1739 = vsel %vm1737, %v1738, %v1736
    %v1740 = vrsqrt.pop %v857
    %v1741 = vmul.f32 %v1740, %v857
    %v1742 = vmul.f32 %v1741, %v1740
    %v1743 = vmul.f32 0.5, %v1742
    %v1744 = vsub.f32 1.5, %v1743
    %v1745 = vmul.f32 %v1740, %v1744
    %v1746 = vmul.f32 %v857, %v1745
    %vm1747 = vcmp.eq.f32.partialorder %v857, inf
    %v1748 = vsel %vm1747, %v857, %v1746
    %vm1749 = vcmp.eq.f32.partialorder %v857, 0.0
    %v1750 = vand.u32 %v857, 2147483648
    %v1751 = vsel %vm1749, %v1750, %v1748
    %v1752 = vrsqrt.pop %v860
    %v1753 = vmul.f32 %v1752, %v860
    %v1754 = vmul.f32 %v1753, %v1752
    %v1755 = vmul.f32 0.5, %v1754
    %v1756 = vsub.f32 1.5, %v1755
    %v1757 = vmul.f32 %v1752, %v1756
    %v1758 = vmul.f32 %v860, %v1757
    %vm1759 = vcmp.eq.f32.partialorder %v860, inf
    %v1760 = vsel %vm1759, %v860, %v1758
    %vm1761 = vcmp.eq.f32.partialorder %v860, 0.0
    %v1762 = vand.u32 %v860, 2147483648
    %v1763 = vsel %vm1761, %v1762, %v1760
    %v1764 = vrsqrt.pop %v863
    %v1765 = vmul.f32 %v1764, %v863
    %v1766 = vmul.f32 %v1765, %v1764
    %v1767 = vmul.f32 0.5, %v1766
    %v1768 = vsub.f32 1.5, %v1767
    %v1769 = vmul.f32 %v1764, %v1768
    %v1770 = vmul.f32 %v863, %v1769
    %vm1771 = vcmp.eq.f32.partialorder %v863, inf
    %v1772 = vsel %vm1771, %v863, %v1770
    %vm1773 = vcmp.eq.f32.partialorder %v863, 0.0
    %v1774 = vand.u32 %v863, 2147483648
    %v1775 = vsel %vm1773, %v1774, %v1772
    %v1776 = vrsqrt.pop %v866
    %v1777 = vmul.f32 %v1776, %v866
    %v1778 = vmul.f32 %v1777, %v1776
    %v1779 = vmul.f32 0.5, %v1778
    %v1780 = vsub.f32 1.5, %v1779
    %v1781 = vmul.f32 %v1776, %v1780
    %v1782 = vmul.f32 %v866, %v1781
    %vm1783 = vcmp.eq.f32.partialorder %v866, inf
    %v1784 = vsel %vm1783, %v866, %v1782
    %vm1785 = vcmp.eq.f32.partialorder %v866, 0.0
    %v1786 = vand.u32 %v866, 2147483648
    %v1787 = vsel %vm1785, %v1786, %v1784
    %v1788 = vrsqrt.pop %v869
    %v1789 = vmul.f32 %v1788, %v869
    %v1790 = vmul.f32 %v1789, %v1788
    %v1791 = vmul.f32 0.5, %v1790
    %v1792 = vsub.f32 1.5, %v1791
    %v1793 = vmul.f32 %v1788, %v1792
    %v1794 = vmul.f32 %v869, %v1793
    %vm1795 = vcmp.eq.f32.partialorder %v869, inf
    %v1796 = vsel %vm1795, %v869, %v1794
    %vm1797 = vcmp.eq.f32.partialorder %v869, 0.0
    %v1798 = vand.u32 %v869, 2147483648
    %v1799 = vsel %vm1797, %v1798, %v1796
    %v1800 = vrsqrt.pop %v872
    %v1801 = vmul.f32 %v1800, %v872
    %v1802 = vmul.f32 %v1801, %v1800
    %v1803 = vmul.f32 0.5, %v1802
    %v1804 = vsub.f32 1.5, %v1803
    %v1805 = vmul.f32 %v1800, %v1804
    %v1806 = vmul.f32 %v872, %v1805
    %vm1807 = vcmp.eq.f32.partialorder %v872, inf
    %v1808 = vsel %vm1807, %v872, %v1806
    %vm1809 = vcmp.eq.f32.partialorder %v872, 0.0
    %v1810 = vand.u32 %v872, 2147483648
    %v1811 = vsel %vm1809, %v1810, %v1808
    %v1812 = vrsqrt.pop %v875
    %v1813 = vmul.f32 %v1812, %v875
    %v1814 = vmul.f32 %v1813, %v1812
    %v1815 = vmul.f32 0.5, %v1814
    %v1816 = vsub.f32 1.5, %v1815
    %v1817 = vmul.f32 %v1812, %v1816
    %v1818 = vmul.f32 %v875, %v1817
    %vm1819 = vcmp.eq.f32.partialorder %v875, inf
    %v1820 = vsel %vm1819, %v875, %v1818
    %vm1821 = vcmp.eq.f32.partialorder %v875, 0.0
    %v1822 = vand.u32 %v875, 2147483648
    %v1823 = vsel %vm1821, %v1822, %v1820
    %v1824 = vrsqrt.pop %v878
    %v1825 = vmul.f32 %v1824, %v878
    %v1826 = vmul.f32 %v1825, %v1824
    %v1827 = vmul.f32 0.5, %v1826
    %v1828 = vsub.f32 1.5, %v1827
    %v1829 = vmul.f32 %v1824, %v1828
    %v1830 = vmul.f32 %v878, %v1829
    %vm1831 = vcmp.eq.f32.partialorder %v878, inf
    %v1832 = vsel %vm1831, %v878, %v1830
    %vm1833 = vcmp.eq.f32.partialorder %v878, 0.0
    %v1834 = vand.u32 %v878, 2147483648
    %v1835 = vsel %vm1833, %v1834, %v1832
    %v1836 = vrsqrt.pop %v881
    %v1837 = vmul.f32 %v1836, %v881
    %v1838 = vmul.f32 %v1837, %v1836
    %v1839 = vmul.f32 0.5, %v1838
    %v1840 = vsub.f32 1.5, %v1839
    %v1841 = vmul.f32 %v1836, %v1840
    %v1842 = vmul.f32 %v881, %v1841
    %vm1843 = vcmp.eq.f32.partialorder %v881, inf
    %v1844 = vsel %vm1843, %v881, %v1842
    %vm1845 = vcmp.eq.f32.partialorder %v881, 0.0
    %v1846 = vand.u32 %v881, 2147483648
    %v1847 = vsel %vm1845, %v1846, %v1844
    %v1848 = vrsqrt.pop %v884
    %v1849 = vmul.f32 %v1848, %v884
    %v1850 = vmul.f32 %v1849, %v1848
    %v1851 = vmul.f32 0.5, %v1850
    %v1852 = vsub.f32 1.5, %v1851
    %v1853 = vmul.f32 %v1848, %v1852
    %v1854 = vmul.f32 %v884, %v1853
    %vm1855 = vcmp.eq.f32.partialorder %v884, inf
    %v1856 = vsel %vm1855, %v884, %v1854
    %vm1857 = vcmp.eq.f32.partialorder %v884, 0.0
    %v1858 = vand.u32 %v884, 2147483648
    %v1859 = vsel %vm1857, %v1858, %v1856
    %v1860 = vrsqrt.pop %v887
    %v1861 = vmul.f32 %v1860, %v887
    %v1862 = vmul.f32 %v1861, %v1860
    %v1863 = vmul.f32 0.5, %v1862
    %v1864 = vsub.f32 1.5, %v1863
    %v1865 = vmul.f32 %v1860, %v1864
    %v1866 = vmul.f32 %v887, %v1865
    %vm1867 = vcmp.eq.f32.partialorder %v887, inf
    %v1868 = vsel %vm1867, %v887, %v1866
    %vm1869 = vcmp.eq.f32.partialorder %v887, 0.0
    %v1870 = vand.u32 %v887, 2147483648
    %v1871 = vsel %vm1869, %v1870, %v1868
    %v1872 = vrsqrt.pop %v890
    %v1873 = vmul.f32 %v1872, %v890
    %v1874 = vmul.f32 %v1873, %v1872
    %v1875 = vmul.f32 0.5, %v1874
    %v1876 = vsub.f32 1.5, %v1875
    %v1877 = vmul.f32 %v1872, %v1876
    %v1878 = vmul.f32 %v890, %v1877
    %vm1879 = vcmp.eq.f32.partialorder %v890, inf
    %v1880 = vsel %vm1879, %v890, %v1878
    %vm1881 = vcmp.eq.f32.partialorder %v890, 0.0
    %v1882 = vand.u32 %v890, 2147483648
    %v1883 = vsel %vm1881, %v1882, %v1880
    %v1884 = vrsqrt.pop %v893
    %v1885 = vmul.f32 %v1884, %v893
    %v1886 = vmul.f32 %v1885, %v1884
    %v1887 = vmul.f32 0.5, %v1886
    %v1888 = vsub.f32 1.5, %v1887
    %v1889 = vmul.f32 %v1884, %v1888
    %v1890 = vmul.f32 %v893, %v1889
    %vm1891 = vcmp.eq.f32.partialorder %v893, inf
    %v1892 = vsel %vm1891, %v893, %v1890
    %vm1893 = vcmp.eq.f32.partialorder %v893, 0.0
    %v1894 = vand.u32 %v893, 2147483648
    %v1895 = vsel %vm1893, %v1894, %v1892
    %v1896 = vrsqrt.pop %v896
    %v1897 = vmul.f32 %v1896, %v896
    %v1898 = vmul.f32 %v1897, %v1896
    %v1899 = vmul.f32 0.5, %v1898
    %v1900 = vsub.f32 1.5, %v1899
    %v1901 = vmul.f32 %v1896, %v1900
    %v1902 = vmul.f32 %v896, %v1901
    %vm1903 = vcmp.eq.f32.partialorder %v896, inf
    %v1904 = vsel %vm1903, %v896, %v1902
    %vm1905 = vcmp.eq.f32.partialorder %v896, 0.0
    %v1906 = vand.u32 %v896, 2147483648
    %v1907 = vsel %vm1905, %v1906, %v1904
    %v1908 = vrsqrt.pop %v899
    %v1909 = vmul.f32 %v1908, %v899
    %v1910 = vmul.f32 %v1909, %v1908
    %v1911 = vmul.f32 0.5, %v1910
    %v1912 = vsub.f32 1.5, %v1911
    %v1913 = vmul.f32 %v1908, %v1912
    %v1914 = vmul.f32 %v899, %v1913
    %vm1915 = vcmp.eq.f32.partialorder %v899, inf
    %v1916 = vsel %vm1915, %v899, %v1914
    %vm1917 = vcmp.eq.f32.partialorder %v899, 0.0
    %v1918 = vand.u32 %v899, 2147483648
    %v1919 = vsel %vm1917, %v1918, %v1916
    %v1920 = vrsqrt.pop %v902
    %v1921 = vmul.f32 %v1920, %v902
    %v1922 = vmul.f32 %v1921, %v1920
    %v1923 = vmul.f32 0.5, %v1922
    %v1924 = vsub.f32 1.5, %v1923
    %v1925 = vmul.f32 %v1920, %v1924
    %v1926 = vmul.f32 %v902, %v1925
    %vm1927 = vcmp.eq.f32.partialorder %v902, inf
    %v1928 = vsel %vm1927, %v902, %v1926
    %vm1929 = vcmp.eq.f32.partialorder %v902, 0.0
    %v1930 = vand.u32 %v902, 2147483648
    %v1931 = vsel %vm1929, %v1930, %v1928
    %v1932 = vrsqrt.pop %v905
    %v1933 = vmul.f32 %v1932, %v905
    %v1934 = vmul.f32 %v1933, %v1932
    %v1935 = vmul.f32 0.5, %v1934
    %v1936 = vsub.f32 1.5, %v1935
    %v1937 = vmul.f32 %v1932, %v1936
    %v1938 = vmul.f32 %v905, %v1937
    %vm1939 = vcmp.eq.f32.partialorder %v905, inf
    %v1940 = vsel %vm1939, %v905, %v1938
    %vm1941 = vcmp.eq.f32.partialorder %v905, 0.0
    %v1942 = vand.u32 %v905, 2147483648
    %v1943 = vsel %vm1941, %v1942, %v1940
    %v1944 = vrsqrt.pop %v908
    %v1945 = vmul.f32 %v1944, %v908
    %v1946 = vmul.f32 %v1945, %v1944
    %v1947 = vmul.f32 0.5, %v1946
    %v1948 = vsub.f32 1.5, %v1947
    %v1949 = vmul.f32 %v1944, %v1948
    %v1950 = vmul.f32 %v908, %v1949
    %vm1951 = vcmp.eq.f32.partialorder %v908, inf
    %v1952 = vsel %vm1951, %v908, %v1950
    %vm1953 = vcmp.eq.f32.partialorder %v908, 0.0
    %v1954 = vand.u32 %v908, 2147483648
    %v1955 = vsel %vm1953, %v1954, %v1952
    %v1956 = vrsqrt.pop %v911
    %v1957 = vmul.f32 %v1956, %v911
    %v1958 = vmul.f32 %v1957, %v1956
    %v1959 = vmul.f32 0.5, %v1958
    %v1960 = vsub.f32 1.5, %v1959
    %v1961 = vmul.f32 %v1956, %v1960
    %v1962 = vmul.f32 %v911, %v1961
    %vm1963 = vcmp.eq.f32.partialorder %v911, inf
    %v1964 = vsel %vm1963, %v911, %v1962
    %vm1965 = vcmp.eq.f32.partialorder %v911, 0.0
    %v1966 = vand.u32 %v911, 2147483648
    %v1967 = vsel %vm1965, %v1966, %v1964
    %v1968 = vrsqrt.pop %v914
    %v1969 = vmul.f32 %v1968, %v914
    %v1970 = vmul.f32 %v1969, %v1968
    %v1971 = vmul.f32 0.5, %v1970
    %v1972 = vsub.f32 1.5, %v1971
    %v1973 = vmul.f32 %v1968, %v1972
    %v1974 = vmul.f32 %v914, %v1973
    %vm1975 = vcmp.eq.f32.partialorder %v914, inf
    %v1976 = vsel %vm1975, %v914, %v1974
    %vm1977 = vcmp.eq.f32.partialorder %v914, 0.0
    %v1978 = vand.u32 %v914, 2147483648
    %v1979 = vsel %vm1977, %v1978, %v1976
    %v1980 = vrsqrt.pop %v917
    %v1981 = vmul.f32 %v1980, %v917
    %v1982 = vmul.f32 %v1981, %v1980
    %v1983 = vmul.f32 0.5, %v1982
    %v1984 = vsub.f32 1.5, %v1983
    %v1985 = vmul.f32 %v1980, %v1984
    %v1986 = vmul.f32 %v917, %v1985
    %vm1987 = vcmp.eq.f32.partialorder %v917, inf
    %v1988 = vsel %vm1987, %v917, %v1986
    %vm1989 = vcmp.eq.f32.partialorder %v917, 0.0
    %v1990 = vand.u32 %v917, 2147483648
    %v1991 = vsel %vm1989, %v1990, %v1988
    %v1992 = vrsqrt.pop %v920
    %v1993 = vmul.f32 %v1992, %v920
    %v1994 = vmul.f32 %v1993, %v1992
    %v1995 = vmul.f32 0.5, %v1994
    %v1996 = vsub.f32 1.5, %v1995
    %v1997 = vmul.f32 %v1992, %v1996
    %v1998 = vmul.f32 %v920, %v1997
    %vm1999 = vcmp.eq.f32.partialorder %v920, inf
    %v2000 = vsel %vm1999, %v920, %v1998
    %vm2001 = vcmp.eq.f32.partialorder %v920, 0.0
    %v2002 = vand.u32 %v920, 2147483648
    %v2003 = vsel %vm2001, %v2002, %v2000
    %v2004 = vrsqrt.pop %v923
    %v2005 = vmul.f32 %v2004, %v923
    %v2006 = vmul.f32 %v2005, %v2004
    %v2007 = vmul.f32 0.5, %v2006
    %v2008 = vsub.f32 1.5, %v2007
    %v2009 = vmul.f32 %v2004, %v2008
    %v2010 = vmul.f32 %v923, %v2009
    %vm2011 = vcmp.eq.f32.partialorder %v923, inf
    %v2012 = vsel %vm2011, %v923, %v2010
    %vm2013 = vcmp.eq.f32.partialorder %v923, 0.0
    %v2014 = vand.u32 %v923, 2147483648
    %v2015 = vsel %vm2013, %v2014, %v2012
    %v2016 = vrsqrt.pop %v926
    %v2017 = vmul.f32 %v2016, %v926
    %v2018 = vmul.f32 %v2017, %v2016
    %v2019 = vmul.f32 0.5, %v2018
    %v2020 = vsub.f32 1.5, %v2019
    %v2021 = vmul.f32 %v2016, %v2020
    %v2022 = vmul.f32 %v926, %v2021
    %vm2023 = vcmp.eq.f32.partialorder %v926, inf
    %v2024 = vsel %vm2023, %v926, %v2022
    %vm2025 = vcmp.eq.f32.partialorder %v926, 0.0
    %v2026 = vand.u32 %v926, 2147483648
    %v2027 = vsel %vm2025, %v2026, %v2024
    %v2028 = vrsqrt.pop %v929
    %v2029 = vmul.f32 %v2028, %v929
    %v2030 = vmul.f32 %v2029, %v2028
    %v2031 = vmul.f32 0.5, %v2030
    %v2032 = vsub.f32 1.5, %v2031
    %v2033 = vmul.f32 %v2028, %v2032
    %v2034 = vmul.f32 %v929, %v2033
    %vm2035 = vcmp.eq.f32.partialorder %v929, inf
    %v2036 = vsel %vm2035, %v929, %v2034
    %vm2037 = vcmp.eq.f32.partialorder %v929, 0.0
    %v2038 = vand.u32 %v929, 2147483648
    %v2039 = vsel %vm2037, %v2038, %v2036
    %v2040 = vrsqrt.pop %v932
    %v2041 = vmul.f32 %v2040, %v932
    %v2042 = vmul.f32 %v2041, %v2040
    %v2043 = vmul.f32 0.5, %v2042
    %v2044 = vsub.f32 1.5, %v2043
    %v2045 = vmul.f32 %v2040, %v2044
    %v2046 = vmul.f32 %v932, %v2045
    %vm2047 = vcmp.eq.f32.partialorder %v932, inf
    %v2048 = vsel %vm2047, %v932, %v2046
    %vm2049 = vcmp.eq.f32.partialorder %v932, 0.0
    %v2050 = vand.u32 %v932, 2147483648
    %v2051 = vsel %vm2049, %v2050, %v2048
    %v2052 = vrsqrt.pop %v935
    %v2053 = vmul.f32 %v2052, %v935
    %v2054 = vmul.f32 %v2053, %v2052
    %v2055 = vmul.f32 0.5, %v2054
    %v2056 = vsub.f32 1.5, %v2055
    %v2057 = vmul.f32 %v2052, %v2056
    %v2058 = vmul.f32 %v935, %v2057
    %vm2059 = vcmp.eq.f32.partialorder %v935, inf
    %v2060 = vsel %vm2059, %v935, %v2058
    %vm2061 = vcmp.eq.f32.partialorder %v935, 0.0
    %v2062 = vand.u32 %v935, 2147483648
    %v2063 = vsel %vm2061, %v2062, %v2060
    %v2064 = vrsqrt.pop %v938
    %v2065 = vmul.f32 %v2064, %v938
    %v2066 = vmul.f32 %v2065, %v2064
    %v2067 = vmul.f32 0.5, %v2066
    %v2068 = vsub.f32 1.5, %v2067
    %v2069 = vmul.f32 %v2064, %v2068
    %v2070 = vmul.f32 %v938, %v2069
    %vm2071 = vcmp.eq.f32.partialorder %v938, inf
    %v2072 = vsel %vm2071, %v938, %v2070
    %vm2073 = vcmp.eq.f32.partialorder %v938, 0.0
    %v2074 = vand.u32 %v938, 2147483648
    %v2075 = vsel %vm2073, %v2074, %v2072
    %v2076 = vrsqrt.pop %v941
    %v2077 = vmul.f32 %v2076, %v941
    %v2078 = vmul.f32 %v2077, %v2076
    %v2079 = vmul.f32 0.5, %v2078
    %v2080 = vsub.f32 1.5, %v2079
    %v2081 = vmul.f32 %v2076, %v2080
    %v2082 = vmul.f32 %v941, %v2081
    %vm2083 = vcmp.eq.f32.partialorder %v941, inf
    %v2084 = vsel %vm2083, %v941, %v2082
    %vm2085 = vcmp.eq.f32.partialorder %v941, 0.0
    %v2086 = vand.u32 %v941, 2147483648
    %v2087 = vsel %vm2085, %v2086, %v2084
    %v2088 = vrsqrt.pop %v944
    %v2089 = vmul.f32 %v2088, %v944
    %v2090 = vmul.f32 %v2089, %v2088
    %v2091 = vmul.f32 0.5, %v2090
    %v2092 = vsub.f32 1.5, %v2091
    %v2093 = vmul.f32 %v2088, %v2092
    %v2094 = vmul.f32 %v944, %v2093
    %vm2095 = vcmp.eq.f32.partialorder %v944, inf
    %v2096 = vsel %vm2095, %v944, %v2094
    %vm2097 = vcmp.eq.f32.partialorder %v944, 0.0
    %v2098 = vand.u32 %v944, 2147483648
    %v2099 = vsel %vm2097, %v2098, %v2096
    %v2100 = vrsqrt.pop %v947
    %v2101 = vmul.f32 %v2100, %v947
    %v2102 = vmul.f32 %v2101, %v2100
    %v2103 = vmul.f32 0.5, %v2102
    %v2104 = vsub.f32 1.5, %v2103
    %v2105 = vmul.f32 %v2100, %v2104
    %v2106 = vmul.f32 %v947, %v2105
    %vm2107 = vcmp.eq.f32.partialorder %v947, inf
    %v2108 = vsel %vm2107, %v947, %v2106
    %vm2109 = vcmp.eq.f32.partialorder %v947, 0.0
    %v2110 = vand.u32 %v947, 2147483648
    %v2111 = vsel %vm2109, %v2110, %v2108
    %v2112 = vrsqrt.pop %v950
    %v2113 = vmul.f32 %v2112, %v950
    %v2114 = vmul.f32 %v2113, %v2112
    %v2115 = vmul.f32 0.5, %v2114
    %v2116 = vsub.f32 1.5, %v2115
    %v2117 = vmul.f32 %v2112, %v2116
    %v2118 = vmul.f32 %v950, %v2117
    %vm2119 = vcmp.eq.f32.partialorder %v950, inf
    %v2120 = vsel %vm2119, %v950, %v2118
    %vm2121 = vcmp.eq.f32.partialorder %v950, 0.0
    %v2122 = vand.u32 %v950, 2147483648
    %v2123 = vsel %vm2121, %v2122, %v2120
    %v2124 = vrsqrt.pop %v953
    %v2125 = vmul.f32 %v2124, %v953
    %v2126 = vmul.f32 %v2125, %v2124
    %v2127 = vmul.f32 0.5, %v2126
    %v2128 = vsub.f32 1.5, %v2127
    %v2129 = vmul.f32 %v2124, %v2128
    %v2130 = vmul.f32 %v953, %v2129
    %vm2131 = vcmp.eq.f32.partialorder %v953, inf
    %v2132 = vsel %vm2131, %v953, %v2130
    %vm2133 = vcmp.eq.f32.partialorder %v953, 0.0
    %v2134 = vand.u32 %v953, 2147483648
    %v2135 = vsel %vm2133, %v2134, %v2132
    %v2136 = vrsqrt.pop %v956
    %v2137 = vmul.f32 %v2136, %v956
    %v2138 = vmul.f32 %v2137, %v2136
    %v2139 = vmul.f32 0.5, %v2138
    %v2140 = vsub.f32 1.5, %v2139
    %v2141 = vmul.f32 %v2136, %v2140
    %v2142 = vmul.f32 %v956, %v2141
    %vm2143 = vcmp.eq.f32.partialorder %v956, inf
    %v2144 = vsel %vm2143, %v956, %v2142
    %vm2145 = vcmp.eq.f32.partialorder %v956, 0.0
    %v2146 = vand.u32 %v956, 2147483648
    %v2147 = vsel %vm2145, %v2146, %v2144
    %v2148 = vrsqrt.pop %v959
    %v2149 = vmul.f32 %v2148, %v959
    %v2150 = vmul.f32 %v2149, %v2148
    %v2151 = vmul.f32 0.5, %v2150
    %v2152 = vsub.f32 1.5, %v2151
    %v2153 = vmul.f32 %v2148, %v2152
    %v2154 = vmul.f32 %v959, %v2153
    %vm2155 = vcmp.eq.f32.partialorder %v959, inf
    %v2156 = vsel %vm2155, %v959, %v2154
    %vm2157 = vcmp.eq.f32.partialorder %v959, 0.0
    %v2158 = vand.u32 %v959, 2147483648
    %v2159 = vsel %vm2157, %v2158, %v2156
    %v2160 = vrsqrt.pop %v962
    %v2161 = vmul.f32 %v2160, %v962
    %v2162 = vmul.f32 %v2161, %v2160
    %v2163 = vmul.f32 0.5, %v2162
    %v2164 = vsub.f32 1.5, %v2163
    %v2165 = vmul.f32 %v2160, %v2164
    %v2166 = vmul.f32 %v962, %v2165
    %vm2167 = vcmp.eq.f32.partialorder %v962, inf
    %v2168 = vsel %vm2167, %v962, %v2166
    %vm2169 = vcmp.eq.f32.partialorder %v962, 0.0
    %v2170 = vand.u32 %v962, 2147483648
    %v2171 = vsel %vm2169, %v2170, %v2168
    %v2172 = vrsqrt.pop %v965
    %v2173 = vmul.f32 %v2172, %v965
    %v2174 = vmul.f32 %v2173, %v2172
    %v2175 = vmul.f32 0.5, %v2174
    %v2176 = vsub.f32 1.5, %v2175
    %v2177 = vmul.f32 %v2172, %v2176
    %v2178 = vmul.f32 %v965, %v2177
    %vm2179 = vcmp.eq.f32.partialorder %v965, inf
    %v2180 = vsel %vm2179, %v965, %v2178
    %vm2181 = vcmp.eq.f32.partialorder %v965, 0.0
    %v2182 = vand.u32 %v965, 2147483648
    %v2183 = vsel %vm2181, %v2182, %v2180
    %v2184 = vrsqrt.pop %v968
    %v2185 = vmul.f32 %v2184, %v968
    %v2186 = vmul.f32 %v2185, %v2184
    %v2187 = vmul.f32 0.5, %v2186
    %v2188 = vsub.f32 1.5, %v2187
    %v2189 = vmul.f32 %v2184, %v2188
    %v2190 = vmul.f32 %v968, %v2189
    %vm2191 = vcmp.eq.f32.partialorder %v968, inf
    %v2192 = vsel %vm2191, %v968, %v2190
    %vm2193 = vcmp.eq.f32.partialorder %v968, 0.0
    %v2194 = vand.u32 %v968, 2147483648
    %v2195 = vsel %vm2193, %v2194, %v2192
    %v2196 = vrsqrt.pop %v971
    %v2197 = vmul.f32 %v2196, %v971
    %v2198 = vmul.f32 %v2197, %v2196
    %v2199 = vmul.f32 0.5, %v2198
    %v2200 = vsub.f32 1.5, %v2199
    %v2201 = vmul.f32 %v2196, %v2200
    %v2202 = vmul.f32 %v971, %v2201
    %vm2203 = vcmp.eq.f32.partialorder %v971, inf
    %v2204 = vsel %vm2203, %v971, %v2202
    %vm2205 = vcmp.eq.f32.partialorder %v971, 0.0
    %v2206 = vand.u32 %v971, 2147483648
    %v2207 = vsel %vm2205, %v2206, %v2204
    %v2208 = vrsqrt.pop %v974
    %v2209 = vmul.f32 %v2208, %v974
    %v2210 = vmul.f32 %v2209, %v2208
    %v2211 = vmul.f32 0.5, %v2210
    %v2212 = vsub.f32 1.5, %v2211
    %v2213 = vmul.f32 %v2208, %v2212
    %v2214 = vmul.f32 %v974, %v2213
    %vm2215 = vcmp.eq.f32.partialorder %v974, inf
    %v2216 = vsel %vm2215, %v974, %v2214
    %vm2217 = vcmp.eq.f32.partialorder %v974, 0.0
    %v2218 = vand.u32 %v974, 2147483648
    %v2219 = vsel %vm2217, %v2218, %v2216
    %v2220 = vrsqrt.pop %v977
    %v2221 = vmul.f32 %v2220, %v977
    %v2222 = vmul.f32 %v2221, %v2220
    %v2223 = vmul.f32 0.5, %v2222
    %v2224 = vsub.f32 1.5, %v2223
    %v2225 = vmul.f32 %v2220, %v2224
    %v2226 = vmul.f32 %v977, %v2225
    %vm2227 = vcmp.eq.f32.partialorder %v977, inf
    %v2228 = vsel %vm2227, %v977, %v2226
    %vm2229 = vcmp.eq.f32.partialorder %v977, 0.0
    %v2230 = vand.u32 %v977, 2147483648
    %v2231 = vsel %vm2229, %v2230, %v2228
    %v2232 = vrsqrt.pop %v980
    %v2233 = vmul.f32 %v2232, %v980
    %v2234 = vmul.f32 %v2233, %v2232
    %v2235 = vmul.f32 0.5, %v2234
    %v2236 = vsub.f32 1.5, %v2235
    %v2237 = vmul.f32 %v2232, %v2236
    %v2238 = vmul.f32 %v980, %v2237
    %vm2239 = vcmp.eq.f32.partialorder %v980, inf
    %v2240 = vsel %vm2239, %v980, %v2238
    %vm2241 = vcmp.eq.f32.partialorder %v980, 0.0
    %v2242 = vand.u32 %v980, 2147483648
    %v2243 = vsel %vm2241, %v2242, %v2240
    %v2244 = vrsqrt.pop %v983
    %v2245 = vmul.f32 %v2244, %v983
    %v2246 = vmul.f32 %v2245, %v2244
    %v2247 = vmul.f32 0.5, %v2246
    %v2248 = vsub.f32 1.5, %v2247
    %v2249 = vmul.f32 %v2244, %v2248
    %v2250 = vmul.f32 %v983, %v2249
    %vm2251 = vcmp.eq.f32.partialorder %v983, inf
    %v2252 = vsel %vm2251, %v983, %v2250
    %vm2253 = vcmp.eq.f32.partialorder %v983, 0.0
    %v2254 = vand.u32 %v983, 2147483648
    %v2255 = vsel %vm2253, %v2254, %v2252
    %v2256 = vrsqrt.pop %v986
    %v2257 = vmul.f32 %v2256, %v986
    %v2258 = vmul.f32 %v2257, %v2256
    %v2259 = vmul.f32 0.5, %v2258
    %v2260 = vsub.f32 1.5, %v2259
    %v2261 = vmul.f32 %v2256, %v2260
    %v2262 = vmul.f32 %v986, %v2261
    %vm2263 = vcmp.eq.f32.partialorder %v986, inf
    %v2264 = vsel %vm2263, %v986, %v2262
    %vm2265 = vcmp.eq.f32.partialorder %v986, 0.0
    %v2266 = vand.u32 %v986, 2147483648
    %v2267 = vsel %vm2265, %v2266, %v2264
    %v2268 = vrsqrt.pop %v989
    %v2269 = vmul.f32 %v2268, %v989
    %v2270 = vmul.f32 %v2269, %v2268
    %v2271 = vmul.f32 0.5, %v2270
    %v2272 = vsub.f32 1.5, %v2271
    %v2273 = vmul.f32 %v2268, %v2272
    %v2274 = vmul.f32 %v989, %v2273
    %vm2275 = vcmp.eq.f32.partialorder %v989, inf
    %v2276 = vsel %vm2275, %v989, %v2274
    %vm2277 = vcmp.eq.f32.partialorder %v989, 0.0
    %v2278 = vand.u32 %v989, 2147483648
    %v2279 = vsel %vm2277, %v2278, %v2276
    %v2280 = vrsqrt.pop %v992
    %v2281 = vmul.f32 %v2280, %v992
    %v2282 = vmul.f32 %v2281, %v2280
    %v2283 = vmul.f32 0.5, %v2282
    %v2284 = vsub.f32 1.5, %v2283
    %v2285 = vmul.f32 %v2280, %v2284
    %v2286 = vmul.f32 %v992, %v2285
    %vm2287 = vcmp.eq.f32.partialorder %v992, inf
    %v2288 = vsel %vm2287, %v992, %v2286
    %vm2289 = vcmp.eq.f32.partialorder %v992, 0.0
    %v2290 = vand.u32 %v992, 2147483648
    %v2291 = vsel %vm2289, %v2290, %v2288
    %v2292 = vrsqrt.pop %v995
    %v2293 = vmul.f32 %v2292, %v995
    %v2294 = vmul.f32 %v2293, %v2292
    %v2295 = vmul.f32 0.5, %v2294
    %v2296 = vsub.f32 1.5, %v2295
    %v2297 = vmul.f32 %v2292, %v2296
    %v2298 = vmul.f32 %v995, %v2297
    %vm2299 = vcmp.eq.f32.partialorder %v995, inf
    %v2300 = vsel %vm2299, %v995, %v2298
    %vm2301 = vcmp.eq.f32.partialorder %v995, 0.0
    %v2302 = vand.u32 %v995, 2147483648
    %v2303 = vsel %vm2301, %v2302, %v2300
    %v2304 = vrsqrt.pop %v998
    %v2305 = vmul.f32 %v2304, %v998
    %v2306 = vmul.f32 %v2305, %v2304
    %v2307 = vmul.f32 0.5, %v2306
    %v2308 = vsub.f32 1.5, %v2307
    %v2309 = vmul.f32 %v2304, %v2308
    %v2310 = vmul.f32 %v998, %v2309
    %vm2311 = vcmp.eq.f32.partialorder %v998, inf
    %v2312 = vsel %vm2311, %v998, %v2310
    %vm2313 = vcmp.eq.f32.partialorder %v998, 0.0
    %v2314 = vand.u32 %v998, 2147483648
    %v2315 = vsel %vm2313, %v2314, %v2312
    %v2316 = vrsqrt.pop %v1001
    %v2317 = vmul.f32 %v2316, %v1001
    %v2318 = vmul.f32 %v2317, %v2316
    %v2319 = vmul.f32 0.5, %v2318
    %v2320 = vsub.f32 1.5, %v2319
    %v2321 = vmul.f32 %v2316, %v2320
    %v2322 = vmul.f32 %v1001, %v2321
    %vm2323 = vcmp.eq.f32.partialorder %v1001, inf
    %v2324 = vsel %vm2323, %v1001, %v2322
    %vm2325 = vcmp.eq.f32.partialorder %v1001, 0.0
    %v2326 = vand.u32 %v1001, 2147483648
    %v2327 = vsel %vm2325, %v2326, %v2324
    %v2328 = vrsqrt.pop %v1004
    %v2329 = vmul.f32 %v2328, %v1004
    %v2330 = vmul.f32 %v2329, %v2328
    %v2331 = vmul.f32 0.5, %v2330
    %v2332 = vsub.f32 1.5, %v2331
    %v2333 = vmul.f32 %v2328, %v2332
    %v2334 = vmul.f32 %v1004, %v2333
    %vm2335 = vcmp.eq.f32.partialorder %v1004, inf
    %v2336 = vsel %vm2335, %v1004, %v2334
    %vm2337 = vcmp.eq.f32.partialorder %v1004, 0.0
    %v2338 = vand.u32 %v1004, 2147483648
    %v2339 = vsel %vm2337, %v2338, %v2336
    %v2340 = vrsqrt.pop %v1007
    %v2341 = vmul.f32 %v2340, %v1007
    %v2342 = vmul.f32 %v2341, %v2340
    %v2343 = vmul.f32 0.5, %v2342
    %v2344 = vsub.f32 1.5, %v2343
    %v2345 = vmul.f32 %v2340, %v2344
    %v2346 = vmul.f32 %v1007, %v2345
    %vm2347 = vcmp.eq.f32.partialorder %v1007, inf
    %v2348 = vsel %vm2347, %v1007, %v2346
    %vm2349 = vcmp.eq.f32.partialorder %v1007, 0.0
    %v2350 = vand.u32 %v1007, 2147483648
    %v2351 = vsel %vm2349, %v2350, %v2348
    %v2352 = vrsqrt.pop %v1010
    %v2353 = vmul.f32 %v2352, %v1010
    %v2354 = vmul.f32 %v2353, %v2352
    %v2355 = vmul.f32 0.5, %v2354
    %v2356 = vsub.f32 1.5, %v2355
    %v2357 = vmul.f32 %v2352, %v2356
    %v2358 = vmul.f32 %v1010, %v2357
    %vm2359 = vcmp.eq.f32.partialorder %v1010, inf
    %v2360 = vsel %vm2359, %v1010, %v2358
    %vm2361 = vcmp.eq.f32.partialorder %v1010, 0.0
    %v2362 = vand.u32 %v1010, 2147483648
    %v2363 = vsel %vm2361, %v2362, %v2360
    %v2364 = vrsqrt.pop %v1013
    %v2365 = vmul.f32 %v2364, %v1013
    %v2366 = vmul.f32 %v2365, %v2364
    %v2367 = vmul.f32 0.5, %v2366
    %v2368 = vsub.f32 1.5, %v2367
    %v2369 = vmul.f32 %v2364, %v2368
    %v2370 = vmul.f32 %v1013, %v2369
    %vm2371 = vcmp.eq.f32.partialorder %v1013, inf
    %v2372 = vsel %vm2371, %v1013, %v2370
    %vm2373 = vcmp.eq.f32.partialorder %v1013, 0.0
    %v2374 = vand.u32 %v1013, 2147483648
    %v2375 = vsel %vm2373, %v2374, %v2372
    %v2376 = vrsqrt.pop %v1016
    %v2377 = vmul.f32 %v2376, %v1016
    %v2378 = vmul.f32 %v2377, %v2376
    %v2379 = vmul.f32 0.5, %v2378
    %v2380 = vsub.f32 1.5, %v2379
    %v2381 = vmul.f32 %v2376, %v2380
    %v2382 = vmul.f32 %v1016, %v2381
    %vm2383 = vcmp.eq.f32.partialorder %v1016, inf
    %v2384 = vsel %vm2383, %v1016, %v2382
    %vm2385 = vcmp.eq.f32.partialorder %v1016, 0.0
    %v2386 = vand.u32 %v1016, 2147483648
    %v2387 = vsel %vm2385, %v2386, %v2384
    %v2388 = vrsqrt.pop %v1019
    %v2389 = vmul.f32 %v2388, %v1019
    %v2390 = vmul.f32 %v2389, %v2388
    %v2391 = vmul.f32 0.5, %v2390
    %v2392 = vsub.f32 1.5, %v2391
    %v2393 = vmul.f32 %v2388, %v2392
    %v2394 = vmul.f32 %v1019, %v2393
    %vm2395 = vcmp.eq.f32.partialorder %v1019, inf
    %v2396 = vsel %vm2395, %v1019, %v2394
    %vm2397 = vcmp.eq.f32.partialorder %v1019, 0.0
    %v2398 = vand.u32 %v1019, 2147483648
    %v2399 = vsel %vm2397, %v2398, %v2396
    %v2400 = vrsqrt.pop %v1022
    %v2401 = vmul.f32 %v2400, %v1022
    %v2402 = vmul.f32 %v2401, %v2400
    %v2403 = vmul.f32 0.5, %v2402
    %v2404 = vsub.f32 1.5, %v2403
    %v2405 = vmul.f32 %v2400, %v2404
    %v2406 = vmul.f32 %v1022, %v2405
    %vm2407 = vcmp.eq.f32.partialorder %v1022, inf
    %v2408 = vsel %vm2407, %v1022, %v2406
    %vm2409 = vcmp.eq.f32.partialorder %v1022, 0.0
    %v2410 = vand.u32 %v1022, 2147483648
    %v2411 = vsel %vm2409, %v2410, %v2408
    %v2412 = vrsqrt.pop %v1025
    %v2413 = vmul.f32 %v2412, %v1025
    %v2414 = vmul.f32 %v2413, %v2412
    %v2415 = vmul.f32 0.5, %v2414
    %v2416 = vsub.f32 1.5, %v2415
    %v2417 = vmul.f32 %v2412, %v2416
    %v2418 = vmul.f32 %v1025, %v2417
    %vm2419 = vcmp.eq.f32.partialorder %v1025, inf
    %v2420 = vsel %vm2419, %v1025, %v2418
    %vm2421 = vcmp.eq.f32.partialorder %v1025, 0.0
    %v2422 = vand.u32 %v1025, 2147483648
    %v2423 = vsel %vm2421, %v2422, %v2420
    %v2424 = vrsqrt.pop %v1028
    %v2425 = vmul.f32 %v2424, %v1028
    %v2426 = vmul.f32 %v2425, %v2424
    %v2427 = vmul.f32 0.5, %v2426
    %v2428 = vsub.f32 1.5, %v2427
    %v2429 = vmul.f32 %v2424, %v2428
    %v2430 = vmul.f32 %v1028, %v2429
    %vm2431 = vcmp.eq.f32.partialorder %v1028, inf
    %v2432 = vsel %vm2431, %v1028, %v2430
    %vm2433 = vcmp.eq.f32.partialorder %v1028, 0.0
    %v2434 = vand.u32 %v1028, 2147483648
    %v2435 = vsel %vm2433, %v2434, %v2432
    %v2436 = vrsqrt.pop %v1031
    %v2437 = vmul.f32 %v2436, %v1031
    %v2438 = vmul.f32 %v2437, %v2436
    %v2439 = vmul.f32 0.5, %v2438
    %v2440 = vsub.f32 1.5, %v2439
    %v2441 = vmul.f32 %v2436, %v2440
    %v2442 = vmul.f32 %v1031, %v2441
    %vm2443 = vcmp.eq.f32.partialorder %v1031, inf
    %v2444 = vsel %vm2443, %v1031, %v2442
    %vm2445 = vcmp.eq.f32.partialorder %v1031, 0.0
    %v2446 = vand.u32 %v1031, 2147483648
    %v2447 = vsel %vm2445, %v2446, %v2444
    %v2448 = vrsqrt.pop %v1034
    %v2449 = vmul.f32 %v2448, %v1034
    %v2450 = vmul.f32 %v2449, %v2448
    %v2451 = vmul.f32 0.5, %v2450
    %v2452 = vsub.f32 1.5, %v2451
    %v2453 = vmul.f32 %v2448, %v2452
    %v2454 = vmul.f32 %v1034, %v2453
    %vm2455 = vcmp.eq.f32.partialorder %v1034, inf
    %v2456 = vsel %vm2455, %v1034, %v2454
    %vm2457 = vcmp.eq.f32.partialorder %v1034, 0.0
    %v2458 = vand.u32 %v1034, 2147483648
    %v2459 = vsel %vm2457, %v2458, %v2456
    %v2460 = vrsqrt.pop %v1037
    %v2461 = vmul.f32 %v2460, %v1037
    %v2462 = vmul.f32 %v2461, %v2460
    %v2463 = vmul.f32 0.5, %v2462
    %v2464 = vsub.f32 1.5, %v2463
    %v2465 = vmul.f32 %v2460, %v2464
    %v2466 = vmul.f32 %v1037, %v2465
    %vm2467 = vcmp.eq.f32.partialorder %v1037, inf
    %v2468 = vsel %vm2467, %v1037, %v2466
    %vm2469 = vcmp.eq.f32.partialorder %v1037, 0.0
    %v2470 = vand.u32 %v1037, 2147483648
    %v2471 = vsel %vm2469, %v2470, %v2468
    %v2472 = vrsqrt.pop %v1040
    %v2473 = vmul.f32 %v2472, %v1040
    %v2474 = vmul.f32 %v2473, %v2472
    %v2475 = vmul.f32 0.5, %v2474
    %v2476 = vsub.f32 1.5, %v2475
    %v2477 = vmul.f32 %v2472, %v2476
    %v2478 = vmul.f32 %v1040, %v2477
    %vm2479 = vcmp.eq.f32.partialorder %v1040, inf
    %v2480 = vsel %vm2479, %v1040, %v2478
    %vm2481 = vcmp.eq.f32.partialorder %v1040, 0.0
    %v2482 = vand.u32 %v1040, 2147483648
    %v2483 = vsel %vm2481, %v2482, %v2480
    %v2484 = vrsqrt.pop %v1043
    %v2485 = vmul.f32 %v2484, %v1043
    %v2486 = vmul.f32 %v2485, %v2484
    %v2487 = vmul.f32 0.5, %v2486
    %v2488 = vsub.f32 1.5, %v2487
    %v2489 = vmul.f32 %v2484, %v2488
    %v2490 = vmul.f32 %v1043, %v2489
    %vm2491 = vcmp.eq.f32.partialorder %v1043, inf
    %v2492 = vsel %vm2491, %v1043, %v2490
    %vm2493 = vcmp.eq.f32.partialorder %v1043, 0.0
    %v2494 = vand.u32 %v1043, 2147483648
    %v2495 = vsel %vm2493, %v2494, %v2492
    %v2496 = vrsqrt.pop %v1046
    %v2497 = vmul.f32 %v2496, %v1046
    %v2498 = vmul.f32 %v2497, %v2496
    %v2499 = vmul.f32 0.5, %v2498
    %v2500 = vsub.f32 1.5, %v2499
    %v2501 = vmul.f32 %v2496, %v2500
    %v2502 = vmul.f32 %v1046, %v2501
    %vm2503 = vcmp.eq.f32.partialorder %v1046, inf
    %v2504 = vsel %vm2503, %v1046, %v2502
    %vm2505 = vcmp.eq.f32.partialorder %v1046, 0.0
    %v2506 = vand.u32 %v1046, 2147483648
    %v2507 = vsel %vm2505, %v2506, %v2504
    %v2508 = vrsqrt.pop %v1049
    %v2509 = vmul.f32 %v2508, %v1049
    %v2510 = vmul.f32 %v2509, %v2508
    %v2511 = vmul.f32 0.5, %v2510
    %v2512 = vsub.f32 1.5, %v2511
    %v2513 = vmul.f32 %v2508, %v2512
    %v2514 = vmul.f32 %v1049, %v2513
    %vm2515 = vcmp.eq.f32.partialorder %v1049, inf
    %v2516 = vsel %vm2515, %v1049, %v2514
    %vm2517 = vcmp.eq.f32.partialorder %v1049, 0.0
    %v2518 = vand.u32 %v1049, 2147483648
    %v2519 = vsel %vm2517, %v2518, %v2516
    %v2520 = vrsqrt.pop %v1052
    %v2521 = vmul.f32 %v2520, %v1052
    %v2522 = vmul.f32 %v2521, %v2520
    %v2523 = vmul.f32 0.5, %v2522
    %v2524 = vsub.f32 1.5, %v2523
    %v2525 = vmul.f32 %v2520, %v2524
    %v2526 = vmul.f32 %v1052, %v2525
    %vm2527 = vcmp.eq.f32.partialorder %v1052, inf
    %v2528 = vsel %vm2527, %v1052, %v2526
    %vm2529 = vcmp.eq.f32.partialorder %v1052, 0.0
    %v2530 = vand.u32 %v1052, 2147483648
    %v2531 = vsel %vm2529, %v2530, %v2528
    %v2532 = vrsqrt.pop %v1055
    %v2533 = vmul.f32 %v2532, %v1055
    %v2534 = vmul.f32 %v2533, %v2532
    %v2535 = vmul.f32 0.5, %v2534
    %v2536 = vsub.f32 1.5, %v2535
    %v2537 = vmul.f32 %v2532, %v2536
    %v2538 = vmul.f32 %v1055, %v2537
    %vm2539 = vcmp.eq.f32.partialorder %v1055, inf
    %v2540 = vsel %vm2539, %v1055, %v2538
    %vm2541 = vcmp.eq.f32.partialorder %v1055, 0.0
    %v2542 = vand.u32 %v1055, 2147483648
    %v2543 = vsel %vm2541, %v2542, %v2540
    %v2544 = vrsqrt.pop %v1058
    %v2545 = vmul.f32 %v2544, %v1058
    %v2546 = vmul.f32 %v2545, %v2544
    %v2547 = vmul.f32 0.5, %v2546
    %v2548 = vsub.f32 1.5, %v2547
    %v2549 = vmul.f32 %v2544, %v2548
    %v2550 = vmul.f32 %v1058, %v2549
    %vm2551 = vcmp.eq.f32.partialorder %v1058, inf
    %v2552 = vsel %vm2551, %v1058, %v2550
    %vm2553 = vcmp.eq.f32.partialorder %v1058, 0.0
    %v2554 = vand.u32 %v1058, 2147483648
    %v2555 = vsel %vm2553, %v2554, %v2552
    %v2556 = vrsqrt.pop %v1061
    %v2557 = vmul.f32 %v2556, %v1061
    %v2558 = vmul.f32 %v2557, %v2556
    %v2559 = vmul.f32 0.5, %v2558
    %v2560 = vsub.f32 1.5, %v2559
    %v2561 = vmul.f32 %v2556, %v2560
    %v2562 = vmul.f32 %v1061, %v2561
    %vm2563 = vcmp.eq.f32.partialorder %v1061, inf
    %v2564 = vsel %vm2563, %v1061, %v2562
    %vm2565 = vcmp.eq.f32.partialorder %v1061, 0.0
    %v2566 = vand.u32 %v1061, 2147483648
    %v2567 = vsel %vm2565, %v2566, %v2564
    %v2568 = vrsqrt.pop %v1064
    %v2569 = vmul.f32 %v2568, %v1064
    %v2570 = vmul.f32 %v2569, %v2568
    %v2571 = vmul.f32 0.5, %v2570
    %v2572 = vsub.f32 1.5, %v2571
    %v2573 = vmul.f32 %v2568, %v2572
    %v2574 = vmul.f32 %v1064, %v2573
    %vm2575 = vcmp.eq.f32.partialorder %v1064, inf
    %v2576 = vsel %vm2575, %v1064, %v2574
    %vm2577 = vcmp.eq.f32.partialorder %v1064, 0.0
    %v2578 = vand.u32 %v1064, 2147483648
    %v2579 = vsel %vm2577, %v2578, %v2576
    %v2580 = vrsqrt.pop %v1067
    %v2581 = vmul.f32 %v2580, %v1067
    %v2582 = vmul.f32 %v2581, %v2580
    %v2583 = vmul.f32 0.5, %v2582
    %v2584 = vsub.f32 1.5, %v2583
    %v2585 = vmul.f32 %v2580, %v2584
    %v2586 = vmul.f32 %v1067, %v2585
    %vm2587 = vcmp.eq.f32.partialorder %v1067, inf
    %v2588 = vsel %vm2587, %v1067, %v2586
    %vm2589 = vcmp.eq.f32.partialorder %v1067, 0.0
    %v2590 = vand.u32 %v1067, 2147483648
    %v2591 = vsel %vm2589, %v2590, %v2588
    %v2592 = vrsqrt.pop %v1070
    %v2593 = vmul.f32 %v2592, %v1070
    %v2594 = vmul.f32 %v2593, %v2592
    %v2595 = vmul.f32 0.5, %v2594
    %v2596 = vsub.f32 1.5, %v2595
    %v2597 = vmul.f32 %v2592, %v2596
    %v2598 = vmul.f32 %v1070, %v2597
    %vm2599 = vcmp.eq.f32.partialorder %v1070, inf
    %v2600 = vsel %vm2599, %v1070, %v2598
    %vm2601 = vcmp.eq.f32.partialorder %v1070, 0.0
    %v2602 = vand.u32 %v1070, 2147483648
    %v2603 = vsel %vm2601, %v2602, %v2600
    %v2604 = vrsqrt.pop %v1073
    %v2605 = vmul.f32 %v2604, %v1073
    %v2606 = vmul.f32 %v2605, %v2604
    %v2607 = vmul.f32 0.5, %v2606
    %v2608 = vsub.f32 1.5, %v2607
    %v2609 = vmul.f32 %v2604, %v2608
    %v2610 = vmul.f32 %v1073, %v2609
    %vm2611 = vcmp.eq.f32.partialorder %v1073, inf
    %v2612 = vsel %vm2611, %v1073, %v2610
    %vm2613 = vcmp.eq.f32.partialorder %v1073, 0.0
    %v2614 = vand.u32 %v1073, 2147483648
    %v2615 = vsel %vm2613, %v2614, %v2612
    %v2616 = vrsqrt.pop %v1076
    %v2617 = vmul.f32 %v2616, %v1076
    %v2618 = vmul.f32 %v2617, %v2616
    %v2619 = vmul.f32 0.5, %v2618
    %v2620 = vsub.f32 1.5, %v2619
    %v2621 = vmul.f32 %v2616, %v2620
    %v2622 = vmul.f32 %v1076, %v2621
    %vm2623 = vcmp.eq.f32.partialorder %v1076, inf
    %v2624 = vsel %vm2623, %v1076, %v2622
    %vm2625 = vcmp.eq.f32.partialorder %v1076, 0.0
    %v2626 = vand.u32 %v1076, 2147483648
    %v2627 = vsel %vm2625, %v2626, %v2624
    %v2628 = vrsqrt.pop %v1079
    %v2629 = vmul.f32 %v2628, %v1079
    %v2630 = vmul.f32 %v2629, %v2628
    %v2631 = vmul.f32 0.5, %v2630
    %v2632 = vsub.f32 1.5, %v2631
    %v2633 = vmul.f32 %v2628, %v2632
    %v2634 = vmul.f32 %v1079, %v2633
    %vm2635 = vcmp.eq.f32.partialorder %v1079, inf
    %v2636 = vsel %vm2635, %v1079, %v2634
    %vm2637 = vcmp.eq.f32.partialorder %v1079, 0.0
    %v2638 = vand.u32 %v1079, 2147483648
    %v2639 = vsel %vm2637, %v2638, %v2636
    %v2640 = vrsqrt.pop %v1082
    %v2641 = vmul.f32 %v2640, %v1082
    %v2642 = vmul.f32 %v2641, %v2640
    %v2643 = vmul.f32 0.5, %v2642
    %v2644 = vsub.f32 1.5, %v2643
    %v2645 = vmul.f32 %v2640, %v2644
    %v2646 = vmul.f32 %v1082, %v2645
    %vm2647 = vcmp.eq.f32.partialorder %v1082, inf
    %v2648 = vsel %vm2647, %v1082, %v2646
    %vm2649 = vcmp.eq.f32.partialorder %v1082, 0.0
    %v2650 = vand.u32 %v1082, 2147483648
    %v2651 = vsel %vm2649, %v2650, %v2648
    %v2652 = vrsqrt.pop %v1085
    %v2653 = vmul.f32 %v2652, %v1085
    %v2654 = vmul.f32 %v2653, %v2652
    %v2655 = vmul.f32 0.5, %v2654
    %v2656 = vsub.f32 1.5, %v2655
    %v2657 = vmul.f32 %v2652, %v2656
    %v2658 = vmul.f32 %v1085, %v2657
    %vm2659 = vcmp.eq.f32.partialorder %v1085, inf
    %v2660 = vsel %vm2659, %v1085, %v2658
    %vm2661 = vcmp.eq.f32.partialorder %v1085, 0.0
    %v2662 = vand.u32 %v1085, 2147483648
    %v2663 = vsel %vm2661, %v2662, %v2660
    %v2664 = vrsqrt.pop %v1088
    %v2665 = vmul.f32 %v2664, %v1088
    %v2666 = vmul.f32 %v2665, %v2664
    %v2667 = vmul.f32 0.5, %v2666
    %v2668 = vsub.f32 1.5, %v2667
    %v2669 = vmul.f32 %v2664, %v2668
    %v2670 = vmul.f32 %v1088, %v2669
    %vm2671 = vcmp.eq.f32.partialorder %v1088, inf
    %v2672 = vsel %vm2671, %v1088, %v2670
    %vm2673 = vcmp.eq.f32.partialorder %v1088, 0.0
    %v2674 = vand.u32 %v1088, 2147483648
    %v2675 = vsel %vm2673, %v2674, %v2672
    %v2676 = vrsqrt.pop %v1091
    %v2677 = vmul.f32 %v2676, %v1091
    %v2678 = vmul.f32 %v2677, %v2676
    %v2679 = vmul.f32 0.5, %v2678
    %v2680 = vsub.f32 1.5, %v2679
    %v2681 = vmul.f32 %v2676, %v2680
    %v2682 = vmul.f32 %v1091, %v2681
    %vm2683 = vcmp.eq.f32.partialorder %v1091, inf
    %v2684 = vsel %vm2683, %v1091, %v2682
    %vm2685 = vcmp.eq.f32.partialorder %v1091, 0.0
    %v2686 = vand.u32 %v1091, 2147483648
    %v2687 = vsel %vm2685, %v2686, %v2684
    %v2688 = vrsqrt.pop %v1094
    %v2689 = vmul.f32 %v2688, %v1094
    %v2690 = vmul.f32 %v2689, %v2688
    %v2691 = vmul.f32 0.5, %v2690
    %v2692 = vsub.f32 1.5, %v2691
    %v2693 = vmul.f32 %v2688, %v2692
    %v2694 = vmul.f32 %v1094, %v2693
    %vm2695 = vcmp.eq.f32.partialorder %v1094, inf
    %v2696 = vsel %vm2695, %v1094, %v2694
    %vm2697 = vcmp.eq.f32.partialorder %v1094, 0.0
    %v2698 = vand.u32 %v1094, 2147483648
    %v2699 = vsel %vm2697, %v2698, %v2696
    %v2700 = vrsqrt.pop %v1097
    %v2701 = vmul.f32 %v2700, %v1097
    %v2702 = vmul.f32 %v2701, %v2700
    %v2703 = vmul.f32 0.5, %v2702
    %v2704 = vsub.f32 1.5, %v2703
    %v2705 = vmul.f32 %v2700, %v2704
    %v2706 = vmul.f32 %v1097, %v2705
    %vm2707 = vcmp.eq.f32.partialorder %v1097, inf
    %v2708 = vsel %vm2707, %v1097, %v2706
    %vm2709 = vcmp.eq.f32.partialorder %v1097, 0.0
    %v2710 = vand.u32 %v1097, 2147483648
    %v2711 = vsel %vm2709, %v2710, %v2708
    %v2712 = vrsqrt.pop %v1100
    %v2713 = vmul.f32 %v2712, %v1100
    %v2714 = vmul.f32 %v2713, %v2712
    %v2715 = vmul.f32 0.5, %v2714
    %v2716 = vsub.f32 1.5, %v2715
    %v2717 = vmul.f32 %v2712, %v2716
    %v2718 = vmul.f32 %v1100, %v2717
    %vm2719 = vcmp.eq.f32.partialorder %v1100, inf
    %v2720 = vsel %vm2719, %v1100, %v2718
    %vm2721 = vcmp.eq.f32.partialorder %v1100, 0.0
    %v2722 = vand.u32 %v1100, 2147483648
    %v2723 = vsel %vm2721, %v2722, %v2720
    %v2724 = vrsqrt.pop %v1103
    %v2725 = vmul.f32 %v2724, %v1103
    %v2726 = vmul.f32 %v2725, %v2724
    %v2727 = vmul.f32 0.5, %v2726
    %v2728 = vsub.f32 1.5, %v2727
    %v2729 = vmul.f32 %v2724, %v2728
    %v2730 = vmul.f32 %v1103, %v2729
    %vm2731 = vcmp.eq.f32.partialorder %v1103, inf
    %v2732 = vsel %vm2731, %v1103, %v2730
    %vm2733 = vcmp.eq.f32.partialorder %v1103, 0.0
    %v2734 = vand.u32 %v1103, 2147483648
    %v2735 = vsel %vm2733, %v2734, %v2732
    %v2736 = vrsqrt.pop %v1106
    %v2737 = vmul.f32 %v2736, %v1106
    %v2738 = vmul.f32 %v2737, %v2736
    %v2739 = vmul.f32 0.5, %v2738
    %v2740 = vsub.f32 1.5, %v2739
    %v2741 = vmul.f32 %v2736, %v2740
    %v2742 = vmul.f32 %v1106, %v2741
    %vm2743 = vcmp.eq.f32.partialorder %v1106, inf
    %v2744 = vsel %vm2743, %v1106, %v2742
    %vm2745 = vcmp.eq.f32.partialorder %v1106, 0.0
    %v2746 = vand.u32 %v1106, 2147483648
    %v2747 = vsel %vm2745, %v2746, %v2744
    %v2748 = vrsqrt.pop %v1109
    %v2749 = vmul.f32 %v2748, %v1109
    %v2750 = vmul.f32 %v2749, %v2748
    %v2751 = vmul.f32 0.5, %v2750
    %v2752 = vsub.f32 1.5, %v2751
    %v2753 = vmul.f32 %v2748, %v2752
    %v2754 = vmul.f32 %v1109, %v2753
    %vm2755 = vcmp.eq.f32.partialorder %v1109, inf
    %v2756 = vsel %vm2755, %v1109, %v2754
    %vm2757 = vcmp.eq.f32.partialorder %v1109, 0.0
    %v2758 = vand.u32 %v1109, 2147483648
    %v2759 = vsel %vm2757, %v2758, %v2756
    %v2760 = vrsqrt.pop %v1112
    %v2761 = vmul.f32 %v2760, %v1112
    %v2762 = vmul.f32 %v2761, %v2760
    %v2763 = vmul.f32 0.5, %v2762
    %v2764 = vsub.f32 1.5, %v2763
    %v2765 = vmul.f32 %v2760, %v2764
    %v2766 = vmul.f32 %v1112, %v2765
    %vm2767 = vcmp.eq.f32.partialorder %v1112, inf
    %v2768 = vsel %vm2767, %v1112, %v2766
    %vm2769 = vcmp.eq.f32.partialorder %v1112, 0.0
    %v2770 = vand.u32 %v1112, 2147483648
    %v2771 = vsel %vm2769, %v2770, %v2768
    %v2772 = vrsqrt.pop %v1115
    %v2773 = vmul.f32 %v2772, %v1115
    %v2774 = vmul.f32 %v2773, %v2772
    %v2775 = vmul.f32 0.5, %v2774
    %v2776 = vsub.f32 1.5, %v2775
    %v2777 = vmul.f32 %v2772, %v2776
    %v2778 = vmul.f32 %v1115, %v2777
    %vm2779 = vcmp.eq.f32.partialorder %v1115, inf
    %v2780 = vsel %vm2779, %v1115, %v2778
    %vm2781 = vcmp.eq.f32.partialorder %v1115, 0.0
    %v2782 = vand.u32 %v1115, 2147483648
    %v2783 = vsel %vm2781, %v2782, %v2780
    %v2784 = vrsqrt.pop %v1118
    %v2785 = vmul.f32 %v2784, %v1118
    %v2786 = vmul.f32 %v2785, %v2784
    %v2787 = vmul.f32 0.5, %v2786
    %v2788 = vsub.f32 1.5, %v2787
    %v2789 = vmul.f32 %v2784, %v2788
    %v2790 = vmul.f32 %v1118, %v2789
    %vm2791 = vcmp.eq.f32.partialorder %v1118, inf
    %v2792 = vsel %vm2791, %v1118, %v2790
    %vm2793 = vcmp.eq.f32.partialorder %v1118, 0.0
    %v2794 = vand.u32 %v1118, 2147483648
    %v2795 = vsel %vm2793, %v2794, %v2792
    %v2796 = vrsqrt.pop %v1121
    %v2797 = vmul.f32 %v2796, %v1121
    %v2798 = vmul.f32 %v2797, %v2796
    %v2799 = vmul.f32 0.5, %v2798
    %v2800 = vsub.f32 1.5, %v2799
    %v2801 = vmul.f32 %v2796, %v2800
    %v2802 = vmul.f32 %v1121, %v2801
    %vm2803 = vcmp.eq.f32.partialorder %v1121, inf
    %v2804 = vsel %vm2803, %v1121, %v2802
    %vm2805 = vcmp.eq.f32.partialorder %v1121, 0.0
    %v2806 = vand.u32 %v1121, 2147483648
    %v2807 = vsel %vm2805, %v2806, %v2804
    %v2808 = vrsqrt.pop %v1124
    %v2809 = vmul.f32 %v2808, %v1124
    %v2810 = vmul.f32 %v2809, %v2808
    %v2811 = vmul.f32 0.5, %v2810
    %v2812 = vsub.f32 1.5, %v2811
    %v2813 = vmul.f32 %v2808, %v2812
    %v2814 = vmul.f32 %v1124, %v2813
    %vm2815 = vcmp.eq.f32.partialorder %v1124, inf
    %v2816 = vsel %vm2815, %v1124, %v2814
    %vm2817 = vcmp.eq.f32.partialorder %v1124, 0.0
    %v2818 = vand.u32 %v1124, 2147483648
    %v2819 = vsel %vm2817, %v2818, %v2816
    %v2820 = vrsqrt.pop %v1127
    %v2821 = vmul.f32 %v2820, %v1127
    %v2822 = vmul.f32 %v2821, %v2820
    %v2823 = vmul.f32 0.5, %v2822
    %v2824 = vsub.f32 1.5, %v2823
    %v2825 = vmul.f32 %v2820, %v2824
    %v2826 = vmul.f32 %v1127, %v2825
    %vm2827 = vcmp.eq.f32.partialorder %v1127, inf
    %v2828 = vsel %vm2827, %v1127, %v2826
    %vm2829 = vcmp.eq.f32.partialorder %v1127, 0.0
    %v2830 = vand.u32 %v1127, 2147483648
    %v2831 = vsel %vm2829, %v2830, %v2828
    %v2832 = vrsqrt.pop %v1130
    %v2833 = vmul.f32 %v2832, %v1130
    %v2834 = vmul.f32 %v2833, %v2832
    %v2835 = vmul.f32 0.5, %v2834
    %v2836 = vsub.f32 1.5, %v2835
    %v2837 = vmul.f32 %v2832, %v2836
    %v2838 = vmul.f32 %v1130, %v2837
    %vm2839 = vcmp.eq.f32.partialorder %v1130, inf
    %v2840 = vsel %vm2839, %v1130, %v2838
    %vm2841 = vcmp.eq.f32.partialorder %v1130, 0.0
    %v2842 = vand.u32 %v1130, 2147483648
    %v2843 = vsel %vm2841, %v2842, %v2840
    %v2844 = vrsqrt.pop %v1133
    %v2845 = vmul.f32 %v2844, %v1133
    %v2846 = vmul.f32 %v2845, %v2844
    %v2847 = vmul.f32 0.5, %v2846
    %v2848 = vsub.f32 1.5, %v2847
    %v2849 = vmul.f32 %v2844, %v2848
    %v2850 = vmul.f32 %v1133, %v2849
    %vm2851 = vcmp.eq.f32.partialorder %v1133, inf
    %v2852 = vsel %vm2851, %v1133, %v2850
    %vm2853 = vcmp.eq.f32.partialorder %v1133, 0.0
    %v2854 = vand.u32 %v1133, 2147483648
    %v2855 = vsel %vm2853, %v2854, %v2852
    %v2856 = vrsqrt.pop %v1136
    %v2857 = vmul.f32 %v2856, %v1136
    %v2858 = vmul.f32 %v2857, %v2856
    %v2859 = vmul.f32 0.5, %v2858
    %v2860 = vsub.f32 1.5, %v2859
    %v2861 = vmul.f32 %v2856, %v2860
    %v2862 = vmul.f32 %v1136, %v2861
    %vm2863 = vcmp.eq.f32.partialorder %v1136, inf
    %v2864 = vsel %vm2863, %v1136, %v2862
    %vm2865 = vcmp.eq.f32.partialorder %v1136, 0.0
    %v2866 = vand.u32 %v1136, 2147483648
    %v2867 = vsel %vm2865, %v2866, %v2864
    %v2868 = vrsqrt.pop %v1139
    %v2869 = vmul.f32 %v2868, %v1139
    %v2870 = vmul.f32 %v2869, %v2868
    %v2871 = vmul.f32 0.5, %v2870
    %v2872 = vsub.f32 1.5, %v2871
    %v2873 = vmul.f32 %v2868, %v2872
    %v2874 = vmul.f32 %v1139, %v2873
    %vm2875 = vcmp.eq.f32.partialorder %v1139, inf
    %v2876 = vsel %vm2875, %v1139, %v2874
    %vm2877 = vcmp.eq.f32.partialorder %v1139, 0.0
    %v2878 = vand.u32 %v1139, 2147483648
    %v2879 = vsel %vm2877, %v2878, %v2876
    %v2880 = vrsqrt.pop %v1142
    %v2881 = vmul.f32 %v2880, %v1142
    %v2882 = vmul.f32 %v2881, %v2880
    %v2883 = vmul.f32 0.5, %v2882
    %v2884 = vsub.f32 1.5, %v2883
    %v2885 = vmul.f32 %v2880, %v2884
    %v2886 = vmul.f32 %v1142, %v2885
    %vm2887 = vcmp.eq.f32.partialorder %v1142, inf
    %v2888 = vsel %vm2887, %v1142, %v2886
    %vm2889 = vcmp.eq.f32.partialorder %v1142, 0.0
    %v2890 = vand.u32 %v1142, 2147483648
    %v2891 = vsel %vm2889, %v2890, %v2888
    %v2892 = vrsqrt.pop %v1145
    %v2893 = vmul.f32 %v2892, %v1145
    %v2894 = vmul.f32 %v2893, %v2892
    %v2895 = vmul.f32 0.5, %v2894
    %v2896 = vsub.f32 1.5, %v2895
    %v2897 = vmul.f32 %v2892, %v2896
    %v2898 = vmul.f32 %v1145, %v2897
    %vm2899 = vcmp.eq.f32.partialorder %v1145, inf
    %v2900 = vsel %vm2899, %v1145, %v2898
    %vm2901 = vcmp.eq.f32.partialorder %v1145, 0.0
    %v2902 = vand.u32 %v1145, 2147483648
    %v2903 = vsel %vm2901, %v2902, %v2900
    %v2904 = vrsqrt.pop %v1148
    %v2905 = vmul.f32 %v2904, %v1148
    %v2906 = vmul.f32 %v2905, %v2904
    %v2907 = vmul.f32 0.5, %v2906
    %v2908 = vsub.f32 1.5, %v2907
    %v2909 = vmul.f32 %v2904, %v2908
    %v2910 = vmul.f32 %v1148, %v2909
    %vm2911 = vcmp.eq.f32.partialorder %v1148, inf
    %v2912 = vsel %vm2911, %v1148, %v2910
    %vm2913 = vcmp.eq.f32.partialorder %v1148, 0.0
    %v2914 = vand.u32 %v1148, 2147483648
    %v2915 = vsel %vm2913, %v2914, %v2912
    %v2916 = vrsqrt.pop %v1151
    %v2917 = vmul.f32 %v2916, %v1151
    %v2918 = vmul.f32 %v2917, %v2916
    %v2919 = vmul.f32 0.5, %v2918
    %v2920 = vsub.f32 1.5, %v2919
    %v2921 = vmul.f32 %v2916, %v2920
    %v2922 = vmul.f32 %v1151, %v2921
    %vm2923 = vcmp.eq.f32.partialorder %v1151, inf
    %v2924 = vsel %vm2923, %v1151, %v2922
    %vm2925 = vcmp.eq.f32.partialorder %v1151, 0.0
    %v2926 = vand.u32 %v1151, 2147483648
    %v2927 = vsel %vm2925, %v2926, %v2924
    %v2928 = vrsqrt.pop %v1154
    %v2929 = vmul.f32 %v2928, %v1154
    %v2930 = vmul.f32 %v2929, %v2928
    %v2931 = vmul.f32 0.5, %v2930
    %v2932 = vsub.f32 1.5, %v2931
    %v2933 = vmul.f32 %v2928, %v2932
    %v2934 = vmul.f32 %v1154, %v2933
    %vm2935 = vcmp.eq.f32.partialorder %v1154, inf
    %v2936 = vsel %vm2935, %v1154, %v2934
    %vm2937 = vcmp.eq.f32.partialorder %v1154, 0.0
    %v2938 = vand.u32 %v1154, 2147483648
    %v2939 = vsel %vm2937, %v2938, %v2936
    %v2940 = vrsqrt.pop %v1157
    %v2941 = vmul.f32 %v2940, %v1157
    %v2942 = vmul.f32 %v2941, %v2940
    %v2943 = vmul.f32 0.5, %v2942
    %v2944 = vsub.f32 1.5, %v2943
    %v2945 = vmul.f32 %v2940, %v2944
    %v2946 = vmul.f32 %v1157, %v2945
    %vm2947 = vcmp.eq.f32.partialorder %v1157, inf
    %v2948 = vsel %vm2947, %v1157, %v2946
    %vm2949 = vcmp.eq.f32.partialorder %v1157, 0.0
    %v2950 = vand.u32 %v1157, 2147483648
    %v2951 = vsel %vm2949, %v2950, %v2948
    %v2952 = vrsqrt.pop %v1160
    %v2953 = vmul.f32 %v2952, %v1160
    %v2954 = vmul.f32 %v2953, %v2952
    %v2955 = vmul.f32 0.5, %v2954
    %v2956 = vsub.f32 1.5, %v2955
    %v2957 = vmul.f32 %v2952, %v2956
    %v2958 = vmul.f32 %v1160, %v2957
    %vm2959 = vcmp.eq.f32.partialorder %v1160, inf
    %v2960 = vsel %vm2959, %v1160, %v2958
    %vm2961 = vcmp.eq.f32.partialorder %v1160, 0.0
    %v2962 = vand.u32 %v1160, 2147483648
    %v2963 = vsel %vm2961, %v2962, %v2960
    %v2964 = vrsqrt.pop %v1163
    %v2965 = vmul.f32 %v2964, %v1163
    %v2966 = vmul.f32 %v2965, %v2964
    %v2967 = vmul.f32 0.5, %v2966
    %v2968 = vsub.f32 1.5, %v2967
    %v2969 = vmul.f32 %v2964, %v2968
    %v2970 = vmul.f32 %v1163, %v2969
    %vm2971 = vcmp.eq.f32.partialorder %v1163, inf
    %v2972 = vsel %vm2971, %v1163, %v2970
    %vm2973 = vcmp.eq.f32.partialorder %v1163, 0.0
    %v2974 = vand.u32 %v1163, 2147483648
    %v2975 = vsel %vm2973, %v2974, %v2972
    %v2976 = vrsqrt.pop %v1166
    %v2977 = vmul.f32 %v2976, %v1166
    %v2978 = vmul.f32 %v2977, %v2976
    %v2979 = vmul.f32 0.5, %v2978
    %v2980 = vsub.f32 1.5, %v2979
    %v2981 = vmul.f32 %v2976, %v2980
    %v2982 = vmul.f32 %v1166, %v2981
    %vm2983 = vcmp.eq.f32.partialorder %v1166, inf
    %v2984 = vsel %vm2983, %v1166, %v2982
    %vm2985 = vcmp.eq.f32.partialorder %v1166, 0.0
    %v2986 = vand.u32 %v1166, 2147483648
    %v2987 = vsel %vm2985, %v2986, %v2984
    %v2988 = vrsqrt.pop %v1169
    %v2989 = vmul.f32 %v2988, %v1169
    %v2990 = vmul.f32 %v2989, %v2988
    %v2991 = vmul.f32 0.5, %v2990
    %v2992 = vsub.f32 1.5, %v2991
    %v2993 = vmul.f32 %v2988, %v2992
    %v2994 = vmul.f32 %v1169, %v2993
    %vm2995 = vcmp.eq.f32.partialorder %v1169, inf
    %v2996 = vsel %vm2995, %v1169, %v2994
    %vm2997 = vcmp.eq.f32.partialorder %v1169, 0.0
    %v2998 = vand.u32 %v1169, 2147483648
    %v2999 = vsel %vm2997, %v2998, %v2996
    %v3000 = vrsqrt.pop %v1172
    %v3001 = vmul.f32 %v3000, %v1172
    %v3002 = vmul.f32 %v3001, %v3000
    %v3003 = vmul.f32 0.5, %v3002
    %v3004 = vsub.f32 1.5, %v3003
    %v3005 = vmul.f32 %v3000, %v3004
    %v3006 = vmul.f32 %v1172, %v3005
    %vm3007 = vcmp.eq.f32.partialorder %v1172, inf
    %v3008 = vsel %vm3007, %v1172, %v3006
    %vm3009 = vcmp.eq.f32.partialorder %v1172, 0.0
    %v3010 = vand.u32 %v1172, 2147483648
    %v3011 = vsel %vm3009, %v3010, %v3008
    %v3012 = vrsqrt.pop %v1175
    %v3013 = vmul.f32 %v3012, %v1175
    %v3014 = vmul.f32 %v3013, %v3012
    %v3015 = vmul.f32 0.5, %v3014
    %v3016 = vsub.f32 1.5, %v3015
    %v3017 = vmul.f32 %v3012, %v3016
    %v3018 = vmul.f32 %v1175, %v3017
    %vm3019 = vcmp.eq.f32.partialorder %v1175, inf
    %v3020 = vsel %vm3019, %v1175, %v3018
    %vm3021 = vcmp.eq.f32.partialorder %v1175, 0.0
    %v3022 = vand.u32 %v1175, 2147483648
    %v3023 = vsel %vm3021, %v3022, %v3020
    %v3024 = vrsqrt.pop %v1178
    %v3025 = vmul.f32 %v3024, %v1178
    %v3026 = vmul.f32 %v3025, %v3024
    %v3027 = vmul.f32 0.5, %v3026
    %v3028 = vsub.f32 1.5, %v3027
    %v3029 = vmul.f32 %v3024, %v3028
    %v3030 = vmul.f32 %v1178, %v3029
    %vm3031 = vcmp.eq.f32.partialorder %v1178, inf
    %v3032 = vsel %vm3031, %v1178, %v3030
    %vm3033 = vcmp.eq.f32.partialorder %v1178, 0.0
    %v3034 = vand.u32 %v1178, 2147483648
    %v3035 = vsel %vm3033, %v3034, %v3032
    %v3036 = vrsqrt.pop %v1181
    %v3037 = vmul.f32 %v3036, %v1181
    %v3038 = vmul.f32 %v3037, %v3036
    %v3039 = vmul.f32 0.5, %v3038
    %v3040 = vsub.f32 1.5, %v3039
    %v3041 = vmul.f32 %v3036, %v3040
    %v3042 = vmul.f32 %v1181, %v3041
    %vm3043 = vcmp.eq.f32.partialorder %v1181, inf
    %v3044 = vsel %vm3043, %v1181, %v3042
    %vm3045 = vcmp.eq.f32.partialorder %v1181, 0.0
    %v3046 = vand.u32 %v1181, 2147483648
    %v3047 = vsel %vm3045, %v3046, %v3044
    %v3048 = vrsqrt.pop %v1184
    %v3049 = vmul.f32 %v3048, %v1184
    %v3050 = vmul.f32 %v3049, %v3048
    %v3051 = vmul.f32 0.5, %v3050
    %v3052 = vsub.f32 1.5, %v3051
    %v3053 = vmul.f32 %v3048, %v3052
    %v3054 = vmul.f32 %v1184, %v3053
    %vm3055 = vcmp.eq.f32.partialorder %v1184, inf
    %v3056 = vsel %vm3055, %v1184, %v3054
    %vm3057 = vcmp.eq.f32.partialorder %v1184, 0.0
    %v3058 = vand.u32 %v1184, 2147483648
    %v3059 = vsel %vm3057, %v3058, %v3056
    %v3060 = vrsqrt.pop %v1187
    %v3061 = vmul.f32 %v3060, %v1187
    %v3062 = vmul.f32 %v3061, %v3060
    %v3063 = vmul.f32 0.5, %v3062
    %v3064 = vsub.f32 1.5, %v3063
    %v3065 = vmul.f32 %v3060, %v3064
    %v3066 = vmul.f32 %v1187, %v3065
    %vm3067 = vcmp.eq.f32.partialorder %v1187, inf
    %v3068 = vsel %vm3067, %v1187, %v3066
    %vm3069 = vcmp.eq.f32.partialorder %v1187, 0.0
    %v3070 = vand.u32 %v1187, 2147483648
    %v3071 = vsel %vm3069, %v3070, %v3068
    %v3072 = vrsqrt.pop %v1190
    %v3073 = vmul.f32 %v3072, %v1190
    %v3074 = vmul.f32 %v3073, %v3072
    %v3075 = vmul.f32 0.5, %v3074
    %v3076 = vsub.f32 1.5, %v3075
    %v3077 = vmul.f32 %v3072, %v3076
    %v3078 = vmul.f32 %v1190, %v3077
    %vm3079 = vcmp.eq.f32.partialorder %v1190, inf
    %v3080 = vsel %vm3079, %v1190, %v3078
    %vm3081 = vcmp.eq.f32.partialorder %v1190, 0.0
    %v3082 = vand.u32 %v1190, 2147483648
    %v3083 = vsel %vm3081, %v3082, %v3080
    %v3084 = vrsqrt.pop %v1193
    %v3085 = vmul.f32 %v3084, %v1193
    %v3086 = vmul.f32 %v3085, %v3084
    %v3087 = vmul.f32 0.5, %v3086
    %v3088 = vsub.f32 1.5, %v3087
    %v3089 = vmul.f32 %v3084, %v3088
    %v3090 = vmul.f32 %v1193, %v3089
    %vm3091 = vcmp.eq.f32.partialorder %v1193, inf
    %v3092 = vsel %vm3091, %v1193, %v3090
    %vm3093 = vcmp.eq.f32.partialorder %v1193, 0.0
    %v3094 = vand.u32 %v1193, 2147483648
    %v3095 = vsel %vm3093, %v3094, %v3092
    %v3096 = vrsqrt.pop %v1196
    %v3097 = vmul.f32 %v3096, %v1196
    %v3098 = vmul.f32 %v3097, %v3096
    %v3099 = vmul.f32 0.5, %v3098
    %v3100 = vsub.f32 1.5, %v3099
    %v3101 = vmul.f32 %v3096, %v3100
    %v3102 = vmul.f32 %v1196, %v3101
    %vm3103 = vcmp.eq.f32.partialorder %v1196, inf
    %v3104 = vsel %vm3103, %v1196, %v3102
    %vm3105 = vcmp.eq.f32.partialorder %v1196, 0.0
    %v3106 = vand.u32 %v1196, 2147483648
    %v3107 = vsel %vm3105, %v3106, %v3104
    %v3108 = vrsqrt.pop %v1199
    %v3109 = vmul.f32 %v3108, %v1199
    %v3110 = vmul.f32 %v3109, %v3108
    %v3111 = vmul.f32 0.5, %v3110
    %v3112 = vsub.f32 1.5, %v3111
    %v3113 = vmul.f32 %v3108, %v3112
    %v3114 = vmul.f32 %v1199, %v3113
    %vm3115 = vcmp.eq.f32.partialorder %v1199, inf
    %v3116 = vsel %vm3115, %v1199, %v3114
    %vm3117 = vcmp.eq.f32.partialorder %v1199, 0.0
    %v3118 = vand.u32 %v1199, 2147483648
    %v3119 = vsel %vm3117, %v3118, %v3116
    %v3120 = vrsqrt.pop %v1202
    %v3121 = vmul.f32 %v3120, %v1202
    %v3122 = vmul.f32 %v3121, %v3120
    %v3123 = vmul.f32 0.5, %v3122
    %v3124 = vsub.f32 1.5, %v3123
    %v3125 = vmul.f32 %v3120, %v3124
    %v3126 = vmul.f32 %v1202, %v3125
    %vm3127 = vcmp.eq.f32.partialorder %v1202, inf
    %v3128 = vsel %vm3127, %v1202, %v3126
    %vm3129 = vcmp.eq.f32.partialorder %v1202, 0.0
    %v3130 = vand.u32 %v1202, 2147483648
    %v3131 = vsel %vm3129, %v3130, %v3128
    %v3132 = vrsqrt.pop %v1205
    %v3133 = vmul.f32 %v3132, %v1205
    %v3134 = vmul.f32 %v3133, %v3132
    %v3135 = vmul.f32 0.5, %v3134
    %v3136 = vsub.f32 1.5, %v3135
    %v3137 = vmul.f32 %v3132, %v3136
    %v3138 = vmul.f32 %v1205, %v3137
    %vm3139 = vcmp.eq.f32.partialorder %v1205, inf
    %v3140 = vsel %vm3139, %v1205, %v3138
    %vm3141 = vcmp.eq.f32.partialorder %v1205, 0.0
    %v3142 = vand.u32 %v1205, 2147483648
    %v3143 = vsel %vm3141, %v3142, %v3140
    %v3144 = vrsqrt.pop %v1208
    %v3145 = vmul.f32 %v3144, %v1208
    %v3146 = vmul.f32 %v3145, %v3144
    %v3147 = vmul.f32 0.5, %v3146
    %v3148 = vsub.f32 1.5, %v3147
    %v3149 = vmul.f32 %v3144, %v3148
    %v3150 = vmul.f32 %v1208, %v3149
    %vm3151 = vcmp.eq.f32.partialorder %v1208, inf
    %v3152 = vsel %vm3151, %v1208, %v3150
    %vm3153 = vcmp.eq.f32.partialorder %v1208, 0.0
    %v3154 = vand.u32 %v1208, 2147483648
    %v3155 = vsel %vm3153, %v3154, %v3152
    %v3156 = vrsqrt.pop %v1211
    %v3157 = vmul.f32 %v3156, %v1211
    %v3158 = vmul.f32 %v3157, %v3156
    %v3159 = vmul.f32 0.5, %v3158
    %v3160 = vsub.f32 1.5, %v3159
    %v3161 = vmul.f32 %v3156, %v3160
    %v3162 = vmul.f32 %v1211, %v3161
    %vm3163 = vcmp.eq.f32.partialorder %v1211, inf
    %v3164 = vsel %vm3163, %v1211, %v3162
    %vm3165 = vcmp.eq.f32.partialorder %v1211, 0.0
    %v3166 = vand.u32 %v1211, 2147483648
    %v3167 = vsel %vm3165, %v3166, %v3164
    %v3168 = vrsqrt.pop %v1214
    %v3169 = vmul.f32 %v3168, %v1214
    %v3170 = vmul.f32 %v3169, %v3168
    %v3171 = vmul.f32 0.5, %v3170
    %v3172 = vsub.f32 1.5, %v3171
    %v3173 = vmul.f32 %v3168, %v3172
    %v3174 = vmul.f32 %v1214, %v3173
    %vm3175 = vcmp.eq.f32.partialorder %v1214, inf
    %v3176 = vsel %vm3175, %v1214, %v3174
    %vm3177 = vcmp.eq.f32.partialorder %v1214, 0.0
    %v3178 = vand.u32 %v1214, 2147483648
    %v3179 = vsel %vm3177, %v3178, %v3176
    %v3180 = vrsqrt.pop %v1217
    %v3181 = vmul.f32 %v3180, %v1217
    %v3182 = vmul.f32 %v3181, %v3180
    %v3183 = vmul.f32 0.5, %v3182
    %v3184 = vsub.f32 1.5, %v3183
    %v3185 = vmul.f32 %v3180, %v3184
    %v3186 = vmul.f32 %v1217, %v3185
    %vm3187 = vcmp.eq.f32.partialorder %v1217, inf
    %v3188 = vsel %vm3187, %v1217, %v3186
    %vm3189 = vcmp.eq.f32.partialorder %v1217, 0.0
    %v3190 = vand.u32 %v1217, 2147483648
    %v3191 = vsel %vm3189, %v3190, %v3188
    %v3192 = vrsqrt.pop %v1220
    %v3193 = vmul.f32 %v3192, %v1220
    %v3194 = vmul.f32 %v3193, %v3192
    %v3195 = vmul.f32 0.5, %v3194
    %v3196 = vsub.f32 1.5, %v3195
    %v3197 = vmul.f32 %v3192, %v3196
    %v3198 = vmul.f32 %v1220, %v3197
    %vm3199 = vcmp.eq.f32.partialorder %v1220, inf
    %v3200 = vsel %vm3199, %v1220, %v3198
    %vm3201 = vcmp.eq.f32.partialorder %v1220, 0.0
    %v3202 = vand.u32 %v1220, 2147483648
    %v3203 = vsel %vm3201, %v3202, %v3200
    %v3204 = vrsqrt.pop %v1223
    %v3205 = vmul.f32 %v3204, %v1223
    %v3206 = vmul.f32 %v3205, %v3204
    %v3207 = vmul.f32 0.5, %v3206
    %v3208 = vsub.f32 1.5, %v3207
    %v3209 = vmul.f32 %v3204, %v3208
    %v3210 = vmul.f32 %v1223, %v3209
    %vm3211 = vcmp.eq.f32.partialorder %v1223, inf
    %v3212 = vsel %vm3211, %v1223, %v3210
    %vm3213 = vcmp.eq.f32.partialorder %v1223, 0.0
    %v3214 = vand.u32 %v1223, 2147483648
    %v3215 = vsel %vm3213, %v3214, %v3212
    %v3216 = vrsqrt.pop %v1226
    %v3217 = vmul.f32 %v3216, %v1226
    %v3218 = vmul.f32 %v3217, %v3216
    %v3219 = vmul.f32 0.5, %v3218
    %v3220 = vsub.f32 1.5, %v3219
    %v3221 = vmul.f32 %v3216, %v3220
    %v3222 = vmul.f32 %v1226, %v3221
    %vm3223 = vcmp.eq.f32.partialorder %v1226, inf
    %v3224 = vsel %vm3223, %v1226, %v3222
    %vm3225 = vcmp.eq.f32.partialorder %v1226, 0.0
    %v3226 = vand.u32 %v1226, 2147483648
    %v3227 = vsel %vm3225, %v3226, %v3224
    %v3228 = vrsqrt.pop %v1229
    %v3229 = vmul.f32 %v3228, %v1229
    %v3230 = vmul.f32 %v3229, %v3228
    %v3231 = vmul.f32 0.5, %v3230
    %v3232 = vsub.f32 1.5, %v3231
    %v3233 = vmul.f32 %v3228, %v3232
    %v3234 = vmul.f32 %v1229, %v3233
    %vm3235 = vcmp.eq.f32.partialorder %v1229, inf
    %v3236 = vsel %vm3235, %v1229, %v3234
    %vm3237 = vcmp.eq.f32.partialorder %v1229, 0.0
    %v3238 = vand.u32 %v1229, 2147483648
    %v3239 = vsel %vm3237, %v3238, %v3236
    %v3240 = vrsqrt.pop %v1232
    %v3241 = vmul.f32 %v3240, %v1232
    %v3242 = vmul.f32 %v3241, %v3240
    %v3243 = vmul.f32 0.5, %v3242
    %v3244 = vsub.f32 1.5, %v3243
    %v3245 = vmul.f32 %v3240, %v3244
    %v3246 = vmul.f32 %v1232, %v3245
    %vm3247 = vcmp.eq.f32.partialorder %v1232, inf
    %v3248 = vsel %vm3247, %v1232, %v3246
    %vm3249 = vcmp.eq.f32.partialorder %v1232, 0.0
    %v3250 = vand.u32 %v1232, 2147483648
    %v3251 = vsel %vm3249, %v3250, %v3248
    %v3252 = vrsqrt.pop %v1235
    %v3253 = vmul.f32 %v3252, %v1235
    %v3254 = vmul.f32 %v3253, %v3252
    %v3255 = vmul.f32 0.5, %v3254
    %v3256 = vsub.f32 1.5, %v3255
    %v3257 = vmul.f32 %v3252, %v3256
    %v3258 = vmul.f32 %v1235, %v3257
    %vm3259 = vcmp.eq.f32.partialorder %v1235, inf
    %v3260 = vsel %vm3259, %v1235, %v3258
    %vm3261 = vcmp.eq.f32.partialorder %v1235, 0.0
    %v3262 = vand.u32 %v1235, 2147483648
    %v3263 = vsel %vm3261, %v3262, %v3260
    %v3264 = vrsqrt.pop %v1238
    %v3265 = vmul.f32 %v3264, %v1238
    %v3266 = vmul.f32 %v3265, %v3264
    %v3267 = vmul.f32 0.5, %v3266
    %v3268 = vsub.f32 1.5, %v3267
    %v3269 = vmul.f32 %v3264, %v3268
    %v3270 = vmul.f32 %v1238, %v3269
    %vm3271 = vcmp.eq.f32.partialorder %v1238, inf
    %v3272 = vsel %vm3271, %v1238, %v3270
    %vm3273 = vcmp.eq.f32.partialorder %v1238, 0.0
    %v3274 = vand.u32 %v1238, 2147483648
    %v3275 = vsel %vm3273, %v3274, %v3272
    %v3276 = vrsqrt.pop %v1241
    %v3277 = vmul.f32 %v3276, %v1241
    %v3278 = vmul.f32 %v3277, %v3276
    %v3279 = vmul.f32 0.5, %v3278
    %v3280 = vsub.f32 1.5, %v3279
    %v3281 = vmul.f32 %v3276, %v3280
    %v3282 = vmul.f32 %v1241, %v3281
    %vm3283 = vcmp.eq.f32.partialorder %v1241, inf
    %v3284 = vsel %vm3283, %v1241, %v3282
    %vm3285 = vcmp.eq.f32.partialorder %v1241, 0.0
    %v3286 = vand.u32 %v1241, 2147483648
    %v3287 = vsel %vm3285, %v3286, %v3284
    %v3288 = vrsqrt.pop %v1244
    %v3289 = vmul.f32 %v3288, %v1244
    %v3290 = vmul.f32 %v3289, %v3288
    %v3291 = vmul.f32 0.5, %v3290
    %v3292 = vsub.f32 1.5, %v3291
    %v3293 = vmul.f32 %v3288, %v3292
    %v3294 = vmul.f32 %v1244, %v3293
    %vm3295 = vcmp.eq.f32.partialorder %v1244, inf
    %v3296 = vsel %vm3295, %v1244, %v3294
    %vm3297 = vcmp.eq.f32.partialorder %v1244, 0.0
    %v3298 = vand.u32 %v1244, 2147483648
    %v3299 = vsel %vm3297, %v3298, %v3296
    %v3300 = vrsqrt.pop %v1247
    %v3301 = vmul.f32 %v3300, %v1247
    %v3302 = vmul.f32 %v3301, %v3300
    %v3303 = vmul.f32 0.5, %v3302
    %v3304 = vsub.f32 1.5, %v3303
    %v3305 = vmul.f32 %v3300, %v3304
    %v3306 = vmul.f32 %v1247, %v3305
    %vm3307 = vcmp.eq.f32.partialorder %v1247, inf
    %v3308 = vsel %vm3307, %v1247, %v3306
    %vm3309 = vcmp.eq.f32.partialorder %v1247, 0.0
    %v3310 = vand.u32 %v1247, 2147483648
    %v3311 = vsel %vm3309, %v3310, %v3308
    %v3312 = vrsqrt.pop %v1250
    %v3313 = vmul.f32 %v3312, %v1250
    %v3314 = vmul.f32 %v3313, %v3312
    %v3315 = vmul.f32 0.5, %v3314
    %v3316 = vsub.f32 1.5, %v3315
    %v3317 = vmul.f32 %v3312, %v3316
    %v3318 = vmul.f32 %v1250, %v3317
    %vm3319 = vcmp.eq.f32.partialorder %v1250, inf
    %v3320 = vsel %vm3319, %v1250, %v3318
    %vm3321 = vcmp.eq.f32.partialorder %v1250, 0.0
    %v3322 = vand.u32 %v1250, 2147483648
    %v3323 = vsel %vm3321, %v3322, %v3320
    %v3324 = vrsqrt.pop %v1253
    %v3325 = vmul.f32 %v3324, %v1253
    %v3326 = vmul.f32 %v3325, %v3324
    %v3327 = vmul.f32 0.5, %v3326
    %v3328 = vsub.f32 1.5, %v3327
    %v3329 = vmul.f32 %v3324, %v3328
    %v3330 = vmul.f32 %v1253, %v3329
    %vm3331 = vcmp.eq.f32.partialorder %v1253, inf
    %v3332 = vsel %vm3331, %v1253, %v3330
    %vm3333 = vcmp.eq.f32.partialorder %v1253, 0.0
    %v3334 = vand.u32 %v1253, 2147483648
    %v3335 = vsel %vm3333, %v3334, %v3332
    %v3336 = vrsqrt.pop %v1256
    %v3337 = vmul.f32 %v3336, %v1256
    %v3338 = vmul.f32 %v3337, %v3336
    %v3339 = vmul.f32 0.5, %v3338
    %v3340 = vsub.f32 1.5, %v3339
    %v3341 = vmul.f32 %v3336, %v3340
    %v3342 = vmul.f32 %v1256, %v3341
    %vm3343 = vcmp.eq.f32.partialorder %v1256, inf
    %v3344 = vsel %vm3343, %v1256, %v3342
    %vm3345 = vcmp.eq.f32.partialorder %v1256, 0.0
    %v3346 = vand.u32 %v1256, 2147483648
    %v3347 = vsel %vm3345, %v3346, %v3344
    %v3348 = vrsqrt.pop %v1259
    %v3349 = vmul.f32 %v3348, %v1259
    %v3350 = vmul.f32 %v3349, %v3348
    %v3351 = vmul.f32 0.5, %v3350
    %v3352 = vsub.f32 1.5, %v3351
    %v3353 = vmul.f32 %v3348, %v3352
    %v3354 = vmul.f32 %v1259, %v3353
    %vm3355 = vcmp.eq.f32.partialorder %v1259, inf
    %v3356 = vsel %vm3355, %v1259, %v3354
    %vm3357 = vcmp.eq.f32.partialorder %v1259, 0.0
    %v3358 = vand.u32 %v1259, 2147483648
    %v3359 = vsel %vm3357, %v3358, %v3356
    %v3360 = vrsqrt.pop %v1262
    %v3361 = vmul.f32 %v3360, %v1262
    %v3362 = vmul.f32 %v3361, %v3360
    %v3363 = vmul.f32 0.5, %v3362
    %v3364 = vsub.f32 1.5, %v3363
    %v3365 = vmul.f32 %v3360, %v3364
    %v3366 = vmul.f32 %v1262, %v3365
    %vm3367 = vcmp.eq.f32.partialorder %v1262, inf
    %v3368 = vsel %vm3367, %v1262, %v3366
    %vm3369 = vcmp.eq.f32.partialorder %v1262, 0.0
    %v3370 = vand.u32 %v1262, 2147483648
    %v3371 = vsel %vm3369, %v3370, %v3368
    %v3372 = vrsqrt.pop %v1265
    %v3373 = vmul.f32 %v3372, %v1265
    %v3374 = vmul.f32 %v3373, %v3372
    %v3375 = vmul.f32 0.5, %v3374
    %v3376 = vsub.f32 1.5, %v3375
    %v3377 = vmul.f32 %v3372, %v3376
    %v3378 = vmul.f32 %v1265, %v3377
    %vm3379 = vcmp.eq.f32.partialorder %v1265, inf
    %v3380 = vsel %vm3379, %v1265, %v3378
    %vm3381 = vcmp.eq.f32.partialorder %v1265, 0.0
    %v3382 = vand.u32 %v1265, 2147483648
    %v3383 = vsel %vm3381, %v3382, %v3380
    %v3384 = vrsqrt.pop %v1268
    %v3385 = vmul.f32 %v3384, %v1268
    %v3386 = vmul.f32 %v3385, %v3384
    %v3387 = vmul.f32 0.5, %v3386
    %v3388 = vsub.f32 1.5, %v3387
    %v3389 = vmul.f32 %v3384, %v3388
    %v3390 = vmul.f32 %v1268, %v3389
    %vm3391 = vcmp.eq.f32.partialorder %v1268, inf
    %v3392 = vsel %vm3391, %v1268, %v3390
    %vm3393 = vcmp.eq.f32.partialorder %v1268, 0.0
    %v3394 = vand.u32 %v1268, 2147483648
    %v3395 = vsel %vm3393, %v3394, %v3392
    %v3396 = vrsqrt.pop %v1271
    %v3397 = vmul.f32 %v3396, %v1271
    %v3398 = vmul.f32 %v3397, %v3396
    %v3399 = vmul.f32 0.5, %v3398
    %v3400 = vsub.f32 1.5, %v3399
    %v3401 = vmul.f32 %v3396, %v3400
    %v3402 = vmul.f32 %v1271, %v3401
    %vm3403 = vcmp.eq.f32.partialorder %v1271, inf
    %v3404 = vsel %vm3403, %v1271, %v3402
    %vm3405 = vcmp.eq.f32.partialorder %v1271, 0.0
    %v3406 = vand.u32 %v1271, 2147483648
    %v3407 = vsel %vm3405, %v3406, %v3404
    %v3408 = vrsqrt.pop %v1274
    %v3409 = vmul.f32 %v3408, %v1274
    %v3410 = vmul.f32 %v3409, %v3408
    %v3411 = vmul.f32 0.5, %v3410
    %v3412 = vsub.f32 1.5, %v3411
    %v3413 = vmul.f32 %v3408, %v3412
    %v3414 = vmul.f32 %v1274, %v3413
    %vm3415 = vcmp.eq.f32.partialorder %v1274, inf
    %v3416 = vsel %vm3415, %v1274, %v3414
    %vm3417 = vcmp.eq.f32.partialorder %v1274, 0.0
    %v3418 = vand.u32 %v1274, 2147483648
    %v3419 = vsel %vm3417, %v3418, %v3416
    %v3420 = vrsqrt.pop %v1277
    %v3421 = vmul.f32 %v3420, %v1277
    %v3422 = vmul.f32 %v3421, %v3420
    %v3423 = vmul.f32 0.5, %v3422
    %v3424 = vsub.f32 1.5, %v3423
    %v3425 = vmul.f32 %v3420, %v3424
    %v3426 = vmul.f32 %v1277, %v3425
    %vm3427 = vcmp.eq.f32.partialorder %v1277, inf
    %v3428 = vsel %vm3427, %v1277, %v3426
    %vm3429 = vcmp.eq.f32.partialorder %v1277, 0.0
    %v3430 = vand.u32 %v1277, 2147483648
    %v3431 = vsel %vm3429, %v3430, %v3428
    %v3432 = vrsqrt.pop %v1280
    %v3433 = vmul.f32 %v3432, %v1280
    %v3434 = vmul.f32 %v3433, %v3432
    %v3435 = vmul.f32 0.5, %v3434
    %v3436 = vsub.f32 1.5, %v3435
    %v3437 = vmul.f32 %v3432, %v3436
    %v3438 = vmul.f32 %v1280, %v3437
    %vm3439 = vcmp.eq.f32.partialorder %v1280, inf
    %v3440 = vsel %vm3439, %v1280, %v3438
    %vm3441 = vcmp.eq.f32.partialorder %v1280, 0.0
    %v3442 = vand.u32 %v1280, 2147483648
    %v3443 = vsel %vm3441, %v3442, %v3440
    %v3444 = vrsqrt.pop %v1283
    %v3445 = vmul.f32 %v3444, %v1283
    %v3446 = vmul.f32 %v3445, %v3444
    %v3447 = vmul.f32 0.5, %v3446
    %v3448 = vsub.f32 1.5, %v3447
    %v3449 = vmul.f32 %v3444, %v3448
    %v3450 = vmul.f32 %v1283, %v3449
    %vm3451 = vcmp.eq.f32.partialorder %v1283, inf
    %v3452 = vsel %vm3451, %v1283, %v3450
    %vm3453 = vcmp.eq.f32.partialorder %v1283, 0.0
    %v3454 = vand.u32 %v1283, 2147483648
    %v3455 = vsel %vm3453, %v3454, %v3452
    %v3456 = vrsqrt.pop %v1286
    %v3457 = vmul.f32 %v3456, %v1286
    %v3458 = vmul.f32 %v3457, %v3456
    %v3459 = vmul.f32 0.5, %v3458
    %v3460 = vsub.f32 1.5, %v3459
    %v3461 = vmul.f32 %v3456, %v3460
    %v3462 = vmul.f32 %v1286, %v3461
    %vm3463 = vcmp.eq.f32.partialorder %v1286, inf
    %v3464 = vsel %vm3463, %v1286, %v3462
    %vm3465 = vcmp.eq.f32.partialorder %v1286, 0.0
    %v3466 = vand.u32 %v1286, 2147483648
    %v3467 = vsel %vm3465, %v3466, %v3464
    %v3468 = vrsqrt.pop %v1289
    %v3469 = vmul.f32 %v3468, %v1289
    %v3470 = vmul.f32 %v3469, %v3468
    %v3471 = vmul.f32 0.5, %v3470
    %v3472 = vsub.f32 1.5, %v3471
    %v3473 = vmul.f32 %v3468, %v3472
    %v3474 = vmul.f32 %v1289, %v3473
    %vm3475 = vcmp.eq.f32.partialorder %v1289, inf
    %v3476 = vsel %vm3475, %v1289, %v3474
    %vm3477 = vcmp.eq.f32.partialorder %v1289, 0.0
    %v3478 = vand.u32 %v1289, 2147483648
    %v3479 = vsel %vm3477, %v3478, %v3476
    %v3480 = vrsqrt.pop %v1292
    %v3481 = vmul.f32 %v3480, %v1292
    %v3482 = vmul.f32 %v3481, %v3480
    %v3483 = vmul.f32 0.5, %v3482
    %v3484 = vsub.f32 1.5, %v3483
    %v3485 = vmul.f32 %v3480, %v3484
    %v3486 = vmul.f32 %v1292, %v3485
    %vm3487 = vcmp.eq.f32.partialorder %v1292, inf
    %v3488 = vsel %vm3487, %v1292, %v3486
    %vm3489 = vcmp.eq.f32.partialorder %v1292, 0.0
    %v3490 = vand.u32 %v1292, 2147483648
    %v3491 = vsel %vm3489, %v3490, %v3488
    %v3492 = vrsqrt.pop %v1295
    %v3493 = vmul.f32 %v3492, %v1295
    %v3494 = vmul.f32 %v3493, %v3492
    %v3495 = vmul.f32 0.5, %v3494
    %v3496 = vsub.f32 1.5, %v3495
    %v3497 = vmul.f32 %v3492, %v3496
    %v3498 = vmul.f32 %v1295, %v3497
    %vm3499 = vcmp.eq.f32.partialorder %v1295, inf
    %v3500 = vsel %vm3499, %v1295, %v3498
    %vm3501 = vcmp.eq.f32.partialorder %v1295, 0.0
    %v3502 = vand.u32 %v1295, 2147483648
    %v3503 = vsel %vm3501, %v3502, %v3500
    %v3504 = vrsqrt.pop %v1298
    %v3505 = vmul.f32 %v3504, %v1298
    %v3506 = vmul.f32 %v3505, %v3504
    %v3507 = vmul.f32 0.5, %v3506
    %v3508 = vsub.f32 1.5, %v3507
    %v3509 = vmul.f32 %v3504, %v3508
    %v3510 = vmul.f32 %v1298, %v3509
    %vm3511 = vcmp.eq.f32.partialorder %v1298, inf
    %v3512 = vsel %vm3511, %v1298, %v3510
    %vm3513 = vcmp.eq.f32.partialorder %v1298, 0.0
    %v3514 = vand.u32 %v1298, 2147483648
    %v3515 = vsel %vm3513, %v3514, %v3512
    %v3516 = vrsqrt.pop %v1301
    %v3517 = vmul.f32 %v3516, %v1301
    %v3518 = vmul.f32 %v3517, %v3516
    %v3519 = vmul.f32 0.5, %v3518
    %v3520 = vsub.f32 1.5, %v3519
    %v3521 = vmul.f32 %v3516, %v3520
    %v3522 = vmul.f32 %v1301, %v3521
    %vm3523 = vcmp.eq.f32.partialorder %v1301, inf
    %v3524 = vsel %vm3523, %v1301, %v3522
    %vm3525 = vcmp.eq.f32.partialorder %v1301, 0.0
    %v3526 = vand.u32 %v1301, 2147483648
    %v3527 = vsel %vm3525, %v3526, %v3524
    %v3528 = vrsqrt.pop %v1304
    %v3529 = vmul.f32 %v3528, %v1304
    %v3530 = vmul.f32 %v3529, %v3528
    %v3531 = vmul.f32 0.5, %v3530
    %v3532 = vsub.f32 1.5, %v3531
    %v3533 = vmul.f32 %v3528, %v3532
    %v3534 = vmul.f32 %v1304, %v3533
    %vm3535 = vcmp.eq.f32.partialorder %v1304, inf
    %v3536 = vsel %vm3535, %v1304, %v3534
    %vm3537 = vcmp.eq.f32.partialorder %v1304, 0.0
    %v3538 = vand.u32 %v1304, 2147483648
    %v3539 = vsel %vm3537, %v3538, %v3536
    %v3540 = vrsqrt.pop %v1307
    %v3541 = vmul.f32 %v3540, %v1307
    %v3542 = vmul.f32 %v3541, %v3540
    %v3543 = vmul.f32 0.5, %v3542
    %v3544 = vsub.f32 1.5, %v3543
    %v3545 = vmul.f32 %v3540, %v3544
    %v3546 = vmul.f32 %v1307, %v3545
    %vm3547 = vcmp.eq.f32.partialorder %v1307, inf
    %v3548 = vsel %vm3547, %v1307, %v3546
    %vm3549 = vcmp.eq.f32.partialorder %v1307, 0.0
    %v3550 = vand.u32 %v1307, 2147483648
    %v3551 = vsel %vm3549, %v3550, %v3548
    %v3552 = vrsqrt.pop %v1310
    %v3553 = vmul.f32 %v3552, %v1310
    %v3554 = vmul.f32 %v3553, %v3552
    %v3555 = vmul.f32 0.5, %v3554
    %v3556 = vsub.f32 1.5, %v3555
    %v3557 = vmul.f32 %v3552, %v3556
    %v3558 = vmul.f32 %v1310, %v3557
    %vm3559 = vcmp.eq.f32.partialorder %v1310, inf
    %v3560 = vsel %vm3559, %v1310, %v3558
    %vm3561 = vcmp.eq.f32.partialorder %v1310, 0.0
    %v3562 = vand.u32 %v1310, 2147483648
    %v3563 = vsel %vm3561, %v3562, %v3560
    %v3564 = vrsqrt.pop %v1313
    %v3565 = vmul.f32 %v3564, %v1313
    %v3566 = vmul.f32 %v3565, %v3564
    %v3567 = vmul.f32 0.5, %v3566
    %v3568 = vsub.f32 1.5, %v3567
    %v3569 = vmul.f32 %v3564, %v3568
    %v3570 = vmul.f32 %v1313, %v3569
    %vm3571 = vcmp.eq.f32.partialorder %v1313, inf
    %v3572 = vsel %vm3571, %v1313, %v3570
    %vm3573 = vcmp.eq.f32.partialorder %v1313, 0.0
    %v3574 = vand.u32 %v1313, 2147483648
    %v3575 = vsel %vm3573, %v3574, %v3572
    %v3576 = vrsqrt.pop %v1316
    %v3577 = vmul.f32 %v3576, %v1316
    %v3578 = vmul.f32 %v3577, %v3576
    %v3579 = vmul.f32 0.5, %v3578
    %v3580 = vsub.f32 1.5, %v3579
    %v3581 = vmul.f32 %v3576, %v3580
    %v3582 = vmul.f32 %v1316, %v3581
    %vm3583 = vcmp.eq.f32.partialorder %v1316, inf
    %v3584 = vsel %vm3583, %v1316, %v3582
    %vm3585 = vcmp.eq.f32.partialorder %v1316, 0.0
    %v3586 = vand.u32 %v1316, 2147483648
    %v3587 = vsel %vm3585, %v3586, %v3584
    %v3588 = vrsqrt.pop %v1319
    %v3589 = vmul.f32 %v3588, %v1319
    %v3590 = vmul.f32 %v3589, %v3588
    %v3591 = vmul.f32 0.5, %v3590
    %v3592 = vsub.f32 1.5, %v3591
    %v3593 = vmul.f32 %v3588, %v3592
    %v3594 = vmul.f32 %v1319, %v3593
    %vm3595 = vcmp.eq.f32.partialorder %v1319, inf
    %v3596 = vsel %vm3595, %v1319, %v3594
    %vm3597 = vcmp.eq.f32.partialorder %v1319, 0.0
    %v3598 = vand.u32 %v1319, 2147483648
    %v3599 = vsel %vm3597, %v3598, %v3596
    %v3600 = vrsqrt.pop %v1322
    %v3601 = vmul.f32 %v3600, %v1322
    %v3602 = vmul.f32 %v3601, %v3600
    %v3603 = vmul.f32 0.5, %v3602
    %v3604 = vsub.f32 1.5, %v3603
    %v3605 = vmul.f32 %v3600, %v3604
    %v3606 = vmul.f32 %v1322, %v3605
    %vm3607 = vcmp.eq.f32.partialorder %v1322, inf
    %v3608 = vsel %vm3607, %v1322, %v3606
    %vm3609 = vcmp.eq.f32.partialorder %v1322, 0.0
    %v3610 = vand.u32 %v1322, 2147483648
    %v3611 = vsel %vm3609, %v3610, %v3608
    %v3612 = vrsqrt.pop %v1325
    %v3613 = vmul.f32 %v3612, %v1325
    %v3614 = vmul.f32 %v3613, %v3612
    %v3615 = vmul.f32 0.5, %v3614
    %v3616 = vsub.f32 1.5, %v3615
    %v3617 = vmul.f32 %v3612, %v3616
    %v3618 = vmul.f32 %v1325, %v3617
    %vm3619 = vcmp.eq.f32.partialorder %v1325, inf
    %v3620 = vsel %vm3619, %v1325, %v3618
    %vm3621 = vcmp.eq.f32.partialorder %v1325, 0.0
    %v3622 = vand.u32 %v1325, 2147483648
    %v3623 = vsel %vm3621, %v3622, %v3620
    %v3624 = vrsqrt.pop %v1328
    %v3625 = vmul.f32 %v3624, %v1328
    %v3626 = vmul.f32 %v3625, %v3624
    %v3627 = vmul.f32 0.5, %v3626
    %v3628 = vsub.f32 1.5, %v3627
    %v3629 = vmul.f32 %v3624, %v3628
    %v3630 = vmul.f32 %v1328, %v3629
    %vm3631 = vcmp.eq.f32.partialorder %v1328, inf
    %v3632 = vsel %vm3631, %v1328, %v3630
    %vm3633 = vcmp.eq.f32.partialorder %v1328, 0.0
    %v3634 = vand.u32 %v1328, 2147483648
    %v3635 = vsel %vm3633, %v3634, %v3632
    %v3636 = vrsqrt.pop %v1331
    %v3637 = vmul.f32 %v3636, %v1331
    %v3638 = vmul.f32 %v3637, %v3636
    %v3639 = vmul.f32 0.5, %v3638
    %v3640 = vsub.f32 1.5, %v3639
    %v3641 = vmul.f32 %v3636, %v3640
    %v3642 = vmul.f32 %v1331, %v3641
    %vm3643 = vcmp.eq.f32.partialorder %v1331, inf
    %v3644 = vsel %vm3643, %v1331, %v3642
    %vm3645 = vcmp.eq.f32.partialorder %v1331, 0.0
    %v3646 = vand.u32 %v1331, 2147483648
    %v3647 = vsel %vm3645, %v3646, %v3644
    %v3648 = vrsqrt.pop %v1334
    %v3649 = vmul.f32 %v3648, %v1334
    %v3650 = vmul.f32 %v3649, %v3648
    %v3651 = vmul.f32 0.5, %v3650
    %v3652 = vsub.f32 1.5, %v3651
    %v3653 = vmul.f32 %v3648, %v3652
    %v3654 = vmul.f32 %v1334, %v3653
    %vm3655 = vcmp.eq.f32.partialorder %v1334, inf
    %v3656 = vsel %vm3655, %v1334, %v3654
    %vm3657 = vcmp.eq.f32.partialorder %v1334, 0.0
    %v3658 = vand.u32 %v1334, 2147483648
    %v3659 = vsel %vm3657, %v3658, %v3656
    %v3660 = vrsqrt.pop %v1337
    %v3661 = vmul.f32 %v3660, %v1337
    %v3662 = vmul.f32 %v3661, %v3660
    %v3663 = vmul.f32 0.5, %v3662
    %v3664 = vsub.f32 1.5, %v3663
    %v3665 = vmul.f32 %v3660, %v3664
    %v3666 = vmul.f32 %v1337, %v3665
    %vm3667 = vcmp.eq.f32.partialorder %v1337, inf
    %v3668 = vsel %vm3667, %v1337, %v3666
    %vm3669 = vcmp.eq.f32.partialorder %v1337, 0.0
    %v3670 = vand.u32 %v1337, 2147483648
    %v3671 = vsel %vm3669, %v3670, %v3668
    %v3672 = vrsqrt.pop %v1340
    %v3673 = vmul.f32 %v3672, %v1340
    %v3674 = vmul.f32 %v3673, %v3672
    %v3675 = vmul.f32 0.5, %v3674
    %v3676 = vsub.f32 1.5, %v3675
    %v3677 = vmul.f32 %v3672, %v3676
    %v3678 = vmul.f32 %v1340, %v3677
    %vm3679 = vcmp.eq.f32.partialorder %v1340, inf
    %v3680 = vsel %vm3679, %v1340, %v3678
    %vm3681 = vcmp.eq.f32.partialorder %v1340, 0.0
    %v3682 = vand.u32 %v1340, 2147483648
    %v3683 = vsel %vm3681, %v3682, %v3680
    %v3684 = vrsqrt.pop %v1343
    %v3685 = vmul.f32 %v3684, %v1343
    %v3686 = vmul.f32 %v3685, %v3684
    %v3687 = vmul.f32 0.5, %v3686
    %v3688 = vsub.f32 1.5, %v3687
    %v3689 = vmul.f32 %v3684, %v3688
    %v3690 = vmul.f32 %v1343, %v3689
    %vm3691 = vcmp.eq.f32.partialorder %v1343, inf
    %v3692 = vsel %vm3691, %v1343, %v3690
    %vm3693 = vcmp.eq.f32.partialorder %v1343, 0.0
    %v3694 = vand.u32 %v1343, 2147483648
    %v3695 = vsel %vm3693, %v3694, %v3692
    %v3696 = vrsqrt.pop %v1346
    %v3697 = vmul.f32 %v3696, %v1346
    %v3698 = vmul.f32 %v3697, %v3696
    %v3699 = vmul.f32 0.5, %v3698
    %v3700 = vsub.f32 1.5, %v3699
    %v3701 = vmul.f32 %v3696, %v3700
    %v3702 = vmul.f32 %v1346, %v3701
    %vm3703 = vcmp.eq.f32.partialorder %v1346, inf
    %v3704 = vsel %vm3703, %v1346, %v3702
    %vm3705 = vcmp.eq.f32.partialorder %v1346, 0.0
    %v3706 = vand.u32 %v1346, 2147483648
    %v3707 = vsel %vm3705, %v3706, %v3704
    %v3708 = vrsqrt.pop %v1349
    %v3709 = vmul.f32 %v3708, %v1349
    %v3710 = vmul.f32 %v3709, %v3708
    %v3711 = vmul.f32 0.5, %v3710
    %v3712 = vsub.f32 1.5, %v3711
    %v3713 = vmul.f32 %v3708, %v3712
    %v3714 = vmul.f32 %v1349, %v3713
    %vm3715 = vcmp.eq.f32.partialorder %v1349, inf
    %v3716 = vsel %vm3715, %v1349, %v3714
    %vm3717 = vcmp.eq.f32.partialorder %v1349, 0.0
    %v3718 = vand.u32 %v1349, 2147483648
    %v3719 = vsel %vm3717, %v3718, %v3716
    %v3720 = vrsqrt.pop %v1352
    %v3721 = vmul.f32 %v3720, %v1352
    %v3722 = vmul.f32 %v3721, %v3720
    %v3723 = vmul.f32 0.5, %v3722
    %v3724 = vsub.f32 1.5, %v3723
    %v3725 = vmul.f32 %v3720, %v3724
    %v3726 = vmul.f32 %v1352, %v3725
    %vm3727 = vcmp.eq.f32.partialorder %v1352, inf
    %v3728 = vsel %vm3727, %v1352, %v3726
    %vm3729 = vcmp.eq.f32.partialorder %v1352, 0.0
    %v3730 = vand.u32 %v1352, 2147483648
    %v3731 = vsel %vm3729, %v3730, %v3728
    %v3732 = vrsqrt.pop %v1355
    %v3733 = vmul.f32 %v3732, %v1355
    %v3734 = vmul.f32 %v3733, %v3732
    %v3735 = vmul.f32 0.5, %v3734
    %v3736 = vsub.f32 1.5, %v3735
    %v3737 = vmul.f32 %v3732, %v3736
    %v3738 = vmul.f32 %v1355, %v3737
    %vm3739 = vcmp.eq.f32.partialorder %v1355, inf
    %v3740 = vsel %vm3739, %v1355, %v3738
    %vm3741 = vcmp.eq.f32.partialorder %v1355, 0.0
    %v3742 = vand.u32 %v1355, 2147483648
    %v3743 = vsel %vm3741, %v3742, %v3740
    %v3744 = vrsqrt.pop %v1358
    %v3745 = vmul.f32 %v3744, %v1358
    %v3746 = vmul.f32 %v3745, %v3744
    %v3747 = vmul.f32 0.5, %v3746
    %v3748 = vsub.f32 1.5, %v3747
    %v3749 = vmul.f32 %v3744, %v3748
    %v3750 = vmul.f32 %v1358, %v3749
    %vm3751 = vcmp.eq.f32.partialorder %v1358, inf
    %v3752 = vsel %vm3751, %v1358, %v3750
    %vm3753 = vcmp.eq.f32.partialorder %v1358, 0.0
    %v3754 = vand.u32 %v1358, 2147483648
    %v3755 = vsel %vm3753, %v3754, %v3752
    %v3756 = vrsqrt.pop %v1361
    %v3757 = vmul.f32 %v3756, %v1361
    %v3758 = vmul.f32 %v3757, %v3756
    %v3759 = vmul.f32 0.5, %v3758
    %v3760 = vsub.f32 1.5, %v3759
    %v3761 = vmul.f32 %v3756, %v3760
    %v3762 = vmul.f32 %v1361, %v3761
    %vm3763 = vcmp.eq.f32.partialorder %v1361, inf
    %v3764 = vsel %vm3763, %v1361, %v3762
    %vm3765 = vcmp.eq.f32.partialorder %v1361, 0.0
    %v3766 = vand.u32 %v1361, 2147483648
    %v3767 = vsel %vm3765, %v3766, %v3764
    %v3768 = vrsqrt.pop %v1364
    %v3769 = vmul.f32 %v3768, %v1364
    %v3770 = vmul.f32 %v3769, %v3768
    %v3771 = vmul.f32 0.5, %v3770
    %v3772 = vsub.f32 1.5, %v3771
    %v3773 = vmul.f32 %v3768, %v3772
    %v3774 = vmul.f32 %v1364, %v3773
    %vm3775 = vcmp.eq.f32.partialorder %v1364, inf
    %v3776 = vsel %vm3775, %v1364, %v3774
    %vm3777 = vcmp.eq.f32.partialorder %v1364, 0.0
    %v3778 = vand.u32 %v1364, 2147483648
    %v3779 = vsel %vm3777, %v3778, %v3776
    %v3780 = vrsqrt.pop %v1367
    %v3781 = vmul.f32 %v3780, %v1367
    %v3782 = vmul.f32 %v3781, %v3780
    %v3783 = vmul.f32 0.5, %v3782
    %v3784 = vsub.f32 1.5, %v3783
    %v3785 = vmul.f32 %v3780, %v3784
    %v3786 = vmul.f32 %v1367, %v3785
    %vm3787 = vcmp.eq.f32.partialorder %v1367, inf
    %v3788 = vsel %vm3787, %v1367, %v3786
    %vm3789 = vcmp.eq.f32.partialorder %v1367, 0.0
    %v3790 = vand.u32 %v1367, 2147483648
    %v3791 = vsel %vm3789, %v3790, %v3788
    %v3792 = vrsqrt.pop %v1370
    %v3793 = vmul.f32 %v3792, %v1370
    %v3794 = vmul.f32 %v3793, %v3792
    %v3795 = vmul.f32 0.5, %v3794
    %v3796 = vsub.f32 1.5, %v3795
    %v3797 = vmul.f32 %v3792, %v3796
    %v3798 = vmul.f32 %v1370, %v3797
    %vm3799 = vcmp.eq.f32.partialorder %v1370, inf
    %v3800 = vsel %vm3799, %v1370, %v3798
    %vm3801 = vcmp.eq.f32.partialorder %v1370, 0.0
    %v3802 = vand.u32 %v1370, 2147483648
    %v3803 = vsel %vm3801, %v3802, %v3800
    %v3804 = vrsqrt.pop %v1373
    %v3805 = vmul.f32 %v3804, %v1373
    %v3806 = vmul.f32 %v3805, %v3804
    %v3807 = vmul.f32 0.5, %v3806
    %v3808 = vsub.f32 1.5, %v3807
    %v3809 = vmul.f32 %v3804, %v3808
    %v3810 = vmul.f32 %v1373, %v3809
    %vm3811 = vcmp.eq.f32.partialorder %v1373, inf
    %v3812 = vsel %vm3811, %v1373, %v3810
    %vm3813 = vcmp.eq.f32.partialorder %v1373, 0.0
    %v3814 = vand.u32 %v1373, 2147483648
    %v3815 = vsel %vm3813, %v3814, %v3812
    %v3816 = vrsqrt.pop %v1376
    %v3817 = vmul.f32 %v3816, %v1376
    %v3818 = vmul.f32 %v3817, %v3816
    %v3819 = vmul.f32 0.5, %v3818
    %v3820 = vsub.f32 1.5, %v3819
    %v3821 = vmul.f32 %v3816, %v3820
    %v3822 = vmul.f32 %v1376, %v3821
    %vm3823 = vcmp.eq.f32.partialorder %v1376, inf
    %v3824 = vsel %vm3823, %v1376, %v3822
    %vm3825 = vcmp.eq.f32.partialorder %v1376, 0.0
    %v3826 = vand.u32 %v1376, 2147483648
    %v3827 = vsel %vm3825, %v3826, %v3824
    %v3828 = vrsqrt.pop %v1379
    %v3829 = vmul.f32 %v3828, %v1379
    %v3830 = vmul.f32 %v3829, %v3828
    %v3831 = vmul.f32 0.5, %v3830
    %v3832 = vsub.f32 1.5, %v3831
    %v3833 = vmul.f32 %v3828, %v3832
    %v3834 = vmul.f32 %v1379, %v3833
    %vm3835 = vcmp.eq.f32.partialorder %v1379, inf
    %v3836 = vsel %vm3835, %v1379, %v3834
    %vm3837 = vcmp.eq.f32.partialorder %v1379, 0.0
    %v3838 = vand.u32 %v1379, 2147483648
    %v3839 = vsel %vm3837, %v3838, %v3836
    %v3840 = vrsqrt.pop %v1382
    %v3841 = vmul.f32 %v3840, %v1382
    %v3842 = vmul.f32 %v3841, %v3840
    %v3843 = vmul.f32 0.5, %v3842
    %v3844 = vsub.f32 1.5, %v3843
    %v3845 = vmul.f32 %v3840, %v3844
    %v3846 = vmul.f32 %v1382, %v3845
    %vm3847 = vcmp.eq.f32.partialorder %v1382, inf
    %v3848 = vsel %vm3847, %v1382, %v3846
    %vm3849 = vcmp.eq.f32.partialorder %v1382, 0.0
    %v3850 = vand.u32 %v1382, 2147483648
    %v3851 = vsel %vm3849, %v3850, %v3848
    %v3852 = vrsqrt.pop %v1385
    %v3853 = vmul.f32 %v3852, %v1385
    %v3854 = vmul.f32 %v3853, %v3852
    %v3855 = vmul.f32 0.5, %v3854
    %v3856 = vsub.f32 1.5, %v3855
    %v3857 = vmul.f32 %v3852, %v3856
    %v3858 = vmul.f32 %v1385, %v3857
    %vm3859 = vcmp.eq.f32.partialorder %v1385, inf
    %v3860 = vsel %vm3859, %v1385, %v3858
    %vm3861 = vcmp.eq.f32.partialorder %v1385, 0.0
    %v3862 = vand.u32 %v1385, 2147483648
    %v3863 = vsel %vm3861, %v3862, %v3860
    %v3864 = vrsqrt.pop %v1388
    %v3865 = vmul.f32 %v3864, %v1388
    %v3866 = vmul.f32 %v3865, %v3864
    %v3867 = vmul.f32 0.5, %v3866
    %v3868 = vsub.f32 1.5, %v3867
    %v3869 = vmul.f32 %v3864, %v3868
    %v3870 = vmul.f32 %v1388, %v3869
    %vm3871 = vcmp.eq.f32.partialorder %v1388, inf
    %v3872 = vsel %vm3871, %v1388, %v3870
    %vm3873 = vcmp.eq.f32.partialorder %v1388, 0.0
    %v3874 = vand.u32 %v1388, 2147483648
    %v3875 = vsel %vm3873, %v3874, %v3872
    %v3876 = vrsqrt.pop %v1391
    %v3877 = vmul.f32 %v3876, %v1391
    %v3878 = vmul.f32 %v3877, %v3876
    %v3879 = vmul.f32 0.5, %v3878
    %v3880 = vsub.f32 1.5, %v3879
    %v3881 = vmul.f32 %v3876, %v3880
    %v3882 = vmul.f32 %v1391, %v3881
    %vm3883 = vcmp.eq.f32.partialorder %v1391, inf
    %v3884 = vsel %vm3883, %v1391, %v3882
    %vm3885 = vcmp.eq.f32.partialorder %v1391, 0.0
    %v3886 = vand.u32 %v1391, 2147483648
    %v3887 = vsel %vm3885, %v3886, %v3884
    %v3888 = vrsqrt.pop %v1394
    %v3889 = vmul.f32 %v3888, %v1394
    %v3890 = vmul.f32 %v3889, %v3888
    %v3891 = vmul.f32 0.5, %v3890
    %v3892 = vsub.f32 1.5, %v3891
    %v3893 = vmul.f32 %v3888, %v3892
    %v3894 = vmul.f32 %v1394, %v3893
    %vm3895 = vcmp.eq.f32.partialorder %v1394, inf
    %v3896 = vsel %vm3895, %v1394, %v3894
    %vm3897 = vcmp.eq.f32.partialorder %v1394, 0.0
    %v3898 = vand.u32 %v1394, 2147483648
    %v3899 = vsel %vm3897, %v3898, %v3896
    %v3900 = vrsqrt.pop %v1397
    %v3901 = vmul.f32 %v3900, %v1397
    %v3902 = vmul.f32 %v3901, %v3900
    %v3903 = vmul.f32 0.5, %v3902
    %v3904 = vsub.f32 1.5, %v3903
    %v3905 = vmul.f32 %v3900, %v3904
    %v3906 = vmul.f32 %v1397, %v3905
    %vm3907 = vcmp.eq.f32.partialorder %v1397, inf
    %v3908 = vsel %vm3907, %v1397, %v3906
    %vm3909 = vcmp.eq.f32.partialorder %v1397, 0.0
    %v3910 = vand.u32 %v1397, 2147483648
    %v3911 = vsel %vm3909, %v3910, %v3908
    %v3912 = vrsqrt.pop %v1400
    %v3913 = vmul.f32 %v3912, %v1400
    %v3914 = vmul.f32 %v3913, %v3912
    %v3915 = vmul.f32 0.5, %v3914
    %v3916 = vsub.f32 1.5, %v3915
    %v3917 = vmul.f32 %v3912, %v3916
    %v3918 = vmul.f32 %v1400, %v3917
    %vm3919 = vcmp.eq.f32.partialorder %v1400, inf
    %v3920 = vsel %vm3919, %v1400, %v3918
    %vm3921 = vcmp.eq.f32.partialorder %v1400, 0.0
    %v3922 = vand.u32 %v1400, 2147483648
    %v3923 = vsel %vm3921, %v3922, %v3920
    %v3924 = vrsqrt.pop %v1403
    %v3925 = vmul.f32 %v3924, %v1403
    %v3926 = vmul.f32 %v3925, %v3924
    %v3927 = vmul.f32 0.5, %v3926
    %v3928 = vsub.f32 1.5, %v3927
    %v3929 = vmul.f32 %v3924, %v3928
    %v3930 = vmul.f32 %v1403, %v3929
    %vm3931 = vcmp.eq.f32.partialorder %v1403, inf
    %v3932 = vsel %vm3931, %v1403, %v3930
    %vm3933 = vcmp.eq.f32.partialorder %v1403, 0.0
    %v3934 = vand.u32 %v1403, 2147483648
    %v3935 = vsel %vm3933, %v3934, %v3932
    %v3936 = vrsqrt.pop %v1406
    %v3937 = vmul.f32 %v3936, %v1406
    %v3938 = vmul.f32 %v3937, %v3936
    %v3939 = vmul.f32 0.5, %v3938
    %v3940 = vsub.f32 1.5, %v3939
    %v3941 = vmul.f32 %v3936, %v3940
    %v3942 = vmul.f32 %v1406, %v3941
    %vm3943 = vcmp.eq.f32.partialorder %v1406, inf
    %v3944 = vsel %vm3943, %v1406, %v3942
    %vm3945 = vcmp.eq.f32.partialorder %v1406, 0.0
    %v3946 = vand.u32 %v1406, 2147483648
    %v3947 = vsel %vm3945, %v3946, %v3944
    %v3948 = vrsqrt.pop %v1409
    %v3949 = vmul.f32 %v3948, %v1409
    %v3950 = vmul.f32 %v3949, %v3948
    %v3951 = vmul.f32 0.5, %v3950
    %v3952 = vsub.f32 1.5, %v3951
    %v3953 = vmul.f32 %v3948, %v3952
    %v3954 = vmul.f32 %v1409, %v3953
    %vm3955 = vcmp.eq.f32.partialorder %v1409, inf
    %v3956 = vsel %vm3955, %v1409, %v3954
    %vm3957 = vcmp.eq.f32.partialorder %v1409, 0.0
    %v3958 = vand.u32 %v1409, 2147483648
    %v3959 = vsel %vm3957, %v3958, %v3956
    %v3960 = vrsqrt.pop %v1412
    %v3961 = vmul.f32 %v3960, %v1412
    %v3962 = vmul.f32 %v3961, %v3960
    %v3963 = vmul.f32 0.5, %v3962
    %v3964 = vsub.f32 1.5, %v3963
    %v3965 = vmul.f32 %v3960, %v3964
    %v3966 = vmul.f32 %v1412, %v3965
    %vm3967 = vcmp.eq.f32.partialorder %v1412, inf
    %v3968 = vsel %vm3967, %v1412, %v3966
    %vm3969 = vcmp.eq.f32.partialorder %v1412, 0.0
    %v3970 = vand.u32 %v1412, 2147483648
    %v3971 = vsel %vm3969, %v3970, %v3968
    %v3972 = vrsqrt.pop %v1415
    %v3973 = vmul.f32 %v3972, %v1415
    %v3974 = vmul.f32 %v3973, %v3972
    %v3975 = vmul.f32 0.5, %v3974
    %v3976 = vsub.f32 1.5, %v3975
    %v3977 = vmul.f32 %v3972, %v3976
    %v3978 = vmul.f32 %v1415, %v3977
    %vm3979 = vcmp.eq.f32.partialorder %v1415, inf
    %v3980 = vsel %vm3979, %v1415, %v3978
    %vm3981 = vcmp.eq.f32.partialorder %v1415, 0.0
    %v3982 = vand.u32 %v1415, 2147483648
    %v3983 = vsel %vm3981, %v3982, %v3980
    %v3984 = vrsqrt.pop %v1418
    %v3985 = vmul.f32 %v3984, %v1418
    %v3986 = vmul.f32 %v3985, %v3984
    %v3987 = vmul.f32 0.5, %v3986
    %v3988 = vsub.f32 1.5, %v3987
    %v3989 = vmul.f32 %v3984, %v3988
    %v3990 = vmul.f32 %v1418, %v3989
    %vm3991 = vcmp.eq.f32.partialorder %v1418, inf
    %v3992 = vsel %vm3991, %v1418, %v3990
    %vm3993 = vcmp.eq.f32.partialorder %v1418, 0.0
    %v3994 = vand.u32 %v1418, 2147483648
    %v3995 = vsel %vm3993, %v3994, %v3992
    %v3996 = vrsqrt.pop %v1421
    %v3997 = vmul.f32 %v3996, %v1421
    %v3998 = vmul.f32 %v3997, %v3996
    %v3999 = vmul.f32 0.5, %v3998
    %v4000 = vsub.f32 1.5, %v3999
    %v4001 = vmul.f32 %v3996, %v4000
    %v4002 = vmul.f32 %v1421, %v4001
    %vm4003 = vcmp.eq.f32.partialorder %v1421, inf
    %v4004 = vsel %vm4003, %v1421, %v4002
    %vm4005 = vcmp.eq.f32.partialorder %v1421, 0.0
    %v4006 = vand.u32 %v1421, 2147483648
    %v4007 = vsel %vm4005, %v4006, %v4004
    %v4008 = vrsqrt.pop %v1424
    %v4009 = vmul.f32 %v4008, %v1424
    %v4010 = vmul.f32 %v4009, %v4008
    %v4011 = vmul.f32 0.5, %v4010
    %v4012 = vsub.f32 1.5, %v4011
    %v4013 = vmul.f32 %v4008, %v4012
    %v4014 = vmul.f32 %v1424, %v4013
    %vm4015 = vcmp.eq.f32.partialorder %v1424, inf
    %v4016 = vsel %vm4015, %v1424, %v4014
    %vm4017 = vcmp.eq.f32.partialorder %v1424, 0.0
    %v4018 = vand.u32 %v1424, 2147483648
    %v4019 = vsel %vm4017, %v4018, %v4016
    %v4020 = vrsqrt.pop %v1427
    %v4021 = vmul.f32 %v4020, %v1427
    %v4022 = vmul.f32 %v4021, %v4020
    %v4023 = vmul.f32 0.5, %v4022
    %v4024 = vsub.f32 1.5, %v4023
    %v4025 = vmul.f32 %v4020, %v4024
    %v4026 = vmul.f32 %v1427, %v4025
    %vm4027 = vcmp.eq.f32.partialorder %v1427, inf
    %v4028 = vsel %vm4027, %v1427, %v4026
    %vm4029 = vcmp.eq.f32.partialorder %v1427, 0.0
    %v4030 = vand.u32 %v1427, 2147483648
    %v4031 = vsel %vm4029, %v4030, %v4028
    %v4032 = vrsqrt.pop %v1430
    %v4033 = vmul.f32 %v4032, %v1430
    %v4034 = vmul.f32 %v4033, %v4032
    %v4035 = vmul.f32 0.5, %v4034
    %v4036 = vsub.f32 1.5, %v4035
    %v4037 = vmul.f32 %v4032, %v4036
    %v4038 = vmul.f32 %v1430, %v4037
    %vm4039 = vcmp.eq.f32.partialorder %v1430, inf
    %v4040 = vsel %vm4039, %v1430, %v4038
    %vm4041 = vcmp.eq.f32.partialorder %v1430, 0.0
    %v4042 = vand.u32 %v1430, 2147483648
    %v4043 = vsel %vm4041, %v4042, %v4040
    %v4044 = vrsqrt.pop %v1433
    %v4045 = vmul.f32 %v4044, %v1433
    %v4046 = vmul.f32 %v4045, %v4044
    %v4047 = vmul.f32 0.5, %v4046
    %v4048 = vsub.f32 1.5, %v4047
    %v4049 = vmul.f32 %v4044, %v4048
    %v4050 = vmul.f32 %v1433, %v4049
    %vm4051 = vcmp.eq.f32.partialorder %v1433, inf
    %v4052 = vsel %vm4051, %v1433, %v4050
    %vm4053 = vcmp.eq.f32.partialorder %v1433, 0.0
    %v4054 = vand.u32 %v1433, 2147483648
    %v4055 = vsel %vm4053, %v4054, %v4052
    %v4056 = vrsqrt.pop %v1436
    %v4057 = vmul.f32 %v4056, %v1436
    %v4058 = vmul.f32 %v4057, %v4056
    %v4059 = vmul.f32 0.5, %v4058
    %v4060 = vsub.f32 1.5, %v4059
    %v4061 = vmul.f32 %v4056, %v4060
    %v4062 = vmul.f32 %v1436, %v4061
    %vm4063 = vcmp.eq.f32.partialorder %v1436, inf
    %v4064 = vsel %vm4063, %v1436, %v4062
    %vm4065 = vcmp.eq.f32.partialorder %v1436, 0.0
    %v4066 = vand.u32 %v1436, 2147483648
    %v4067 = vsel %vm4065, %v4066, %v4064
    %v4068 = vrsqrt.pop %v1439
    %v4069 = vmul.f32 %v4068, %v1439
    %v4070 = vmul.f32 %v4069, %v4068
    %v4071 = vmul.f32 0.5, %v4070
    %v4072 = vsub.f32 1.5, %v4071
    %v4073 = vmul.f32 %v4068, %v4072
    %v4074 = vmul.f32 %v1439, %v4073
    %vm4075 = vcmp.eq.f32.partialorder %v1439, inf
    %v4076 = vsel %vm4075, %v1439, %v4074
    %vm4077 = vcmp.eq.f32.partialorder %v1439, 0.0
    %v4078 = vand.u32 %v1439, 2147483648
    %v4079 = vsel %vm4077, %v4078, %v4076
    %v4080 = vrsqrt.pop %v1442
    %v4081 = vmul.f32 %v4080, %v1442
    %v4082 = vmul.f32 %v4081, %v4080
    %v4083 = vmul.f32 0.5, %v4082
    %v4084 = vsub.f32 1.5, %v4083
    %v4085 = vmul.f32 %v4080, %v4084
    %v4086 = vmul.f32 %v1442, %v4085
    %vm4087 = vcmp.eq.f32.partialorder %v1442, inf
    %v4088 = vsel %vm4087, %v1442, %v4086
    %vm4089 = vcmp.eq.f32.partialorder %v1442, 0.0
    %v4090 = vand.u32 %v1442, 2147483648
    %v4091 = vsel %vm4089, %v4090, %v4088
    %v4092 = vrsqrt.pop %v1445
    %v4093 = vmul.f32 %v4092, %v1445
    %v4094 = vmul.f32 %v4093, %v4092
    %v4095 = vmul.f32 0.5, %v4094
    %v4096 = vsub.f32 1.5, %v4095
    %v4097 = vmul.f32 %v4092, %v4096
    %v4098 = vmul.f32 %v1445, %v4097
    %vm4099 = vcmp.eq.f32.partialorder %v1445, inf
    %v4100 = vsel %vm4099, %v1445, %v4098
    %vm4101 = vcmp.eq.f32.partialorder %v1445, 0.0
    %v4102 = vand.u32 %v1445, 2147483648
    %v4103 = vsel %vm4101, %v4102, %v4100
    %v4104 = vrsqrt.pop %v1448
    %v4105 = vmul.f32 %v4104, %v1448
    %v4106 = vmul.f32 %v4105, %v4104
    %v4107 = vmul.f32 0.5, %v4106
    %v4108 = vsub.f32 1.5, %v4107
    %v4109 = vmul.f32 %v4104, %v4108
    %v4110 = vmul.f32 %v1448, %v4109
    %vm4111 = vcmp.eq.f32.partialorder %v1448, inf
    %v4112 = vsel %vm4111, %v1448, %v4110
    %vm4113 = vcmp.eq.f32.partialorder %v1448, 0.0
    %v4114 = vand.u32 %v1448, 2147483648
    %v4115 = vsel %vm4113, %v4114, %v4112
    %v4116 = vrsqrt.pop %v1451
    %v4117 = vmul.f32 %v4116, %v1451
    %v4118 = vmul.f32 %v4117, %v4116
    %v4119 = vmul.f32 0.5, %v4118
    %v4120 = vsub.f32 1.5, %v4119
    %v4121 = vmul.f32 %v4116, %v4120
    %v4122 = vmul.f32 %v1451, %v4121
    %vm4123 = vcmp.eq.f32.partialorder %v1451, inf
    %v4124 = vsel %vm4123, %v1451, %v4122
    %vm4125 = vcmp.eq.f32.partialorder %v1451, 0.0
    %v4126 = vand.u32 %v1451, 2147483648
    %v4127 = vsel %vm4125, %v4126, %v4124
    %v4128 = vrsqrt.pop %v1454
    %v4129 = vmul.f32 %v4128, %v1454
    %v4130 = vmul.f32 %v4129, %v4128
    %v4131 = vmul.f32 0.5, %v4130
    %v4132 = vsub.f32 1.5, %v4131
    %v4133 = vmul.f32 %v4128, %v4132
    %v4134 = vmul.f32 %v1454, %v4133
    %vm4135 = vcmp.eq.f32.partialorder %v1454, inf
    %v4136 = vsel %vm4135, %v1454, %v4134
    %vm4137 = vcmp.eq.f32.partialorder %v1454, 0.0
    %v4138 = vand.u32 %v1454, 2147483648
    %v4139 = vsel %vm4137, %v4138, %v4136
    %v4140 = vrsqrt.pop %v1457
    %v4141 = vmul.f32 %v4140, %v1457
    %v4142 = vmul.f32 %v4141, %v4140
    %v4143 = vmul.f32 0.5, %v4142
    %v4144 = vsub.f32 1.5, %v4143
    %v4145 = vmul.f32 %v4140, %v4144
    %v4146 = vmul.f32 %v1457, %v4145
    %vm4147 = vcmp.eq.f32.partialorder %v1457, inf
    %v4148 = vsel %vm4147, %v1457, %v4146
    %vm4149 = vcmp.eq.f32.partialorder %v1457, 0.0
    %v4150 = vand.u32 %v1457, 2147483648
    %v4151 = vsel %vm4149, %v4150, %v4148
    %v4152 = vrsqrt.pop %v1460
    %v4153 = vmul.f32 %v4152, %v1460
    %v4154 = vmul.f32 %v4153, %v4152
    %v4155 = vmul.f32 0.5, %v4154
    %v4156 = vsub.f32 1.5, %v4155
    %v4157 = vmul.f32 %v4152, %v4156
    %v4158 = vmul.f32 %v1460, %v4157
    %vm4159 = vcmp.eq.f32.partialorder %v1460, inf
    %v4160 = vsel %vm4159, %v1460, %v4158
    %vm4161 = vcmp.eq.f32.partialorder %v1460, 0.0
    %v4162 = vand.u32 %v1460, 2147483648
    %v4163 = vsel %vm4161, %v4162, %v4160
    %v4164 = vrsqrt.pop %v1463
    %v4165 = vmul.f32 %v4164, %v1463
    %v4166 = vmul.f32 %v4165, %v4164
    %v4167 = vmul.f32 0.5, %v4166
    %v4168 = vsub.f32 1.5, %v4167
    %v4169 = vmul.f32 %v4164, %v4168
    %v4170 = vmul.f32 %v1463, %v4169
    %vm4171 = vcmp.eq.f32.partialorder %v1463, inf
    %v4172 = vsel %vm4171, %v1463, %v4170
    %vm4173 = vcmp.eq.f32.partialorder %v1463, 0.0
    %v4174 = vand.u32 %v1463, 2147483648
    %v4175 = vsel %vm4173, %v4174, %v4172
    %v4176 = vrsqrt.pop %v1466
    %v4177 = vmul.f32 %v4176, %v1466
    %v4178 = vmul.f32 %v4177, %v4176
    %v4179 = vmul.f32 0.5, %v4178
    %v4180 = vsub.f32 1.5, %v4179
    %v4181 = vmul.f32 %v4176, %v4180
    %v4182 = vmul.f32 %v1466, %v4181
    %vm4183 = vcmp.eq.f32.partialorder %v1466, inf
    %v4184 = vsel %vm4183, %v1466, %v4182
    %vm4185 = vcmp.eq.f32.partialorder %v1466, 0.0
    %v4186 = vand.u32 %v1466, 2147483648
    %v4187 = vsel %vm4185, %v4186, %v4184
    %v4188 = vrsqrt.pop %v1469
    %v4189 = vmul.f32 %v4188, %v1469
    %v4190 = vmul.f32 %v4189, %v4188
    %v4191 = vmul.f32 0.5, %v4190
    %v4192 = vsub.f32 1.5, %v4191
    %v4193 = vmul.f32 %v4188, %v4192
    %v4194 = vmul.f32 %v1469, %v4193
    %vm4195 = vcmp.eq.f32.partialorder %v1469, inf
    %v4196 = vsel %vm4195, %v1469, %v4194
    %vm4197 = vcmp.eq.f32.partialorder %v1469, 0.0
    %v4198 = vand.u32 %v1469, 2147483648
    %v4199 = vsel %vm4197, %v4198, %v4196
    %v4200 = vrsqrt.pop %v1472
    %v4201 = vmul.f32 %v4200, %v1472
    %v4202 = vmul.f32 %v4201, %v4200
    %v4203 = vmul.f32 0.5, %v4202
    %v4204 = vsub.f32 1.5, %v4203
    %v4205 = vmul.f32 %v4200, %v4204
    %v4206 = vmul.f32 %v1472, %v4205
    %vm4207 = vcmp.eq.f32.partialorder %v1472, inf
    %v4208 = vsel %vm4207, %v1472, %v4206
    %vm4209 = vcmp.eq.f32.partialorder %v1472, 0.0
    %v4210 = vand.u32 %v1472, 2147483648
    %v4211 = vsel %vm4209, %v4210, %v4208
    %v4212 = vrsqrt.pop %v1475
    %v4213 = vmul.f32 %v4212, %v1475
    %v4214 = vmul.f32 %v4213, %v4212
    %v4215 = vmul.f32 0.5, %v4214
    %v4216 = vsub.f32 1.5, %v4215
    %v4217 = vmul.f32 %v4212, %v4216
    %v4218 = vmul.f32 %v1475, %v4217
    %vm4219 = vcmp.eq.f32.partialorder %v1475, inf
    %v4220 = vsel %vm4219, %v1475, %v4218
    %vm4221 = vcmp.eq.f32.partialorder %v1475, 0.0
    %v4222 = vand.u32 %v1475, 2147483648
    %v4223 = vsel %vm4221, %v4222, %v4220
    %v4224 = vrsqrt.pop %v1478
    %v4225 = vmul.f32 %v4224, %v1478
    %v4226 = vmul.f32 %v4225, %v4224
    %v4227 = vmul.f32 0.5, %v4226
    %v4228 = vsub.f32 1.5, %v4227
    %v4229 = vmul.f32 %v4224, %v4228
    %v4230 = vmul.f32 %v1478, %v4229
    %vm4231 = vcmp.eq.f32.partialorder %v1478, inf
    %v4232 = vsel %vm4231, %v1478, %v4230
    %vm4233 = vcmp.eq.f32.partialorder %v1478, 0.0
    %v4234 = vand.u32 %v1478, 2147483648
    %v4235 = vsel %vm4233, %v4234, %v4232
    %v4236 = vrsqrt.pop %v1481
    %v4237 = vmul.f32 %v4236, %v1481
    %v4238 = vmul.f32 %v4237, %v4236
    %v4239 = vmul.f32 0.5, %v4238
    %v4240 = vsub.f32 1.5, %v4239
    %v4241 = vmul.f32 %v4236, %v4240
    %v4242 = vmul.f32 %v1481, %v4241
    %vm4243 = vcmp.eq.f32.partialorder %v1481, inf
    %v4244 = vsel %vm4243, %v1481, %v4242
    %vm4245 = vcmp.eq.f32.partialorder %v1481, 0.0
    %v4246 = vand.u32 %v1481, 2147483648
    %v4247 = vsel %vm4245, %v4246, %v4244
    %v4248 = vrsqrt.pop %v1484
    %v4249 = vmul.f32 %v4248, %v1484
    %v4250 = vmul.f32 %v4249, %v4248
    %v4251 = vmul.f32 0.5, %v4250
    %v4252 = vsub.f32 1.5, %v4251
    %v4253 = vmul.f32 %v4248, %v4252
    %v4254 = vmul.f32 %v1484, %v4253
    %vm4255 = vcmp.eq.f32.partialorder %v1484, inf
    %v4256 = vsel %vm4255, %v1484, %v4254
    %vm4257 = vcmp.eq.f32.partialorder %v1484, 0.0
    %v4258 = vand.u32 %v1484, 2147483648
    %v4259 = vsel %vm4257, %v4258, %v4256
    %v4260 = vrsqrt.pop %v1487
    %v4261 = vmul.f32 %v4260, %v1487
    %v4262 = vmul.f32 %v4261, %v4260
    %v4263 = vmul.f32 0.5, %v4262
    %v4264 = vsub.f32 1.5, %v4263
    %v4265 = vmul.f32 %v4260, %v4264
    %v4266 = vmul.f32 %v1487, %v4265
    %vm4267 = vcmp.eq.f32.partialorder %v1487, inf
    %v4268 = vsel %vm4267, %v1487, %v4266
    %vm4269 = vcmp.eq.f32.partialorder %v1487, 0.0
    %v4270 = vand.u32 %v1487, 2147483648
    %v4271 = vsel %vm4269, %v4270, %v4268
    %v4272 = vrsqrt.pop %v1490
    %v4273 = vmul.f32 %v4272, %v1490
    %v4274 = vmul.f32 %v4273, %v4272
    %v4275 = vmul.f32 0.5, %v4274
    %v4276 = vsub.f32 1.5, %v4275
    %v4277 = vmul.f32 %v4272, %v4276
    %v4278 = vmul.f32 %v1490, %v4277
    %vm4279 = vcmp.eq.f32.partialorder %v1490, inf
    %v4280 = vsel %vm4279, %v1490, %v4278
    %vm4281 = vcmp.eq.f32.partialorder %v1490, 0.0
    %v4282 = vand.u32 %v1490, 2147483648
    %v4283 = vsel %vm4281, %v4282, %v4280
    %v4284 = vrsqrt.pop %v1493
    %v4285 = vmul.f32 %v4284, %v1493
    %v4286 = vmul.f32 %v4285, %v4284
    %v4287 = vmul.f32 0.5, %v4286
    %v4288 = vsub.f32 1.5, %v4287
    %v4289 = vmul.f32 %v4284, %v4288
    %v4290 = vmul.f32 %v1493, %v4289
    %vm4291 = vcmp.eq.f32.partialorder %v1493, inf
    %v4292 = vsel %vm4291, %v1493, %v4290
    %vm4293 = vcmp.eq.f32.partialorder %v1493, 0.0
    %v4294 = vand.u32 %v1493, 2147483648
    %v4295 = vsel %vm4293, %v4294, %v4292
    %v4296 = vrsqrt.pop %v1496
    %v4297 = vmul.f32 %v4296, %v1496
    %v4298 = vmul.f32 %v4297, %v4296
    %v4299 = vmul.f32 0.5, %v4298
    %v4300 = vsub.f32 1.5, %v4299
    %v4301 = vmul.f32 %v4296, %v4300
    %v4302 = vmul.f32 %v1496, %v4301
    %vm4303 = vcmp.eq.f32.partialorder %v1496, inf
    %v4304 = vsel %vm4303, %v1496, %v4302
    %vm4305 = vcmp.eq.f32.partialorder %v1496, 0.0
    %v4306 = vand.u32 %v1496, 2147483648
    %v4307 = vsel %vm4305, %v4306, %v4304
    %v4308 = vrsqrt.pop %v1499
    %v4309 = vmul.f32 %v4308, %v1499
    %v4310 = vmul.f32 %v4309, %v4308
    %v4311 = vmul.f32 0.5, %v4310
    %v4312 = vsub.f32 1.5, %v4311
    %v4313 = vmul.f32 %v4308, %v4312
    %v4314 = vmul.f32 %v1499, %v4313
    %vm4315 = vcmp.eq.f32.partialorder %v1499, inf
    %v4316 = vsel %vm4315, %v1499, %v4314
    %vm4317 = vcmp.eq.f32.partialorder %v1499, 0.0
    %v4318 = vand.u32 %v1499, 2147483648
    %v4319 = vsel %vm4317, %v4318, %v4316
    %v4320 = vrsqrt.pop %v1502
    %v4321 = vmul.f32 %v4320, %v1502
    %v4322 = vmul.f32 %v4321, %v4320
    %v4323 = vmul.f32 0.5, %v4322
    %v4324 = vsub.f32 1.5, %v4323
    %v4325 = vmul.f32 %v4320, %v4324
    %v4326 = vmul.f32 %v1502, %v4325
    %vm4327 = vcmp.eq.f32.partialorder %v1502, inf
    %v4328 = vsel %vm4327, %v1502, %v4326
    %vm4329 = vcmp.eq.f32.partialorder %v1502, 0.0
    %v4330 = vand.u32 %v1502, 2147483648
    %v4331 = vsel %vm4329, %v4330, %v4328
    %v4332 = vrsqrt.pop %v1505
    %v4333 = vmul.f32 %v4332, %v1505
    %v4334 = vmul.f32 %v4333, %v4332
    %v4335 = vmul.f32 0.5, %v4334
    %v4336 = vsub.f32 1.5, %v4335
    %v4337 = vmul.f32 %v4332, %v4336
    %v4338 = vmul.f32 %v1505, %v4337
    %vm4339 = vcmp.eq.f32.partialorder %v1505, inf
    %v4340 = vsel %vm4339, %v1505, %v4338
    %vm4341 = vcmp.eq.f32.partialorder %v1505, 0.0
    %v4342 = vand.u32 %v1505, 2147483648
    %v4343 = vsel %vm4341, %v4342, %v4340
    %v4344 = vrsqrt.pop %v1508
    %v4345 = vmul.f32 %v4344, %v1508
    %v4346 = vmul.f32 %v4345, %v4344
    %v4347 = vmul.f32 0.5, %v4346
    %v4348 = vsub.f32 1.5, %v4347
    %v4349 = vmul.f32 %v4344, %v4348
    %v4350 = vmul.f32 %v1508, %v4349
    %vm4351 = vcmp.eq.f32.partialorder %v1508, inf
    %v4352 = vsel %vm4351, %v1508, %v4350
    %vm4353 = vcmp.eq.f32.partialorder %v1508, 0.0
    %v4354 = vand.u32 %v1508, 2147483648
    %v4355 = vsel %vm4353, %v4354, %v4352
    %v4356 = vrsqrt.pop %v1511
    %v4357 = vmul.f32 %v4356, %v1511
    %v4358 = vmul.f32 %v4357, %v4356
    %v4359 = vmul.f32 0.5, %v4358
    %v4360 = vsub.f32 1.5, %v4359
    %v4361 = vmul.f32 %v4356, %v4360
    %v4362 = vmul.f32 %v1511, %v4361
    %vm4363 = vcmp.eq.f32.partialorder %v1511, inf
    %v4364 = vsel %vm4363, %v1511, %v4362
    %vm4365 = vcmp.eq.f32.partialorder %v1511, 0.0
    %v4366 = vand.u32 %v1511, 2147483648
    %v4367 = vsel %vm4365, %v4366, %v4364
    %v4368 = vrsqrt.pop %v1514
    %v4369 = vmul.f32 %v4368, %v1514
    %v4370 = vmul.f32 %v4369, %v4368
    %v4371 = vmul.f32 0.5, %v4370
    %v4372 = vsub.f32 1.5, %v4371
    %v4373 = vmul.f32 %v4368, %v4372
    %v4374 = vmul.f32 %v1514, %v4373
    %vm4375 = vcmp.eq.f32.partialorder %v1514, inf
    %v4376 = vsel %vm4375, %v1514, %v4374
    %vm4377 = vcmp.eq.f32.partialorder %v1514, 0.0
    %v4378 = vand.u32 %v1514, 2147483648
    %v4379 = vsel %vm4377, %v4378, %v4376
    %v4380 = vrsqrt.pop %v1517
    %v4381 = vmul.f32 %v4380, %v1517
    %v4382 = vmul.f32 %v4381, %v4380
    %v4383 = vmul.f32 0.5, %v4382
    %v4384 = vsub.f32 1.5, %v4383
    %v4385 = vmul.f32 %v4380, %v4384
    %v4386 = vmul.f32 %v1517, %v4385
    %vm4387 = vcmp.eq.f32.partialorder %v1517, inf
    %v4388 = vsel %vm4387, %v1517, %v4386
    %vm4389 = vcmp.eq.f32.partialorder %v1517, 0.0
    %v4390 = vand.u32 %v1517, 2147483648
    %v4391 = vsel %vm4389, %v4390, %v4388
    %v4392 = vrsqrt.pop %v1520
    %v4393 = vmul.f32 %v4392, %v1520
    %v4394 = vmul.f32 %v4393, %v4392
    %v4395 = vmul.f32 0.5, %v4394
    %v4396 = vsub.f32 1.5, %v4395
    %v4397 = vmul.f32 %v4392, %v4396
    %v4398 = vmul.f32 %v1520, %v4397
    %vm4399 = vcmp.eq.f32.partialorder %v1520, inf
    %v4400 = vsel %vm4399, %v1520, %v4398
    %vm4401 = vcmp.eq.f32.partialorder %v1520, 0.0
    %v4402 = vand.u32 %v1520, 2147483648
    %v4403 = vsel %vm4401, %v4402, %v4400
    %v4404 = vrsqrt.pop %v1523
    %v4405 = vmul.f32 %v4404, %v1523
    %v4406 = vmul.f32 %v4405, %v4404
    %v4407 = vmul.f32 0.5, %v4406
    %v4408 = vsub.f32 1.5, %v4407
    %v4409 = vmul.f32 %v4404, %v4408
    %v4410 = vmul.f32 %v1523, %v4409
    %vm4411 = vcmp.eq.f32.partialorder %v1523, inf
    %v4412 = vsel %vm4411, %v1523, %v4410
    %vm4413 = vcmp.eq.f32.partialorder %v1523, 0.0
    %v4414 = vand.u32 %v1523, 2147483648
    %v4415 = vsel %vm4413, %v4414, %v4412
    %v4416 = vrsqrt.pop %v1526
    %v4417 = vmul.f32 %v4416, %v1526
    %v4418 = vmul.f32 %v4417, %v4416
    %v4419 = vmul.f32 0.5, %v4418
    %v4420 = vsub.f32 1.5, %v4419
    %v4421 = vmul.f32 %v4416, %v4420
    %v4422 = vmul.f32 %v1526, %v4421
    %vm4423 = vcmp.eq.f32.partialorder %v1526, inf
    %v4424 = vsel %vm4423, %v1526, %v4422
    %vm4425 = vcmp.eq.f32.partialorder %v1526, 0.0
    %v4426 = vand.u32 %v1526, 2147483648
    %v4427 = vsel %vm4425, %v4426, %v4424
    %v4428 = vrsqrt.pop %v1529
    %v4429 = vmul.f32 %v4428, %v1529
    %v4430 = vmul.f32 %v4429, %v4428
    %v4431 = vmul.f32 0.5, %v4430
    %v4432 = vsub.f32 1.5, %v4431
    %v4433 = vmul.f32 %v4428, %v4432
    %v4434 = vmul.f32 %v1529, %v4433
    %vm4435 = vcmp.eq.f32.partialorder %v1529, inf
    %v4436 = vsel %vm4435, %v1529, %v4434
    %vm4437 = vcmp.eq.f32.partialorder %v1529, 0.0
    %v4438 = vand.u32 %v1529, 2147483648
    %v4439 = vsel %vm4437, %v4438, %v4436
    %v4440 = vrsqrt.pop %v1532
    %v4441 = vmul.f32 %v4440, %v1532
    %v4442 = vmul.f32 %v4441, %v4440
    %v4443 = vmul.f32 0.5, %v4442
    %v4444 = vsub.f32 1.5, %v4443
    %v4445 = vmul.f32 %v4440, %v4444
    %v4446 = vmul.f32 %v1532, %v4445
    %vm4447 = vcmp.eq.f32.partialorder %v1532, inf
    %v4448 = vsel %vm4447, %v1532, %v4446
    %vm4449 = vcmp.eq.f32.partialorder %v1532, 0.0
    %v4450 = vand.u32 %v1532, 2147483648
    %v4451 = vsel %vm4449, %v4450, %v4448
    %v4452 = vrsqrt.pop %v1535
    %v4453 = vmul.f32 %v4452, %v1535
    %v4454 = vmul.f32 %v4453, %v4452
    %v4455 = vmul.f32 0.5, %v4454
    %v4456 = vsub.f32 1.5, %v4455
    %v4457 = vmul.f32 %v4452, %v4456
    %v4458 = vmul.f32 %v1535, %v4457
    %vm4459 = vcmp.eq.f32.partialorder %v1535, inf
    %v4460 = vsel %vm4459, %v1535, %v4458
    %vm4461 = vcmp.eq.f32.partialorder %v1535, 0.0
    %v4462 = vand.u32 %v1535, 2147483648
    %v4463 = vsel %vm4461, %v4462, %v4460
    %v4464 = vrsqrt.pop %v1538
    %v4465 = vmul.f32 %v4464, %v1538
    %v4466 = vmul.f32 %v4465, %v4464
    %v4467 = vmul.f32 0.5, %v4466
    %v4468 = vsub.f32 1.5, %v4467
    %v4469 = vmul.f32 %v4464, %v4468
    %v4470 = vmul.f32 %v1538, %v4469
    %vm4471 = vcmp.eq.f32.partialorder %v1538, inf
    %v4472 = vsel %vm4471, %v1538, %v4470
    %vm4473 = vcmp.eq.f32.partialorder %v1538, 0.0
    %v4474 = vand.u32 %v1538, 2147483648
    %v4475 = vsel %vm4473, %v4474, %v4472
    %v4476 = vrsqrt.pop %v1541
    %v4477 = vmul.f32 %v4476, %v1541
    %v4478 = vmul.f32 %v4477, %v4476
    %v4479 = vmul.f32 0.5, %v4478
    %v4480 = vsub.f32 1.5, %v4479
    %v4481 = vmul.f32 %v4476, %v4480
    %v4482 = vmul.f32 %v1541, %v4481
    %vm4483 = vcmp.eq.f32.partialorder %v1541, inf
    %v4484 = vsel %vm4483, %v1541, %v4482
    %vm4485 = vcmp.eq.f32.partialorder %v1541, 0.0
    %v4486 = vand.u32 %v1541, 2147483648
    %v4487 = vsel %vm4485, %v4486, %v4484
    %v4488 = vrsqrt.pop %v1544
    %v4489 = vmul.f32 %v4488, %v1544
    %v4490 = vmul.f32 %v4489, %v4488
    %v4491 = vmul.f32 0.5, %v4490
    %v4492 = vsub.f32 1.5, %v4491
    %v4493 = vmul.f32 %v4488, %v4492
    %v4494 = vmul.f32 %v1544, %v4493
    %vm4495 = vcmp.eq.f32.partialorder %v1544, inf
    %v4496 = vsel %vm4495, %v1544, %v4494
    %vm4497 = vcmp.eq.f32.partialorder %v1544, 0.0
    %v4498 = vand.u32 %v1544, 2147483648
    %v4499 = vsel %vm4497, %v4498, %v4496
    %v4500 = vrsqrt.pop %v1547
    %v4501 = vmul.f32 %v4500, %v1547
    %v4502 = vmul.f32 %v4501, %v4500
    %v4503 = vmul.f32 0.5, %v4502
    %v4504 = vsub.f32 1.5, %v4503
    %v4505 = vmul.f32 %v4500, %v4504
    %v4506 = vmul.f32 %v1547, %v4505
    %vm4507 = vcmp.eq.f32.partialorder %v1547, inf
    %v4508 = vsel %vm4507, %v1547, %v4506
    %vm4509 = vcmp.eq.f32.partialorder %v1547, 0.0
    %v4510 = vand.u32 %v1547, 2147483648
    %v4511 = vsel %vm4509, %v4510, %v4508
    %v4512 = vrsqrt.pop %v1550
    %v4513 = vmul.f32 %v4512, %v1550
    %v4514 = vmul.f32 %v4513, %v4512
    %v4515 = vmul.f32 0.5, %v4514
    %v4516 = vsub.f32 1.5, %v4515
    %v4517 = vmul.f32 %v4512, %v4516
    %v4518 = vmul.f32 %v1550, %v4517
    %vm4519 = vcmp.eq.f32.partialorder %v1550, inf
    %v4520 = vsel %vm4519, %v1550, %v4518
    %vm4521 = vcmp.eq.f32.partialorder %v1550, 0.0
    %v4522 = vand.u32 %v1550, 2147483648
    %v4523 = vsel %vm4521, %v4522, %v4520
    %v4524 = vrsqrt.pop %v1553
    %v4525 = vmul.f32 %v4524, %v1553
    %v4526 = vmul.f32 %v4525, %v4524
    %v4527 = vmul.f32 0.5, %v4526
    %v4528 = vsub.f32 1.5, %v4527
    %v4529 = vmul.f32 %v4524, %v4528
    %v4530 = vmul.f32 %v1553, %v4529
    %vm4531 = vcmp.eq.f32.partialorder %v1553, inf
    %v4532 = vsel %vm4531, %v1553, %v4530
    %vm4533 = vcmp.eq.f32.partialorder %v1553, 0.0
    %v4534 = vand.u32 %v1553, 2147483648
    %v4535 = vsel %vm4533, %v4534, %v4532
    %v4536 = vrsqrt.pop %v1556
    %v4537 = vmul.f32 %v4536, %v1556
    %v4538 = vmul.f32 %v4537, %v4536
    %v4539 = vmul.f32 0.5, %v4538
    %v4540 = vsub.f32 1.5, %v4539
    %v4541 = vmul.f32 %v4536, %v4540
    %v4542 = vmul.f32 %v1556, %v4541
    %vm4543 = vcmp.eq.f32.partialorder %v1556, inf
    %v4544 = vsel %vm4543, %v1556, %v4542
    %vm4545 = vcmp.eq.f32.partialorder %v1556, 0.0
    %v4546 = vand.u32 %v1556, 2147483648
    %v4547 = vsel %vm4545, %v4546, %v4544
    %v4548 = vrsqrt.pop %v1559
    %v4549 = vmul.f32 %v4548, %v1559
    %v4550 = vmul.f32 %v4549, %v4548
    %v4551 = vmul.f32 0.5, %v4550
    %v4552 = vsub.f32 1.5, %v4551
    %v4553 = vmul.f32 %v4548, %v4552
    %v4554 = vmul.f32 %v1559, %v4553
    %vm4555 = vcmp.eq.f32.partialorder %v1559, inf
    %v4556 = vsel %vm4555, %v1559, %v4554
    %vm4557 = vcmp.eq.f32.partialorder %v1559, 0.0
    %v4558 = vand.u32 %v1559, 2147483648
    %v4559 = vsel %vm4557, %v4558, %v4556
    %v4560 = vrsqrt.pop %v1562
    %v4561 = vmul.f32 %v4560, %v1562
    %v4562 = vmul.f32 %v4561, %v4560
    %v4563 = vmul.f32 0.5, %v4562
    %v4564 = vsub.f32 1.5, %v4563
    %v4565 = vmul.f32 %v4560, %v4564
    %v4566 = vmul.f32 %v1562, %v4565
    %vm4567 = vcmp.eq.f32.partialorder %v1562, inf
    %v4568 = vsel %vm4567, %v1562, %v4566
    %vm4569 = vcmp.eq.f32.partialorder %v1562, 0.0
    %v4570 = vand.u32 %v1562, 2147483648
    %v4571 = vsel %vm4569, %v4570, %v4568
    %v4572 = vrsqrt.pop %v1565
    %v4573 = vmul.f32 %v4572, %v1565
    %v4574 = vmul.f32 %v4573, %v4572
    %v4575 = vmul.f32 0.5, %v4574
    %v4576 = vsub.f32 1.5, %v4575
    %v4577 = vmul.f32 %v4572, %v4576
    %v4578 = vmul.f32 %v1565, %v4577
    %vm4579 = vcmp.eq.f32.partialorder %v1565, inf
    %v4580 = vsel %vm4579, %v1565, %v4578
    %vm4581 = vcmp.eq.f32.partialorder %v1565, 0.0
    %v4582 = vand.u32 %v1565, 2147483648
    %v4583 = vsel %vm4581, %v4582, %v4580
    %v4584 = vrsqrt.pop %v1568
    %v4585 = vmul.f32 %v4584, %v1568
    %v4586 = vmul.f32 %v4585, %v4584
    %v4587 = vmul.f32 0.5, %v4586
    %v4588 = vsub.f32 1.5, %v4587
    %v4589 = vmul.f32 %v4584, %v4588
    %v4590 = vmul.f32 %v1568, %v4589
    %vm4591 = vcmp.eq.f32.partialorder %v1568, inf
    %v4592 = vsel %vm4591, %v1568, %v4590
    %vm4593 = vcmp.eq.f32.partialorder %v1568, 0.0
    %v4594 = vand.u32 %v1568, 2147483648
    %v4595 = vsel %vm4593, %v4594, %v4592
    %v4596 = vrsqrt.pop %v1571
    %v4597 = vmul.f32 %v4596, %v1571
    %v4598 = vmul.f32 %v4597, %v4596
    %v4599 = vmul.f32 0.5, %v4598
    %v4600 = vsub.f32 1.5, %v4599
    %v4601 = vmul.f32 %v4596, %v4600
    %v4602 = vmul.f32 %v1571, %v4601
    %vm4603 = vcmp.eq.f32.partialorder %v1571, inf
    %v4604 = vsel %vm4603, %v1571, %v4602
    %vm4605 = vcmp.eq.f32.partialorder %v1571, 0.0
    %v4606 = vand.u32 %v1571, 2147483648
    %v4607 = vsel %vm4605, %v4606, %v4604
    %v4608 = vrsqrt.pop %v1574
    %v4609 = vmul.f32 %v4608, %v1574
    %v4610 = vmul.f32 %v4609, %v4608
    %v4611 = vmul.f32 0.5, %v4610
    %v4612 = vsub.f32 1.5, %v4611
    %v4613 = vmul.f32 %v4608, %v4612
    %v4614 = vmul.f32 %v1574, %v4613
    %vm4615 = vcmp.eq.f32.partialorder %v1574, inf
    %v4616 = vsel %vm4615, %v1574, %v4614
    %vm4617 = vcmp.eq.f32.partialorder %v1574, 0.0
    %v4618 = vand.u32 %v1574, 2147483648
    %v4619 = vsel %vm4617, %v4618, %v4616
    %v4620 = vrsqrt.pop %v1577
    %v4621 = vmul.f32 %v4620, %v1577
    %v4622 = vmul.f32 %v4621, %v4620
    %v4623 = vmul.f32 0.5, %v4622
    %v4624 = vsub.f32 1.5, %v4623
    %v4625 = vmul.f32 %v4620, %v4624
    %v4626 = vmul.f32 %v1577, %v4625
    %vm4627 = vcmp.eq.f32.partialorder %v1577, inf
    %v4628 = vsel %vm4627, %v1577, %v4626
    %vm4629 = vcmp.eq.f32.partialorder %v1577, 0.0
    %v4630 = vand.u32 %v1577, 2147483648
    %v4631 = vsel %vm4629, %v4630, %v4628
    %v4632 = vrsqrt.pop %v1580
    %v4633 = vmul.f32 %v4632, %v1580
    %v4634 = vmul.f32 %v4633, %v4632
    %v4635 = vmul.f32 0.5, %v4634
    %v4636 = vsub.f32 1.5, %v4635
    %v4637 = vmul.f32 %v4632, %v4636
    %v4638 = vmul.f32 %v1580, %v4637
    %vm4639 = vcmp.eq.f32.partialorder %v1580, inf
    %v4640 = vsel %vm4639, %v1580, %v4638
    %vm4641 = vcmp.eq.f32.partialorder %v1580, 0.0
    %v4642 = vand.u32 %v1580, 2147483648
    %v4643 = vsel %vm4641, %v4642, %v4640
    %v4644 = vrsqrt.pop %v1583
    %v4645 = vmul.f32 %v4644, %v1583
    %v4646 = vmul.f32 %v4645, %v4644
    %v4647 = vmul.f32 0.5, %v4646
    %v4648 = vsub.f32 1.5, %v4647
    %v4649 = vmul.f32 %v4644, %v4648
    %v4650 = vmul.f32 %v1583, %v4649
    %vm4651 = vcmp.eq.f32.partialorder %v1583, inf
    %v4652 = vsel %vm4651, %v1583, %v4650
    %vm4653 = vcmp.eq.f32.partialorder %v1583, 0.0
    %v4654 = vand.u32 %v1583, 2147483648
    %v4655 = vsel %vm4653, %v4654, %v4652
    %v4656 = vsub.f32 1.0, %v1595
    %v4657 = vsub.f32 1.0, %v1607
    %v4658 = vsub.f32 1.0, %v1619
    %v4659 = vsub.f32 1.0, %v1631
    %v4660 = vsub.f32 1.0, %v1643
    %v4661 = vsub.f32 1.0, %v1655
    %v4662 = vsub.f32 1.0, %v1667
    %v4663 = vsub.f32 1.0, %v1679
    %v4664 = vsub.f32 1.0, %v1691
    %v4665 = vsub.f32 1.0, %v1703
    %v4666 = vsub.f32 1.0, %v1715
    %v4667 = vsub.f32 1.0, %v1727
    %v4668 = vsub.f32 1.0, %v1739
    %v4669 = vsub.f32 1.0, %v1751
    %v4670 = vsub.f32 1.0, %v1763
    %v4671 = vsub.f32 1.0, %v1775
    %v4672 = vsub.f32 1.0, %v1787
    %v4673 = vsub.f32 1.0, %v1799
    %v4674 = vsub.f32 1.0, %v1811
    %v4675 = vsub.f32 1.0, %v1823
    %v4676 = vsub.f32 1.0, %v1835
    %v4677 = vsub.f32 1.0, %v1847
    %v4678 = vsub.f32 1.0, %v1859
    %v4679 = vsub.f32 1.0, %v1871
    %v4680 = vsub.f32 1.0, %v1883
    %v4681 = vsub.f32 1.0, %v1895
    %v4682 = vsub.f32 1.0, %v1907
    %v4683 = vsub.f32 1.0, %v1919
    %v4684 = vsub.f32 1.0, %v1931
    %v4685 = vsub.f32 1.0, %v1943
    %v4686 = vsub.f32 1.0, %v1955
    %v4687 = vsub.f32 1.0, %v1967
    %v4688 = vsub.f32 1.0, %v1979
    %v4689 = vsub.f32 1.0, %v1991
    %v4690 = vsub.f32 1.0, %v2003
    %v4691 = vsub.f32 1.0, %v2015
    %v4692 = vsub.f32 1.0, %v2027
    %v4693 = vsub.f32 1.0, %v2039
    %v4694 = vsub.f32 1.0, %v2051
    %v4695 = vsub.f32 1.0, %v2063
    %v4696 = vsub.f32 1.0, %v2075
    %v4697 = vsub.f32 1.0, %v2087
    %v4698 = vsub.f32 1.0, %v2099
    %v4699 = vsub.f32 1.0, %v2111
    %v4700 = vsub.f32 1.0, %v2123
    %v4701 = vsub.f32 1.0, %v2135
    %v4702 = vsub.f32 1.0, %v2147
    %v4703 = vsub.f32 1.0, %v2159
    %v4704 = vsub.f32 1.0, %v2171
    %v4705 = vsub.f32 1.0, %v2183
    %v4706 = vsub.f32 1.0, %v2195
    %v4707 = vsub.f32 1.0, %v2207
    %v4708 = vsub.f32 1.0, %v2219
    %v4709 = vsub.f32 1.0, %v2231
    %v4710 = vsub.f32 1.0, %v2243
    %v4711 = vsub.f32 1.0, %v2255
    %v4712 = vsub.f32 1.0, %v2267
    %v4713 = vsub.f32 1.0, %v2279
    %v4714 = vsub.f32 1.0, %v2291
    %v4715 = vsub.f32 1.0, %v2303
    %v4716 = vsub.f32 1.0, %v2315
    %v4717 = vsub.f32 1.0, %v2327
    %v4718 = vsub.f32 1.0, %v2339
    %v4719 = vsub.f32 1.0, %v2351
    %v4720 = vsub.f32 1.0, %v2363
    %v4721 = vsub.f32 1.0, %v2375
    %v4722 = vsub.f32 1.0, %v2387
    %v4723 = vsub.f32 1.0, %v2399
    %v4724 = vsub.f32 1.0, %v2411
    %v4725 = vsub.f32 1.0, %v2423
    %v4726 = vsub.f32 1.0, %v2435
    %v4727 = vsub.f32 1.0, %v2447
    %v4728 = vsub.f32 1.0, %v2459
    %v4729 = vsub.f32 1.0, %v2471
    %v4730 = vsub.f32 1.0, %v2483
    %v4731 = vsub.f32 1.0, %v2495
    %v4732 = vsub.f32 1.0, %v2507
    %v4733 = vsub.f32 1.0, %v2519
    %v4734 = vsub.f32 1.0, %v2531
    %v4735 = vsub.f32 1.0, %v2543
    %v4736 = vsub.f32 1.0, %v2555
    %v4737 = vsub.f32 1.0, %v2567
    %v4738 = vsub.f32 1.0, %v2579
    %v4739 = vsub.f32 1.0, %v2591
    %v4740 = vsub.f32 1.0, %v2603
    %v4741 = vsub.f32 1.0, %v2615
    %v4742 = vsub.f32 1.0, %v2627
    %v4743 = vsub.f32 1.0, %v2639
    %v4744 = vsub.f32 1.0, %v2651
    %v4745 = vsub.f32 1.0, %v2663
    %v4746 = vsub.f32 1.0, %v2675
    %v4747 = vsub.f32 1.0, %v2687
    %v4748 = vsub.f32 1.0, %v2699
    %v4749 = vsub.f32 1.0, %v2711
    %v4750 = vsub.f32 1.0, %v2723
    %v4751 = vsub.f32 1.0, %v2735
    %v4752 = vsub.f32 1.0, %v2747
    %v4753 = vsub.f32 1.0, %v2759
    %v4754 = vsub.f32 1.0, %v2771
    %v4755 = vsub.f32 1.0, %v2783
    %v4756 = vsub.f32 1.0, %v2795
    %v4757 = vsub.f32 1.0, %v2807
    %v4758 = vsub.f32 1.0, %v2819
    %v4759 = vsub.f32 1.0, %v2831
    %v4760 = vsub.f32 1.0, %v2843
    %v4761 = vsub.f32 1.0, %v2855
    %v4762 = vsub.f32 1.0, %v2867
    %v4763 = vsub.f32 1.0, %v2879
    %v4764 = vsub.f32 1.0, %v2891
    %v4765 = vsub.f32 1.0, %v2903
    %v4766 = vsub.f32 1.0, %v2915
    %v4767 = vsub.f32 1.0, %v2927
    %v4768 = vsub.f32 1.0, %v2939
    %v4769 = vsub.f32 1.0, %v2951
    %v4770 = vsub.f32 1.0, %v2963
    %v4771 = vsub.f32 1.0, %v2975
    %v4772 = vsub.f32 1.0, %v2987
    %v4773 = vsub.f32 1.0, %v2999
    %v4774 = vsub.f32 1.0, %v3011
    %v4775 = vsub.f32 1.0, %v3023
    %v4776 = vsub.f32 1.0, %v3035
    %v4777 = vsub.f32 1.0, %v3047
    %v4778 = vsub.f32 1.0, %v3059
    %v4779 = vsub.f32 1.0, %v3071
    %v4780 = vsub.f32 1.0, %v3083
    %v4781 = vsub.f32 1.0, %v3095
    %v4782 = vsub.f32 1.0, %v3107
    %v4783 = vsub.f32 1.0, %v3119
    %v4784 = vsub.f32 1.0, %v3131
    %v4785 = vsub.f32 1.0, %v3143
    %v4786 = vsub.f32 1.0, %v3155
    %v4787 = vsub.f32 1.0, %v3167
    %v4788 = vsub.f32 1.0, %v3179
    %v4789 = vsub.f32 1.0, %v3191
    %v4790 = vsub.f32 1.0, %v3203
    %v4791 = vsub.f32 1.0, %v3215
    %v4792 = vsub.f32 1.0, %v3227
    %v4793 = vsub.f32 1.0, %v3239
    %v4794 = vsub.f32 1.0, %v3251
    %v4795 = vsub.f32 1.0, %v3263
    %v4796 = vsub.f32 1.0, %v3275
    %v4797 = vsub.f32 1.0, %v3287
    %v4798 = vsub.f32 1.0, %v3299
    %v4799 = vsub.f32 1.0, %v3311
    %v4800 = vsub.f32 1.0, %v3323
    %v4801 = vsub.f32 1.0, %v3335
    %v4802 = vsub.f32 1.0, %v3347
    %v4803 = vsub.f32 1.0, %v3359
    %v4804 = vsub.f32 1.0, %v3371
    %v4805 = vsub.f32 1.0, %v3383
    %v4806 = vsub.f32 1.0, %v3395
    %v4807 = vsub.f32 1.0, %v3407
    %v4808 = vsub.f32 1.0, %v3419
    %v4809 = vsub.f32 1.0, %v3431
    %v4810 = vsub.f32 1.0, %v3443
    %v4811 = vsub.f32 1.0, %v3455
    %v4812 = vsub.f32 1.0, %v3467
    %v4813 = vsub.f32 1.0, %v3479
    %v4814 = vsub.f32 1.0, %v3491
    %v4815 = vsub.f32 1.0, %v3503
    %v4816 = vsub.f32 1.0, %v3515
    %v4817 = vsub.f32 1.0, %v3527
    %v4818 = vsub.f32 1.0, %v3539
    %v4819 = vsub.f32 1.0, %v3551
    %v4820 = vsub.f32 1.0, %v3563
    %v4821 = vsub.f32 1.0, %v3575
    %v4822 = vsub.f32 1.0, %v3587
    %v4823 = vsub.f32 1.0, %v3599
    %v4824 = vsub.f32 1.0, %v3611
    %v4825 = vsub.f32 1.0, %v3623
    %v4826 = vsub.f32 1.0, %v3635
    %v4827 = vsub.f32 1.0, %v3647
    %v4828 = vsub.f32 1.0, %v3659
    %v4829 = vsub.f32 1.0, %v3671
    %v4830 = vsub.f32 1.0, %v3683
    %v4831 = vsub.f32 1.0, %v3695
    %v4832 = vsub.f32 1.0, %v3707
    %v4833 = vsub.f32 1.0, %v3719
    %v4834 = vsub.f32 1.0, %v3731
    %v4835 = vsub.f32 1.0, %v3743
    %v4836 = vsub.f32 1.0, %v3755
    %v4837 = vsub.f32 1.0, %v3767
    %v4838 = vsub.f32 1.0, %v3779
    %v4839 = vsub.f32 1.0, %v3791
    %v4840 = vsub.f32 1.0, %v3803
    %v4841 = vsub.f32 1.0, %v3815
    %v4842 = vsub.f32 1.0, %v3827
    %v4843 = vsub.f32 1.0, %v3839
    %v4844 = vsub.f32 1.0, %v3851
    %v4845 = vsub.f32 1.0, %v3863
    %v4846 = vsub.f32 1.0, %v3875
    %v4847 = vsub.f32 1.0, %v3887
    %v4848 = vsub.f32 1.0, %v3899
    %v4849 = vsub.f32 1.0, %v3911
    %v4850 = vsub.f32 1.0, %v3923
    %v4851 = vsub.f32 1.0, %v3935
    %v4852 = vsub.f32 1.0, %v3947
    %v4853 = vsub.f32 1.0, %v3959
    %v4854 = vsub.f32 1.0, %v3971
    %v4855 = vsub.f32 1.0, %v3983
    %v4856 = vsub.f32 1.0, %v3995
    %v4857 = vsub.f32 1.0, %v4007
    %v4858 = vsub.f32 1.0, %v4019
    %v4859 = vsub.f32 1.0, %v4031
    %v4860 = vsub.f32 1.0, %v4043
    %v4861 = vsub.f32 1.0, %v4055
    %v4862 = vsub.f32 1.0, %v4067
    %v4863 = vsub.f32 1.0, %v4079
    %v4864 = vsub.f32 1.0, %v4091
    %v4865 = vsub.f32 1.0, %v4103
    %v4866 = vsub.f32 1.0, %v4115
    %v4867 = vsub.f32 1.0, %v4127
    %v4868 = vsub.f32 1.0, %v4139
    %v4869 = vsub.f32 1.0, %v4151
    %v4870 = vsub.f32 1.0, %v4163
    %v4871 = vsub.f32 1.0, %v4175
    %v4872 = vsub.f32 1.0, %v4187
    %v4873 = vsub.f32 1.0, %v4199
    %v4874 = vsub.f32 1.0, %v4211
    %v4875 = vsub.f32 1.0, %v4223
    %v4876 = vsub.f32 1.0, %v4235
    %v4877 = vsub.f32 1.0, %v4247
    %v4878 = vsub.f32 1.0, %v4259
    %v4879 = vsub.f32 1.0, %v4271
    %v4880 = vsub.f32 1.0, %v4283
    %v4881 = vsub.f32 1.0, %v4295
    %v4882 = vsub.f32 1.0, %v4307
    %v4883 = vsub.f32 1.0, %v4319
    %v4884 = vsub.f32 1.0, %v4331
    %v4885 = vsub.f32 1.0, %v4343
    %v4886 = vsub.f32 1.0, %v4355
    %v4887 = vsub.f32 1.0, %v4367
    %v4888 = vsub.f32 1.0, %v4379
    %v4889 = vsub.f32 1.0, %v4391
    %v4890 = vsub.f32 1.0, %v4403
    %v4891 = vsub.f32 1.0, %v4415
    %v4892 = vsub.f32 1.0, %v4427
    %v4893 = vsub.f32 1.0, %v4439
    %v4894 = vsub.f32 1.0, %v4451
    %v4895 = vsub.f32 1.0, %v4463
    %v4896 = vsub.f32 1.0, %v4475
    %v4897 = vsub.f32 1.0, %v4487
    %v4898 = vsub.f32 1.0, %v4499
    %v4899 = vsub.f32 1.0, %v4511
    %v4900 = vsub.f32 1.0, %v4523
    %v4901 = vsub.f32 1.0, %v4535
    %v4902 = vsub.f32 1.0, %v4547
    %v4903 = vsub.f32 1.0, %v4559
    %v4904 = vsub.f32 1.0, %v4571
    %v4905 = vsub.f32 1.0, %v4583
    %v4906 = vsub.f32 1.0, %v4595
    %v4907 = vsub.f32 1.0, %v4607
    %v4908 = vsub.f32 1.0, %v4619
    %v4909 = vsub.f32 1.0, %v4631
    %v4910 = vsub.f32 1.0, %v4643
    %v4911 = vsub.f32 1.0, %v4655
    %v4912 = vld [vmem:[%s2] sm:$0xff]
    %v4913 = vld [vmem:[%s2 + $0x8] sm:$0xff]
    %v4916 = vperm.slane %v4912, 0
    %v4917 = vlaneseq
    %v4918 = vshrl.u32 %v4917, 7
    %4920 = vset.pattern.permute.xlu0 %v4918
    %4921 = vperm.xlu0 %4920, %v4916
    %v4922 = vpop.permute.xlu0 %4921
    %v4923 = vlaneseq
    %v4924 = vshrl.u32 %v4923, 7
    %v4925 = vadd.s32 %v4924, 8
    %4926 = vset.pattern.permute.xlu0 %v4925
    %4927 = vperm.xlu0 %4926, %v4916
    %v4928 = vpop.permute.xlu0 %4927
    %v4929 = vlaneseq
    %v4930 = vshrl.u32 %v4929, 7
    %v4931 = vadd.s32 %v4930, 16
    %4932 = vset.pattern.permute.xlu0 %v4931
    %4933 = vperm.xlu0 %4932, %v4916
    %v4934 = vpop.permute.xlu0 %4933
    %v4935 = vlaneseq
    %v4936 = vshrl.u32 %v4935, 7
    %v4937 = vadd.s32 %v4936, 24
    %4938 = vset.pattern.permute.xlu0 %v4937
    %4939 = vperm.xlu0 %4938, %v4916
    %v4940 = vpop.permute.xlu0 %4939
    %v4941 = vlaneseq
    %v4942 = vshrl.u32 %v4941, 7
    %v4943 = vadd.s32 %v4942, 32
    %4944 = vset.pattern.permute.xlu0 %v4943
    %4945 = vperm.xlu0 %4944, %v4916
    %v4946 = vpop.permute.xlu0 %4945
    %v4947 = vlaneseq
    %v4948 = vshrl.u32 %v4947, 7
    %v4949 = vadd.s32 %v4948, 40
    %4950 = vset.pattern.permute.xlu0 %v4949
    %4951 = vperm.xlu0 %4950, %v4916
    %v4952 = vpop.permute.xlu0 %4951
    %v4953 = vlaneseq
    %v4954 = vshrl.u32 %v4953, 7
    %v4955 = vadd.s32 %v4954, 48
    %4956 = vset.pattern.permute.xlu0 %v4955
    %4957 = vperm.xlu0 %4956, %v4916
    %v4958 = vpop.permute.xlu0 %4957
    %v4959 = vlaneseq
    %v4960 = vshrl.u32 %v4959, 7
    %v4961 = vadd.s32 %v4960, 56
    %4962 = vset.pattern.permute.xlu0 %v4961
    %4963 = vperm.xlu0 %4962, %v4916
    %v4964 = vpop.permute.xlu0 %4963
    %v4965 = vlaneseq
    %v4966 = vshrl.u32 %v4965, 7
    %v4967 = vadd.s32 %v4966, 64
    %4968 = vset.pattern.permute.xlu0 %v4967
    %4969 = vperm.xlu0 %4968, %v4916
    %v4970 = vpop.permute.xlu0 %4969
    %v4971 = vlaneseq
    %v4972 = vshrl.u32 %v4971, 7
    %v4973 = vadd.s32 %v4972, 72
    %4974 = vset.pattern.permute.xlu0 %v4973
    %4975 = vperm.xlu0 %4974, %v4916
    %v4976 = vpop.permute.xlu0 %4975
    %v4977 = vlaneseq
    %v4978 = vshrl.u32 %v4977, 7
    %v4979 = vadd.s32 %v4978, 80
    %4980 = vset.pattern.permute.xlu0 %v4979
    %4981 = vperm.xlu0 %4980, %v4916
    %v4982 = vpop.permute.xlu0 %4981
    %v4983 = vlaneseq
    %v4984 = vshrl.u32 %v4983, 7
    %v4985 = vadd.s32 %v4984, 88
    %4986 = vset.pattern.permute.xlu0 %v4985
    %4987 = vperm.xlu0 %4986, %v4916
    %v4988 = vpop.permute.xlu0 %4987
    %v4989 = vlaneseq
    %v4990 = vshrl.u32 %v4989, 7
    %v4991 = vadd.s32 %v4990, 96
    %4992 = vset.pattern.permute.xlu0 %v4991
    %4993 = vperm.xlu0 %4992, %v4916
    %v4994 = vpop.permute.xlu0 %4993
    %v4995 = vlaneseq
    %v4996 = vshrl.u32 %v4995, 7
    %v4997 = vadd.s32 %v4996, 104
    %4998 = vset.pattern.permute.xlu0 %v4997
    %4999 = vperm.xlu0 %4998, %v4916
    %v5000 = vpop.permute.xlu0 %4999
    %v5001 = vlaneseq
    %v5002 = vshrl.u32 %v5001, 7
    %v5003 = vadd.s32 %v5002, 112
    %5004 = vset.pattern.permute.xlu0 %v5003
    %5005 = vperm.xlu0 %5004, %v4916
    %v5006 = vpop.permute.xlu0 %5005
    %v5007 = vlaneseq
    %v5008 = vshrl.u32 %v5007, 7
    %v5009 = vadd.s32 %v5008, 120
    %5010 = vset.pattern.permute.xlu0 %v5009
    %5011 = vperm.xlu0 %5010, %v4916
    %v5012 = vpop.permute.xlu0 %5011
    %v5013 = vperm.slane %v4913, 0
    %v5014 = vlaneseq
    %v5015 = vshrl.u32 %v5014, 7
    %5017 = vset.pattern.permute.xlu0 %v5015
    %5018 = vperm.xlu0 %5017, %v5013
    %v5019 = vpop.permute.xlu0 %5018
    %v5020 = vlaneseq
    %v5021 = vshrl.u32 %v5020, 7
    %v5022 = vadd.s32 %v5021, 8
    %5023 = vset.pattern.permute.xlu0 %v5022
    %5024 = vperm.xlu0 %5023, %v5013
    %v5025 = vpop.permute.xlu0 %5024
    %v5026 = vlaneseq
    %v5027 = vshrl.u32 %v5026, 7
    %v5028 = vadd.s32 %v5027, 16
    %5029 = vset.pattern.permute.xlu0 %v5028
    %5030 = vperm.xlu0 %5029, %v5013
    %v5031 = vpop.permute.xlu0 %5030
    %v5032 = vlaneseq
    %v5033 = vshrl.u32 %v5032, 7
    %v5034 = vadd.s32 %v5033, 24
    %5035 = vset.pattern.permute.xlu0 %v5034
    %5036 = vperm.xlu0 %5035, %v5013
    %v5037 = vpop.permute.xlu0 %5036
    %v5038 = vlaneseq
    %v5039 = vshrl.u32 %v5038, 7
    %v5040 = vadd.s32 %v5039, 32
    %5041 = vset.pattern.permute.xlu0 %v5040
    %5042 = vperm.xlu0 %5041, %v5013
    %v5043 = vpop.permute.xlu0 %5042
    %v5044 = vlaneseq
    %v5045 = vshrl.u32 %v5044, 7
    %v5046 = vadd.s32 %v5045, 40
    %5047 = vset.pattern.permute.xlu0 %v5046
    %5048 = vperm.xlu0 %5047, %v5013
    %v5049 = vpop.permute.xlu0 %5048
    %v5050 = vlaneseq
    %v5051 = vshrl.u32 %v5050, 7
    %v5052 = vadd.s32 %v5051, 48
    %5053 = vset.pattern.permute.xlu0 %v5052
    %5054 = vperm.xlu0 %5053, %v5013
    %v5055 = vpop.permute.xlu0 %5054
    %v5056 = vlaneseq
    %v5057 = vshrl.u32 %v5056, 7
    %v5058 = vadd.s32 %v5057, 56
    %5059 = vset.pattern.permute.xlu0 %v5058
    %5060 = vperm.xlu0 %5059, %v5013
    %v5061 = vpop.permute.xlu0 %5060
    %v5062 = vlaneseq
    %v5063 = vshrl.u32 %v5062, 7
    %v5064 = vadd.s32 %v5063, 64
    %5065 = vset.pattern.permute.xlu0 %v5064
    %5066 = vperm.xlu0 %5065, %v5013
    %v5067 = vpop.permute.xlu0 %5066
    %v5068 = vlaneseq
    %v5069 = vshrl.u32 %v5068, 7
    %v5070 = vadd.s32 %v5069, 72
    %5071 = vset.pattern.permute.xlu0 %v5070
    %5072 = vperm.xlu0 %5071, %v5013
    %v5073 = vpop.permute.xlu0 %5072
    %v5074 = vlaneseq
    %v5075 = vshrl.u32 %v5074, 7
    %v5076 = vadd.s32 %v5075, 80
    %5077 = vset.pattern.permute.xlu0 %v5076
    %5078 = vperm.xlu0 %5077, %v5013
    %v5079 = vpop.permute.xlu0 %5078
    %v5080 = vlaneseq
    %v5081 = vshrl.u32 %v5080, 7
    %v5082 = vadd.s32 %v5081, 88
    %5083 = vset.pattern.permute.xlu0 %v5082
    %5084 = vperm.xlu0 %5083, %v5013
    %v5085 = vpop.permute.xlu0 %5084
    %v5086 = vlaneseq
    %v5087 = vshrl.u32 %v5086, 7
    %v5088 = vadd.s32 %v5087, 96
    %5089 = vset.pattern.permute.xlu0 %v5088
    %5090 = vperm.xlu0 %5089, %v5013
    %v5091 = vpop.permute.xlu0 %5090
    %v5092 = vlaneseq
    %v5093 = vshrl.u32 %v5092, 7
    %v5094 = vadd.s32 %v5093, 104
    %5095 = vset.pattern.permute.xlu0 %v5094
    %5096 = vperm.xlu0 %5095, %v5013
    %v5097 = vpop.permute.xlu0 %5096
    %v5098 = vlaneseq
    %v5099 = vshrl.u32 %v5098, 7
    %v5100 = vadd.s32 %v5099, 112
    %5101 = vset.pattern.permute.xlu0 %v5100
    %5102 = vperm.xlu0 %5101, %v5013
    %v5103 = vpop.permute.xlu0 %5102
    %v5104 = vlaneseq
    %v5105 = vshrl.u32 %v5104, 7
    %v5106 = vadd.s32 %v5105, 120
    %5107 = vset.pattern.permute.xlu0 %v5106
    %5108 = vperm.xlu0 %5107, %v5013
    %v5109 = vpop.permute.xlu0 %5108
    %v5110 = vperm.slane %v4912, 1
    %v5111 = vlaneseq
    %v5112 = vshrl.u32 %v5111, 7
    %5114 = vset.pattern.permute.xlu0 %v5112
    %5115 = vperm.xlu0 %5114, %v5110
    %v5116 = vpop.permute.xlu0 %5115
    %v5117 = vlaneseq
    %v5118 = vshrl.u32 %v5117, 7
    %v5119 = vadd.s32 %v5118, 8
    %5120 = vset.pattern.permute.xlu0 %v5119
    %5121 = vperm.xlu0 %5120, %v5110
    %v5122 = vpop.permute.xlu0 %5121
    %v5123 = vlaneseq
    %v5124 = vshrl.u32 %v5123, 7
    %v5125 = vadd.s32 %v5124, 16
    %5126 = vset.pattern.permute.xlu0 %v5125
    %5127 = vperm.xlu0 %5126, %v5110
    %v5128 = vpop.permute.xlu0 %5127
    %v5129 = vlaneseq
    %v5130 = vshrl.u32 %v5129, 7
    %v5131 = vadd.s32 %v5130, 24
    %5132 = vset.pattern.permute.xlu0 %v5131
    %5133 = vperm.xlu0 %5132, %v5110
    %v5134 = vpop.permute.xlu0 %5133
    %v5135 = vlaneseq
    %v5136 = vshrl.u32 %v5135, 7
    %v5137 = vadd.s32 %v5136, 32
    %5138 = vset.pattern.permute.xlu0 %v5137
    %5139 = vperm.xlu0 %5138, %v5110
    %v5140 = vpop.permute.xlu0 %5139
    %v5141 = vlaneseq
    %v5142 = vshrl.u32 %v5141, 7
    %v5143 = vadd.s32 %v5142, 40
    %5144 = vset.pattern.permute.xlu0 %v5143
    %5145 = vperm.xlu0 %5144, %v5110
    %v5146 = vpop.permute.xlu0 %5145
    %v5147 = vlaneseq
    %v5148 = vshrl.u32 %v5147, 7
    %v5149 = vadd.s32 %v5148, 48
    %5150 = vset.pattern.permute.xlu0 %v5149
    %5151 = vperm.xlu0 %5150, %v5110
    %v5152 = vpop.permute.xlu0 %5151
    %v5153 = vlaneseq
    %v5154 = vshrl.u32 %v5153, 7
    %v5155 = vadd.s32 %v5154, 56
    %5156 = vset.pattern.permute.xlu0 %v5155
    %5157 = vperm.xlu0 %5156, %v5110
    %v5158 = vpop.permute.xlu0 %5157
    %v5159 = vlaneseq
    %v5160 = vshrl.u32 %v5159, 7
    %v5161 = vadd.s32 %v5160, 64
    %5162 = vset.pattern.permute.xlu0 %v5161
    %5163 = vperm.xlu0 %5162, %v5110
    %v5164 = vpop.permute.xlu0 %5163
    %v5165 = vlaneseq
    %v5166 = vshrl.u32 %v5165, 7
    %v5167 = vadd.s32 %v5166, 72
    %5168 = vset.pattern.permute.xlu0 %v5167
    %5169 = vperm.xlu0 %5168, %v5110
    %v5170 = vpop.permute.xlu0 %5169
    %v5171 = vlaneseq
    %v5172 = vshrl.u32 %v5171, 7
    %v5173 = vadd.s32 %v5172, 80
    %5174 = vset.pattern.permute.xlu0 %v5173
    %5175 = vperm.xlu0 %5174, %v5110
    %v5176 = vpop.permute.xlu0 %5175
    %v5177 = vlaneseq
    %v5178 = vshrl.u32 %v5177, 7
    %v5179 = vadd.s32 %v5178, 88
    %5180 = vset.pattern.permute.xlu0 %v5179
    %5181 = vperm.xlu0 %5180, %v5110
    %v5182 = vpop.permute.xlu0 %5181
    %v5183 = vlaneseq
    %v5184 = vshrl.u32 %v5183, 7
    %v5185 = vadd.s32 %v5184, 96
    %5186 = vset.pattern.permute.xlu0 %v5185
    %5187 = vperm.xlu0 %5186, %v5110
    %v5188 = vpop.permute.xlu0 %5187
    %v5189 = vlaneseq
    %v5190 = vshrl.u32 %v5189, 7
    %v5191 = vadd.s32 %v5190, 104
    %5192 = vset.pattern.permute.xlu0 %v5191
    %5193 = vperm.xlu0 %5192, %v5110
    %v5194 = vpop.permute.xlu0 %5193
    %v5195 = vlaneseq
    %v5196 = vshrl.u32 %v5195, 7
    %v5197 = vadd.s32 %v5196, 112
    %5198 = vset.pattern.permute.xlu0 %v5197
    %5199 = vperm.xlu0 %5198, %v5110
    %v5200 = vpop.permute.xlu0 %5199
    %v5201 = vlaneseq
    %v5202 = vshrl.u32 %v5201, 7
    %v5203 = vadd.s32 %v5202, 120
    %5204 = vset.pattern.permute.xlu0 %v5203
    %5205 = vperm.xlu0 %5204, %v5110
    %v5206 = vpop.permute.xlu0 %5205
    %v5207 = vperm.slane %v4913, 1
    %v5208 = vlaneseq
    %v5209 = vshrl.u32 %v5208, 7
    %5211 = vset.pattern.permute.xlu0 %v5209
    %5212 = vperm.xlu0 %5211, %v5207
    %v5213 = vpop.permute.xlu0 %5212
    %v5214 = vlaneseq
    %v5215 = vshrl.u32 %v5214, 7
    %v5216 = vadd.s32 %v5215, 8
    %5217 = vset.pattern.permute.xlu0 %v5216
    %5218 = vperm.xlu0 %5217, %v5207
    %v5219 = vpop.permute.xlu0 %5218
    %v5220 = vlaneseq
    %v5221 = vshrl.u32 %v5220, 7
    %v5222 = vadd.s32 %v5221, 16
    %5223 = vset.pattern.permute.xlu0 %v5222
    %5224 = vperm.xlu0 %5223, %v5207
    %v5225 = vpop.permute.xlu0 %5224
    %v5226 = vlaneseq
    %v5227 = vshrl.u32 %v5226, 7
    %v5228 = vadd.s32 %v5227, 24
    %5229 = vset.pattern.permute.xlu0 %v5228
    %5230 = vperm.xlu0 %5229, %v5207
    %v5231 = vpop.permute.xlu0 %5230
    %v5232 = vlaneseq
    %v5233 = vshrl.u32 %v5232, 7
    %v5234 = vadd.s32 %v5233, 32
    %5235 = vset.pattern.permute.xlu0 %v5234
    %5236 = vperm.xlu0 %5235, %v5207
    %v5237 = vpop.permute.xlu0 %5236
    %v5238 = vlaneseq
    %v5239 = vshrl.u32 %v5238, 7
    %v5240 = vadd.s32 %v5239, 40
    %5241 = vset.pattern.permute.xlu0 %v5240
    %5242 = vperm.xlu0 %5241, %v5207
    %v5243 = vpop.permute.xlu0 %5242
    %v5244 = vlaneseq
    %v5245 = vshrl.u32 %v5244, 7
    %v5246 = vadd.s32 %v5245, 48
    %5247 = vset.pattern.permute.xlu0 %v5246
    %5248 = vperm.xlu0 %5247, %v5207
    %v5249 = vpop.permute.xlu0 %5248
    %v5250 = vlaneseq
    %v5251 = vshrl.u32 %v5250, 7
    %v5252 = vadd.s32 %v5251, 56
    %5253 = vset.pattern.permute.xlu0 %v5252
    %5254 = vperm.xlu0 %5253, %v5207
    %v5255 = vpop.permute.xlu0 %5254
    %v5256 = vlaneseq
    %v5257 = vshrl.u32 %v5256, 7
    %v5258 = vadd.s32 %v5257, 64
    %5259 = vset.pattern.permute.xlu0 %v5258
    %5260 = vperm.xlu0 %5259, %v5207
    %v5261 = vpop.permute.xlu0 %5260
    %v5262 = vlaneseq
    %v5263 = vshrl.u32 %v5262, 7
    %v5264 = vadd.s32 %v5263, 72
    %5265 = vset.pattern.permute.xlu0 %v5264
    %5266 = vperm.xlu0 %5265, %v5207
    %v5267 = vpop.permute.xlu0 %5266
    %v5268 = vlaneseq
    %v5269 = vshrl.u32 %v5268, 7
    %v5270 = vadd.s32 %v5269, 80
    %5271 = vset.pattern.permute.xlu0 %v5270
    %5272 = vperm.xlu0 %5271, %v5207
    %v5273 = vpop.permute.xlu0 %5272
    %v5274 = vlaneseq
    %v5275 = vshrl.u32 %v5274, 7
    %v5276 = vadd.s32 %v5275, 88
    %5277 = vset.pattern.permute.xlu0 %v5276
    %5278 = vperm.xlu0 %5277, %v5207
    %v5279 = vpop.permute.xlu0 %5278
    %v5280 = vlaneseq
    %v5281 = vshrl.u32 %v5280, 7
    %v5282 = vadd.s32 %v5281, 96
    %5283 = vset.pattern.permute.xlu0 %v5282
    %5284 = vperm.xlu0 %5283, %v5207
    %v5285 = vpop.permute.xlu0 %5284
    %v5286 = vlaneseq
    %v5287 = vshrl.u32 %v5286, 7
    %v5288 = vadd.s32 %v5287, 104
    %5289 = vset.pattern.permute.xlu0 %v5288
    %5290 = vperm.xlu0 %5289, %v5207
    %v5291 = vpop.permute.xlu0 %5290
    %v5292 = vlaneseq
    %v5293 = vshrl.u32 %v5292, 7
    %v5294 = vadd.s32 %v5293, 112
    %5295 = vset.pattern.permute.xlu0 %v5294
    %5296 = vperm.xlu0 %5295, %v5207
    %v5297 = vpop.permute.xlu0 %5296
    %v5298 = vlaneseq
    %v5299 = vshrl.u32 %v5298, 7
    %v5300 = vadd.s32 %v5299, 120
    %5301 = vset.pattern.permute.xlu0 %v5300
    %5302 = vperm.xlu0 %5301, %v5207
    %v5303 = vpop.permute.xlu0 %5302
    %v5304 = vperm.slane %v4912, 2
    %v5305 = vlaneseq
    %v5306 = vshrl.u32 %v5305, 7
    %5308 = vset.pattern.permute.xlu0 %v5306
    %5309 = vperm.xlu0 %5308, %v5304
    %v5310 = vpop.permute.xlu0 %5309
    %v5311 = vlaneseq
    %v5312 = vshrl.u32 %v5311, 7
    %v5313 = vadd.s32 %v5312, 8
    %5314 = vset.pattern.permute.xlu0 %v5313
    %5315 = vperm.xlu0 %5314, %v5304
    %v5316 = vpop.permute.xlu0 %5315
    %v5317 = vlaneseq
    %v5318 = vshrl.u32 %v5317, 7
    %v5319 = vadd.s32 %v5318, 16
    %5320 = vset.pattern.permute.xlu0 %v5319
    %5321 = vperm.xlu0 %5320, %v5304
    %v5322 = vpop.permute.xlu0 %5321
    %v5323 = vlaneseq
    %v5324 = vshrl.u32 %v5323, 7
    %v5325 = vadd.s32 %v5324, 24
    %5326 = vset.pattern.permute.xlu0 %v5325
    %5327 = vperm.xlu0 %5326, %v5304
    %v5328 = vpop.permute.xlu0 %5327
    %v5329 = vlaneseq
    %v5330 = vshrl.u32 %v5329, 7
    %v5331 = vadd.s32 %v5330, 32
    %5332 = vset.pattern.permute.xlu0 %v5331
    %5333 = vperm.xlu0 %5332, %v5304
    %v5334 = vpop.permute.xlu0 %5333
    %v5335 = vlaneseq
    %v5336 = vshrl.u32 %v5335, 7
    %v5337 = vadd.s32 %v5336, 40
    %5338 = vset.pattern.permute.xlu0 %v5337
    %5339 = vperm.xlu0 %5338, %v5304
    %v5340 = vpop.permute.xlu0 %5339
    %v5341 = vlaneseq
    %v5342 = vshrl.u32 %v5341, 7
    %v5343 = vadd.s32 %v5342, 48
    %5344 = vset.pattern.permute.xlu0 %v5343
    %5345 = vperm.xlu0 %5344, %v5304
    %v5346 = vpop.permute.xlu0 %5345
    %v5347 = vlaneseq
    %v5348 = vshrl.u32 %v5347, 7
    %v5349 = vadd.s32 %v5348, 56
    %5350 = vset.pattern.permute.xlu0 %v5349
    %5351 = vperm.xlu0 %5350, %v5304
    %v5352 = vpop.permute.xlu0 %5351
    %v5353 = vlaneseq
    %v5354 = vshrl.u32 %v5353, 7
    %v5355 = vadd.s32 %v5354, 64
    %5356 = vset.pattern.permute.xlu0 %v5355
    %5357 = vperm.xlu0 %5356, %v5304
    %v5358 = vpop.permute.xlu0 %5357
    %v5359 = vlaneseq
    %v5360 = vshrl.u32 %v5359, 7
    %v5361 = vadd.s32 %v5360, 72
    %5362 = vset.pattern.permute.xlu0 %v5361
    %5363 = vperm.xlu0 %5362, %v5304
    %v5364 = vpop.permute.xlu0 %5363
    %v5365 = vlaneseq
    %v5366 = vshrl.u32 %v5365, 7
    %v5367 = vadd.s32 %v5366, 80
    %5368 = vset.pattern.permute.xlu0 %v5367
    %5369 = vperm.xlu0 %5368, %v5304
    %v5370 = vpop.permute.xlu0 %5369
    %v5371 = vlaneseq
    %v5372 = vshrl.u32 %v5371, 7
    %v5373 = vadd.s32 %v5372, 88
    %5374 = vset.pattern.permute.xlu0 %v5373
    %5375 = vperm.xlu0 %5374, %v5304
    %v5376 = vpop.permute.xlu0 %5375
    %v5377 = vlaneseq
    %v5378 = vshrl.u32 %v5377, 7
    %v5379 = vadd.s32 %v5378, 96
    %5380 = vset.pattern.permute.xlu0 %v5379
    %5381 = vperm.xlu0 %5380, %v5304
    %v5382 = vpop.permute.xlu0 %5381
    %v5383 = vlaneseq
    %v5384 = vshrl.u32 %v5383, 7
    %v5385 = vadd.s32 %v5384, 104
    %5386 = vset.pattern.permute.xlu0 %v5385
    %5387 = vperm.xlu0 %5386, %v5304
    %v5388 = vpop.permute.xlu0 %5387
    %v5389 = vlaneseq
    %v5390 = vshrl.u32 %v5389, 7
    %v5391 = vadd.s32 %v5390, 112
    %5392 = vset.pattern.permute.xlu0 %v5391
    %5393 = vperm.xlu0 %5392, %v5304
    %v5394 = vpop.permute.xlu0 %5393
    %v5395 = vlaneseq
    %v5396 = vshrl.u32 %v5395, 7
    %v5397 = vadd.s32 %v5396, 120
    %5398 = vset.pattern.permute.xlu0 %v5397
    %5399 = vperm.xlu0 %5398, %v5304
    %v5400 = vpop.permute.xlu0 %5399
    %v5401 = vperm.slane %v4913, 2
    %v5402 = vlaneseq
    %v5403 = vshrl.u32 %v5402, 7
    %5405 = vset.pattern.permute.xlu0 %v5403
    %5406 = vperm.xlu0 %5405, %v5401
    %v5407 = vpop.permute.xlu0 %5406
    %v5408 = vlaneseq
    %v5409 = vshrl.u32 %v5408, 7
    %v5410 = vadd.s32 %v5409, 8
    %5411 = vset.pattern.permute.xlu0 %v5410
    %5412 = vperm.xlu0 %5411, %v5401
    %v5413 = vpop.permute.xlu0 %5412
    %v5414 = vlaneseq
    %v5415 = vshrl.u32 %v5414, 7
    %v5416 = vadd.s32 %v5415, 16
    %5417 = vset.pattern.permute.xlu0 %v5416
    %5418 = vperm.xlu0 %5417, %v5401
    %v5419 = vpop.permute.xlu0 %5418
    %v5420 = vlaneseq
    %v5421 = vshrl.u32 %v5420, 7
    %v5422 = vadd.s32 %v5421, 24
    %5423 = vset.pattern.permute.xlu0 %v5422
    %5424 = vperm.xlu0 %5423, %v5401
    %v5425 = vpop.permute.xlu0 %5424
    %v5426 = vlaneseq
    %v5427 = vshrl.u32 %v5426, 7
    %v5428 = vadd.s32 %v5427, 32
    %5429 = vset.pattern.permute.xlu0 %v5428
    %5430 = vperm.xlu0 %5429, %v5401
    %v5431 = vpop.permute.xlu0 %5430
    %v5432 = vlaneseq
    %v5433 = vshrl.u32 %v5432, 7
    %v5434 = vadd.s32 %v5433, 40
    %5435 = vset.pattern.permute.xlu0 %v5434
    %5436 = vperm.xlu0 %5435, %v5401
    %v5437 = vpop.permute.xlu0 %5436
    %v5438 = vlaneseq
    %v5439 = vshrl.u32 %v5438, 7
    %v5440 = vadd.s32 %v5439, 48
    %5441 = vset.pattern.permute.xlu0 %v5440
    %5442 = vperm.xlu0 %5441, %v5401
    %v5443 = vpop.permute.xlu0 %5442
    %v5444 = vlaneseq
    %v5445 = vshrl.u32 %v5444, 7
    %v5446 = vadd.s32 %v5445, 56
    %5447 = vset.pattern.permute.xlu0 %v5446
    %5448 = vperm.xlu0 %5447, %v5401
    %v5449 = vpop.permute.xlu0 %5448
    %v5450 = vlaneseq
    %v5451 = vshrl.u32 %v5450, 7
    %v5452 = vadd.s32 %v5451, 64
    %5453 = vset.pattern.permute.xlu0 %v5452
    %5454 = vperm.xlu0 %5453, %v5401
    %v5455 = vpop.permute.xlu0 %5454
    %v5456 = vlaneseq
    %v5457 = vshrl.u32 %v5456, 7
    %v5458 = vadd.s32 %v5457, 72
    %5459 = vset.pattern.permute.xlu0 %v5458
    %5460 = vperm.xlu0 %5459, %v5401
    %v5461 = vpop.permute.xlu0 %5460
    %v5462 = vlaneseq
    %v5463 = vshrl.u32 %v5462, 7
    %v5464 = vadd.s32 %v5463, 80
    %5465 = vset.pattern.permute.xlu0 %v5464
    %5466 = vperm.xlu0 %5465, %v5401
    %v5467 = vpop.permute.xlu0 %5466
    %v5468 = vlaneseq
    %v5469 = vshrl.u32 %v5468, 7
    %v5470 = vadd.s32 %v5469, 88
    %5471 = vset.pattern.permute.xlu0 %v5470
    %5472 = vperm.xlu0 %5471, %v5401
    %v5473 = vpop.permute.xlu0 %5472
    %v5474 = vlaneseq
    %v5475 = vshrl.u32 %v5474, 7
    %v5476 = vadd.s32 %v5475, 96
    %5477 = vset.pattern.permute.xlu0 %v5476
    %5478 = vperm.xlu0 %5477, %v5401
    %v5479 = vpop.permute.xlu0 %5478
    %v5480 = vlaneseq
    %v5481 = vshrl.u32 %v5480, 7
    %v5482 = vadd.s32 %v5481, 104
    %5483 = vset.pattern.permute.xlu0 %v5482
    %5484 = vperm.xlu0 %5483, %v5401
    %v5485 = vpop.permute.xlu0 %5484
    %v5486 = vlaneseq
    %v5487 = vshrl.u32 %v5486, 7
    %v5488 = vadd.s32 %v5487, 112
    %5489 = vset.pattern.permute.xlu0 %v5488
    %5490 = vperm.xlu0 %5489, %v5401
    %v5491 = vpop.permute.xlu0 %5490
    %v5492 = vlaneseq
    %v5493 = vshrl.u32 %v5492, 7
    %v5494 = vadd.s32 %v5493, 120
    %5495 = vset.pattern.permute.xlu0 %v5494
    %5496 = vperm.xlu0 %5495, %v5401
    %v5497 = vpop.permute.xlu0 %5496
    %v5498 = vperm.slane %v4912, 3
    %v5499 = vlaneseq
    %v5500 = vshrl.u32 %v5499, 7
    %5502 = vset.pattern.permute.xlu0 %v5500
    %5503 = vperm.xlu0 %5502, %v5498
    %v5504 = vpop.permute.xlu0 %5503
    %v5505 = vlaneseq
    %v5506 = vshrl.u32 %v5505, 7
    %v5507 = vadd.s32 %v5506, 8
    %5508 = vset.pattern.permute.xlu0 %v5507
    %5509 = vperm.xlu0 %5508, %v5498
    %v5510 = vpop.permute.xlu0 %5509
    %v5511 = vlaneseq
    %v5512 = vshrl.u32 %v5511, 7
    %v5513 = vadd.s32 %v5512, 16
    %5514 = vset.pattern.permute.xlu0 %v5513
    %5515 = vperm.xlu0 %5514, %v5498
    %v5516 = vpop.permute.xlu0 %5515
    %v5517 = vlaneseq
    %v5518 = vshrl.u32 %v5517, 7
    %v5519 = vadd.s32 %v5518, 24
    %5520 = vset.pattern.permute.xlu0 %v5519
    %5521 = vperm.xlu0 %5520, %v5498
    %v5522 = vpop.permute.xlu0 %5521
    %v5523 = vlaneseq
    %v5524 = vshrl.u32 %v5523, 7
    %v5525 = vadd.s32 %v5524, 32
    %5526 = vset.pattern.permute.xlu0 %v5525
    %5527 = vperm.xlu0 %5526, %v5498
    %v5528 = vpop.permute.xlu0 %5527
    %v5529 = vlaneseq
    %v5530 = vshrl.u32 %v5529, 7
    %v5531 = vadd.s32 %v5530, 40
    %5532 = vset.pattern.permute.xlu0 %v5531
    %5533 = vperm.xlu0 %5532, %v5498
    %v5534 = vpop.permute.xlu0 %5533
    %v5535 = vlaneseq
    %v5536 = vshrl.u32 %v5535, 7
    %v5537 = vadd.s32 %v5536, 48
    %5538 = vset.pattern.permute.xlu0 %v5537
    %5539 = vperm.xlu0 %5538, %v5498
    %v5540 = vpop.permute.xlu0 %5539
    %v5541 = vlaneseq
    %v5542 = vshrl.u32 %v5541, 7
    %v5543 = vadd.s32 %v5542, 56
    %5544 = vset.pattern.permute.xlu0 %v5543
    %5545 = vperm.xlu0 %5544, %v5498
    %v5546 = vpop.permute.xlu0 %5545
    %v5547 = vlaneseq
    %v5548 = vshrl.u32 %v5547, 7
    %v5549 = vadd.s32 %v5548, 64
    %5550 = vset.pattern.permute.xlu0 %v5549
    %5551 = vperm.xlu0 %5550, %v5498
    %v5552 = vpop.permute.xlu0 %5551
    %v5553 = vlaneseq
    %v5554 = vshrl.u32 %v5553, 7
    %v5555 = vadd.s32 %v5554, 72
    %5556 = vset.pattern.permute.xlu0 %v5555
    %5557 = vperm.xlu0 %5556, %v5498
    %v5558 = vpop.permute.xlu0 %5557
    %v5559 = vlaneseq
    %v5560 = vshrl.u32 %v5559, 7
    %v5561 = vadd.s32 %v5560, 80
    %5562 = vset.pattern.permute.xlu0 %v5561
    %5563 = vperm.xlu0 %5562, %v5498
    %v5564 = vpop.permute.xlu0 %5563
    %v5565 = vlaneseq
    %v5566 = vshrl.u32 %v5565, 7
    %v5567 = vadd.s32 %v5566, 88
    %5568 = vset.pattern.permute.xlu0 %v5567
    %5569 = vperm.xlu0 %5568, %v5498
    %v5570 = vpop.permute.xlu0 %5569
    %v5571 = vlaneseq
    %v5572 = vshrl.u32 %v5571, 7
    %v5573 = vadd.s32 %v5572, 96
    %5574 = vset.pattern.permute.xlu0 %v5573
    %5575 = vperm.xlu0 %5574, %v5498
    %v5576 = vpop.permute.xlu0 %5575
    %v5577 = vlaneseq
    %v5578 = vshrl.u32 %v5577, 7
    %v5579 = vadd.s32 %v5578, 104
    %5580 = vset.pattern.permute.xlu0 %v5579
    %5581 = vperm.xlu0 %5580, %v5498
    %v5582 = vpop.permute.xlu0 %5581
    %v5583 = vlaneseq
    %v5584 = vshrl.u32 %v5583, 7
    %v5585 = vadd.s32 %v5584, 112
    %5586 = vset.pattern.permute.xlu0 %v5585
    %5587 = vperm.xlu0 %5586, %v5498
    %v5588 = vpop.permute.xlu0 %5587
    %v5589 = vlaneseq
    %v5590 = vshrl.u32 %v5589, 7
    %v5591 = vadd.s32 %v5590, 120
    %5592 = vset.pattern.permute.xlu0 %v5591
    %5593 = vperm.xlu0 %5592, %v5498
    %v5594 = vpop.permute.xlu0 %5593
    %v5595 = vperm.slane %v4913, 3
    %v5596 = vlaneseq
    %v5597 = vshrl.u32 %v5596, 7
    %5599 = vset.pattern.permute.xlu0 %v5597
    %5600 = vperm.xlu0 %5599, %v5595
    %v5601 = vpop.permute.xlu0 %5600
    %v5602 = vlaneseq
    %v5603 = vshrl.u32 %v5602, 7
    %v5604 = vadd.s32 %v5603, 8
    %5605 = vset.pattern.permute.xlu0 %v5604
    %5606 = vperm.xlu0 %5605, %v5595
    %v5607 = vpop.permute.xlu0 %5606
    %v5608 = vlaneseq
    %v5609 = vshrl.u32 %v5608, 7
    %v5610 = vadd.s32 %v5609, 16
    %5611 = vset.pattern.permute.xlu0 %v5610
    %5612 = vperm.xlu0 %5611, %v5595
    %v5613 = vpop.permute.xlu0 %5612
    %v5614 = vlaneseq
    %v5615 = vshrl.u32 %v5614, 7
    %v5616 = vadd.s32 %v5615, 24
    %5617 = vset.pattern.permute.xlu0 %v5616
    %5618 = vperm.xlu0 %5617, %v5595
    %v5619 = vpop.permute.xlu0 %5618
    %v5620 = vlaneseq
    %v5621 = vshrl.u32 %v5620, 7
    %v5622 = vadd.s32 %v5621, 32
    %5623 = vset.pattern.permute.xlu0 %v5622
    %5624 = vperm.xlu0 %5623, %v5595
    %v5625 = vpop.permute.xlu0 %5624
    %v5626 = vlaneseq
    %v5627 = vshrl.u32 %v5626, 7
    %v5628 = vadd.s32 %v5627, 40
    %5629 = vset.pattern.permute.xlu0 %v5628
    %5630 = vperm.xlu0 %5629, %v5595
    %v5631 = vpop.permute.xlu0 %5630
    %v5632 = vlaneseq
    %v5633 = vshrl.u32 %v5632, 7
    %v5634 = vadd.s32 %v5633, 48
    %5635 = vset.pattern.permute.xlu0 %v5634
    %5636 = vperm.xlu0 %5635, %v5595
    %v5637 = vpop.permute.xlu0 %5636
    %v5638 = vlaneseq
    %v5639 = vshrl.u32 %v5638, 7
    %v5640 = vadd.s32 %v5639, 56
    %5641 = vset.pattern.permute.xlu0 %v5640
    %5642 = vperm.xlu0 %5641, %v5595
    %v5643 = vpop.permute.xlu0 %5642
    %v5644 = vlaneseq
    %v5645 = vshrl.u32 %v5644, 7
    %v5646 = vadd.s32 %v5645, 64
    %5647 = vset.pattern.permute.xlu0 %v5646
    %5648 = vperm.xlu0 %5647, %v5595
    %v5649 = vpop.permute.xlu0 %5648
    %v5650 = vlaneseq
    %v5651 = vshrl.u32 %v5650, 7
    %v5652 = vadd.s32 %v5651, 72
    %5653 = vset.pattern.permute.xlu0 %v5652
    %5654 = vperm.xlu0 %5653, %v5595
    %v5655 = vpop.permute.xlu0 %5654
    %v5656 = vlaneseq
    %v5657 = vshrl.u32 %v5656, 7
    %v5658 = vadd.s32 %v5657, 80
    %5659 = vset.pattern.permute.xlu0 %v5658
    %5660 = vperm.xlu0 %5659, %v5595
    %v5661 = vpop.permute.xlu0 %5660
    %v5662 = vlaneseq
    %v5663 = vshrl.u32 %v5662, 7
    %v5664 = vadd.s32 %v5663, 88
    %5665 = vset.pattern.permute.xlu0 %v5664
    %5666 = vperm.xlu0 %5665, %v5595
    %v5667 = vpop.permute.xlu0 %5666
    %v5668 = vlaneseq
    %v5669 = vshrl.u32 %v5668, 7
    %v5670 = vadd.s32 %v5669, 96
    %5671 = vset.pattern.permute.xlu0 %v5670
    %5672 = vperm.xlu0 %5671, %v5595
    %v5673 = vpop.permute.xlu0 %5672
    %v5674 = vlaneseq
    %v5675 = vshrl.u32 %v5674, 7
    %v5676 = vadd.s32 %v5675, 104
    %5677 = vset.pattern.permute.xlu0 %v5676
    %5678 = vperm.xlu0 %5677, %v5595
    %v5679 = vpop.permute.xlu0 %5678
    %v5680 = vlaneseq
    %v5681 = vshrl.u32 %v5680, 7
    %v5682 = vadd.s32 %v5681, 112
    %5683 = vset.pattern.permute.xlu0 %v5682
    %5684 = vperm.xlu0 %5683, %v5595
    %v5685 = vpop.permute.xlu0 %5684
    %v5686 = vlaneseq
    %v5687 = vshrl.u32 %v5686, 7
    %v5688 = vadd.s32 %v5687, 120
    %5689 = vset.pattern.permute.xlu0 %v5688
    %5690 = vperm.xlu0 %5689, %v5595
    %v5691 = vpop.permute.xlu0 %5690
    %v5692 = vperm.slane %v4912, 4
    %v5693 = vlaneseq
    %v5694 = vshrl.u32 %v5693, 7
    %5696 = vset.pattern.permute.xlu0 %v5694
    %5697 = vperm.xlu0 %5696, %v5692
    %v5698 = vpop.permute.xlu0 %5697
    %v5699 = vlaneseq
    %v5700 = vshrl.u32 %v5699, 7
    %v5701 = vadd.s32 %v5700, 8
    %5702 = vset.pattern.permute.xlu0 %v5701
    %5703 = vperm.xlu0 %5702, %v5692
    %v5704 = vpop.permute.xlu0 %5703
    %v5705 = vlaneseq
    %v5706 = vshrl.u32 %v5705, 7
    %v5707 = vadd.s32 %v5706, 16
    %5708 = vset.pattern.permute.xlu0 %v5707
    %5709 = vperm.xlu0 %5708, %v5692
    %v5710 = vpop.permute.xlu0 %5709
    %v5711 = vlaneseq
    %v5712 = vshrl.u32 %v5711, 7
    %v5713 = vadd.s32 %v5712, 24
    %5714 = vset.pattern.permute.xlu0 %v5713
    %5715 = vperm.xlu0 %5714, %v5692
    %v5716 = vpop.permute.xlu0 %5715
    %v5717 = vlaneseq
    %v5718 = vshrl.u32 %v5717, 7
    %v5719 = vadd.s32 %v5718, 32
    %5720 = vset.pattern.permute.xlu0 %v5719
    %5721 = vperm.xlu0 %5720, %v5692
    %v5722 = vpop.permute.xlu0 %5721
    %v5723 = vlaneseq
    %v5724 = vshrl.u32 %v5723, 7
    %v5725 = vadd.s32 %v5724, 40
    %5726 = vset.pattern.permute.xlu0 %v5725
    %5727 = vperm.xlu0 %5726, %v5692
    %v5728 = vpop.permute.xlu0 %5727
    %v5729 = vlaneseq
    %v5730 = vshrl.u32 %v5729, 7
    %v5731 = vadd.s32 %v5730, 48
    %5732 = vset.pattern.permute.xlu0 %v5731
    %5733 = vperm.xlu0 %5732, %v5692
    %v5734 = vpop.permute.xlu0 %5733
    %v5735 = vlaneseq
    %v5736 = vshrl.u32 %v5735, 7
    %v5737 = vadd.s32 %v5736, 56
    %5738 = vset.pattern.permute.xlu0 %v5737
    %5739 = vperm.xlu0 %5738, %v5692
    %v5740 = vpop.permute.xlu0 %5739
    %v5741 = vlaneseq
    %v5742 = vshrl.u32 %v5741, 7
    %v5743 = vadd.s32 %v5742, 64
    %5744 = vset.pattern.permute.xlu0 %v5743
    %5745 = vperm.xlu0 %5744, %v5692
    %v5746 = vpop.permute.xlu0 %5745
    %v5747 = vlaneseq
    %v5748 = vshrl.u32 %v5747, 7
    %v5749 = vadd.s32 %v5748, 72
    %5750 = vset.pattern.permute.xlu0 %v5749
    %5751 = vperm.xlu0 %5750, %v5692
    %v5752 = vpop.permute.xlu0 %5751
    %v5753 = vlaneseq
    %v5754 = vshrl.u32 %v5753, 7
    %v5755 = vadd.s32 %v5754, 80
    %5756 = vset.pattern.permute.xlu0 %v5755
    %5757 = vperm.xlu0 %5756, %v5692
    %v5758 = vpop.permute.xlu0 %5757
    %v5759 = vlaneseq
    %v5760 = vshrl.u32 %v5759, 7
    %v5761 = vadd.s32 %v5760, 88
    %5762 = vset.pattern.permute.xlu0 %v5761
    %5763 = vperm.xlu0 %5762, %v5692
    %v5764 = vpop.permute.xlu0 %5763
    %v5765 = vlaneseq
    %v5766 = vshrl.u32 %v5765, 7
    %v5767 = vadd.s32 %v5766, 96
    %5768 = vset.pattern.permute.xlu0 %v5767
    %5769 = vperm.xlu0 %5768, %v5692
    %v5770 = vpop.permute.xlu0 %5769
    %v5771 = vlaneseq
    %v5772 = vshrl.u32 %v5771, 7
    %v5773 = vadd.s32 %v5772, 104
    %5774 = vset.pattern.permute.xlu0 %v5773
    %5775 = vperm.xlu0 %5774, %v5692
    %v5776 = vpop.permute.xlu0 %5775
    %v5777 = vlaneseq
    %v5778 = vshrl.u32 %v5777, 7
    %v5779 = vadd.s32 %v5778, 112
    %5780 = vset.pattern.permute.xlu0 %v5779
    %5781 = vperm.xlu0 %5780, %v5692
    %v5782 = vpop.permute.xlu0 %5781
    %v5783 = vlaneseq
    %v5784 = vshrl.u32 %v5783, 7
    %v5785 = vadd.s32 %v5784, 120
    %5786 = vset.pattern.permute.xlu0 %v5785
    %5787 = vperm.xlu0 %5786, %v5692
    %v5788 = vpop.permute.xlu0 %5787
    %v5789 = vperm.slane %v4913, 4
    %v5790 = vlaneseq
    %v5791 = vshrl.u32 %v5790, 7
    %5793 = vset.pattern.permute.xlu0 %v5791
    %5794 = vperm.xlu0 %5793, %v5789
    %v5795 = vpop.permute.xlu0 %5794
    %v5796 = vlaneseq
    %v5797 = vshrl.u32 %v5796, 7
    %v5798 = vadd.s32 %v5797, 8
    %5799 = vset.pattern.permute.xlu0 %v5798
    %5800 = vperm.xlu0 %5799, %v5789
    %v5801 = vpop.permute.xlu0 %5800
    %v5802 = vlaneseq
    %v5803 = vshrl.u32 %v5802, 7
    %v5804 = vadd.s32 %v5803, 16
    %5805 = vset.pattern.permute.xlu0 %v5804
    %5806 = vperm.xlu0 %5805, %v5789
    %v5807 = vpop.permute.xlu0 %5806
    %v5808 = vlaneseq
    %v5809 = vshrl.u32 %v5808, 7
    %v5810 = vadd.s32 %v5809, 24
    %5811 = vset.pattern.permute.xlu0 %v5810
    %5812 = vperm.xlu0 %5811, %v5789
    %v5813 = vpop.permute.xlu0 %5812
    %v5814 = vlaneseq
    %v5815 = vshrl.u32 %v5814, 7
    %v5816 = vadd.s32 %v5815, 32
    %5817 = vset.pattern.permute.xlu0 %v5816
    %5818 = vperm.xlu0 %5817, %v5789
    %v5819 = vpop.permute.xlu0 %5818
    %v5820 = vlaneseq
    %v5821 = vshrl.u32 %v5820, 7
    %v5822 = vadd.s32 %v5821, 40
    %5823 = vset.pattern.permute.xlu0 %v5822
    %5824 = vperm.xlu0 %5823, %v5789
    %v5825 = vpop.permute.xlu0 %5824
    %v5826 = vlaneseq
    %v5827 = vshrl.u32 %v5826, 7
    %v5828 = vadd.s32 %v5827, 48
    %5829 = vset.pattern.permute.xlu0 %v5828
    %5830 = vperm.xlu0 %5829, %v5789
    %v5831 = vpop.permute.xlu0 %5830
    %v5832 = vlaneseq
    %v5833 = vshrl.u32 %v5832, 7
    %v5834 = vadd.s32 %v5833, 56
    %5835 = vset.pattern.permute.xlu0 %v5834
    %5836 = vperm.xlu0 %5835, %v5789
    %v5837 = vpop.permute.xlu0 %5836
    %v5838 = vlaneseq
    %v5839 = vshrl.u32 %v5838, 7
    %v5840 = vadd.s32 %v5839, 64
    %5841 = vset.pattern.permute.xlu0 %v5840
    %5842 = vperm.xlu0 %5841, %v5789
    %v5843 = vpop.permute.xlu0 %5842
    %v5844 = vlaneseq
    %v5845 = vshrl.u32 %v5844, 7
    %v5846 = vadd.s32 %v5845, 72
    %5847 = vset.pattern.permute.xlu0 %v5846
    %5848 = vperm.xlu0 %5847, %v5789
    %v5849 = vpop.permute.xlu0 %5848
    %v5850 = vlaneseq
    %v5851 = vshrl.u32 %v5850, 7
    %v5852 = vadd.s32 %v5851, 80
    %5853 = vset.pattern.permute.xlu0 %v5852
    %5854 = vperm.xlu0 %5853, %v5789
    %v5855 = vpop.permute.xlu0 %5854
    %v5856 = vlaneseq
    %v5857 = vshrl.u32 %v5856, 7
    %v5858 = vadd.s32 %v5857, 88
    %5859 = vset.pattern.permute.xlu0 %v5858
    %5860 = vperm.xlu0 %5859, %v5789
    %v5861 = vpop.permute.xlu0 %5860
    %v5862 = vlaneseq
    %v5863 = vshrl.u32 %v5862, 7
    %v5864 = vadd.s32 %v5863, 96
    %5865 = vset.pattern.permute.xlu0 %v5864
    %5866 = vperm.xlu0 %5865, %v5789
    %v5867 = vpop.permute.xlu0 %5866
    %v5868 = vlaneseq
    %v5869 = vshrl.u32 %v5868, 7
    %v5870 = vadd.s32 %v5869, 104
    %5871 = vset.pattern.permute.xlu0 %v5870
    %5872 = vperm.xlu0 %5871, %v5789
    %v5873 = vpop.permute.xlu0 %5872
    %v5874 = vlaneseq
    %v5875 = vshrl.u32 %v5874, 7
    %v5876 = vadd.s32 %v5875, 112
    %5877 = vset.pattern.permute.xlu0 %v5876
    %5878 = vperm.xlu0 %5877, %v5789
    %v5879 = vpop.permute.xlu0 %5878
    %v5880 = vlaneseq
    %v5881 = vshrl.u32 %v5880, 7
    %v5882 = vadd.s32 %v5881, 120
    %5883 = vset.pattern.permute.xlu0 %v5882
    %5884 = vperm.xlu0 %5883, %v5789
    %v5885 = vpop.permute.xlu0 %5884
    %v5886 = vperm.slane %v4912, 5
    %v5887 = vlaneseq
    %v5888 = vshrl.u32 %v5887, 7
    %5890 = vset.pattern.permute.xlu0 %v5888
    %5891 = vperm.xlu0 %5890, %v5886
    %v5892 = vpop.permute.xlu0 %5891
    %v5893 = vlaneseq
    %v5894 = vshrl.u32 %v5893, 7
    %v5895 = vadd.s32 %v5894, 8
    %5896 = vset.pattern.permute.xlu0 %v5895
    %5897 = vperm.xlu0 %5896, %v5886
    %v5898 = vpop.permute.xlu0 %5897
    %v5899 = vlaneseq
    %v5900 = vshrl.u32 %v5899, 7
    %v5901 = vadd.s32 %v5900, 16
    %5902 = vset.pattern.permute.xlu0 %v5901
    %5903 = vperm.xlu0 %5902, %v5886
    %v5904 = vpop.permute.xlu0 %5903
    %v5905 = vlaneseq
    %v5906 = vshrl.u32 %v5905, 7
    %v5907 = vadd.s32 %v5906, 24
    %5908 = vset.pattern.permute.xlu0 %v5907
    %5909 = vperm.xlu0 %5908, %v5886
    %v5910 = vpop.permute.xlu0 %5909
    %v5911 = vlaneseq
    %v5912 = vshrl.u32 %v5911, 7
    %v5913 = vadd.s32 %v5912, 32
    %5914 = vset.pattern.permute.xlu0 %v5913
    %5915 = vperm.xlu0 %5914, %v5886
    %v5916 = vpop.permute.xlu0 %5915
    %v5917 = vlaneseq
    %v5918 = vshrl.u32 %v5917, 7
    %v5919 = vadd.s32 %v5918, 40
    %5920 = vset.pattern.permute.xlu0 %v5919
    %5921 = vperm.xlu0 %5920, %v5886
    %v5922 = vpop.permute.xlu0 %5921
    %v5923 = vlaneseq
    %v5924 = vshrl.u32 %v5923, 7
    %v5925 = vadd.s32 %v5924, 48
    %5926 = vset.pattern.permute.xlu0 %v5925
    %5927 = vperm.xlu0 %5926, %v5886
    %v5928 = vpop.permute.xlu0 %5927
    %v5929 = vlaneseq
    %v5930 = vshrl.u32 %v5929, 7
    %v5931 = vadd.s32 %v5930, 56
    %5932 = vset.pattern.permute.xlu0 %v5931
    %5933 = vperm.xlu0 %5932, %v5886
    %v5934 = vpop.permute.xlu0 %5933
    %v5935 = vlaneseq
    %v5936 = vshrl.u32 %v5935, 7
    %v5937 = vadd.s32 %v5936, 64
    %5938 = vset.pattern.permute.xlu0 %v5937
    %5939 = vperm.xlu0 %5938, %v5886
    %v5940 = vpop.permute.xlu0 %5939
    %v5941 = vlaneseq
    %v5942 = vshrl.u32 %v5941, 7
    %v5943 = vadd.s32 %v5942, 72
    %5944 = vset.pattern.permute.xlu0 %v5943
    %5945 = vperm.xlu0 %5944, %v5886
    %v5946 = vpop.permute.xlu0 %5945
    %v5947 = vlaneseq
    %v5948 = vshrl.u32 %v5947, 7
    %v5949 = vadd.s32 %v5948, 80
    %5950 = vset.pattern.permute.xlu0 %v5949
    %5951 = vperm.xlu0 %5950, %v5886
    %v5952 = vpop.permute.xlu0 %5951
    %v5953 = vlaneseq
    %v5954 = vshrl.u32 %v5953, 7
    %v5955 = vadd.s32 %v5954, 88
    %5956 = vset.pattern.permute.xlu0 %v5955
    %5957 = vperm.xlu0 %5956, %v5886
    %v5958 = vpop.permute.xlu0 %5957
    %v5959 = vlaneseq
    %v5960 = vshrl.u32 %v5959, 7
    %v5961 = vadd.s32 %v5960, 96
    %5962 = vset.pattern.permute.xlu0 %v5961
    %5963 = vperm.xlu0 %5962, %v5886
    %v5964 = vpop.permute.xlu0 %5963
    %v5965 = vlaneseq
    %v5966 = vshrl.u32 %v5965, 7
    %v5967 = vadd.s32 %v5966, 104
    %5968 = vset.pattern.permute.xlu0 %v5967
    %5969 = vperm.xlu0 %5968, %v5886
    %v5970 = vpop.permute.xlu0 %5969
    %v5971 = vlaneseq
    %v5972 = vshrl.u32 %v5971, 7
    %v5973 = vadd.s32 %v5972, 112
    %5974 = vset.pattern.permute.xlu0 %v5973
    %5975 = vperm.xlu0 %5974, %v5886
    %v5976 = vpop.permute.xlu0 %5975
    %v5977 = vlaneseq
    %v5978 = vshrl.u32 %v5977, 7
    %v5979 = vadd.s32 %v5978, 120
    %5980 = vset.pattern.permute.xlu0 %v5979
    %5981 = vperm.xlu0 %5980, %v5886
    %v5982 = vpop.permute.xlu0 %5981
    %v5983 = vperm.slane %v4913, 5
    %v5984 = vlaneseq
    %v5985 = vshrl.u32 %v5984, 7
    %5987 = vset.pattern.permute.xlu0 %v5985
    %5988 = vperm.xlu0 %5987, %v5983
    %v5989 = vpop.permute.xlu0 %5988
    %v5990 = vlaneseq
    %v5991 = vshrl.u32 %v5990, 7
    %v5992 = vadd.s32 %v5991, 8
    %5993 = vset.pattern.permute.xlu0 %v5992
    %5994 = vperm.xlu0 %5993, %v5983
    %v5995 = vpop.permute.xlu0 %5994
    %v5996 = vlaneseq
    %v5997 = vshrl.u32 %v5996, 7
    %v5998 = vadd.s32 %v5997, 16
    %5999 = vset.pattern.permute.xlu0 %v5998
    %6000 = vperm.xlu0 %5999, %v5983
    %v6001 = vpop.permute.xlu0 %6000
    %v6002 = vlaneseq
    %v6003 = vshrl.u32 %v6002, 7
    %v6004 = vadd.s32 %v6003, 24
    %6005 = vset.pattern.permute.xlu0 %v6004
    %6006 = vperm.xlu0 %6005, %v5983
    %v6007 = vpop.permute.xlu0 %6006
    %v6008 = vlaneseq
    %v6009 = vshrl.u32 %v6008, 7
    %v6010 = vadd.s32 %v6009, 32
    %6011 = vset.pattern.permute.xlu0 %v6010
    %6012 = vperm.xlu0 %6011, %v5983
    %v6013 = vpop.permute.xlu0 %6012
    %v6014 = vlaneseq
    %v6015 = vshrl.u32 %v6014, 7
    %v6016 = vadd.s32 %v6015, 40
    %6017 = vset.pattern.permute.xlu0 %v6016
    %6018 = vperm.xlu0 %6017, %v5983
    %v6019 = vpop.permute.xlu0 %6018
    %v6020 = vlaneseq
    %v6021 = vshrl.u32 %v6020, 7
    %v6022 = vadd.s32 %v6021, 48
    %6023 = vset.pattern.permute.xlu0 %v6022
    %6024 = vperm.xlu0 %6023, %v5983
    %v6025 = vpop.permute.xlu0 %6024
    %v6026 = vlaneseq
    %v6027 = vshrl.u32 %v6026, 7
    %v6028 = vadd.s32 %v6027, 56
    %6029 = vset.pattern.permute.xlu0 %v6028
    %6030 = vperm.xlu0 %6029, %v5983
    %v6031 = vpop.permute.xlu0 %6030
    %v6032 = vlaneseq
    %v6033 = vshrl.u32 %v6032, 7
    %v6034 = vadd.s32 %v6033, 64
    %6035 = vset.pattern.permute.xlu0 %v6034
    %6036 = vperm.xlu0 %6035, %v5983
    %v6037 = vpop.permute.xlu0 %6036
    %v6038 = vlaneseq
    %v6039 = vshrl.u32 %v6038, 7
    %v6040 = vadd.s32 %v6039, 72
    %6041 = vset.pattern.permute.xlu0 %v6040
    %6042 = vperm.xlu0 %6041, %v5983
    %v6043 = vpop.permute.xlu0 %6042
    %v6044 = vlaneseq
    %v6045 = vshrl.u32 %v6044, 7
    %v6046 = vadd.s32 %v6045, 80
    %6047 = vset.pattern.permute.xlu0 %v6046
    %6048 = vperm.xlu0 %6047, %v5983
    %v6049 = vpop.permute.xlu0 %6048
    %v6050 = vlaneseq
    %v6051 = vshrl.u32 %v6050, 7
    %v6052 = vadd.s32 %v6051, 88
    %6053 = vset.pattern.permute.xlu0 %v6052
    %6054 = vperm.xlu0 %6053, %v5983
    %v6055 = vpop.permute.xlu0 %6054
    %v6056 = vlaneseq
    %v6057 = vshrl.u32 %v6056, 7
    %v6058 = vadd.s32 %v6057, 96
    %6059 = vset.pattern.permute.xlu0 %v6058
    %6060 = vperm.xlu0 %6059, %v5983
    %v6061 = vpop.permute.xlu0 %6060
    %v6062 = vlaneseq
    %v6063 = vshrl.u32 %v6062, 7
    %v6064 = vadd.s32 %v6063, 104
    %6065 = vset.pattern.permute.xlu0 %v6064
    %6066 = vperm.xlu0 %6065, %v5983
    %v6067 = vpop.permute.xlu0 %6066
    %v6068 = vlaneseq
    %v6069 = vshrl.u32 %v6068, 7
    %v6070 = vadd.s32 %v6069, 112
    %6071 = vset.pattern.permute.xlu0 %v6070
    %6072 = vperm.xlu0 %6071, %v5983
    %v6073 = vpop.permute.xlu0 %6072
    %v6074 = vlaneseq
    %v6075 = vshrl.u32 %v6074, 7
    %v6076 = vadd.s32 %v6075, 120
    %6077 = vset.pattern.permute.xlu0 %v6076
    %6078 = vperm.xlu0 %6077, %v5983
    %v6079 = vpop.permute.xlu0 %6078
    %v6080 = vperm.slane %v4912, 6
    %v6081 = vlaneseq
    %v6082 = vshrl.u32 %v6081, 7
    %6084 = vset.pattern.permute.xlu0 %v6082
    %6085 = vperm.xlu0 %6084, %v6080
    %v6086 = vpop.permute.xlu0 %6085
    %v6087 = vlaneseq
    %v6088 = vshrl.u32 %v6087, 7
    %v6089 = vadd.s32 %v6088, 8
    %6090 = vset.pattern.permute.xlu0 %v6089
    %6091 = vperm.xlu0 %6090, %v6080
    %v6092 = vpop.permute.xlu0 %6091
    %v6093 = vlaneseq
    %v6094 = vshrl.u32 %v6093, 7
    %v6095 = vadd.s32 %v6094, 16
    %6096 = vset.pattern.permute.xlu0 %v6095
    %6097 = vperm.xlu0 %6096, %v6080
    %v6098 = vpop.permute.xlu0 %6097
    %v6099 = vlaneseq
    %v6100 = vshrl.u32 %v6099, 7
    %v6101 = vadd.s32 %v6100, 24
    %6102 = vset.pattern.permute.xlu0 %v6101
    %6103 = vperm.xlu0 %6102, %v6080
    %v6104 = vpop.permute.xlu0 %6103
    %v6105 = vlaneseq
    %v6106 = vshrl.u32 %v6105, 7
    %v6107 = vadd.s32 %v6106, 32
    %6108 = vset.pattern.permute.xlu0 %v6107
    %6109 = vperm.xlu0 %6108, %v6080
    %v6110 = vpop.permute.xlu0 %6109
    %v6111 = vlaneseq
    %v6112 = vshrl.u32 %v6111, 7
    %v6113 = vadd.s32 %v6112, 40
    %6114 = vset.pattern.permute.xlu0 %v6113
    %6115 = vperm.xlu0 %6114, %v6080
    %v6116 = vpop.permute.xlu0 %6115
    %v6117 = vlaneseq
    %v6118 = vshrl.u32 %v6117, 7
    %v6119 = vadd.s32 %v6118, 48
    %6120 = vset.pattern.permute.xlu0 %v6119
    %6121 = vperm.xlu0 %6120, %v6080
    %v6122 = vpop.permute.xlu0 %6121
    %v6123 = vlaneseq
    %v6124 = vshrl.u32 %v6123, 7
    %v6125 = vadd.s32 %v6124, 56
    %6126 = vset.pattern.permute.xlu0 %v6125
    %6127 = vperm.xlu0 %6126, %v6080
    %v6128 = vpop.permute.xlu0 %6127
    %v6129 = vlaneseq
    %v6130 = vshrl.u32 %v6129, 7
    %v6131 = vadd.s32 %v6130, 64
    %6132 = vset.pattern.permute.xlu0 %v6131
    %6133 = vperm.xlu0 %6132, %v6080
    %v6134 = vpop.permute.xlu0 %6133
    %v6135 = vlaneseq
    %v6136 = vshrl.u32 %v6135, 7
    %v6137 = vadd.s32 %v6136, 72
    %6138 = vset.pattern.permute.xlu0 %v6137
    %6139 = vperm.xlu0 %6138, %v6080
    %v6140 = vpop.permute.xlu0 %6139
    %v6141 = vlaneseq
    %v6142 = vshrl.u32 %v6141, 7
    %v6143 = vadd.s32 %v6142, 80
    %6144 = vset.pattern.permute.xlu0 %v6143
    %6145 = vperm.xlu0 %6144, %v6080
    %v6146 = vpop.permute.xlu0 %6145
    %v6147 = vlaneseq
    %v6148 = vshrl.u32 %v6147, 7
    %v6149 = vadd.s32 %v6148, 88
    %6150 = vset.pattern.permute.xlu0 %v6149
    %6151 = vperm.xlu0 %6150, %v6080
    %v6152 = vpop.permute.xlu0 %6151
    %v6153 = vlaneseq
    %v6154 = vshrl.u32 %v6153, 7
    %v6155 = vadd.s32 %v6154, 96
    %6156 = vset.pattern.permute.xlu0 %v6155
    %6157 = vperm.xlu0 %6156, %v6080
    %v6158 = vpop.permute.xlu0 %6157
    %v6159 = vlaneseq
    %v6160 = vshrl.u32 %v6159, 7
    %v6161 = vadd.s32 %v6160, 104
    %6162 = vset.pattern.permute.xlu0 %v6161
    %6163 = vperm.xlu0 %6162, %v6080
    %v6164 = vpop.permute.xlu0 %6163
    %v6165 = vlaneseq
    %v6166 = vshrl.u32 %v6165, 7
    %v6167 = vadd.s32 %v6166, 112
    %6168 = vset.pattern.permute.xlu0 %v6167
    %6169 = vperm.xlu0 %6168, %v6080
    %v6170 = vpop.permute.xlu0 %6169
    %v6171 = vlaneseq
    %v6172 = vshrl.u32 %v6171, 7
    %v6173 = vadd.s32 %v6172, 120
    %6174 = vset.pattern.permute.xlu0 %v6173
    %6175 = vperm.xlu0 %6174, %v6080
    %v6176 = vpop.permute.xlu0 %6175
    %v6177 = vperm.slane %v4913, 6
    %v6178 = vlaneseq
    %v6179 = vshrl.u32 %v6178, 7
    %6181 = vset.pattern.permute.xlu0 %v6179
    %6182 = vperm.xlu0 %6181, %v6177
    %v6183 = vpop.permute.xlu0 %6182
    %v6184 = vlaneseq
    %v6185 = vshrl.u32 %v6184, 7
    %v6186 = vadd.s32 %v6185, 8
    %6187 = vset.pattern.permute.xlu0 %v6186
    %6188 = vperm.xlu0 %6187, %v6177
    %v6189 = vpop.permute.xlu0 %6188
    %v6190 = vlaneseq
    %v6191 = vshrl.u32 %v6190, 7
    %v6192 = vadd.s32 %v6191, 16
    %6193 = vset.pattern.permute.xlu0 %v6192
    %6194 = vperm.xlu0 %6193, %v6177
    %v6195 = vpop.permute.xlu0 %6194
    %v6196 = vlaneseq
    %v6197 = vshrl.u32 %v6196, 7
    %v6198 = vadd.s32 %v6197, 24
    %6199 = vset.pattern.permute.xlu0 %v6198
    %6200 = vperm.xlu0 %6199, %v6177
    %v6201 = vpop.permute.xlu0 %6200
    %v6202 = vlaneseq
    %v6203 = vshrl.u32 %v6202, 7
    %v6204 = vadd.s32 %v6203, 32
    %6205 = vset.pattern.permute.xlu0 %v6204
    %6206 = vperm.xlu0 %6205, %v6177
    %v6207 = vpop.permute.xlu0 %6206
    %v6208 = vlaneseq
    %v6209 = vshrl.u32 %v6208, 7
    %v6210 = vadd.s32 %v6209, 40
    %6211 = vset.pattern.permute.xlu0 %v6210
    %6212 = vperm.xlu0 %6211, %v6177
    %v6213 = vpop.permute.xlu0 %6212
    %v6214 = vlaneseq
    %v6215 = vshrl.u32 %v6214, 7
    %v6216 = vadd.s32 %v6215, 48
    %6217 = vset.pattern.permute.xlu0 %v6216
    %6218 = vperm.xlu0 %6217, %v6177
    %v6219 = vpop.permute.xlu0 %6218
    %v6220 = vlaneseq
    %v6221 = vshrl.u32 %v6220, 7
    %v6222 = vadd.s32 %v6221, 56
    %6223 = vset.pattern.permute.xlu0 %v6222
    %6224 = vperm.xlu0 %6223, %v6177
    %v6225 = vpop.permute.xlu0 %6224
    %v6226 = vlaneseq
    %v6227 = vshrl.u32 %v6226, 7
    %v6228 = vadd.s32 %v6227, 64
    %6229 = vset.pattern.permute.xlu0 %v6228
    %6230 = vperm.xlu0 %6229, %v6177
    %v6231 = vpop.permute.xlu0 %6230
    %v6232 = vlaneseq
    %v6233 = vshrl.u32 %v6232, 7
    %v6234 = vadd.s32 %v6233, 72
    %6235 = vset.pattern.permute.xlu0 %v6234
    %6236 = vperm.xlu0 %6235, %v6177
    %v6237 = vpop.permute.xlu0 %6236
    %v6238 = vlaneseq
    %v6239 = vshrl.u32 %v6238, 7
    %v6240 = vadd.s32 %v6239, 80
    %6241 = vset.pattern.permute.xlu0 %v6240
    %6242 = vperm.xlu0 %6241, %v6177
    %v6243 = vpop.permute.xlu0 %6242
    %v6244 = vlaneseq
    %v6245 = vshrl.u32 %v6244, 7
    %v6246 = vadd.s32 %v6245, 88
    %6247 = vset.pattern.permute.xlu0 %v6246
    %6248 = vperm.xlu0 %6247, %v6177
    %v6249 = vpop.permute.xlu0 %6248
    %v6250 = vlaneseq
    %v6251 = vshrl.u32 %v6250, 7
    %v6252 = vadd.s32 %v6251, 96
    %6253 = vset.pattern.permute.xlu0 %v6252
    %6254 = vperm.xlu0 %6253, %v6177
    %v6255 = vpop.permute.xlu0 %6254
    %v6256 = vlaneseq
    %v6257 = vshrl.u32 %v6256, 7
    %v6258 = vadd.s32 %v6257, 104
    %6259 = vset.pattern.permute.xlu0 %v6258
    %6260 = vperm.xlu0 %6259, %v6177
    %v6261 = vpop.permute.xlu0 %6260
    %v6262 = vlaneseq
    %v6263 = vshrl.u32 %v6262, 7
    %v6264 = vadd.s32 %v6263, 112
    %6265 = vset.pattern.permute.xlu0 %v6264
    %6266 = vperm.xlu0 %6265, %v6177
    %v6267 = vpop.permute.xlu0 %6266
    %v6268 = vlaneseq
    %v6269 = vshrl.u32 %v6268, 7
    %v6270 = vadd.s32 %v6269, 120
    %6271 = vset.pattern.permute.xlu0 %v6270
    %6272 = vperm.xlu0 %6271, %v6177
    %v6273 = vpop.permute.xlu0 %6272
    %v6274 = vperm.slane %v4912, 7
    %v6275 = vlaneseq
    %v6276 = vshrl.u32 %v6275, 7
    %6278 = vset.pattern.permute.xlu0 %v6276
    %6279 = vperm.xlu0 %6278, %v6274
    %v6280 = vpop.permute.xlu0 %6279
    %v6281 = vlaneseq
    %v6282 = vshrl.u32 %v6281, 7
    %v6283 = vadd.s32 %v6282, 8
    %6284 = vset.pattern.permute.xlu0 %v6283
    %6285 = vperm.xlu0 %6284, %v6274
    %v6286 = vpop.permute.xlu0 %6285
    %v6287 = vlaneseq
    %v6288 = vshrl.u32 %v6287, 7
    %v6289 = vadd.s32 %v6288, 16
    %6290 = vset.pattern.permute.xlu0 %v6289
    %6291 = vperm.xlu0 %6290, %v6274
    %v6292 = vpop.permute.xlu0 %6291
    %v6293 = vlaneseq
    %v6294 = vshrl.u32 %v6293, 7
    %v6295 = vadd.s32 %v6294, 24
    %6296 = vset.pattern.permute.xlu0 %v6295
    %6297 = vperm.xlu0 %6296, %v6274
    %v6298 = vpop.permute.xlu0 %6297
    %v6299 = vlaneseq
    %v6300 = vshrl.u32 %v6299, 7
    %v6301 = vadd.s32 %v6300, 32
    %6302 = vset.pattern.permute.xlu0 %v6301
    %6303 = vperm.xlu0 %6302, %v6274
    %v6304 = vpop.permute.xlu0 %6303
    %v6305 = vlaneseq
    %v6306 = vshrl.u32 %v6305, 7
    %v6307 = vadd.s32 %v6306, 40
    %6308 = vset.pattern.permute.xlu0 %v6307
    %6309 = vperm.xlu0 %6308, %v6274
    %v6310 = vpop.permute.xlu0 %6309
    %v6311 = vlaneseq
    %v6312 = vshrl.u32 %v6311, 7
    %v6313 = vadd.s32 %v6312, 48
    %6314 = vset.pattern.permute.xlu0 %v6313
    %6315 = vperm.xlu0 %6314, %v6274
    %v6316 = vpop.permute.xlu0 %6315
    %v6317 = vlaneseq
    %v6318 = vshrl.u32 %v6317, 7
    %v6319 = vadd.s32 %v6318, 56
    %6320 = vset.pattern.permute.xlu0 %v6319
    %6321 = vperm.xlu0 %6320, %v6274
    %v6322 = vpop.permute.xlu0 %6321
    %v6323 = vlaneseq
    %v6324 = vshrl.u32 %v6323, 7
    %v6325 = vadd.s32 %v6324, 64
    %6326 = vset.pattern.permute.xlu0 %v6325
    %6327 = vperm.xlu0 %6326, %v6274
    %v6328 = vpop.permute.xlu0 %6327
    %v6329 = vlaneseq
    %v6330 = vshrl.u32 %v6329, 7
    %v6331 = vadd.s32 %v6330, 72
    %6332 = vset.pattern.permute.xlu0 %v6331
    %6333 = vperm.xlu0 %6332, %v6274
    %v6334 = vpop.permute.xlu0 %6333
    %v6335 = vlaneseq
    %v6336 = vshrl.u32 %v6335, 7
    %v6337 = vadd.s32 %v6336, 80
    %6338 = vset.pattern.permute.xlu0 %v6337
    %6339 = vperm.xlu0 %6338, %v6274
    %v6340 = vpop.permute.xlu0 %6339
    %v6341 = vlaneseq
    %v6342 = vshrl.u32 %v6341, 7
    %v6343 = vadd.s32 %v6342, 88
    %6344 = vset.pattern.permute.xlu0 %v6343
    %6345 = vperm.xlu0 %6344, %v6274
    %v6346 = vpop.permute.xlu0 %6345
    %v6347 = vlaneseq
    %v6348 = vshrl.u32 %v6347, 7
    %v6349 = vadd.s32 %v6348, 96
    %6350 = vset.pattern.permute.xlu0 %v6349
    %6351 = vperm.xlu0 %6350, %v6274
    %v6352 = vpop.permute.xlu0 %6351
    %v6353 = vlaneseq
    %v6354 = vshrl.u32 %v6353, 7
    %v6355 = vadd.s32 %v6354, 104
    %6356 = vset.pattern.permute.xlu0 %v6355
    %6357 = vperm.xlu0 %6356, %v6274
    %v6358 = vpop.permute.xlu0 %6357
    %v6359 = vlaneseq
    %v6360 = vshrl.u32 %v6359, 7
    %v6361 = vadd.s32 %v6360, 112
    %6362 = vset.pattern.permute.xlu0 %v6361
    %6363 = vperm.xlu0 %6362, %v6274
    %v6364 = vpop.permute.xlu0 %6363
    %v6365 = vlaneseq
    %v6366 = vshrl.u32 %v6365, 7
    %v6367 = vadd.s32 %v6366, 120
    %6368 = vset.pattern.permute.xlu0 %v6367
    %6369 = vperm.xlu0 %6368, %v6274
    %v6370 = vpop.permute.xlu0 %6369
    %v6371 = vperm.slane %v4913, 7
    %v6372 = vlaneseq
    %v6373 = vshrl.u32 %v6372, 7
    %6375 = vset.pattern.permute.xlu0 %v6373
    %6376 = vperm.xlu0 %6375, %v6371
    %v6377 = vpop.permute.xlu0 %6376
    %v6378 = vlaneseq
    %v6379 = vshrl.u32 %v6378, 7
    %v6380 = vadd.s32 %v6379, 8
    %6381 = vset.pattern.permute.xlu0 %v6380
    %6382 = vperm.xlu0 %6381, %v6371
    %v6383 = vpop.permute.xlu0 %6382
    %v6384 = vlaneseq
    %v6385 = vshrl.u32 %v6384, 7
    %v6386 = vadd.s32 %v6385, 16
    %6387 = vset.pattern.permute.xlu0 %v6386
    %6388 = vperm.xlu0 %6387, %v6371
    %v6389 = vpop.permute.xlu0 %6388
    %v6390 = vlaneseq
    %v6391 = vshrl.u32 %v6390, 7
    %v6392 = vadd.s32 %v6391, 24
    %6393 = vset.pattern.permute.xlu0 %v6392
    %6394 = vperm.xlu0 %6393, %v6371
    %v6395 = vpop.permute.xlu0 %6394
    %v6396 = vlaneseq
    %v6397 = vshrl.u32 %v6396, 7
    %v6398 = vadd.s32 %v6397, 32
    %6399 = vset.pattern.permute.xlu0 %v6398
    %6400 = vperm.xlu0 %6399, %v6371
    %v6401 = vpop.permute.xlu0 %6400
    %v6402 = vlaneseq
    %v6403 = vshrl.u32 %v6402, 7
    %v6404 = vadd.s32 %v6403, 40
    %6405 = vset.pattern.permute.xlu0 %v6404
    %6406 = vperm.xlu0 %6405, %v6371
    %v6407 = vpop.permute.xlu0 %6406
    %v6408 = vlaneseq
    %v6409 = vshrl.u32 %v6408, 7
    %v6410 = vadd.s32 %v6409, 48
    %6411 = vset.pattern.permute.xlu0 %v6410
    %6412 = vperm.xlu0 %6411, %v6371
    %v6413 = vpop.permute.xlu0 %6412
    %v6414 = vlaneseq
    %v6415 = vshrl.u32 %v6414, 7
    %v6416 = vadd.s32 %v6415, 56
    %6417 = vset.pattern.permute.xlu0 %v6416
    %6418 = vperm.xlu0 %6417, %v6371
    %v6419 = vpop.permute.xlu0 %6418
    %v6420 = vlaneseq
    %v6421 = vshrl.u32 %v6420, 7
    %v6422 = vadd.s32 %v6421, 64
    %6423 = vset.pattern.permute.xlu0 %v6422
    %6424 = vperm.xlu0 %6423, %v6371
    %v6425 = vpop.permute.xlu0 %6424
    %v6426 = vlaneseq
    %v6427 = vshrl.u32 %v6426, 7
    %v6428 = vadd.s32 %v6427, 72
    %6429 = vset.pattern.permute.xlu0 %v6428
    %6430 = vperm.xlu0 %6429, %v6371
    %v6431 = vpop.permute.xlu0 %6430
    %v6432 = vlaneseq
    %v6433 = vshrl.u32 %v6432, 7
    %v6434 = vadd.s32 %v6433, 80
    %6435 = vset.pattern.permute.xlu0 %v6434
    %6436 = vperm.xlu0 %6435, %v6371
    %v6437 = vpop.permute.xlu0 %6436
    %v6438 = vlaneseq
    %v6439 = vshrl.u32 %v6438, 7
    %v6440 = vadd.s32 %v6439, 88
    %6441 = vset.pattern.permute.xlu0 %v6440
    %6442 = vperm.xlu0 %6441, %v6371
    %v6443 = vpop.permute.xlu0 %6442
    %v6444 = vlaneseq
    %v6445 = vshrl.u32 %v6444, 7
    %v6446 = vadd.s32 %v6445, 96
    %6447 = vset.pattern.permute.xlu0 %v6446
    %6448 = vperm.xlu0 %6447, %v6371
    %v6449 = vpop.permute.xlu0 %6448
    %v6450 = vlaneseq
    %v6451 = vshrl.u32 %v6450, 7
    %v6452 = vadd.s32 %v6451, 104
    %6453 = vset.pattern.permute.xlu0 %v6452
    %6454 = vperm.xlu0 %6453, %v6371
    %v6455 = vpop.permute.xlu0 %6454
    %v6456 = vlaneseq
    %v6457 = vshrl.u32 %v6456, 7
    %v6458 = vadd.s32 %v6457, 112
    %6459 = vset.pattern.permute.xlu0 %v6458
    %6460 = vperm.xlu0 %6459, %v6371
    %v6461 = vpop.permute.xlu0 %6460
    %v6462 = vlaneseq
    %v6463 = vshrl.u32 %v6462, 7
    %v6464 = vadd.s32 %v6463, 120
    %6465 = vset.pattern.permute.xlu0 %v6464
    %6466 = vperm.xlu0 %6465, %v6371
    %v6467 = vpop.permute.xlu0 %6466
    %v6724 = vadd.f32 %v4656, %v4922
    %v6725 = vadd.f32 %v4657, %v4928
    %v6726 = vadd.f32 %v4658, %v4934
    %v6727 = vadd.f32 %v4659, %v4940
    %v6728 = vadd.f32 %v4660, %v4946
    %v6729 = vadd.f32 %v4661, %v4952
    %v6730 = vadd.f32 %v4662, %v4958
    %v6731 = vadd.f32 %v4663, %v4964
    %v6732 = vadd.f32 %v4664, %v4970
    %v6733 = vadd.f32 %v4665, %v4976
    %v6734 = vadd.f32 %v4666, %v4982
    %v6735 = vadd.f32 %v4667, %v4988
    %v6736 = vadd.f32 %v4668, %v4994
    %v6737 = vadd.f32 %v4669, %v5000
    %v6738 = vadd.f32 %v4670, %v5006
    %v6739 = vadd.f32 %v4671, %v5012
    %v6740 = vadd.f32 %v4672, %v5019
    %v6741 = vadd.f32 %v4673, %v5025
    %v6742 = vadd.f32 %v4674, %v5031
    %v6743 = vadd.f32 %v4675, %v5037
    %v6744 = vadd.f32 %v4676, %v5043
    %v6745 = vadd.f32 %v4677, %v5049
    %v6746 = vadd.f32 %v4678, %v5055
    %v6747 = vadd.f32 %v4679, %v5061
    %v6748 = vadd.f32 %v4680, %v5067
    %v6749 = vadd.f32 %v4681, %v5073
    %v6750 = vadd.f32 %v4682, %v5079
    %v6751 = vadd.f32 %v4683, %v5085
    %v6752 = vadd.f32 %v4684, %v5091
    %v6753 = vadd.f32 %v4685, %v5097
    %v6754 = vadd.f32 %v4686, %v5103
    %v6755 = vadd.f32 %v4687, %v5109
    %v6756 = vadd.f32 %v4688, %v5116
    %v6757 = vadd.f32 %v4689, %v5122
    %v6758 = vadd.f32 %v4690, %v5128
    %v6759 = vadd.f32 %v4691, %v5134
    %v6760 = vadd.f32 %v4692, %v5140
    %v6761 = vadd.f32 %v4693, %v5146
    %v6762 = vadd.f32 %v4694, %v5152
    %v6763 = vadd.f32 %v4695, %v5158
    %v6764 = vadd.f32 %v4696, %v5164
    %v6765 = vadd.f32 %v4697, %v5170
    %v6766 = vadd.f32 %v4698, %v5176
    %v6767 = vadd.f32 %v4699, %v5182
    %v6768 = vadd.f32 %v4700, %v5188
    %v6769 = vadd.f32 %v4701, %v5194
    %v6770 = vadd.f32 %v4702, %v5200
    %v6771 = vadd.f32 %v4703, %v5206
    %v6772 = vadd.f32 %v4704, %v5213
    %v6773 = vadd.f32 %v4705, %v5219
    %v6774 = vadd.f32 %v4706, %v5225
    %v6775 = vadd.f32 %v4707, %v5231
    %v6776 = vadd.f32 %v4708, %v5237
    %v6777 = vadd.f32 %v4709, %v5243
    %v6778 = vadd.f32 %v4710, %v5249
    %v6779 = vadd.f32 %v4711, %v5255
    %v6780 = vadd.f32 %v4712, %v5261
    %v6781 = vadd.f32 %v4713, %v5267
    %v6782 = vadd.f32 %v4714, %v5273
    %v6783 = vadd.f32 %v4715, %v5279
    %v6784 = vadd.f32 %v4716, %v5285
    %v6785 = vadd.f32 %v4717, %v5291
    %v6786 = vadd.f32 %v4718, %v5297
    %v6787 = vadd.f32 %v4719, %v5303
    %v6788 = vadd.f32 %v4720, %v5310
    %v6789 = vadd.f32 %v4721, %v5316
    %v6790 = vadd.f32 %v4722, %v5322
    %v6791 = vadd.f32 %v4723, %v5328
    %v6792 = vadd.f32 %v4724, %v5334
    %v6793 = vadd.f32 %v4725, %v5340
    %v6794 = vadd.f32 %v4726, %v5346
    %v6795 = vadd.f32 %v4727, %v5352
    %v6796 = vadd.f32 %v4728, %v5358
    %v6797 = vadd.f32 %v4729, %v5364
    %v6798 = vadd.f32 %v4730, %v5370
    %v6799 = vadd.f32 %v4731, %v5376
    %v6800 = vadd.f32 %v4732, %v5382
    %v6801 = vadd.f32 %v4733, %v5388
    %v6802 = vadd.f32 %v4734, %v5394
    %v6803 = vadd.f32 %v4735, %v5400
    %v6804 = vadd.f32 %v4736, %v5407
    %v6805 = vadd.f32 %v4737, %v5413
    %v6806 = vadd.f32 %v4738, %v5419
    %v6807 = vadd.f32 %v4739, %v5425
    %v6808 = vadd.f32 %v4740, %v5431
    %v6809 = vadd.f32 %v4741, %v5437
    %v6810 = vadd.f32 %v4742, %v5443
    %v6811 = vadd.f32 %v4743, %v5449
    %v6812 = vadd.f32 %v4744, %v5455
    %v6813 = vadd.f32 %v4745, %v5461
    %v6814 = vadd.f32 %v4746, %v5467
    %v6815 = vadd.f32 %v4747, %v5473
    %v6816 = vadd.f32 %v4748, %v5479
    %v6817 = vadd.f32 %v4749, %v5485
    %v6818 = vadd.f32 %v4750, %v5491
    %v6819 = vadd.f32 %v4751, %v5497
    %v6820 = vadd.f32 %v4752, %v5504
    %v6821 = vadd.f32 %v4753, %v5510
    %v6822 = vadd.f32 %v4754, %v5516
    %v6823 = vadd.f32 %v4755, %v5522
    %v6824 = vadd.f32 %v4756, %v5528
    %v6825 = vadd.f32 %v4757, %v5534
    %v6826 = vadd.f32 %v4758, %v5540
    %v6827 = vadd.f32 %v4759, %v5546
    %v6828 = vadd.f32 %v4760, %v5552
    %v6829 = vadd.f32 %v4761, %v5558
    %v6830 = vadd.f32 %v4762, %v5564
    %v6831 = vadd.f32 %v4763, %v5570
    %v6832 = vadd.f32 %v4764, %v5576
    %v6833 = vadd.f32 %v4765, %v5582
    %v6834 = vadd.f32 %v4766, %v5588
    %v6835 = vadd.f32 %v4767, %v5594
    %v6836 = vadd.f32 %v4768, %v5601
    %v6837 = vadd.f32 %v4769, %v5607
    %v6838 = vadd.f32 %v4770, %v5613
    %v6839 = vadd.f32 %v4771, %v5619
    %v6840 = vadd.f32 %v4772, %v5625
    %v6841 = vadd.f32 %v4773, %v5631
    %v6842 = vadd.f32 %v4774, %v5637
    %v6843 = vadd.f32 %v4775, %v5643
    %v6844 = vadd.f32 %v4776, %v5649
    %v6845 = vadd.f32 %v4777, %v5655
    %v6846 = vadd.f32 %v4778, %v5661
    %v6847 = vadd.f32 %v4779, %v5667
    %v6848 = vadd.f32 %v4780, %v5673
    %v6849 = vadd.f32 %v4781, %v5679
    %v6850 = vadd.f32 %v4782, %v5685
    %v6851 = vadd.f32 %v4783, %v5691
    %v6852 = vadd.f32 %v4784, %v5698
    %v6853 = vadd.f32 %v4785, %v5704
    %v6854 = vadd.f32 %v4786, %v5710
    %v6855 = vadd.f32 %v4787, %v5716
    %v6856 = vadd.f32 %v4788, %v5722
    %v6857 = vadd.f32 %v4789, %v5728
    %v6858 = vadd.f32 %v4790, %v5734
    %v6859 = vadd.f32 %v4791, %v5740
    %v6860 = vadd.f32 %v4792, %v5746
    %v6861 = vadd.f32 %v4793, %v5752
    %v6862 = vadd.f32 %v4794, %v5758
    %v6863 = vadd.f32 %v4795, %v5764
    %v6864 = vadd.f32 %v4796, %v5770
    %v6865 = vadd.f32 %v4797, %v5776
    %v6866 = vadd.f32 %v4798, %v5782
    %v6867 = vadd.f32 %v4799, %v5788
    %v6868 = vadd.f32 %v4800, %v5795
    %v6869 = vadd.f32 %v4801, %v5801
    %v6870 = vadd.f32 %v4802, %v5807
    %v6871 = vadd.f32 %v4803, %v5813
    %v6872 = vadd.f32 %v4804, %v5819
    %v6873 = vadd.f32 %v4805, %v5825
    %v6874 = vadd.f32 %v4806, %v5831
    %v6875 = vadd.f32 %v4807, %v5837
    %v6876 = vadd.f32 %v4808, %v5843
    %v6877 = vadd.f32 %v4809, %v5849
    %v6878 = vadd.f32 %v4810, %v5855
    %v6879 = vadd.f32 %v4811, %v5861
    %v6880 = vadd.f32 %v4812, %v5867
    %v6881 = vadd.f32 %v4813, %v5873
    %v6882 = vadd.f32 %v4814, %v5879
    %v6883 = vadd.f32 %v4815, %v5885
    %v6884 = vadd.f32 %v4816, %v5892
    %v6885 = vadd.f32 %v4817, %v5898
    %v6886 = vadd.f32 %v4818, %v5904
    %v6887 = vadd.f32 %v4819, %v5910
    %v6888 = vadd.f32 %v4820, %v5916
    %v6889 = vadd.f32 %v4821, %v5922
    %v6890 = vadd.f32 %v4822, %v5928
    %v6891 = vadd.f32 %v4823, %v5934
    %v6892 = vadd.f32 %v4824, %v5940
    %v6893 = vadd.f32 %v4825, %v5946
    %v6894 = vadd.f32 %v4826, %v5952
    %v6895 = vadd.f32 %v4827, %v5958
    %v6896 = vadd.f32 %v4828, %v5964
    %v6897 = vadd.f32 %v4829, %v5970
    %v6898 = vadd.f32 %v4830, %v5976
    %v6899 = vadd.f32 %v4831, %v5982
    %v6900 = vadd.f32 %v4832, %v5989
    %v6901 = vadd.f32 %v4833, %v5995
    %v6902 = vadd.f32 %v4834, %v6001
    %v6903 = vadd.f32 %v4835, %v6007
    %v6904 = vadd.f32 %v4836, %v6013
    %v6905 = vadd.f32 %v4837, %v6019
    %v6906 = vadd.f32 %v4838, %v6025
    %v6907 = vadd.f32 %v4839, %v6031
    %v6908 = vadd.f32 %v4840, %v6037
    %v6909 = vadd.f32 %v4841, %v6043
    %v6910 = vadd.f32 %v4842, %v6049
    %v6911 = vadd.f32 %v4843, %v6055
    %v6912 = vadd.f32 %v4844, %v6061
    %v6913 = vadd.f32 %v4845, %v6067
    %v6914 = vadd.f32 %v4846, %v6073
    %v6915 = vadd.f32 %v4847, %v6079
    %v6916 = vadd.f32 %v4848, %v6086
    %v6917 = vadd.f32 %v4849, %v6092
    %v6918 = vadd.f32 %v4850, %v6098
    %v6919 = vadd.f32 %v4851, %v6104
    %v6920 = vadd.f32 %v4852, %v6110
    %v6921 = vadd.f32 %v4853, %v6116
    %v6922 = vadd.f32 %v4854, %v6122
    %v6923 = vadd.f32 %v4855, %v6128
    %v6924 = vadd.f32 %v4856, %v6134
    %v6925 = vadd.f32 %v4857, %v6140
    %v6926 = vadd.f32 %v4858, %v6146
    %v6927 = vadd.f32 %v4859, %v6152
    %v6928 = vadd.f32 %v4860, %v6158
    %v6929 = vadd.f32 %v4861, %v6164
    %v6930 = vadd.f32 %v4862, %v6170
    %v6931 = vadd.f32 %v4863, %v6176
    %v6932 = vadd.f32 %v4864, %v6183
    %v6933 = vadd.f32 %v4865, %v6189
    %v6934 = vadd.f32 %v4866, %v6195
    %v6935 = vadd.f32 %v4867, %v6201
    %v6936 = vadd.f32 %v4868, %v6207
    %v6937 = vadd.f32 %v4869, %v6213
    %v6938 = vadd.f32 %v4870, %v6219
    %v6939 = vadd.f32 %v4871, %v6225
    %v6940 = vadd.f32 %v4872, %v6231
    %v6941 = vadd.f32 %v4873, %v6237
    %v6942 = vadd.f32 %v4874, %v6243
    %v6943 = vadd.f32 %v4875, %v6249
    %v6944 = vadd.f32 %v4876, %v6255
    %v6945 = vadd.f32 %v4877, %v6261
    %v6946 = vadd.f32 %v4878, %v6267
    %v6947 = vadd.f32 %v4879, %v6273
    %v6948 = vadd.f32 %v4880, %v6280
    %v6949 = vadd.f32 %v4881, %v6286
    %v6950 = vadd.f32 %v4882, %v6292
    %v6951 = vadd.f32 %v4883, %v6298
    %v6952 = vadd.f32 %v4884, %v6304
    %v6953 = vadd.f32 %v4885, %v6310
    %v6954 = vadd.f32 %v4886, %v6316
    %v6955 = vadd.f32 %v4887, %v6322
    %v6956 = vadd.f32 %v4888, %v6328
    %v6957 = vadd.f32 %v4889, %v6334
    %v6958 = vadd.f32 %v4890, %v6340
    %v6959 = vadd.f32 %v4891, %v6346
    %v6960 = vadd.f32 %v4892, %v6352
    %v6961 = vadd.f32 %v4893, %v6358
    %v6962 = vadd.f32 %v4894, %v6364
    %v6963 = vadd.f32 %v4895, %v6370
    %v6964 = vadd.f32 %v4896, %v6377
    %v6965 = vadd.f32 %v4897, %v6383
    %v6966 = vadd.f32 %v4898, %v6389
    %v6967 = vadd.f32 %v4899, %v6395
    %v6968 = vadd.f32 %v4900, %v6401
    %v6969 = vadd.f32 %v4901, %v6407
    %v6970 = vadd.f32 %v4902, %v6413
    %v6971 = vadd.f32 %v4903, %v6419
    %v6972 = vadd.f32 %v4904, %v6425
    %v6973 = vadd.f32 %v4905, %v6431
    %v6974 = vadd.f32 %v4906, %v6437
    %v6975 = vadd.f32 %v4907, %v6443
    %v6976 = vadd.f32 %v4908, %v6449
    %v6977 = vadd.f32 %v4909, %v6455
    %v6978 = vadd.f32 %v4910, %v6461
    %v6979 = vadd.f32 %v4911, %v6467
    %7236 = vset.pattern.permute.xlu0 0
    %7237 = vperm.xlu0 %7236, %v6724
    %v7238 = vpop.permute.xlu0 %7237
    %7239 = vset.pattern.permute.xlu0 0
    %7240 = vperm.xlu0 %7239, %v6725
    %v7241 = vpop.permute.xlu0 %7240
    %7242 = vset.pattern.permute.xlu0 0
    %7243 = vperm.xlu0 %7242, %v6726
    %v7244 = vpop.permute.xlu0 %7243
    %7245 = vset.pattern.permute.xlu0 0
    %7246 = vperm.xlu0 %7245, %v6727
    %v7247 = vpop.permute.xlu0 %7246
    %7248 = vset.pattern.permute.xlu0 0
    %7249 = vperm.xlu0 %7248, %v6728
    %v7250 = vpop.permute.xlu0 %7249
    %7251 = vset.pattern.permute.xlu0 0
    %7252 = vperm.xlu0 %7251, %v6729
    %v7253 = vpop.permute.xlu0 %7252
    %7254 = vset.pattern.permute.xlu0 0
    %7255 = vperm.xlu0 %7254, %v6730
    %v7256 = vpop.permute.xlu0 %7255
    %7257 = vset.pattern.permute.xlu0 0
    %7258 = vperm.xlu0 %7257, %v6731
    %v7259 = vpop.permute.xlu0 %7258
    %7260 = vset.pattern.permute.xlu0 0
    %7261 = vperm.xlu0 %7260, %v6732
    %v7262 = vpop.permute.xlu0 %7261
    %7263 = vset.pattern.permute.xlu0 0
    %7264 = vperm.xlu0 %7263, %v6733
    %v7265 = vpop.permute.xlu0 %7264
    %7266 = vset.pattern.permute.xlu0 0
    %7267 = vperm.xlu0 %7266, %v6734
    %v7268 = vpop.permute.xlu0 %7267
    %7269 = vset.pattern.permute.xlu0 0
    %7270 = vperm.xlu0 %7269, %v6735
    %v7271 = vpop.permute.xlu0 %7270
    %7272 = vset.pattern.permute.xlu0 0
    %7273 = vperm.xlu0 %7272, %v6736
    %v7274 = vpop.permute.xlu0 %7273
    %7275 = vset.pattern.permute.xlu0 0
    %7276 = vperm.xlu0 %7275, %v6737
    %v7277 = vpop.permute.xlu0 %7276
    %7278 = vset.pattern.permute.xlu0 0
    %7279 = vperm.xlu0 %7278, %v6738
    %v7280 = vpop.permute.xlu0 %7279
    %7281 = vset.pattern.permute.xlu0 0
    %7282 = vperm.xlu0 %7281, %v6739
    %v7283 = vpop.permute.xlu0 %7282
    %7284 = vset.pattern.permute.xlu0 0
    %7285 = vperm.xlu0 %7284, %v6740
    %v7286 = vpop.permute.xlu0 %7285
    %7287 = vset.pattern.permute.xlu0 0
    %7288 = vperm.xlu0 %7287, %v6741
    %v7289 = vpop.permute.xlu0 %7288
    %7290 = vset.pattern.permute.xlu0 0
    %7291 = vperm.xlu0 %7290, %v6742
    %v7292 = vpop.permute.xlu0 %7291
    %7293 = vset.pattern.permute.xlu0 0
    %7294 = vperm.xlu0 %7293, %v6743
    %v7295 = vpop.permute.xlu0 %7294
    %7296 = vset.pattern.permute.xlu0 0
    %7297 = vperm.xlu0 %7296, %v6744
    %v7298 = vpop.permute.xlu0 %7297
    %7299 = vset.pattern.permute.xlu0 0
    %7300 = vperm.xlu0 %7299, %v6745
    %v7301 = vpop.permute.xlu0 %7300
    %7302 = vset.pattern.permute.xlu0 0
    %7303 = vperm.xlu0 %7302, %v6746
    %v7304 = vpop.permute.xlu0 %7303
    %7305 = vset.pattern.permute.xlu0 0
    %7306 = vperm.xlu0 %7305, %v6747
    %v7307 = vpop.permute.xlu0 %7306
    %7308 = vset.pattern.permute.xlu0 0
    %7309 = vperm.xlu0 %7308, %v6748
    %v7310 = vpop.permute.xlu0 %7309
    %7311 = vset.pattern.permute.xlu0 0
    %7312 = vperm.xlu0 %7311, %v6749
    %v7313 = vpop.permute.xlu0 %7312
    %7314 = vset.pattern.permute.xlu0 0
    %7315 = vperm.xlu0 %7314, %v6750
    %v7316 = vpop.permute.xlu0 %7315
    %7317 = vset.pattern.permute.xlu0 0
    %7318 = vperm.xlu0 %7317, %v6751
    %v7319 = vpop.permute.xlu0 %7318
    %7320 = vset.pattern.permute.xlu0 0
    %7321 = vperm.xlu0 %7320, %v6752
    %v7322 = vpop.permute.xlu0 %7321
    %7323 = vset.pattern.permute.xlu0 0
    %7324 = vperm.xlu0 %7323, %v6753
    %v7325 = vpop.permute.xlu0 %7324
    %7326 = vset.pattern.permute.xlu0 0
    %7327 = vperm.xlu0 %7326, %v6754
    %v7328 = vpop.permute.xlu0 %7327
    %7329 = vset.pattern.permute.xlu0 0
    %7330 = vperm.xlu0 %7329, %v6755
    %v7331 = vpop.permute.xlu0 %7330
    %7332 = vset.pattern.permute.xlu0 0
    %7333 = vperm.xlu0 %7332, %v6756
    %v7334 = vpop.permute.xlu0 %7333
    %7335 = vset.pattern.permute.xlu0 0
    %7336 = vperm.xlu0 %7335, %v6757
    %v7337 = vpop.permute.xlu0 %7336
    %7338 = vset.pattern.permute.xlu0 0
    %7339 = vperm.xlu0 %7338, %v6758
    %v7340 = vpop.permute.xlu0 %7339
    %7341 = vset.pattern.permute.xlu0 0
    %7342 = vperm.xlu0 %7341, %v6759
    %v7343 = vpop.permute.xlu0 %7342
    %7344 = vset.pattern.permute.xlu0 0
    %7345 = vperm.xlu0 %7344, %v6760
    %v7346 = vpop.permute.xlu0 %7345
    %7347 = vset.pattern.permute.xlu0 0
    %7348 = vperm.xlu0 %7347, %v6761
    %v7349 = vpop.permute.xlu0 %7348
    %7350 = vset.pattern.permute.xlu0 0
    %7351 = vperm.xlu0 %7350, %v6762
    %v7352 = vpop.permute.xlu0 %7351
    %7353 = vset.pattern.permute.xlu0 0
    %7354 = vperm.xlu0 %7353, %v6763
    %v7355 = vpop.permute.xlu0 %7354
    %7356 = vset.pattern.permute.xlu0 0
    %7357 = vperm.xlu0 %7356, %v6764
    %v7358 = vpop.permute.xlu0 %7357
    %7359 = vset.pattern.permute.xlu0 0
    %7360 = vperm.xlu0 %7359, %v6765
    %v7361 = vpop.permute.xlu0 %7360
    %7362 = vset.pattern.permute.xlu0 0
    %7363 = vperm.xlu0 %7362, %v6766
    %v7364 = vpop.permute.xlu0 %7363
    %7365 = vset.pattern.permute.xlu0 0
    %7366 = vperm.xlu0 %7365, %v6767
    %v7367 = vpop.permute.xlu0 %7366
    %7368 = vset.pattern.permute.xlu0 0
    %7369 = vperm.xlu0 %7368, %v6768
    %v7370 = vpop.permute.xlu0 %7369
    %7371 = vset.pattern.permute.xlu0 0
    %7372 = vperm.xlu0 %7371, %v6769
    %v7373 = vpop.permute.xlu0 %7372
    %7374 = vset.pattern.permute.xlu0 0
    %7375 = vperm.xlu0 %7374, %v6770
    %v7376 = vpop.permute.xlu0 %7375
    %7377 = vset.pattern.permute.xlu0 0
    %7378 = vperm.xlu0 %7377, %v6771
    %v7379 = vpop.permute.xlu0 %7378
    %7380 = vset.pattern.permute.xlu0 0
    %7381 = vperm.xlu0 %7380, %v6772
    %v7382 = vpop.permute.xlu0 %7381
    %7383 = vset.pattern.permute.xlu0 0
    %7384 = vperm.xlu0 %7383, %v6773
    %v7385 = vpop.permute.xlu0 %7384
    %7386 = vset.pattern.permute.xlu0 0
    %7387 = vperm.xlu0 %7386, %v6774
    %v7388 = vpop.permute.xlu0 %7387
    %7389 = vset.pattern.permute.xlu0 0
    %7390 = vperm.xlu0 %7389, %v6775
    %v7391 = vpop.permute.xlu0 %7390
    %7392 = vset.pattern.permute.xlu0 0
    %7393 = vperm.xlu0 %7392, %v6776
    %v7394 = vpop.permute.xlu0 %7393
    %7395 = vset.pattern.permute.xlu0 0
    %7396 = vperm.xlu0 %7395, %v6777
    %v7397 = vpop.permute.xlu0 %7396
    %7398 = vset.pattern.permute.xlu0 0
    %7399 = vperm.xlu0 %7398, %v6778
    %v7400 = vpop.permute.xlu0 %7399
    %7401 = vset.pattern.permute.xlu0 0
    %7402 = vperm.xlu0 %7401, %v6779
    %v7403 = vpop.permute.xlu0 %7402
    %7404 = vset.pattern.permute.xlu0 0
    %7405 = vperm.xlu0 %7404, %v6780
    %v7406 = vpop.permute.xlu0 %7405
    %7407 = vset.pattern.permute.xlu0 0
    %7408 = vperm.xlu0 %7407, %v6781
    %v7409 = vpop.permute.xlu0 %7408
    %7410 = vset.pattern.permute.xlu0 0
    %7411 = vperm.xlu0 %7410, %v6782
    %v7412 = vpop.permute.xlu0 %7411
    %7413 = vset.pattern.permute.xlu0 0
    %7414 = vperm.xlu0 %7413, %v6783
    %v7415 = vpop.permute.xlu0 %7414
    %7416 = vset.pattern.permute.xlu0 0
    %7417 = vperm.xlu0 %7416, %v6784
    %v7418 = vpop.permute.xlu0 %7417
    %7419 = vset.pattern.permute.xlu0 0
    %7420 = vperm.xlu0 %7419, %v6785
    %v7421 = vpop.permute.xlu0 %7420
    %7422 = vset.pattern.permute.xlu0 0
    %7423 = vperm.xlu0 %7422, %v6786
    %v7424 = vpop.permute.xlu0 %7423
    %7425 = vset.pattern.permute.xlu0 0
    %7426 = vperm.xlu0 %7425, %v6787
    %v7427 = vpop.permute.xlu0 %7426
    %7428 = vset.pattern.permute.xlu0 0
    %7429 = vperm.xlu0 %7428, %v6788
    %v7430 = vpop.permute.xlu0 %7429
    %7431 = vset.pattern.permute.xlu0 0
    %7432 = vperm.xlu0 %7431, %v6789
    %v7433 = vpop.permute.xlu0 %7432
    %7434 = vset.pattern.permute.xlu0 0
    %7435 = vperm.xlu0 %7434, %v6790
    %v7436 = vpop.permute.xlu0 %7435
    %7437 = vset.pattern.permute.xlu0 0
    %7438 = vperm.xlu0 %7437, %v6791
    %v7439 = vpop.permute.xlu0 %7438
    %7440 = vset.pattern.permute.xlu0 0
    %7441 = vperm.xlu0 %7440, %v6792
    %v7442 = vpop.permute.xlu0 %7441
    %7443 = vset.pattern.permute.xlu0 0
    %7444 = vperm.xlu0 %7443, %v6793
    %v7445 = vpop.permute.xlu0 %7444
    %7446 = vset.pattern.permute.xlu0 0
    %7447 = vperm.xlu0 %7446, %v6794
    %v7448 = vpop.permute.xlu0 %7447
    %7449 = vset.pattern.permute.xlu0 0
    %7450 = vperm.xlu0 %7449, %v6795
    %v7451 = vpop.permute.xlu0 %7450
    %7452 = vset.pattern.permute.xlu0 0
    %7453 = vperm.xlu0 %7452, %v6796
    %v7454 = vpop.permute.xlu0 %7453
    %7455 = vset.pattern.permute.xlu0 0
    %7456 = vperm.xlu0 %7455, %v6797
    %v7457 = vpop.permute.xlu0 %7456
    %7458 = vset.pattern.permute.xlu0 0
    %7459 = vperm.xlu0 %7458, %v6798
    %v7460 = vpop.permute.xlu0 %7459
    %7461 = vset.pattern.permute.xlu0 0
    %7462 = vperm.xlu0 %7461, %v6799
    %v7463 = vpop.permute.xlu0 %7462
    %7464 = vset.pattern.permute.xlu0 0
    %7465 = vperm.xlu0 %7464, %v6800
    %v7466 = vpop.permute.xlu0 %7465
    %7467 = vset.pattern.permute.xlu0 0
    %7468 = vperm.xlu0 %7467, %v6801
    %v7469 = vpop.permute.xlu0 %7468
    %7470 = vset.pattern.permute.xlu0 0
    %7471 = vperm.xlu0 %7470, %v6802
    %v7472 = vpop.permute.xlu0 %7471
    %7473 = vset.pattern.permute.xlu0 0
    %7474 = vperm.xlu0 %7473, %v6803
    %v7475 = vpop.permute.xlu0 %7474
    %7476 = vset.pattern.permute.xlu0 0
    %7477 = vperm.xlu0 %7476, %v6804
    %v7478 = vpop.permute.xlu0 %7477
    %7479 = vset.pattern.permute.xlu0 0
    %7480 = vperm.xlu0 %7479, %v6805
    %v7481 = vpop.permute.xlu0 %7480
    %7482 = vset.pattern.permute.xlu0 0
    %7483 = vperm.xlu0 %7482, %v6806
    %v7484 = vpop.permute.xlu0 %7483
    %7485 = vset.pattern.permute.xlu0 0
    %7486 = vperm.xlu0 %7485, %v6807
    %v7487 = vpop.permute.xlu0 %7486
    %7488 = vset.pattern.permute.xlu0 0
    %7489 = vperm.xlu0 %7488, %v6808
    %v7490 = vpop.permute.xlu0 %7489
    %7491 = vset.pattern.permute.xlu0 0
    %7492 = vperm.xlu0 %7491, %v6809
    %v7493 = vpop.permute.xlu0 %7492
    %7494 = vset.pattern.permute.xlu0 0
    %7495 = vperm.xlu0 %7494, %v6810
    %v7496 = vpop.permute.xlu0 %7495
    %7497 = vset.pattern.permute.xlu0 0
    %7498 = vperm.xlu0 %7497, %v6811
    %v7499 = vpop.permute.xlu0 %7498
    %7500 = vset.pattern.permute.xlu0 0
    %7501 = vperm.xlu0 %7500, %v6812
    %v7502 = vpop.permute.xlu0 %7501
    %7503 = vset.pattern.permute.xlu0 0
    %7504 = vperm.xlu0 %7503, %v6813
    %v7505 = vpop.permute.xlu0 %7504
    %7506 = vset.pattern.permute.xlu0 0
    %7507 = vperm.xlu0 %7506, %v6814
    %v7508 = vpop.permute.xlu0 %7507
    %7509 = vset.pattern.permute.xlu0 0
    %7510 = vperm.xlu0 %7509, %v6815
    %v7511 = vpop.permute.xlu0 %7510
    %7512 = vset.pattern.permute.xlu0 0
    %7513 = vperm.xlu0 %7512, %v6816
    %v7514 = vpop.permute.xlu0 %7513
    %7515 = vset.pattern.permute.xlu0 0
    %7516 = vperm.xlu0 %7515, %v6817
    %v7517 = vpop.permute.xlu0 %7516
    %7518 = vset.pattern.permute.xlu0 0
    %7519 = vperm.xlu0 %7518, %v6818
    %v7520 = vpop.permute.xlu0 %7519
    %7521 = vset.pattern.permute.xlu0 0
    %7522 = vperm.xlu0 %7521, %v6819
    %v7523 = vpop.permute.xlu0 %7522
    %7524 = vset.pattern.permute.xlu0 0
    %7525 = vperm.xlu0 %7524, %v6820
    %v7526 = vpop.permute.xlu0 %7525
    %7527 = vset.pattern.permute.xlu0 0
    %7528 = vperm.xlu0 %7527, %v6821
    %v7529 = vpop.permute.xlu0 %7528
    %7530 = vset.pattern.permute.xlu0 0
    %7531 = vperm.xlu0 %7530, %v6822
    %v7532 = vpop.permute.xlu0 %7531
    %7533 = vset.pattern.permute.xlu0 0
    %7534 = vperm.xlu0 %7533, %v6823
    %v7535 = vpop.permute.xlu0 %7534
    %7536 = vset.pattern.permute.xlu0 0
    %7537 = vperm.xlu0 %7536, %v6824
    %v7538 = vpop.permute.xlu0 %7537
    %7539 = vset.pattern.permute.xlu0 0
    %7540 = vperm.xlu0 %7539, %v6825
    %v7541 = vpop.permute.xlu0 %7540
    %7542 = vset.pattern.permute.xlu0 0
    %7543 = vperm.xlu0 %7542, %v6826
    %v7544 = vpop.permute.xlu0 %7543
    %7545 = vset.pattern.permute.xlu0 0
    %7546 = vperm.xlu0 %7545, %v6827
    %v7547 = vpop.permute.xlu0 %7546
    %7548 = vset.pattern.permute.xlu0 0
    %7549 = vperm.xlu0 %7548, %v6828
    %v7550 = vpop.permute.xlu0 %7549
    %7551 = vset.pattern.permute.xlu0 0
    %7552 = vperm.xlu0 %7551, %v6829
    %v7553 = vpop.permute.xlu0 %7552
    %7554 = vset.pattern.permute.xlu0 0
    %7555 = vperm.xlu0 %7554, %v6830
    %v7556 = vpop.permute.xlu0 %7555
    %7557 = vset.pattern.permute.xlu0 0
    %7558 = vperm.xlu0 %7557, %v6831
    %v7559 = vpop.permute.xlu0 %7558
    %7560 = vset.pattern.permute.xlu0 0
    %7561 = vperm.xlu0 %7560, %v6832
    %v7562 = vpop.permute.xlu0 %7561
    %7563 = vset.pattern.permute.xlu0 0
    %7564 = vperm.xlu0 %7563, %v6833
    %v7565 = vpop.permute.xlu0 %7564
    %7566 = vset.pattern.permute.xlu0 0
    %7567 = vperm.xlu0 %7566, %v6834
    %v7568 = vpop.permute.xlu0 %7567
    %7569 = vset.pattern.permute.xlu0 0
    %7570 = vperm.xlu0 %7569, %v6835
    %v7571 = vpop.permute.xlu0 %7570
    %7572 = vset.pattern.permute.xlu0 0
    %7573 = vperm.xlu0 %7572, %v6836
    %v7574 = vpop.permute.xlu0 %7573
    %7575 = vset.pattern.permute.xlu0 0
    %7576 = vperm.xlu0 %7575, %v6837
    %v7577 = vpop.permute.xlu0 %7576
    %7578 = vset.pattern.permute.xlu0 0
    %7579 = vperm.xlu0 %7578, %v6838
    %v7580 = vpop.permute.xlu0 %7579
    %7581 = vset.pattern.permute.xlu0 0
    %7582 = vperm.xlu0 %7581, %v6839
    %v7583 = vpop.permute.xlu0 %7582
    %7584 = vset.pattern.permute.xlu0 0
    %7585 = vperm.xlu0 %7584, %v6840
    %v7586 = vpop.permute.xlu0 %7585
    %7587 = vset.pattern.permute.xlu0 0
    %7588 = vperm.xlu0 %7587, %v6841
    %v7589 = vpop.permute.xlu0 %7588
    %7590 = vset.pattern.permute.xlu0 0
    %7591 = vperm.xlu0 %7590, %v6842
    %v7592 = vpop.permute.xlu0 %7591
    %7593 = vset.pattern.permute.xlu0 0
    %7594 = vperm.xlu0 %7593, %v6843
    %v7595 = vpop.permute.xlu0 %7594
    %7596 = vset.pattern.permute.xlu0 0
    %7597 = vperm.xlu0 %7596, %v6844
    %v7598 = vpop.permute.xlu0 %7597
    %7599 = vset.pattern.permute.xlu0 0
    %7600 = vperm.xlu0 %7599, %v6845
    %v7601 = vpop.permute.xlu0 %7600
    %7602 = vset.pattern.permute.xlu0 0
    %7603 = vperm.xlu0 %7602, %v6846
    %v7604 = vpop.permute.xlu0 %7603
    %7605 = vset.pattern.permute.xlu0 0
    %7606 = vperm.xlu0 %7605, %v6847
    %v7607 = vpop.permute.xlu0 %7606
    %7608 = vset.pattern.permute.xlu0 0
    %7609 = vperm.xlu0 %7608, %v6848
    %v7610 = vpop.permute.xlu0 %7609
    %7611 = vset.pattern.permute.xlu0 0
    %7612 = vperm.xlu0 %7611, %v6849
    %v7613 = vpop.permute.xlu0 %7612
    %7614 = vset.pattern.permute.xlu0 0
    %7615 = vperm.xlu0 %7614, %v6850
    %v7616 = vpop.permute.xlu0 %7615
    %7617 = vset.pattern.permute.xlu0 0
    %7618 = vperm.xlu0 %7617, %v6851
    %v7619 = vpop.permute.xlu0 %7618
    %7620 = vset.pattern.permute.xlu0 0
    %7621 = vperm.xlu0 %7620, %v6852
    %v7622 = vpop.permute.xlu0 %7621
    %7623 = vset.pattern.permute.xlu0 0
    %7624 = vperm.xlu0 %7623, %v6853
    %v7625 = vpop.permute.xlu0 %7624
    %7626 = vset.pattern.permute.xlu0 0
    %7627 = vperm.xlu0 %7626, %v6854
    %v7628 = vpop.permute.xlu0 %7627
    %7629 = vset.pattern.permute.xlu0 0
    %7630 = vperm.xlu0 %7629, %v6855
    %v7631 = vpop.permute.xlu0 %7630
    %7632 = vset.pattern.permute.xlu0 0
    %7633 = vperm.xlu0 %7632, %v6856
    %v7634 = vpop.permute.xlu0 %7633
    %7635 = vset.pattern.permute.xlu0 0
    %7636 = vperm.xlu0 %7635, %v6857
    %v7637 = vpop.permute.xlu0 %7636
    %7638 = vset.pattern.permute.xlu0 0
    %7639 = vperm.xlu0 %7638, %v6858
    %v7640 = vpop.permute.xlu0 %7639
    %7641 = vset.pattern.permute.xlu0 0
    %7642 = vperm.xlu0 %7641, %v6859
    %v7643 = vpop.permute.xlu0 %7642
    %7644 = vset.pattern.permute.xlu0 0
    %7645 = vperm.xlu0 %7644, %v6860
    %v7646 = vpop.permute.xlu0 %7645
    %7647 = vset.pattern.permute.xlu0 0
    %7648 = vperm.xlu0 %7647, %v6861
    %v7649 = vpop.permute.xlu0 %7648
    %7650 = vset.pattern.permute.xlu0 0
    %7651 = vperm.xlu0 %7650, %v6862
    %v7652 = vpop.permute.xlu0 %7651
    %7653 = vset.pattern.permute.xlu0 0
    %7654 = vperm.xlu0 %7653, %v6863
    %v7655 = vpop.permute.xlu0 %7654
    %7656 = vset.pattern.permute.xlu0 0
    %7657 = vperm.xlu0 %7656, %v6864
    %v7658 = vpop.permute.xlu0 %7657
    %7659 = vset.pattern.permute.xlu0 0
    %7660 = vperm.xlu0 %7659, %v6865
    %v7661 = vpop.permute.xlu0 %7660
    %7662 = vset.pattern.permute.xlu0 0
    %7663 = vperm.xlu0 %7662, %v6866
    %v7664 = vpop.permute.xlu0 %7663
    %7665 = vset.pattern.permute.xlu0 0
    %7666 = vperm.xlu0 %7665, %v6867
    %v7667 = vpop.permute.xlu0 %7666
    %7668 = vset.pattern.permute.xlu0 0
    %7669 = vperm.xlu0 %7668, %v6868
    %v7670 = vpop.permute.xlu0 %7669
    %7671 = vset.pattern.permute.xlu0 0
    %7672 = vperm.xlu0 %7671, %v6869
    %v7673 = vpop.permute.xlu0 %7672
    %7674 = vset.pattern.permute.xlu0 0
    %7675 = vperm.xlu0 %7674, %v6870
    %v7676 = vpop.permute.xlu0 %7675
    %7677 = vset.pattern.permute.xlu0 0
    %7678 = vperm.xlu0 %7677, %v6871
    %v7679 = vpop.permute.xlu0 %7678
    %7680 = vset.pattern.permute.xlu0 0
    %7681 = vperm.xlu0 %7680, %v6872
    %v7682 = vpop.permute.xlu0 %7681
    %7683 = vset.pattern.permute.xlu0 0
    %7684 = vperm.xlu0 %7683, %v6873
    %v7685 = vpop.permute.xlu0 %7684
    %7686 = vset.pattern.permute.xlu0 0
    %7687 = vperm.xlu0 %7686, %v6874
    %v7688 = vpop.permute.xlu0 %7687
    %7689 = vset.pattern.permute.xlu0 0
    %7690 = vperm.xlu0 %7689, %v6875
    %v7691 = vpop.permute.xlu0 %7690
    %7692 = vset.pattern.permute.xlu0 0
    %7693 = vperm.xlu0 %7692, %v6876
    %v7694 = vpop.permute.xlu0 %7693
    %7695 = vset.pattern.permute.xlu0 0
    %7696 = vperm.xlu0 %7695, %v6877
    %v7697 = vpop.permute.xlu0 %7696
    %7698 = vset.pattern.permute.xlu0 0
    %7699 = vperm.xlu0 %7698, %v6878
    %v7700 = vpop.permute.xlu0 %7699
    %7701 = vset.pattern.permute.xlu0 0
    %7702 = vperm.xlu0 %7701, %v6879
    %v7703 = vpop.permute.xlu0 %7702
    %7704 = vset.pattern.permute.xlu0 0
    %7705 = vperm.xlu0 %7704, %v6880
    %v7706 = vpop.permute.xlu0 %7705
    %7707 = vset.pattern.permute.xlu0 0
    %7708 = vperm.xlu0 %7707, %v6881
    %v7709 = vpop.permute.xlu0 %7708
    %7710 = vset.pattern.permute.xlu0 0
    %7711 = vperm.xlu0 %7710, %v6882
    %v7712 = vpop.permute.xlu0 %7711
    %7713 = vset.pattern.permute.xlu0 0
    %7714 = vperm.xlu0 %7713, %v6883
    %v7715 = vpop.permute.xlu0 %7714
    %7716 = vset.pattern.permute.xlu0 0
    %7717 = vperm.xlu0 %7716, %v6884
    %v7718 = vpop.permute.xlu0 %7717
    %7719 = vset.pattern.permute.xlu0 0
    %7720 = vperm.xlu0 %7719, %v6885
    %v7721 = vpop.permute.xlu0 %7720
    %7722 = vset.pattern.permute.xlu0 0
    %7723 = vperm.xlu0 %7722, %v6886
    %v7724 = vpop.permute.xlu0 %7723
    %7725 = vset.pattern.permute.xlu0 0
    %7726 = vperm.xlu0 %7725, %v6887
    %v7727 = vpop.permute.xlu0 %7726
    %7728 = vset.pattern.permute.xlu0 0
    %7729 = vperm.xlu0 %7728, %v6888
    %v7730 = vpop.permute.xlu0 %7729
    %7731 = vset.pattern.permute.xlu0 0
    %7732 = vperm.xlu0 %7731, %v6889
    %v7733 = vpop.permute.xlu0 %7732
    %7734 = vset.pattern.permute.xlu0 0
    %7735 = vperm.xlu0 %7734, %v6890
    %v7736 = vpop.permute.xlu0 %7735
    %7737 = vset.pattern.permute.xlu0 0
    %7738 = vperm.xlu0 %7737, %v6891
    %v7739 = vpop.permute.xlu0 %7738
    %7740 = vset.pattern.permute.xlu0 0
    %7741 = vperm.xlu0 %7740, %v6892
    %v7742 = vpop.permute.xlu0 %7741
    %7743 = vset.pattern.permute.xlu0 0
    %7744 = vperm.xlu0 %7743, %v6893
    %v7745 = vpop.permute.xlu0 %7744
    %7746 = vset.pattern.permute.xlu0 0
    %7747 = vperm.xlu0 %7746, %v6894
    %v7748 = vpop.permute.xlu0 %7747
    %7749 = vset.pattern.permute.xlu0 0
    %7750 = vperm.xlu0 %7749, %v6895
    %v7751 = vpop.permute.xlu0 %7750
    %7752 = vset.pattern.permute.xlu0 0
    %7753 = vperm.xlu0 %7752, %v6896
    %v7754 = vpop.permute.xlu0 %7753
    %7755 = vset.pattern.permute.xlu0 0
    %7756 = vperm.xlu0 %7755, %v6897
    %v7757 = vpop.permute.xlu0 %7756
    %7758 = vset.pattern.permute.xlu0 0
    %7759 = vperm.xlu0 %7758, %v6898
    %v7760 = vpop.permute.xlu0 %7759
    %7761 = vset.pattern.permute.xlu0 0
    %7762 = vperm.xlu0 %7761, %v6899
    %v7763 = vpop.permute.xlu0 %7762
    %7764 = vset.pattern.permute.xlu0 0
    %7765 = vperm.xlu0 %7764, %v6900
    %v7766 = vpop.permute.xlu0 %7765
    %7767 = vset.pattern.permute.xlu0 0
    %7768 = vperm.xlu0 %7767, %v6901
    %v7769 = vpop.permute.xlu0 %7768
    %7770 = vset.pattern.permute.xlu0 0
    %7771 = vperm.xlu0 %7770, %v6902
    %v7772 = vpop.permute.xlu0 %7771
    %7773 = vset.pattern.permute.xlu0 0
    %7774 = vperm.xlu0 %7773, %v6903
    %v7775 = vpop.permute.xlu0 %7774
    %7776 = vset.pattern.permute.xlu0 0
    %7777 = vperm.xlu0 %7776, %v6904
    %v7778 = vpop.permute.xlu0 %7777
    %7779 = vset.pattern.permute.xlu0 0
    %7780 = vperm.xlu0 %7779, %v6905
    %v7781 = vpop.permute.xlu0 %7780
    %7782 = vset.pattern.permute.xlu0 0
    %7783 = vperm.xlu0 %7782, %v6906
    %v7784 = vpop.permute.xlu0 %7783
    %7785 = vset.pattern.permute.xlu0 0
    %7786 = vperm.xlu0 %7785, %v6907
    %v7787 = vpop.permute.xlu0 %7786
    %7788 = vset.pattern.permute.xlu0 0
    %7789 = vperm.xlu0 %7788, %v6908
    %v7790 = vpop.permute.xlu0 %7789
    %7791 = vset.pattern.permute.xlu0 0
    %7792 = vperm.xlu0 %7791, %v6909
    %v7793 = vpop.permute.xlu0 %7792
    %7794 = vset.pattern.permute.xlu0 0
    %7795 = vperm.xlu0 %7794, %v6910
    %v7796 = vpop.permute.xlu0 %7795
    %7797 = vset.pattern.permute.xlu0 0
    %7798 = vperm.xlu0 %7797, %v6911
    %v7799 = vpop.permute.xlu0 %7798
    %7800 = vset.pattern.permute.xlu0 0
    %7801 = vperm.xlu0 %7800, %v6912
    %v7802 = vpop.permute.xlu0 %7801
    %7803 = vset.pattern.permute.xlu0 0
    %7804 = vperm.xlu0 %7803, %v6913
    %v7805 = vpop.permute.xlu0 %7804
    %7806 = vset.pattern.permute.xlu0 0
    %7807 = vperm.xlu0 %7806, %v6914
    %v7808 = vpop.permute.xlu0 %7807
    %7809 = vset.pattern.permute.xlu0 0
    %7810 = vperm.xlu0 %7809, %v6915
    %v7811 = vpop.permute.xlu0 %7810
    %7812 = vset.pattern.permute.xlu0 0
    %7813 = vperm.xlu0 %7812, %v6916
    %v7814 = vpop.permute.xlu0 %7813
    %7815 = vset.pattern.permute.xlu0 0
    %7816 = vperm.xlu0 %7815, %v6917
    %v7817 = vpop.permute.xlu0 %7816
    %7818 = vset.pattern.permute.xlu0 0
    %7819 = vperm.xlu0 %7818, %v6918
    %v7820 = vpop.permute.xlu0 %7819
    %7821 = vset.pattern.permute.xlu0 0
    %7822 = vperm.xlu0 %7821, %v6919
    %v7823 = vpop.permute.xlu0 %7822
    %7824 = vset.pattern.permute.xlu0 0
    %7825 = vperm.xlu0 %7824, %v6920
    %v7826 = vpop.permute.xlu0 %7825
    %7827 = vset.pattern.permute.xlu0 0
    %7828 = vperm.xlu0 %7827, %v6921
    %v7829 = vpop.permute.xlu0 %7828
    %7830 = vset.pattern.permute.xlu0 0
    %7831 = vperm.xlu0 %7830, %v6922
    %v7832 = vpop.permute.xlu0 %7831
    %7833 = vset.pattern.permute.xlu0 0
    %7834 = vperm.xlu0 %7833, %v6923
    %v7835 = vpop.permute.xlu0 %7834
    %7836 = vset.pattern.permute.xlu0 0
    %7837 = vperm.xlu0 %7836, %v6924
    %v7838 = vpop.permute.xlu0 %7837
    %7839 = vset.pattern.permute.xlu0 0
    %7840 = vperm.xlu0 %7839, %v6925
    %v7841 = vpop.permute.xlu0 %7840
    %7842 = vset.pattern.permute.xlu0 0
    %7843 = vperm.xlu0 %7842, %v6926
    %v7844 = vpop.permute.xlu0 %7843
    %7845 = vset.pattern.permute.xlu0 0
    %7846 = vperm.xlu0 %7845, %v6927
    %v7847 = vpop.permute.xlu0 %7846
    %7848 = vset.pattern.permute.xlu0 0
    %7849 = vperm.xlu0 %7848, %v6928
    %v7850 = vpop.permute.xlu0 %7849
    %7851 = vset.pattern.permute.xlu0 0
    %7852 = vperm.xlu0 %7851, %v6929
    %v7853 = vpop.permute.xlu0 %7852
    %7854 = vset.pattern.permute.xlu0 0
    %7855 = vperm.xlu0 %7854, %v6930
    %v7856 = vpop.permute.xlu0 %7855
    %7857 = vset.pattern.permute.xlu0 0
    %7858 = vperm.xlu0 %7857, %v6931
    %v7859 = vpop.permute.xlu0 %7858
    %7860 = vset.pattern.permute.xlu0 0
    %7861 = vperm.xlu0 %7860, %v6932
    %v7862 = vpop.permute.xlu0 %7861
    %7863 = vset.pattern.permute.xlu0 0
    %7864 = vperm.xlu0 %7863, %v6933
    %v7865 = vpop.permute.xlu0 %7864
    %7866 = vset.pattern.permute.xlu0 0
    %7867 = vperm.xlu0 %7866, %v6934
    %v7868 = vpop.permute.xlu0 %7867
    %7869 = vset.pattern.permute.xlu0 0
    %7870 = vperm.xlu0 %7869, %v6935
    %v7871 = vpop.permute.xlu0 %7870
    %7872 = vset.pattern.permute.xlu0 0
    %7873 = vperm.xlu0 %7872, %v6936
    %v7874 = vpop.permute.xlu0 %7873
    %7875 = vset.pattern.permute.xlu0 0
    %7876 = vperm.xlu0 %7875, %v6937
    %v7877 = vpop.permute.xlu0 %7876
    %7878 = vset.pattern.permute.xlu0 0
    %7879 = vperm.xlu0 %7878, %v6938
    %v7880 = vpop.permute.xlu0 %7879
    %7881 = vset.pattern.permute.xlu0 0
    %7882 = vperm.xlu0 %7881, %v6939
    %v7883 = vpop.permute.xlu0 %7882
    %7884 = vset.pattern.permute.xlu0 0
    %7885 = vperm.xlu0 %7884, %v6940
    %v7886 = vpop.permute.xlu0 %7885
    %7887 = vset.pattern.permute.xlu0 0
    %7888 = vperm.xlu0 %7887, %v6941
    %v7889 = vpop.permute.xlu0 %7888
    %7890 = vset.pattern.permute.xlu0 0
    %7891 = vperm.xlu0 %7890, %v6942
    %v7892 = vpop.permute.xlu0 %7891
    %7893 = vset.pattern.permute.xlu0 0
    %7894 = vperm.xlu0 %7893, %v6943
    %v7895 = vpop.permute.xlu0 %7894
    %7896 = vset.pattern.permute.xlu0 0
    %7897 = vperm.xlu0 %7896, %v6944
    %v7898 = vpop.permute.xlu0 %7897
    %7899 = vset.pattern.permute.xlu0 0
    %7900 = vperm.xlu0 %7899, %v6945
    %v7901 = vpop.permute.xlu0 %7900
    %7902 = vset.pattern.permute.xlu0 0
    %7903 = vperm.xlu0 %7902, %v6946
    %v7904 = vpop.permute.xlu0 %7903
    %7905 = vset.pattern.permute.xlu0 0
    %7906 = vperm.xlu0 %7905, %v6947
    %v7907 = vpop.permute.xlu0 %7906
    %7908 = vset.pattern.permute.xlu0 0
    %7909 = vperm.xlu0 %7908, %v6948
    %v7910 = vpop.permute.xlu0 %7909
    %7911 = vset.pattern.permute.xlu0 0
    %7912 = vperm.xlu0 %7911, %v6949
    %v7913 = vpop.permute.xlu0 %7912
    %7914 = vset.pattern.permute.xlu0 0
    %7915 = vperm.xlu0 %7914, %v6950
    %v7916 = vpop.permute.xlu0 %7915
    %7917 = vset.pattern.permute.xlu0 0
    %7918 = vperm.xlu0 %7917, %v6951
    %v7919 = vpop.permute.xlu0 %7918
    %7920 = vset.pattern.permute.xlu0 0
    %7921 = vperm.xlu0 %7920, %v6952
    %v7922 = vpop.permute.xlu0 %7921
    %7923 = vset.pattern.permute.xlu0 0
    %7924 = vperm.xlu0 %7923, %v6953
    %v7925 = vpop.permute.xlu0 %7924
    %7926 = vset.pattern.permute.xlu0 0
    %7927 = vperm.xlu0 %7926, %v6954
    %v7928 = vpop.permute.xlu0 %7927
    %7929 = vset.pattern.permute.xlu0 0
    %7930 = vperm.xlu0 %7929, %v6955
    %v7931 = vpop.permute.xlu0 %7930
    %7932 = vset.pattern.permute.xlu0 0
    %7933 = vperm.xlu0 %7932, %v6956
    %v7934 = vpop.permute.xlu0 %7933
    %7935 = vset.pattern.permute.xlu0 0
    %7936 = vperm.xlu0 %7935, %v6957
    %v7937 = vpop.permute.xlu0 %7936
    %7938 = vset.pattern.permute.xlu0 0
    %7939 = vperm.xlu0 %7938, %v6958
    %v7940 = vpop.permute.xlu0 %7939
    %7941 = vset.pattern.permute.xlu0 0
    %7942 = vperm.xlu0 %7941, %v6959
    %v7943 = vpop.permute.xlu0 %7942
    %7944 = vset.pattern.permute.xlu0 0
    %7945 = vperm.xlu0 %7944, %v6960
    %v7946 = vpop.permute.xlu0 %7945
    %7947 = vset.pattern.permute.xlu0 0
    %7948 = vperm.xlu0 %7947, %v6961
    %v7949 = vpop.permute.xlu0 %7948
    %7950 = vset.pattern.permute.xlu0 0
    %7951 = vperm.xlu0 %7950, %v6962
    %v7952 = vpop.permute.xlu0 %7951
    %7953 = vset.pattern.permute.xlu0 0
    %7954 = vperm.xlu0 %7953, %v6963
    %v7955 = vpop.permute.xlu0 %7954
    %7956 = vset.pattern.permute.xlu0 0
    %7957 = vperm.xlu0 %7956, %v6964
    %v7958 = vpop.permute.xlu0 %7957
    %7959 = vset.pattern.permute.xlu0 0
    %7960 = vperm.xlu0 %7959, %v6965
    %v7961 = vpop.permute.xlu0 %7960
    %7962 = vset.pattern.permute.xlu0 0
    %7963 = vperm.xlu0 %7962, %v6966
    %v7964 = vpop.permute.xlu0 %7963
    %7965 = vset.pattern.permute.xlu0 0
    %7966 = vperm.xlu0 %7965, %v6967
    %v7967 = vpop.permute.xlu0 %7966
    %7968 = vset.pattern.permute.xlu0 0
    %7969 = vperm.xlu0 %7968, %v6968
    %v7970 = vpop.permute.xlu0 %7969
    %7971 = vset.pattern.permute.xlu0 0
    %7972 = vperm.xlu0 %7971, %v6969
    %v7973 = vpop.permute.xlu0 %7972
    %7974 = vset.pattern.permute.xlu0 0
    %7975 = vperm.xlu0 %7974, %v6970
    %v7976 = vpop.permute.xlu0 %7975
    %7977 = vset.pattern.permute.xlu0 0
    %7978 = vperm.xlu0 %7977, %v6971
    %v7979 = vpop.permute.xlu0 %7978
    %7980 = vset.pattern.permute.xlu0 0
    %7981 = vperm.xlu0 %7980, %v6972
    %v7982 = vpop.permute.xlu0 %7981
    %7983 = vset.pattern.permute.xlu0 0
    %7984 = vperm.xlu0 %7983, %v6973
    %v7985 = vpop.permute.xlu0 %7984
    %7986 = vset.pattern.permute.xlu0 0
    %7987 = vperm.xlu0 %7986, %v6974
    %v7988 = vpop.permute.xlu0 %7987
    %7989 = vset.pattern.permute.xlu0 0
    %7990 = vperm.xlu0 %7989, %v6975
    %v7991 = vpop.permute.xlu0 %7990
    %7992 = vset.pattern.permute.xlu0 0
    %7993 = vperm.xlu0 %7992, %v6976
    %v7994 = vpop.permute.xlu0 %7993
    %7995 = vset.pattern.permute.xlu0 0
    %7996 = vperm.xlu0 %7995, %v6977
    %v7997 = vpop.permute.xlu0 %7996
    %7998 = vset.pattern.permute.xlu0 0
    %7999 = vperm.xlu0 %7998, %v6978
    %v8000 = vpop.permute.xlu0 %7999
    %8001 = vset.pattern.permute.xlu0 0
    %8002 = vperm.xlu0 %8001, %v6979
    %v8003 = vpop.permute.xlu0 %8002
    %v8004 = vlaneseq
    %v8005 = vand.u32 %v8004, 127
    %v8006 = vperm.slane %v7238, %v8005
    %v8007 = vadd.s32 %v8005, 4294967288
    %v8008 = vperm.slane %v7241, %v8007
    %vm8009 = vcmask 130112
    %v8010 = vsel %vm8009, %v8008, %v8006
    %v8011 = vadd.s32 %v8005, 4294967280
    %v8012 = vperm.slane %v7244, %v8011
    %vm8013 = vcmask 195712
    %v8014 = vsel %vm8013, %v8012, %v8010
    %v8015 = vadd.s32 %v8005, 4294967272
    %v8016 = vperm.slane %v7247, %v8015
    %vm8017 = vcmask 261312
    %v8018 = vsel %vm8017, %v8016, %v8014
    %v8019 = vadd.s32 %v8005, 4294967264
    %v8020 = vperm.slane %v7250, %v8019
    %vm8021 = vcmask 326912
    %v8022 = vsel %vm8021, %v8020, %v8018
    %v8023 = vadd.s32 %v8005, 4294967256
    %v8024 = vperm.slane %v7253, %v8023
    %vm8025 = vcmask 392512
    %v8026 = vsel %vm8025, %v8024, %v8022
    %v8027 = vadd.s32 %v8005, 4294967248
    %v8028 = vperm.slane %v7256, %v8027
    %vm8029 = vcmask 458112
    %v8030 = vsel %vm8029, %v8028, %v8026
    %v8031 = vadd.s32 %v8005, 4294967240
    %v8032 = vperm.slane %v7259, %v8031
    %vm8033 = vcmask 523712
    %v8034 = vsel %vm8033, %v8032, %v8030
    %v8035 = vadd.s32 %v8005, 4294967232
    %v8036 = vperm.slane %v7262, %v8035
    %vm8037 = vcmask 589312
    %v8038 = vsel %vm8037, %v8036, %v8034
    %v8039 = vadd.s32 %v8005, 4294967224
    %v8040 = vperm.slane %v7265, %v8039
    %vm8041 = vcmask 654912
    %v8042 = vsel %vm8041, %v8040, %v8038
    %v8043 = vadd.s32 %v8005, 4294967216
    %v8044 = vperm.slane %v7268, %v8043
    %vm8045 = vcmask 720512
    %v8046 = vsel %vm8045, %v8044, %v8042
    %v8047 = vadd.s32 %v8005, 4294967208
    %v8048 = vperm.slane %v7271, %v8047
    %vm8049 = vcmask 786112
    %v8050 = vsel %vm8049, %v8048, %v8046
    %v8051 = vadd.s32 %v8005, 4294967200
    %v8052 = vperm.slane %v7274, %v8051
    %vm8053 = vcmask 851712
    %v8054 = vsel %vm8053, %v8052, %v8050
    %v8055 = vadd.s32 %v8005, 4294967192
    %v8056 = vperm.slane %v7277, %v8055
    %vm8057 = vcmask 917312
    %v8058 = vsel %vm8057, %v8056, %v8054
    %v8059 = vadd.s32 %v8005, 4294967184
    %v8060 = vperm.slane %v7280, %v8059
    %vm8061 = vcmask 982912
    %v8062 = vsel %vm8061, %v8060, %v8058
    %v8063 = vadd.s32 %v8005, 4294967176
    %v8064 = vperm.slane %v7283, %v8063
    %vm8065 = vcmask 1048512
    %v8066 = vsel %vm8065, %v8064, %v8062
    %v8067 = vperm.slane %v7286, %v8005
    %v8068 = vperm.slane %v7289, %v8007
    %v8069 = vsel %vm8009, %v8068, %v8067
    %v8070 = vperm.slane %v7292, %v8011
    %v8071 = vsel %vm8013, %v8070, %v8069
    %v8072 = vperm.slane %v7295, %v8015
    %v8073 = vsel %vm8017, %v8072, %v8071
    %v8074 = vperm.slane %v7298, %v8019
    %v8075 = vsel %vm8021, %v8074, %v8073
    %v8076 = vperm.slane %v7301, %v8023
    %v8077 = vsel %vm8025, %v8076, %v8075
    %v8078 = vperm.slane %v7304, %v8027
    %v8079 = vsel %vm8029, %v8078, %v8077
    %v8080 = vperm.slane %v7307, %v8031
    %v8081 = vsel %vm8033, %v8080, %v8079
    %v8082 = vperm.slane %v7310, %v8035
    %v8083 = vsel %vm8037, %v8082, %v8081
    %v8084 = vperm.slane %v7313, %v8039
    %v8085 = vsel %vm8041, %v8084, %v8083
    %v8086 = vperm.slane %v7316, %v8043
    %v8087 = vsel %vm8045, %v8086, %v8085
    %v8088 = vperm.slane %v7319, %v8047
    %v8089 = vsel %vm8049, %v8088, %v8087
    %v8090 = vperm.slane %v7322, %v8051
    %v8091 = vsel %vm8053, %v8090, %v8089
    %v8092 = vperm.slane %v7325, %v8055
    %v8093 = vsel %vm8057, %v8092, %v8091
    %v8094 = vperm.slane %v7328, %v8059
    %v8095 = vsel %vm8061, %v8094, %v8093
    %v8096 = vperm.slane %v7331, %v8063
    %v8097 = vsel %vm8065, %v8096, %v8095
    %v8098 = vperm.slane %v7334, %v8005
    %v8099 = vperm.slane %v7337, %v8007
    %v8100 = vsel %vm8009, %v8099, %v8098
    %v8101 = vperm.slane %v7340, %v8011
    %v8102 = vsel %vm8013, %v8101, %v8100
    %v8103 = vperm.slane %v7343, %v8015
    %v8104 = vsel %vm8017, %v8103, %v8102
    %v8105 = vperm.slane %v7346, %v8019
    %v8106 = vsel %vm8021, %v8105, %v8104
    %v8107 = vperm.slane %v7349, %v8023
    %v8108 = vsel %vm8025, %v8107, %v8106
    %v8109 = vperm.slane %v7352, %v8027
    %v8110 = vsel %vm8029, %v8109, %v8108
    %v8111 = vperm.slane %v7355, %v8031
    %v8112 = vsel %vm8033, %v8111, %v8110
    %v8113 = vperm.slane %v7358, %v8035
    %v8114 = vsel %vm8037, %v8113, %v8112
    %v8115 = vperm.slane %v7361, %v8039
    %v8116 = vsel %vm8041, %v8115, %v8114
    %v8117 = vperm.slane %v7364, %v8043
    %v8118 = vsel %vm8045, %v8117, %v8116
    %v8119 = vperm.slane %v7367, %v8047
    %v8120 = vsel %vm8049, %v8119, %v8118
    %v8121 = vperm.slane %v7370, %v8051
    %v8122 = vsel %vm8053, %v8121, %v8120
    %v8123 = vperm.slane %v7373, %v8055
    %v8124 = vsel %vm8057, %v8123, %v8122
    %v8125 = vperm.slane %v7376, %v8059
    %v8126 = vsel %vm8061, %v8125, %v8124
    %v8127 = vperm.slane %v7379, %v8063
    %v8128 = vsel %vm8065, %v8127, %v8126
    %v8129 = vperm.slane %v7382, %v8005
    %v8130 = vperm.slane %v7385, %v8007
    %v8131 = vsel %vm8009, %v8130, %v8129
    %v8132 = vperm.slane %v7388, %v8011
    %v8133 = vsel %vm8013, %v8132, %v8131
    %v8134 = vperm.slane %v7391, %v8015
    %v8135 = vsel %vm8017, %v8134, %v8133
    %v8136 = vperm.slane %v7394, %v8019
    %v8137 = vsel %vm8021, %v8136, %v8135
    %v8138 = vperm.slane %v7397, %v8023
    %v8139 = vsel %vm8025, %v8138, %v8137
    %v8140 = vperm.slane %v7400, %v8027
    %v8141 = vsel %vm8029, %v8140, %v8139
    %v8142 = vperm.slane %v7403, %v8031
    %v8143 = vsel %vm8033, %v8142, %v8141
    %v8144 = vperm.slane %v7406, %v8035
    %v8145 = vsel %vm8037, %v8144, %v8143
    %v8146 = vperm.slane %v7409, %v8039
    %v8147 = vsel %vm8041, %v8146, %v8145
    %v8148 = vperm.slane %v7412, %v8043
    %v8149 = vsel %vm8045, %v8148, %v8147
    %v8150 = vperm.slane %v7415, %v8047
    %v8151 = vsel %vm8049, %v8150, %v8149
    %v8152 = vperm.slane %v7418, %v8051
    %v8153 = vsel %vm8053, %v8152, %v8151
    %v8154 = vperm.slane %v7421, %v8055
    %v8155 = vsel %vm8057, %v8154, %v8153
    %v8156 = vperm.slane %v7424, %v8059
    %v8157 = vsel %vm8061, %v8156, %v8155
    %v8158 = vperm.slane %v7427, %v8063
    %v8159 = vsel %vm8065, %v8158, %v8157
    %v8160 = vperm.slane %v7430, %v8005
    %v8161 = vperm.slane %v7433, %v8007
    %v8162 = vsel %vm8009, %v8161, %v8160
    %v8163 = vperm.slane %v7436, %v8011
    %v8164 = vsel %vm8013, %v8163, %v8162
    %v8165 = vperm.slane %v7439, %v8015
    %v8166 = vsel %vm8017, %v8165, %v8164
    %v8167 = vperm.slane %v7442, %v8019
    %v8168 = vsel %vm8021, %v8167, %v8166
    %v8169 = vperm.slane %v7445, %v8023
    %v8170 = vsel %vm8025, %v8169, %v8168
    %v8171 = vperm.slane %v7448, %v8027
    %v8172 = vsel %vm8029, %v8171, %v8170
    %v8173 = vperm.slane %v7451, %v8031
    %v8174 = vsel %vm8033, %v8173, %v8172
    %v8175 = vperm.slane %v7454, %v8035
    %v8176 = vsel %vm8037, %v8175, %v8174
    %v8177 = vperm.slane %v7457, %v8039
    %v8178 = vsel %vm8041, %v8177, %v8176
    %v8179 = vperm.slane %v7460, %v8043
    %v8180 = vsel %vm8045, %v8179, %v8178
    %v8181 = vperm.slane %v7463, %v8047
    %v8182 = vsel %vm8049, %v8181, %v8180
    %v8183 = vperm.slane %v7466, %v8051
    %v8184 = vsel %vm8053, %v8183, %v8182
    %v8185 = vperm.slane %v7469, %v8055
    %v8186 = vsel %vm8057, %v8185, %v8184
    %v8187 = vperm.slane %v7472, %v8059
    %v8188 = vsel %vm8061, %v8187, %v8186
    %v8189 = vperm.slane %v7475, %v8063
    %v8190 = vsel %vm8065, %v8189, %v8188
    %v8191 = vperm.slane %v7478, %v8005
    %v8192 = vperm.slane %v7481, %v8007
    %v8193 = vsel %vm8009, %v8192, %v8191
    %v8194 = vperm.slane %v7484, %v8011
    %v8195 = vsel %vm8013, %v8194, %v8193
    %v8196 = vperm.slane %v7487, %v8015
    %v8197 = vsel %vm8017, %v8196, %v8195
    %v8198 = vperm.slane %v7490, %v8019
    %v8199 = vsel %vm8021, %v8198, %v8197
    %v8200 = vperm.slane %v7493, %v8023
    %v8201 = vsel %vm8025, %v8200, %v8199
    %v8202 = vperm.slane %v7496, %v8027
    %v8203 = vsel %vm8029, %v8202, %v8201
    %v8204 = vperm.slane %v7499, %v8031
    %v8205 = vsel %vm8033, %v8204, %v8203
    %v8206 = vperm.slane %v7502, %v8035
    %v8207 = vsel %vm8037, %v8206, %v8205
    %v8208 = vperm.slane %v7505, %v8039
    %v8209 = vsel %vm8041, %v8208, %v8207
    %v8210 = vperm.slane %v7508, %v8043
    %v8211 = vsel %vm8045, %v8210, %v8209
    %v8212 = vperm.slane %v7511, %v8047
    %v8213 = vsel %vm8049, %v8212, %v8211
    %v8214 = vperm.slane %v7514, %v8051
    %v8215 = vsel %vm8053, %v8214, %v8213
    %v8216 = vperm.slane %v7517, %v8055
    %v8217 = vsel %vm8057, %v8216, %v8215
    %v8218 = vperm.slane %v7520, %v8059
    %v8219 = vsel %vm8061, %v8218, %v8217
    %v8220 = vperm.slane %v7523, %v8063
    %v8221 = vsel %vm8065, %v8220, %v8219
    %v8222 = vperm.slane %v7526, %v8005
    %v8223 = vperm.slane %v7529, %v8007
    %v8224 = vsel %vm8009, %v8223, %v8222
    %v8225 = vperm.slane %v7532, %v8011
    %v8226 = vsel %vm8013, %v8225, %v8224
    %v8227 = vperm.slane %v7535, %v8015
    %v8228 = vsel %vm8017, %v8227, %v8226
    %v8229 = vperm.slane %v7538, %v8019
    %v8230 = vsel %vm8021, %v8229, %v8228
    %v8231 = vperm.slane %v7541, %v8023
    %v8232 = vsel %vm8025, %v8231, %v8230
    %v8233 = vperm.slane %v7544, %v8027
    %v8234 = vsel %vm8029, %v8233, %v8232
    %v8235 = vperm.slane %v7547, %v8031
    %v8236 = vsel %vm8033, %v8235, %v8234
    %v8237 = vperm.slane %v7550, %v8035
    %v8238 = vsel %vm8037, %v8237, %v8236
    %v8239 = vperm.slane %v7553, %v8039
    %v8240 = vsel %vm8041, %v8239, %v8238
    %v8241 = vperm.slane %v7556, %v8043
    %v8242 = vsel %vm8045, %v8241, %v8240
    %v8243 = vperm.slane %v7559, %v8047
    %v8244 = vsel %vm8049, %v8243, %v8242
    %v8245 = vperm.slane %v7562, %v8051
    %v8246 = vsel %vm8053, %v8245, %v8244
    %v8247 = vperm.slane %v7565, %v8055
    %v8248 = vsel %vm8057, %v8247, %v8246
    %v8249 = vperm.slane %v7568, %v8059
    %v8250 = vsel %vm8061, %v8249, %v8248
    %v8251 = vperm.slane %v7571, %v8063
    %v8252 = vsel %vm8065, %v8251, %v8250
    %v8253 = vperm.slane %v7574, %v8005
    %v8254 = vperm.slane %v7577, %v8007
    %v8255 = vsel %vm8009, %v8254, %v8253
    %v8256 = vperm.slane %v7580, %v8011
    %v8257 = vsel %vm8013, %v8256, %v8255
    %v8258 = vperm.slane %v7583, %v8015
    %v8259 = vsel %vm8017, %v8258, %v8257
    %v8260 = vperm.slane %v7586, %v8019
    %v8261 = vsel %vm8021, %v8260, %v8259
    %v8262 = vperm.slane %v7589, %v8023
    %v8263 = vsel %vm8025, %v8262, %v8261
    %v8264 = vperm.slane %v7592, %v8027
    %v8265 = vsel %vm8029, %v8264, %v8263
    %v8266 = vperm.slane %v7595, %v8031
    %v8267 = vsel %vm8033, %v8266, %v8265
    %v8268 = vperm.slane %v7598, %v8035
    %v8269 = vsel %vm8037, %v8268, %v8267
    %v8270 = vperm.slane %v7601, %v8039
    %v8271 = vsel %vm8041, %v8270, %v8269
    %v8272 = vperm.slane %v7604, %v8043
    %v8273 = vsel %vm8045, %v8272, %v8271
    %v8274 = vperm.slane %v7607, %v8047
    %v8275 = vsel %vm8049, %v8274, %v8273
    %v8276 = vperm.slane %v7610, %v8051
    %v8277 = vsel %vm8053, %v8276, %v8275
    %v8278 = vperm.slane %v7613, %v8055
    %v8279 = vsel %vm8057, %v8278, %v8277
    %v8280 = vperm.slane %v7616, %v8059
    %v8281 = vsel %vm8061, %v8280, %v8279
    %v8282 = vperm.slane %v7619, %v8063
    %v8283 = vsel %vm8065, %v8282, %v8281
    %v8284 = vperm.slane %v7622, %v8005
    %v8285 = vperm.slane %v7625, %v8007
    %v8286 = vsel %vm8009, %v8285, %v8284
    %v8287 = vperm.slane %v7628, %v8011
    %v8288 = vsel %vm8013, %v8287, %v8286
    %v8289 = vperm.slane %v7631, %v8015
    %v8290 = vsel %vm8017, %v8289, %v8288
    %v8291 = vperm.slane %v7634, %v8019
    %v8292 = vsel %vm8021, %v8291, %v8290
    %v8293 = vperm.slane %v7637, %v8023
    %v8294 = vsel %vm8025, %v8293, %v8292
    %v8295 = vperm.slane %v7640, %v8027
    %v8296 = vsel %vm8029, %v8295, %v8294
    %v8297 = vperm.slane %v7643, %v8031
    %v8298 = vsel %vm8033, %v8297, %v8296
    %v8299 = vperm.slane %v7646, %v8035
    %v8300 = vsel %vm8037, %v8299, %v8298
    %v8301 = vperm.slane %v7649, %v8039
    %v8302 = vsel %vm8041, %v8301, %v8300
    %v8303 = vperm.slane %v7652, %v8043
    %v8304 = vsel %vm8045, %v8303, %v8302
    %v8305 = vperm.slane %v7655, %v8047
    %v8306 = vsel %vm8049, %v8305, %v8304
    %v8307 = vperm.slane %v7658, %v8051
    %v8308 = vsel %vm8053, %v8307, %v8306
    %v8309 = vperm.slane %v7661, %v8055
    %v8310 = vsel %vm8057, %v8309, %v8308
    %v8311 = vperm.slane %v7664, %v8059
    %v8312 = vsel %vm8061, %v8311, %v8310
    %v8313 = vperm.slane %v7667, %v8063
    %v8314 = vsel %vm8065, %v8313, %v8312
    %v8315 = vperm.slane %v7670, %v8005
    %v8316 = vperm.slane %v7673, %v8007
    %v8317 = vsel %vm8009, %v8316, %v8315
    %v8318 = vperm.slane %v7676, %v8011
    %v8319 = vsel %vm8013, %v8318, %v8317
    %v8320 = vperm.slane %v7679, %v8015
    %v8321 = vsel %vm8017, %v8320, %v8319
    %v8322 = vperm.slane %v7682, %v8019
    %v8323 = vsel %vm8021, %v8322, %v8321
    %v8324 = vperm.slane %v7685, %v8023
    %v8325 = vsel %vm8025, %v8324, %v8323
    %v8326 = vperm.slane %v7688, %v8027
    %v8327 = vsel %vm8029, %v8326, %v8325
    %v8328 = vperm.slane %v7691, %v8031
    %v8329 = vsel %vm8033, %v8328, %v8327
    %v8330 = vperm.slane %v7694, %v8035
    %v8331 = vsel %vm8037, %v8330, %v8329
    %v8332 = vperm.slane %v7697, %v8039
    %v8333 = vsel %vm8041, %v8332, %v8331
    %v8334 = vperm.slane %v7700, %v8043
    %v8335 = vsel %vm8045, %v8334, %v8333
    %v8336 = vperm.slane %v7703, %v8047
    %v8337 = vsel %vm8049, %v8336, %v8335
    %v8338 = vperm.slane %v7706, %v8051
    %v8339 = vsel %vm8053, %v8338, %v8337
    %v8340 = vperm.slane %v7709, %v8055
    %v8341 = vsel %vm8057, %v8340, %v8339
    %v8342 = vperm.slane %v7712, %v8059
    %v8343 = vsel %vm8061, %v8342, %v8341
    %v8344 = vperm.slane %v7715, %v8063
    %v8345 = vsel %vm8065, %v8344, %v8343
    %v8346 = vperm.slane %v7718, %v8005
    %v8347 = vperm.slane %v7721, %v8007
    %v8348 = vsel %vm8009, %v8347, %v8346
    %v8349 = vperm.slane %v7724, %v8011
    %v8350 = vsel %vm8013, %v8349, %v8348
    %v8351 = vperm.slane %v7727, %v8015
    %v8352 = vsel %vm8017, %v8351, %v8350
    %v8353 = vperm.slane %v7730, %v8019
    %v8354 = vsel %vm8021, %v8353, %v8352
    %v8355 = vperm.slane %v7733, %v8023
    %v8356 = vsel %vm8025, %v8355, %v8354
    %v8357 = vperm.slane %v7736, %v8027
    %v8358 = vsel %vm8029, %v8357, %v8356
    %v8359 = vperm.slane %v7739, %v8031
    %v8360 = vsel %vm8033, %v8359, %v8358
    %v8361 = vperm.slane %v7742, %v8035
    %v8362 = vsel %vm8037, %v8361, %v8360
    %v8363 = vperm.slane %v7745, %v8039
    %v8364 = vsel %vm8041, %v8363, %v8362
    %v8365 = vperm.slane %v7748, %v8043
    %v8366 = vsel %vm8045, %v8365, %v8364
    %v8367 = vperm.slane %v7751, %v8047
    %v8368 = vsel %vm8049, %v8367, %v8366
    %v8369 = vperm.slane %v7754, %v8051
    %v8370 = vsel %vm8053, %v8369, %v8368
    %v8371 = vperm.slane %v7757, %v8055
    %v8372 = vsel %vm8057, %v8371, %v8370
    %v8373 = vperm.slane %v7760, %v8059
    %v8374 = vsel %vm8061, %v8373, %v8372
    %v8375 = vperm.slane %v7763, %v8063
    %v8376 = vsel %vm8065, %v8375, %v8374
    %v8377 = vperm.slane %v7766, %v8005
    %v8378 = vperm.slane %v7769, %v8007
    %v8379 = vsel %vm8009, %v8378, %v8377
    %v8380 = vperm.slane %v7772, %v8011
    %v8381 = vsel %vm8013, %v8380, %v8379
    %v8382 = vperm.slane %v7775, %v8015
    %v8383 = vsel %vm8017, %v8382, %v8381
    %v8384 = vperm.slane %v7778, %v8019
    %v8385 = vsel %vm8021, %v8384, %v8383
    %v8386 = vperm.slane %v7781, %v8023
    %v8387 = vsel %vm8025, %v8386, %v8385
    %v8388 = vperm.slane %v7784, %v8027
    %v8389 = vsel %vm8029, %v8388, %v8387
    %v8390 = vperm.slane %v7787, %v8031
    %v8391 = vsel %vm8033, %v8390, %v8389
    %v8392 = vperm.slane %v7790, %v8035
    %v8393 = vsel %vm8037, %v8392, %v8391
    %v8394 = vperm.slane %v7793, %v8039
    %v8395 = vsel %vm8041, %v8394, %v8393
    %v8396 = vperm.slane %v7796, %v8043
    %v8397 = vsel %vm8045, %v8396, %v8395
    %v8398 = vperm.slane %v7799, %v8047
    %v8399 = vsel %vm8049, %v8398, %v8397
    %v8400 = vperm.slane %v7802, %v8051
    %v8401 = vsel %vm8053, %v8400, %v8399
    %v8402 = vperm.slane %v7805, %v8055
    %v8403 = vsel %vm8057, %v8402, %v8401
    %v8404 = vperm.slane %v7808, %v8059
    %v8405 = vsel %vm8061, %v8404, %v8403
    %v8406 = vperm.slane %v7811, %v8063
    %v8407 = vsel %vm8065, %v8406, %v8405
    %v8408 = vperm.slane %v7814, %v8005
    %v8409 = vperm.slane %v7817, %v8007
    %v8410 = vsel %vm8009, %v8409, %v8408
    %v8411 = vperm.slane %v7820, %v8011
    %v8412 = vsel %vm8013, %v8411, %v8410
    %v8413 = vperm.slane %v7823, %v8015
    %v8414 = vsel %vm8017, %v8413, %v8412
    %v8415 = vperm.slane %v7826, %v8019
    %v8416 = vsel %vm8021, %v8415, %v8414
    %v8417 = vperm.slane %v7829, %v8023
    %v8418 = vsel %vm8025, %v8417, %v8416
    %v8419 = vperm.slane %v7832, %v8027
    %v8420 = vsel %vm8029, %v8419, %v8418
    %v8421 = vperm.slane %v7835, %v8031
    %v8422 = vsel %vm8033, %v8421, %v8420
    %v8423 = vperm.slane %v7838, %v8035
    %v8424 = vsel %vm8037, %v8423, %v8422
    %v8425 = vperm.slane %v7841, %v8039
    %v8426 = vsel %vm8041, %v8425, %v8424
    %v8427 = vperm.slane %v7844, %v8043
    %v8428 = vsel %vm8045, %v8427, %v8426
    %v8429 = vperm.slane %v7847, %v8047
    %v8430 = vsel %vm8049, %v8429, %v8428
    %v8431 = vperm.slane %v7850, %v8051
    %v8432 = vsel %vm8053, %v8431, %v8430
    %v8433 = vperm.slane %v7853, %v8055
    %v8434 = vsel %vm8057, %v8433, %v8432
    %v8435 = vperm.slane %v7856, %v8059
    %v8436 = vsel %vm8061, %v8435, %v8434
    %v8437 = vperm.slane %v7859, %v8063
    %v8438 = vsel %vm8065, %v8437, %v8436
    %v8439 = vperm.slane %v7862, %v8005
    %v8440 = vperm.slane %v7865, %v8007
    %v8441 = vsel %vm8009, %v8440, %v8439
    %v8442 = vperm.slane %v7868, %v8011
    %v8443 = vsel %vm8013, %v8442, %v8441
    %v8444 = vperm.slane %v7871, %v8015
    %v8445 = vsel %vm8017, %v8444, %v8443
    %v8446 = vperm.slane %v7874, %v8019
    %v8447 = vsel %vm8021, %v8446, %v8445
    %v8448 = vperm.slane %v7877, %v8023
    %v8449 = vsel %vm8025, %v8448, %v8447
    %v8450 = vperm.slane %v7880, %v8027
    %v8451 = vsel %vm8029, %v8450, %v8449
    %v8452 = vperm.slane %v7883, %v8031
    %v8453 = vsel %vm8033, %v8452, %v8451
    %v8454 = vperm.slane %v7886, %v8035
    %v8455 = vsel %vm8037, %v8454, %v8453
    %v8456 = vperm.slane %v7889, %v8039
    %v8457 = vsel %vm8041, %v8456, %v8455
    %v8458 = vperm.slane %v7892, %v8043
    %v8459 = vsel %vm8045, %v8458, %v8457
    %v8460 = vperm.slane %v7895, %v8047
    %v8461 = vsel %vm8049, %v8460, %v8459
    %v8462 = vperm.slane %v7898, %v8051
    %v8463 = vsel %vm8053, %v8462, %v8461
    %v8464 = vperm.slane %v7901, %v8055
    %v8465 = vsel %vm8057, %v8464, %v8463
    %v8466 = vperm.slane %v7904, %v8059
    %v8467 = vsel %vm8061, %v8466, %v8465
    %v8468 = vperm.slane %v7907, %v8063
    %v8469 = vsel %vm8065, %v8468, %v8467
    %v8470 = vperm.slane %v7910, %v8005
    %v8471 = vperm.slane %v7913, %v8007
    %v8472 = vsel %vm8009, %v8471, %v8470
    %v8473 = vperm.slane %v7916, %v8011
    %v8474 = vsel %vm8013, %v8473, %v8472
    %v8475 = vperm.slane %v7919, %v8015
    %v8476 = vsel %vm8017, %v8475, %v8474
    %v8477 = vperm.slane %v7922, %v8019
    %v8478 = vsel %vm8021, %v8477, %v8476
    %v8479 = vperm.slane %v7925, %v8023
    %v8480 = vsel %vm8025, %v8479, %v8478
    %v8481 = vperm.slane %v7928, %v8027
    %v8482 = vsel %vm8029, %v8481, %v8480
    %v8483 = vperm.slane %v7931, %v8031
    %v8484 = vsel %vm8033, %v8483, %v8482
    %v8485 = vperm.slane %v7934, %v8035
    %v8486 = vsel %vm8037, %v8485, %v8484
    %v8487 = vperm.slane %v7937, %v8039
    %v8488 = vsel %vm8041, %v8487, %v8486
    %v8489 = vperm.slane %v7940, %v8043
    %v8490 = vsel %vm8045, %v8489, %v8488
    %v8491 = vperm.slane %v7943, %v8047
    %v8492 = vsel %vm8049, %v8491, %v8490
    %v8493 = vperm.slane %v7946, %v8051
    %v8494 = vsel %vm8053, %v8493, %v8492
    %v8495 = vperm.slane %v7949, %v8055
    %v8496 = vsel %vm8057, %v8495, %v8494
    %v8497 = vperm.slane %v7952, %v8059
    %v8498 = vsel %vm8061, %v8497, %v8496
    %v8499 = vperm.slane %v7955, %v8063
    %v8500 = vsel %vm8065, %v8499, %v8498
    %v8501 = vperm.slane %v7958, %v8005
    %v8502 = vperm.slane %v7961, %v8007
    %v8503 = vsel %vm8009, %v8502, %v8501
    %v8504 = vperm.slane %v7964, %v8011
    %v8505 = vsel %vm8013, %v8504, %v8503
    %v8506 = vperm.slane %v7967, %v8015
    %v8507 = vsel %vm8017, %v8506, %v8505
    %v8508 = vperm.slane %v7970, %v8019
    %v8509 = vsel %vm8021, %v8508, %v8507
    %v8510 = vperm.slane %v7973, %v8023
    %v8511 = vsel %vm8025, %v8510, %v8509
    %v8512 = vperm.slane %v7976, %v8027
    %v8513 = vsel %vm8029, %v8512, %v8511
    %v8514 = vperm.slane %v7979, %v8031
    %v8515 = vsel %vm8033, %v8514, %v8513
    %v8516 = vperm.slane %v7982, %v8035
    %v8517 = vsel %vm8037, %v8516, %v8515
    %v8518 = vperm.slane %v7985, %v8039
    %v8519 = vsel %vm8041, %v8518, %v8517
    %v8520 = vperm.slane %v7988, %v8043
    %v8521 = vsel %vm8045, %v8520, %v8519
    %v8522 = vperm.slane %v7991, %v8047
    %v8523 = vsel %vm8049, %v8522, %v8521
    %v8524 = vperm.slane %v7994, %v8051
    %v8525 = vsel %vm8053, %v8524, %v8523
    %v8526 = vperm.slane %v7997, %v8055
    %v8527 = vsel %vm8057, %v8526, %v8525
    %v8528 = vperm.slane %v8000, %v8059
    %v8529 = vsel %vm8061, %v8528, %v8527
    %v8530 = vperm.slane %v8003, %v8063
    %v8531 = vsel %vm8065, %v8530, %v8529
    %vm8532 = vcmask 1041409
    %v8533 = vsel %vm8532, %v8128, %v8066
    %vm8534 = vcmask 1042434
    %v8535 = vsel %vm8534, %v8190, %v8533
    %vm8536 = vcmask 1043459
    %v8537 = vsel %vm8536, %v8252, %v8535
    %vm8538 = vcmask 1044484
    %v8539 = vsel %vm8538, %v8314, %v8537
    %vm8540 = vcmask 1045509
    %v8541 = vsel %vm8540, %v8376, %v8539
    %vm8542 = vcmask 1046534
    %v8543 = vsel %vm8542, %v8438, %v8541
    %vm8544 = vcmask 1047559
    %v8545 = vsel %vm8544, %v8500, %v8543
    %v8546 = vsel %vm8532, %v8159, %v8097
    %v8547 = vsel %vm8534, %v8221, %v8546
    %v8548 = vsel %vm8536, %v8283, %v8547
    %v8549 = vsel %vm8538, %v8345, %v8548
    %v8550 = vsel %vm8540, %v8407, %v8549
    %v8551 = vsel %vm8542, %v8469, %v8550
    %v8552 = vsel %vm8544, %v8531, %v8551
    %8555 = vst [vmem:[#allocation2] sm:$0xff] %v8545
    %8556 = vst [vmem:[#allocation2 + $0x8] sm:$0xff] %v8552
    // Predicated region
    $region14: #{tpu_custom_call.1} parent=1 // pred_check
      _
    $region15: #{tpu_custom_call.1} parent=1 // pred_check_branch
      %8558 = sbr.rel (0) target = $region17
    $region16: #{tpu_custom_call.1} parent=1 // pred_region
      %8560 = vsyncadd [#allocation3], 0
      %s8562 = sshll.u32 [#allocation2], 4
      %s8563 = int_to_ptr.vmem [resolvable:$true] %s8562
      %s8564 = sshll.u32 %s3, 4
      %s8565 = int_to_ptr.hbm [resolvable:$true] %s8564
      %8567 = dma.vmem_to_hbm [thread:$0]  %s8563, 256, %s8565, [#allocation3]
    $region17: #{tpu_custom_call.1} parent=1 // pred_fallthru
      _
    // Predicated region
    $region18: #{tpu_custom_call.1} parent=1 // pred_check
      _
    $region19: #{tpu_custom_call.1} parent=1 // pred_check_branch
      %8569 = sbr.rel (0) target = $region21
    $region20: #{tpu_custom_call.1} parent=1 // pred_region
      %8571 = dma.done [#allocation3], 256
    $region21: #{tpu_custom_call.1} parent=1 // pred_fallthru
      _
    %8572 = vsyncpa [#allocation3], 1

</llo_original>
